<compile_context>
chip_gen: v7x
topology: tpu7x:2x2x1
jax: 0.10.0
libtpu: 0.0.40
codegen_flags: <defaults>
</compile_context>

<pallas_src>
import jax
import jax.numpy as jnp
import numpy as np
from jax import lax
from jax.experimental import pallas as pl
from jax.experimental.pallas import tpu as pltpu

# ----------------------------- synthetic config ------------------------------
ENTITY_DIM = 32          # config.entity_embedding_dim
NUM_SPECIES = 32         # pokedex vocab incl. null token 0
NUM_ABILITIES = 16
NUM_ITEMS = 16
NUM_ITEM_EFFECTS = 7     # len(ITEM_EFFECTS)
NUM_MOVES = 24
NUM_FORMES = 8           # len(formes) + 1
NUM_GENDERS = 3          # len(GENDERS)
NUM_STATUS = 7           # len(STATUS)
NUM_TYPES = 19           # len(BattleTypeChart)
PP_BITS = 6              # binary_enc_matrix(64) -> 6 bits
P = 12                   # pokemon slots per side
NMOVESLOTS = 4
NUM_FEATURES = 38
E = ENTITY_DIM

# onehots concat order: forme, hp, active, fainted, gender, level, status, sleep, toxic, tera
ONEHOT_SIZE = (NUM_FORMES - 1) + 10 + 2 + 2 + NUM_GENDERS + 100 + NUM_STATUS + 3 + 3 + 2  # 139

W_SP = NUM_SPECIES - 1                       # 31
W_MV = NUM_MOVES - 1                         # 23
W_PP = PP_BITS                               # 6
W_AB = NUM_ABILITIES - 1                     # 15
W_IT = NUM_ITEMS - 1                         # 15
W_IE = NUM_ITEM_EFFECTS                      # 7
W_TT = NUM_TYPES                             # 19

# ---------------- fused one-hot layout: two exact 128-lane halves ----------------
# half A (global columns 0..127)
A_SPECIES = 0                                 # 31
A_MOVE = 31                                   # 23 (sum of known moves)
A_PP = 54                                     # 6  (sum of masked pp bits)
A_ABILITY = 60                                # 15
A_ITEM = 75                                   # 15
A_ITEMEFF = 90                                # 7
A_TERATYPE = 97                               # 19
A_SIDECOL = 116                               # scalar: side value (0/1)
A_TERACOL = 117                               # scalar: terastallized flag (0/1)
A_TTUNK = 118                                 # scalar: 1 if teratype unknown
A_FORME = 119                                 # 7
A_ACTIVE = 126                                # 2
# half B (local columns 0..127, global 128+)
B_HP = 0                                      # 10
B_FAINTED = 10                                # 2
B_GENDER = 12                                 # 3
B_LEVEL = 15                                  # 100
B_STATUS = 115                                # 7
B_SLEEP = 122                                 # 3
B_TOXIC = 125                                 # 3
K_FUSED = 256
X_PAD = 512                                   # lane-aligned padded input width (>= P*F = 456)

# row offsets inside the original 139-wide onehots linear
OH_FORME, OH_HP, OH_ACTIVE, OH_FAINTED, OH_GENDER = 0, 7, 17, 19, 21
OH_LEVEL, OH_STATUS, OH_SLEEP, OH_TOXIC, OH_TERA = 24, 124, 131, 134, 137


def _round_up(n, m):
    return ((n + m - 1) // m) * m


def _choose_rows(n, requested):
    # Prefer >= 2 grid steps when possible so the single "parallel" axis can split
    # across both TensorCores on v7x (harmless on single-core v5e/v6e).
    if n > 8:
        cap = max(8, _round_up((n + 1) // 2, 8))
    else:
        cap = 8
    return max(8, min(_round_up(int(requested), 8), cap))


# --------------------------------- main kernel ------------------------------------
def pokemon_embedding_kernel(x_ref, wbig_ref, bias_ref, wunk_ref, bunk_ref, emb_ref):
    f32 = jnp.float32
    x2 = x_ref[...]                                   # (Gt, X_PAD) f32
    Gt = x2.shape[0]

    def col(s, idx):
        c = s * NUM_FEATURES + idx
        return x2[:, c:c + 1]                         # (Gt, 1) f32

    def tok(s, idx):
        return (col(s, idx) + 1.0).astype(jnp.int32)  # == (x + 1).long()

    iota = lax.broadcasted_iota(jnp.int32, (Gt, 128), 1)

    def hot(tgt):
        # tgt: (Gt,1) int32 target lane within the current 128-lane half (-1 => no hit)
        return jnp.where(iota == tgt, 1.0, 0.0)

    def shifted_tgt(t, off):
        # torch.eye(k+1)[..., 1:] semantics: token 0 -> no hot lane, token j>0 -> off+j-1
        return jnp.where(t > 0, t - 1 + off, -1)

    # precomputed helpers for the summed pp-bit block (half A columns A_PP..A_PP+5)
    pp_shift = jnp.clip(iota - A_PP, 0, W_PP - 1)
    pp_cols = (iota >= A_PP) & (iota < A_PP + W_PP)

    # ---------------- pass 1: per-side species statistics ----------------
    sp_tgt, sp_unk = [], []
    known = jnp.zeros((Gt, 128), f32)
    unrev = jnp.zeros((Gt, 1), f32)
    for s in range(P):
        sp = tok(s, 0)
        t = shifted_tgt(sp, A_SPECIES)
        known = known + hot(t)
        if s < 6:
            unk = jnp.where(sp > 0, 0.0, 1.0)
            sp_tgt.append(t)
            sp_unk.append(unk)
            unrev = unrev + unk
    unknown128 = jnp.where(iota < W_SP, (1.0 - known) / jnp.maximum(unrev, 1.0), 0.0)

    wbig = wbig_ref[...]          # (256, 96) bf16
    bias = bias_ref[...]          # (1, 96)  f32
    wunk = wunk_ref[...]          # (64, 96) f32
    bunk = bunk_ref[...]          # (1, 96)  f32

    # ---------------- pass 2: the six visible pokemon slots ----------------
    # NOTE: a static 6-way unroll; if a bundle dump ever shows spills at very large
    # tiles this loop could become a lax.fori_loop / extra grid axis.
    for s in range(6):
        # --- half A: species / moveset / ability / item / teratype / scalars / forme / active ---
        a = hot(sp_tgt[s]) + sp_unk[s] * unknown128
        n_known = jnp.zeros((Gt, 1), f32)
        for j in range(NMOVESLOTS):
            mv = tok(s, 26 + j)
            mv_known = mv > 0
            a = a + hot(jnp.where(mv_known, mv - 1 + A_MOVE, -1))
            pp = jnp.minimum(tok(s, 30 + j), 63)
            bits = jnp.bitwise_and(jnp.right_shift(pp, pp_shift), 1).astype(f32)
            a = a + jnp.where(pp_cols & mv_known, bits, 0.0)
            n_known = n_known + jnp.where(mv_known, 1.0, 0.0)

        ab = tok(s, 15)
        ab_known = jnp.where(ab > 0, 1.0, 0.0)
        a = a + hot(shifted_tgt(ab, A_ABILITY))
        it = tok(s, 17)
        it_known = jnp.where(it > 0, 1.0, 0.0)
        a = a + hot(shifted_tgt(it, A_ITEM))
        ie = tok(s, 19)
        a = a + hot(jnp.where((it > 0) & (ie > 0), ie - 1 + A_ITEMEFF, -1))
        tt = tok(s, 35)
        a = a + hot(shifted_tgt(tt, A_TERATYPE))
        a = a + hot(shifted_tgt(tok(s, 1), A_FORME))        # forme
        a = a + hot(shifted_tgt(tok(s, 12), A_ACTIVE))      # active
        side = jnp.clip(tok(s, 37) - 1, 0, 1).astype(f32)
        a = a + jnp.where(iota == A_SIDECOL, side, 0.0)
        tera = jnp.where(tok(s, 34) > 0, 1.0, 0.0)
        a = a + jnp.where(iota == A_TERACOL, tera, 0.0)
        a = a + jnp.where(iota == A_TTUNK, jnp.where(tt > 0, 0.0, 1.0), 0.0)

        # --- half B: hp / fainted / gender / level / status / sleep / toxic ---
        hp_tok = jnp.clip(col(s, 5) * 10.0, 0.0, 10.0).astype(jnp.int32)
        b = hot(shifted_tgt(hp_tok, B_HP))
        b = b + hot(shifted_tgt(tok(s, 11), B_FAINTED))
        b = b + hot(shifted_tgt(tok(s, 14), B_GENDER))
        level = jnp.maximum(col(s, 13).astype(jnp.int32), 1) - 1
        b = b + hot(level + B_LEVEL)
        b = b + hot(shifted_tgt(tok(s, 21), B_STATUS))
        b = b + hot(shifted_tgt(tok(s, 22), B_SLEEP))
        toxic = jnp.floor(jnp.sqrt(tok(s, 23).astype(f32))).astype(jnp.int32)
        b = b + hot(shifted_tgt(toxic, B_TOXIC))

        # --- fused matmul: one (Gt,256) bf16 x (256,96) bf16 dot, f32 accumulation ---
        fused_in = jnp.concatenate([a, b], axis=-1).astype(jnp.bfloat16)
        fused_out = jnp.dot(fused_in, wbig, preferred_element_type=f32) + bias
        species_emb = fused_out[:, 0:E]
        moveset_lin = fused_out[:, E:2 * E]
        known_sum = fused_out[:, 2 * E:]

        # --- fused unknown-branch MLPs (block-diagonal), kept in f32 ---
        # TODO(synk): the original meloetta MLP helper may apply layernorm / a different
        # activation order; this matches the ReLU->Linear reference used here.
        unk_in = jnp.concatenate(
            [jnp.maximum(species_emb, 0.0),
             jnp.maximum(moveset_lin + species_emb, 0.0)], axis=-1)     # (Gt, 64)
        unk = jnp.dot(unk_in, wunk, preferred_element_type=f32) + bunk  # (Gt, 96)

        emb = (species_emb + known_sum
               + (1.0 - ab_known) * unk[:, 0:E]
               + (1.0 - it_known) * unk[:, E:2 * E]
               + (float(NMOVESLOTS) - n_known) * unk[:, 2 * E:])
        emb_ref[:, s * E:(s + 1) * E] = emb


# ----------------- second (tiny) kernel: active slot-0 move embeddings -----------------
def active_moves_kernel(x8_ref, wmov_ref, bmov_ref, out_ref):
    f32 = jnp.float32
    x8 = x8_ref[...]                              # (gb, 128) f32; cols 0..3 moves, 4..7 pp
    Gb = x8.shape[0]
    iota = lax.broadcasted_iota(jnp.int32, (Gb, 128), 1)
    kmv = W_MV + W_PP                             # 29
    slab = jnp.zeros((Gb, 128), f32)
    for j in range(NMOVESLOTS):
        mv = (x8[:, j:j + 1] + 1.0).astype(jnp.int32)
        pp = jnp.minimum((x8[:, 4 + j:5 + j] + 1.0).astype(jnp.int32), 63)
        off = j * kmv
        slab = slab + jnp.where((iota == mv - 1 + off) & (mv > 0), 1.0, 0.0)
        sh = jnp.clip(iota - (off + W_MV), 0, W_PP - 1)
        in_pp = (iota >= off + W_MV) & (iota < off + kmv)
        bits = jnp.bitwise_and(jnp.right_shift(pp, sh), 1).astype(f32)
        slab = slab + jnp.where(in_pp, bits, 0.0)     # pp bits are NOT masked by mv>0 here
    out_ref[...] = (jnp.dot(slab.astype(jnp.bfloat16), wmov_ref[...],
                            preferred_element_type=f32) + bmov_ref[...])


# --------------------------- host-side param packing ---------------------------
def _pack_params(params):
    (w_pok, b_pok, ab_tbl, w_abu, b_abu, w_itm, b_itm, w_itu, b_itu,
     w_mov, b_mov, w_mst, b_mst, w_umv, b_umv, side_tbl, w_tt, b_tt, w_oh, b_oh) = params
    f32 = jnp.float32

    wbig = jnp.zeros((K_FUSED, 3 * E), f32)
    # column group 0: species embedding
    wbig = wbig.at[A_SPECIES:A_SPECIES + W_SP, 0:E].set(w_pok)
    # column group 1: moveset_onehot linear (its bias goes into the post-matmul bias)
    wbig = wbig.at[A_MOVE:A_MOVE + W_MV, E:2 * E].set(w_mst)
    # column group 2: sum of every "known" contribution
    wbig = wbig.at[A_MOVE:A_MOVE + W_MV, 2 * E:].set(w_mov[:W_MV] + b_mov)   # b_mov per known move
    wbig = wbig.at[A_PP:A_PP + W_PP, 2 * E:].set(w_mov[W_MV:])
    wbig = wbig.at[A_ABILITY:A_ABILITY + W_AB, 2 * E:].set(ab_tbl[1:])
    wbig = wbig.at[A_ITEM:A_ITEM + W_IT, 2 * E:].set(w_itm[:W_IT] + b_itm)   # b_itm per known item
    wbig = wbig.at[A_ITEMEFF:A_ITEMEFF + W_IE, 2 * E:].set(w_itm[W_IT:])
    wbig = wbig.at[A_TERATYPE:A_TERATYPE + W_TT, 2 * E:].set(w_tt)
    wbig = wbig.at[A_SIDECOL, 2 * E:].set(side_tbl[1] - side_tbl[0])
    wbig = wbig.at[A_TERACOL, 2 * E:].set(w_oh[OH_TERA + 1] - w_oh[OH_TERA])
    wbig = wbig.at[A_TTUNK, 2 * E:].set(jnp.mean(w_tt, axis=0))              # uniform 1/19 branch
    wbig = wbig.at[A_FORME:A_FORME + NUM_FORMES - 1, 2 * E:].set(w_oh[OH_FORME:OH_FORME + NUM_FORMES - 1])
    wbig = wbig.at[A_ACTIVE:A_ACTIVE + 2, 2 * E:].set(w_oh[OH_ACTIVE:OH_ACTIVE + 2])
    base = 128
    wbig = wbig.at[base + B_HP:base + B_HP + 10, 2 * E:].set(w_oh[OH_HP:OH_HP + 10])
    wbig = wbig.at[base + B_FAINTED:base + B_FAINTED + 2, 2 * E:].set(w_oh[OH_FAINTED:OH_FAINTED + 2])
    wbig = wbig.at[base + B_GENDER:base + B_GENDER + NUM_GENDERS, 2 * E:].set(w_oh[OH_GENDER:OH_GENDER + NUM_GENDERS])
    wbig = wbig.at[base + B_LEVEL:base + B_LEVEL + 100, 2 * E:].set(w_oh[OH_LEVEL:OH_LEVEL + 100])
    wbig = wbig.at[base + B_STATUS:base + B_STATUS + NUM_STATUS, 2 * E:].set(w_oh[OH_STATUS:OH_STATUS + NUM_STATUS])
    wbig = wbig.at[base + B_SLEEP:base + B_SLEEP + 3, 2 * E:].set(w_oh[OH_SLEEP:OH_SLEEP + 3])
    wbig = wbig.at[base + B_TOXIC:base + B_TOXIC + 3, 2 * E:].set(w_oh[OH_TOXIC:OH_TOXIC + 3])

    bias = jnp.zeros((1, 3 * E), f32)
    bias = bias.at[:, 0:E].set(b_pok)
    bias = bias.at[:, E:2 * E].set(b_mst)
    bias = bias.at[:, 2 * E:].set(b_oh + b_tt + side_tbl[0:1] + w_oh[OH_TERA:OH_TERA + 1])

    # fused unknown MLPs: [ReLU(species) | ReLU(moveset_lin + species)] @ wunk + bunk
    wunk = jnp.zeros((2 * E, 3 * E), f32)
    wunk = wunk.at[0:E, 0:E].set(w_abu)
    wunk = wunk.at[0:E, E:2 * E].set(w_itu)
    wunk = wunk.at[E:2 * E, 2 * E:].set(w_umv)
    bunk = jnp.concatenate([b_abu, b_itu, b_umv], axis=1)

    # block-diagonal weights for the active-move kernel, padded to K = 128 lanes
    kmv = W_MV + W_PP
    wmov4 = jnp.zeros((128, NMOVESLOTS * E), f32)
    for j in range(NMOVESLOTS):
        wmov4 = wmov4.at[j * kmv:(j + 1) * kmv, j * E:(j + 1) * E].set(w_mov)
    bmov4 = jnp.tile(b_mov, (1, NMOVESLOTS))

    return (wbig.astype(jnp.bfloat16), bias, wunk, bunk,
            wmov4.astype(jnp.bfloat16), bmov4)


# -------------------------------- wrapper -------------------------------------
def pokemon_embedding_forward(x, params, rows_per_tile=512):
    T, B, S, P_, F_ = x.shape
    assert P_ == P and F_ == NUM_FEATURES
    G = T * B * S

    wbig, bias, wunk, bunk, wmov4, bmov4 = _pack_params(params)

    # ------------------- per-pokemon embeddings (6 visible slots) -------------------
    gt = _choose_rows(G, rows_per_tile)
    Gp = _round_up(G, gt)
    n_tiles = Gp // gt
    xg = x.reshape(G, P * NUM_FEATURES).astype(jnp.float32)
    xg = jnp.pad(xg, ((0, Gp - G), (0, X_PAD - P * NUM_FEATURES)))

    params_main = [wbig, bias, wunk, bunk]
    pspecs = [pl.BlockSpec(p.shape, lambda i: (0, 0)) for p in params_main]

    emb = pl.pallas_call(
        pokemon_embedding_kernel,
        out_shape=jax.ShapeDtypeStruct((Gp, 6 * E), jnp.float32),
        grid_spec=pltpu.PrefetchScalarGridSpec(
            num_scalar_prefetch=0,
            grid=(n_tiles,),
            in_specs=[pl.BlockSpec((gt, X_PAD), lambda i: (i, 0))] + pspecs,
            out_specs=pl.BlockSpec((gt, 6 * E), lambda i: (i, 0)),
        ),
        compiler_params=pltpu.CompilerParams(
            dimension_semantics=("parallel",),
            vmem_limit_bytes=48 * 1024 * 1024,   # fits 64 MiB v7x, ample on v5e/v6e
        ),
    )(xg, *params_main)

    emb6 = emb[:G].reshape(T, B, S, 6, E)
    pokemon_emb = jnp.concatenate(
        [emb6, jnp.zeros((T, B, S, P - 6, E), emb6.dtype)], axis=3)

    # ------------------- active (side 0, slot 0) move embeddings -------------------
    G2 = T * B
    gb = _choose_rows(G2, rows_per_tile)
    G2p = _round_up(G2, gb)
    n2 = G2p // gb
    x8 = x[:, :, 0, 0, 26:34].reshape(G2, 8).astype(jnp.float32)
    x8 = jnp.pad(x8, ((0, G2p - G2), (0, 128 - 8)))

    mov = pl.pallas_call(
        active_moves_kernel,
        out_shape=jax.ShapeDtypeStruct((G2p, NMOVESLOTS * E), jnp.float32),
        grid_spec=pltpu.PrefetchScalarGridSpec(
            num_scalar_prefetch=0,
            grid=(n2,),
            in_specs=[pl.BlockSpec((gb, 128), lambda i: (i, 0)),
                      pl.BlockSpec(wmov4.shape, lambda i: (0, 0)),
                      pl.BlockSpec(bmov4.shape, lambda i: (0, 0))],
            out_specs=pl.BlockSpec((gb, NMOVESLOTS * E), lambda i: (i, 0)),
        ),
        compiler_params=pltpu.CompilerParams(
            dimension_semantics=("parallel",),
            vmem_limit_bytes=48 * 1024 * 1024,
        ),
    )(x8, wmov4, bmov4)

    active_move_embeddings = mov[:G2].reshape(T, B, NMOVESLOTS, E)
    mask = jnp.broadcast_to(jnp.arange(P) < 6, (T, B, S, P))
    return pokemon_emb, mask, active_move_embeddings


# -------------------------- params / inputs / reference ------------------------
def init_params(key):
    def lin(k, fan_in):
        kw, kb = jax.random.split(k)
        w = jax.random.normal(kw, (fan_in, E), jnp.float32) * (1.0 / (fan_in ** 0.5))
        b = jax.random.normal(kb, (1, E), jnp.float32) * 0.01
        return w, b

    ks = jax.random.split(key, 12)
    params = []
    params += list(lin(ks[0], NUM_SPECIES - 1))                       # pokedex_embedding
    params += [jax.random.normal(ks[1], (NUM_ABILITIES, E), jnp.float32) * 0.1]
    params += list(lin(ks[2], E))                                     # ability unknown MLP
    params += list(lin(ks[3], (NUM_ITEMS - 1) + NUM_ITEM_EFFECTS))    # item_embedding_known
    params += list(lin(ks[4], E))                                     # item unknown MLP
    params += list(lin(ks[5], (NUM_MOVES - 1) + PP_BITS))             # move_embedding
    params += list(lin(ks[6], NUM_MOVES - 1))                         # moveset_onehot
    params += list(lin(ks[7], E))                                     # unknown_move MLP
    params += [jax.random.normal(ks[8], (2, E), jnp.float32) * 0.1]   # side_embedding
    params += list(lin(ks[9], NUM_TYPES))                             # teratype linear
    params += list(lin(ks[10], ONEHOT_SIZE))                          # onehots_lin
    return params


def make_example_input(key, lead_shape):
    shape = lead_shape + (P,)
    ks = jax.random.split(key, 32)

    def ri(k, lo, hi):
        return jax.random.randint(k, shape, lo, hi + 1).astype(jnp.float32)

    x = jnp.zeros(shape + (NUM_FEATURES,), jnp.float32)
    x = x.at[..., 0].set(ri(ks[0], -1, NUM_SPECIES - 2))
    x = x.at[..., 1].set(ri(ks[1], -1, NUM_FORMES - 2))
    x = x.at[..., 5].set(jax.random.uniform(ks[2], shape))             # hp ratio
    x = x.at[..., 11].set(ri(ks[3], -1, 1))
    x = x.at[..., 12].set(ri(ks[4], -1, 1))
    x = x.at[..., 13].set(ri(ks[5], 1, 100))                           # level
    x = x.at[..., 14].set(ri(ks[6], -1, NUM_GENDERS - 1))
    x = x.at[..., 15].set(ri(ks[7], -1, NUM_ABILITIES - 2))
    x = x.at[..., 17].set(ri(ks[8], -1, NUM_ITEMS - 2))
    x = x.at[..., 19].set(ri(ks[9], -1, NUM_ITEM_EFFECTS - 1))
    x = x.at[..., 21].set(ri(ks[10], -1, NUM_STATUS - 1))
    x = x.at[..., 22].set(ri(ks[11], -1, 2))
    x = x.at[..., 23].set(ri(ks[12], -1, 14))
    for j in range(NMOVESLOTS):
        x = x.at[..., 26 + j].set(ri(ks[13 + j], -1, NUM_MOVES - 2))
        x = x.at[..., 30 + j].set(ri(ks[17 + j], -1, 62))
    x = x.at[..., 34].set(ri(ks[21], -1, 1))                           # terastallized
    x = x.at[..., 35].set(ri(ks[22], -1, NUM_TYPES - 1))               # teratype
    x = x.at[..., 37].set(ri(ks[23], 0, 1))                            # side
    return x


def reference_forward(x, params):
    (w_pok, b_pok, ab_tbl, w_abu, b_abu, w_itm, b_itm, w_itu, b_itu,
     w_mov, b_mov, w_mst, b_mst, w_umv, b_umv, side_tbl, w_tt, b_tt, w_oh, b_oh) = params
    f32 = jnp.float32
    longs = (x + 1.0).astype(jnp.int32)

    def eye_shift(t, n):   # torch.eye(n)[..., 1:]
        return jax.nn.one_hot(t - 1, n - 1, dtype=f32)

    def mlp(h, w, b):
        return jnp.maximum(h, 0.0) @ w + b

    sp = longs[..., 0]
    known_probs = eye_shift(sp, NUM_SPECIES)
    unrevealed = (sp[..., :6] == 0).sum(-1, keepdims=True)[..., None].astype(f32)
    known_sum = known_probs.sum(-2, keepdims=True)
    unknown_probs = (1.0 - known_sum) / jnp.maximum(unrevealed, 1.0)
    species_onehot = jnp.where((sp > 0)[..., None], known_probs, unknown_probs)
    species_emb = species_onehot @ w_pok + b_pok

    ab = longs[..., 15]
    ability_emb = jnp.where((ab > 0)[..., None], ab_tbl[ab], mlp(species_emb, w_abu, b_abu))

    it = longs[..., 17]
    ie = longs[..., 19]
    item_concat = jnp.concatenate(
        [eye_shift(it, NUM_ITEMS), eye_shift(ie, NUM_ITEM_EFFECTS + 1)], -1)
    item_emb = jnp.where((it > 0)[..., None],
                         item_concat @ w_itm + b_itm, mlp(species_emb, w_itu, b_itu))

    mv = longs[..., 26:30]
    pp = jnp.minimum(longs[..., 30:34], 63)
    mv_oh = eye_shift(mv, NUM_MOVES)
    pp_bits = ((pp[..., None] >> jnp.arange(PP_BITS)) & 1).astype(f32)
    known_move = jnp.concatenate([mv_oh, pp_bits], -1) @ w_mov + b_mov
    moveset_lin = mv_oh.sum(-2) @ w_mst + b_mst
    unknown_move = mlp(moveset_lin + species_emb, w_umv, b_umv)[..., None, :]
    moveset_emb = jnp.where((mv > 0)[..., None], known_move, unknown_move).sum(-2)

    forme_oh = eye_shift(longs[..., 1], NUM_FORMES)
    hp_oh = eye_shift(jnp.clip(x[..., 5] * 10.0, 0, 10).astype(jnp.int32), 11)
    active_oh = eye_shift(longs[..., 12], 3)
    fainted_oh = eye_shift(longs[..., 11], 3)
    gender_oh = eye_shift(longs[..., 14], NUM_GENDERS + 1)
    level_oh = jax.nn.one_hot(jnp.maximum(x[..., 13].astype(jnp.int32), 1) - 1, 100, dtype=f32)
    status_oh = eye_shift(longs[..., 21], NUM_STATUS + 1)
    sleep_oh = eye_shift(longs[..., 22], 4)
    toxic_oh = eye_shift(jnp.floor(jnp.sqrt(longs[..., 23].astype(f32))).astype(jnp.int32), 4)
    tera_oh = jax.nn.one_hot((longs[..., 34] > 0).astype(jnp.int32), 2, dtype=f32)

    tt_table = jnp.eye(NUM_TYPES + 1, dtype=f32)[:, 1:]
    tt_table = tt_table.at[0].set(1.0 / NUM_TYPES)
    teratype_emb = tt_table[longs[..., 35]] @ w_tt + b_tt
    side_emb = side_tbl[jnp.clip(longs[..., 37] - 1, 0, 1)]

    onehots = jnp.concatenate([forme_oh, hp_oh, active_oh, fainted_oh, gender_oh,
                               level_oh, status_oh, sleep_oh, toxic_oh, tera_oh], -1)
    onehots_emb = onehots @ w_oh + b_oh

    pokemon_emb = (species_emb + ability_emb + item_emb + moveset_emb
                   + side_emb + teratype_emb + onehots_emb)
    mask = jnp.broadcast_to(jnp.arange(P) < 6, sp.shape)
    pokemon_emb = pokemon_emb * mask[..., None]
    return pokemon_emb, mask, known_move[:, :, 0, 0]


# ---------------------------------- main ---------------------------------------
if __name__ == "__main__":
    T, B, S = 2, 3, 2                         # G = 12 sides -> two 8-row grid steps
    key = jax.random.PRNGKey(0)
    kx, kp = jax.random.split(key)
    x = make_example_input(kx, (T, B, S))
    params = init_params(kp)

    pokemon_emb, mask, active_moves = pokemon_embedding_forward(x, params)
    jax.block_until_ready((pokemon_emb, mask, active_moves))

    ref_emb, ref_mask, ref_active = reference_forward(x, params)
    # bf16 weight quantization in the fused matmuls bounds the error well below this.
    np.testing.assert_allclose(np.asarray(pokemon_emb), np.asarray(ref_emb), atol=2e-2, rtol=2e-2)
    np.testing.assert_allclose(np.asarray(active_moves), np.asarray(ref_active), atol=2e-2, rtol=2e-2)
    assert bool(jnp.all(mask == ref_mask))

    print("KERNEL_OK")
</pallas_src>

<mosaic_0001>
module attributes {stable_mosaic.version = 11 : i64} {
  func.func @pokemon_embedding_kernel(%arg0: i32, %arg1: memref<8x512xf32, #tpu.memory_space<vmem>>, %arg2: memref<256x96xbf16, #tpu.memory_space<vmem>>, %arg3: memref<1x96xf32, #tpu.memory_space<vmem>>, %arg4: memref<64x96xf32, #tpu.memory_space<vmem>>, %arg5: memref<1x96xf32, #tpu.memory_space<vmem>>, %arg6: memref<8x192xf32, #tpu.memory_space<vmem>>) attributes {dimension_semantics = [#tpu.dimension_semantics<parallel>], iteration_bounds = array<i64: 2>, scalar_prefetch = 0 : i64, scratch_operands = 0 : i64, tpu.core_type = #tpu.core_type<tc>, window_params = [{transform_indices = @transform_0, window_bounds = array<i64: 8, 512>}, {pipeline_mode = #tpu.pipeline_mode<synchronous>, transform_indices = @transform_1, window_bounds = array<i64: 256, 96>}, {pipeline_mode = #tpu.pipeline_mode<synchronous>, transform_indices = @transform_2, window_bounds = array<i64: 1, 96>}, {pipeline_mode = #tpu.pipeline_mode<synchronous>, transform_indices = @transform_3, window_bounds = array<i64: 64, 96>}, {pipeline_mode = #tpu.pipeline_mode<synchronous>, transform_indices = @transform_4, window_bounds = array<i64: 1, 96>}, {transform_indices = @transform_5, window_bounds = array<i64: 8, 192>}]} {
    %c0 = arith.constant 0 : index
    %c0_0 = arith.constant 0 : index
    %0 = vector.load %arg1[%c0, %c0_0] : memref<8x512xf32, #tpu.memory_space<vmem>>, vector<8x512xf32>
    %1 = tpu.iota {dimensions = array<i32: 1>} : vector<8x128xi32>
    %c54_i32 = arith.constant 54 : i32
    %2 = vector.broadcast %c54_i32 : i32 to vector<8x128xi32>
    %3 = arith.subi %1, %2 : vector<8x128xi32>
    %c0_i32 = arith.constant 0 : i32
    %c5_i32 = arith.constant 5 : i32
    %4 = vector.broadcast %c0_i32 : i32 to vector<8x128xi32>
    %5 = arith.maxsi %4, %3 : vector<8x128xi32>
    %6 = vector.broadcast %c5_i32 : i32 to vector<8x128xi32>
    %7 = arith.minsi %6, %5 : vector<8x128xi32>
    %c54_i32_1 = arith.constant 54 : i32
    %8 = vector.broadcast %c54_i32_1 : i32 to vector<8x128xi32>
    %9 = arith.cmpi sge, %1, %8 : vector<8x128xi32>
    %c60_i32 = arith.constant 60 : i32
    %10 = vector.broadcast %c60_i32 : i32 to vector<8x128xi32>
    %11 = arith.cmpi slt, %1, %10 : vector<8x128xi32>
    %12 = arith.andi %9, %11 : vector<8x128xi1>
    %cst = arith.constant 0.000000e+00 : f32
    %13 = vector.broadcast %cst : f32 to vector<8x128xf32>
    %cst_2 = arith.constant 0.000000e+00 : f32
    %14 = vector.broadcast %cst_2 : f32 to vector<8x1xf32>
    %15 = vector.extract_strided_slice %0 {offsets = [0, 0], sizes = [8, 1], strides = [1, 1]} : vector<8x512xf32> to vector<8x1xf32>
    %cst_3 = arith.constant 1.000000e+00 : f32
    %16 = vector.broadcast %cst_3 : f32 to vector<8x1xf32>
    %17 = arith.addf %15, %16 : vector<8x1xf32>
    %18 = arith.fptosi %17 : vector<8x1xf32> to vector<8x1xi32>
    %c0_i32_4 = arith.constant 0 : i32
    %19 = vector.broadcast %c0_i32_4 : i32 to vector<8x1xi32>
    %20 = arith.cmpi sgt, %18, %19 : vector<8x1xi32>
    %c1_i32 = arith.constant 1 : i32
    %21 = vector.broadcast %c1_i32 : i32 to vector<8x1xi32>
    %22 = arith.subi %18, %21 : vector<8x1xi32>
    %c0_i32_5 = arith.constant 0 : i32
    %23 = vector.broadcast %c0_i32_5 : i32 to vector<8x1xi32>
    %24 = arith.addi %22, %23 : vector<8x1xi32>
    %c-1_i32 = arith.constant -1 : i32
    %25 = vector.broadcast %c-1_i32 : i32 to vector<8x1xi32>
    %26 = arith.select %20, %24, %25 : vector<8x1xi1>, vector<8x1xi32>
    %27 = vector.broadcast %26 : vector<8x1xi32> to vector<8x128xi32>
    %28 = arith.cmpi eq, %1, %27 : vector<8x128xi32>
    %cst_6 = arith.constant 1.000000e+00 : f32
    %cst_7 = arith.constant 0.000000e+00 : f32
    %29 = vector.broadcast %cst_6 : f32 to vector<8x128xf32>
    %30 = vector.broadcast %cst_7 : f32 to vector<8x128xf32>
    %31 = arith.select %28, %29, %30 : vector<8x128xi1>, vector<8x128xf32>
    %32 = arith.addf %13, %31 : vector<8x128xf32>
    %c0_i32_8 = arith.constant 0 : i32
    %33 = vector.broadcast %c0_i32_8 : i32 to vector<8x1xi32>
    %34 = arith.cmpi sgt, %18, %33 : vector<8x1xi32>
    %cst_9 = arith.constant 0.000000e+00 : f32
    %cst_10 = arith.constant 1.000000e+00 : f32
    %35 = vector.broadcast %cst_9 : f32 to vector<8x1xf32>
    %36 = vector.broadcast %cst_10 : f32 to vector<8x1xf32>
    %37 = arith.select %34, %35, %36 : vector<8x1xi1>, vector<8x1xf32>
    %38 = arith.addf %14, %37 : vector<8x1xf32>
    %39 = vector.extract_strided_slice %0 {offsets = [0, 38], sizes = [8, 1], strides = [1, 1]} : vector<8x512xf32> to vector<8x1xf32>
    %cst_11 = arith.constant 1.000000e+00 : f32
    %40 = vector.broadcast %cst_11 : f32 to vector<8x1xf32>
    %41 = arith.addf %39, %40 : vector<8x1xf32>
    %42 = arith.fptosi %41 : vector<8x1xf32> to vector<8x1xi32>
    %c0_i32_12 = arith.constant 0 : i32
    %43 = vector.broadcast %c0_i32_12 : i32 to vector<8x1xi32>
    %44 = arith.cmpi sgt, %42, %43 : vector<8x1xi32>
    %c1_i32_13 = arith.constant 1 : i32
    %45 = vector.broadcast %c1_i32_13 : i32 to vector<8x1xi32>
    %46 = arith.subi %42, %45 : vector<8x1xi32>
    %c0_i32_14 = arith.constant 0 : i32
    %47 = vector.broadcast %c0_i32_14 : i32 to vector<8x1xi32>
    %48 = arith.addi %46, %47 : vector<8x1xi32>
    %c-1_i32_15 = arith.constant -1 : i32
    %49 = vector.broadcast %c-1_i32_15 : i32 to vector<8x1xi32>
    %50 = arith.select %44, %48, %49 : vector<8x1xi1>, vector<8x1xi32>
    %51 = vector.broadcast %50 : vector<8x1xi32> to vector<8x128xi32>
    %52 = arith.cmpi eq, %1, %51 : vector<8x128xi32>
    %cst_16 = arith.constant 1.000000e+00 : f32
    %cst_17 = arith.constant 0.000000e+00 : f32
    %53 = vector.broadcast %cst_16 : f32 to vector<8x128xf32>
    %54 = vector.broadcast %cst_17 : f32 to vector<8x128xf32>
    %55 = arith.select %52, %53, %54 : vector<8x128xi1>, vector<8x128xf32>
    %56 = arith.addf %32, %55 : vector<8x128xf32>
    %c0_i32_18 = arith.constant 0 : i32
    %57 = vector.broadcast %c0_i32_18 : i32 to vector<8x1xi32>
    %58 = arith.cmpi sgt, %42, %57 : vector<8x1xi32>
    %cst_19 = arith.constant 0.000000e+00 : f32
    %cst_20 = arith.constant 1.000000e+00 : f32
    %59 = vector.broadcast %cst_19 : f32 to vector<8x1xf32>
    %60 = vector.broadcast %cst_20 : f32 to vector<8x1xf32>
    %61 = arith.select %58, %59, %60 : vector<8x1xi1>, vector<8x1xf32>
    %62 = arith.addf %38, %61 : vector<8x1xf32>
    %63 = vector.extract_strided_slice %0 {offsets = [0, 76], sizes = [8, 1], strides = [1, 1]} : vector<8x512xf32> to vector<8x1xf32>
    %cst_21 = arith.constant 1.000000e+00 : f32
    %64 = vector.broadcast %cst_21 : f32 to vector<8x1xf32>
    %65 = arith.addf %63, %64 : vector<8x1xf32>
    %66 = arith.fptosi %65 : vector<8x1xf32> to vector<8x1xi32>
    %c0_i32_22 = arith.constant 0 : i32
    %67 = vector.broadcast %c0_i32_22 : i32 to vector<8x1xi32>
    %68 = arith.cmpi sgt, %66, %67 : vector<8x1xi32>
    %c1_i32_23 = arith.constant 1 : i32
    %69 = vector.broadcast %c1_i32_23 : i32 to vector<8x1xi32>
    %70 = arith.subi %66, %69 : vector<8x1xi32>
    %c0_i32_24 = arith.constant 0 : i32
    %71 = vector.broadcast %c0_i32_24 : i32 to vector<8x1xi32>
    %72 = arith.addi %70, %71 : vector<8x1xi32>
    %c-1_i32_25 = arith.constant -1 : i32
    %73 = vector.broadcast %c-1_i32_25 : i32 to vector<8x1xi32>
    %74 = arith.select %68, %72, %73 : vector<8x1xi1>, vector<8x1xi32>
    %75 = vector.broadcast %74 : vector<8x1xi32> to vector<8x128xi32>
    %76 = arith.cmpi eq, %1, %75 : vector<8x128xi32>
    %cst_26 = arith.constant 1.000000e+00 : f32
    %cst_27 = arith.constant 0.000000e+00 : f32
    %77 = vector.broadcast %cst_26 : f32 to vector<8x128xf32>
    %78 = vector.broadcast %cst_27 : f32 to vector<8x128xf32>
    %79 = arith.select %76, %77, %78 : vector<8x128xi1>, vector<8x128xf32>
    %80 = arith.addf %56, %79 : vector<8x128xf32>
    %c0_i32_28 = arith.constant 0 : i32
    %81 = vector.broadcast %c0_i32_28 : i32 to vector<8x1xi32>
    %82 = arith.cmpi sgt, %66, %81 : vector<8x1xi32>
    %cst_29 = arith.constant 0.000000e+00 : f32
    %cst_30 = arith.constant 1.000000e+00 : f32
    %83 = vector.broadcast %cst_29 : f32 to vector<8x1xf32>
    %84 = vector.broadcast %cst_30 : f32 to vector<8x1xf32>
    %85 = arith.select %82, %83, %84 : vector<8x1xi1>, vector<8x1xf32>
    %86 = arith.addf %62, %85 : vector<8x1xf32>
    %87 = vector.extract_strided_slice %0 {offsets = [0, 114], sizes = [8, 1], strides = [1, 1]} : vector<8x512xf32> to vector<8x1xf32>
    %cst_31 = arith.constant 1.000000e+00 : f32
    %88 = vector.broadcast %cst_31 : f32 to vector<8x1xf32>
    %89 = arith.addf %87, %88 : vector<8x1xf32>
    %90 = arith.fptosi %89 : vector<8x1xf32> to vector<8x1xi32>
    %c0_i32_32 = arith.constant 0 : i32
    %91 = vector.broadcast %c0_i32_32 : i32 to vector<8x1xi32>
    %92 = arith.cmpi sgt, %90, %91 : vector<8x1xi32>
    %c1_i32_33 = arith.constant 1 : i32
    %93 = vector.broadcast %c1_i32_33 : i32 to vector<8x1xi32>
    %94 = arith.subi %90, %93 : vector<8x1xi32>
    %c0_i32_34 = arith.constant 0 : i32
    %95 = vector.broadcast %c0_i32_34 : i32 to vector<8x1xi32>
    %96 = arith.addi %94, %95 : vector<8x1xi32>
    %c-1_i32_35 = arith.constant -1 : i32
    %97 = vector.broadcast %c-1_i32_35 : i32 to vector<8x1xi32>
    %98 = arith.select %92, %96, %97 : vector<8x1xi1>, vector<8x1xi32>
    %99 = vector.broadcast %98 : vector<8x1xi32> to vector<8x128xi32>
    %100 = arith.cmpi eq, %1, %99 : vector<8x128xi32>
    %cst_36 = arith.constant 1.000000e+00 : f32
    %cst_37 = arith.constant 0.000000e+00 : f32
    %101 = vector.broadcast %cst_36 : f32 to vector<8x128xf32>
    %102 = vector.broadcast %cst_37 : f32 to vector<8x128xf32>
    %103 = arith.select %100, %101, %102 : vector<8x128xi1>, vector<8x128xf32>
    %104 = arith.addf %80, %103 : vector<8x128xf32>
    %c0_i32_38 = arith.constant 0 : i32
    %105 = vector.broadcast %c0_i32_38 : i32 to vector<8x1xi32>
    %106 = arith.cmpi sgt, %90, %105 : vector<8x1xi32>
    %cst_39 = arith.constant 0.000000e+00 : f32
    %cst_40 = arith.constant 1.000000e+00 : f32
    %107 = vector.broadcast %cst_39 : f32 to vector<8x1xf32>
    %108 = vector.broadcast %cst_40 : f32 to vector<8x1xf32>
    %109 = arith.select %106, %107, %108 : vector<8x1xi1>, vector<8x1xf32>
    %110 = arith.addf %86, %109 : vector<8x1xf32>
    %111 = vector.extract_strided_slice %0 {offsets = [0, 152], sizes = [8, 1], strides = [1, 1]} : vector<8x512xf32> to vector<8x1xf32>
    %cst_41 = arith.constant 1.000000e+00 : f32
    %112 = vector.broadcast %cst_41 : f32 to vector<8x1xf32>
    %113 = arith.addf %111, %112 : vector<8x1xf32>
    %114 = arith.fptosi %113 : vector<8x1xf32> to vector<8x1xi32>
    %c0_i32_42 = arith.constant 0 : i32
    %115 = vector.broadcast %c0_i32_42 : i32 to vector<8x1xi32>
    %116 = arith.cmpi sgt, %114, %115 : vector<8x1xi32>
    %c1_i32_43 = arith.constant 1 : i32
    %117 = vector.broadcast %c1_i32_43 : i32 to vector<8x1xi32>
    %118 = arith.subi %114, %117 : vector<8x1xi32>
    %c0_i32_44 = arith.constant 0 : i32
    %119 = vector.broadcast %c0_i32_44 : i32 to vector<8x1xi32>
    %120 = arith.addi %118, %119 : vector<8x1xi32>
    %c-1_i32_45 = arith.constant -1 : i32
    %121 = vector.broadcast %c-1_i32_45 : i32 to vector<8x1xi32>
    %122 = arith.select %116, %120, %121 : vector<8x1xi1>, vector<8x1xi32>
    %123 = vector.broadcast %122 : vector<8x1xi32> to vector<8x128xi32>
    %124 = arith.cmpi eq, %1, %123 : vector<8x128xi32>
    %cst_46 = arith.constant 1.000000e+00 : f32
    %cst_47 = arith.constant 0.000000e+00 : f32
    %125 = vector.broadcast %cst_46 : f32 to vector<8x128xf32>
    %126 = vector.broadcast %cst_47 : f32 to vector<8x128xf32>
    %127 = arith.select %124, %125, %126 : vector<8x128xi1>, vector<8x128xf32>
    %128 = arith.addf %104, %127 : vector<8x128xf32>
    %c0_i32_48 = arith.constant 0 : i32
    %129 = vector.broadcast %c0_i32_48 : i32 to vector<8x1xi32>
    %130 = arith.cmpi sgt, %114, %129 : vector<8x1xi32>
    %cst_49 = arith.constant 0.000000e+00 : f32
    %cst_50 = arith.constant 1.000000e+00 : f32
    %131 = vector.broadcast %cst_49 : f32 to vector<8x1xf32>
    %132 = vector.broadcast %cst_50 : f32 to vector<8x1xf32>
    %133 = arith.select %130, %131, %132 : vector<8x1xi1>, vector<8x1xf32>
    %134 = arith.addf %110, %133 : vector<8x1xf32>
    %135 = vector.extract_strided_slice %0 {offsets = [0, 190], sizes = [8, 1], strides = [1, 1]} : vector<8x512xf32> to vector<8x1xf32>
    %cst_51 = arith.constant 1.000000e+00 : f32
    %136 = vector.broadcast %cst_51 : f32 to vector<8x1xf32>
    %137 = arith.addf %135, %136 : vector<8x1xf32>
    %138 = arith.fptosi %137 : vector<8x1xf32> to vector<8x1xi32>
    %c0_i32_52 = arith.constant 0 : i32
    %139 = vector.broadcast %c0_i32_52 : i32 to vector<8x1xi32>
    %140 = arith.cmpi sgt, %138, %139 : vector<8x1xi32>
    %c1_i32_53 = arith.constant 1 : i32
    %141 = vector.broadcast %c1_i32_53 : i32 to vector<8x1xi32>
    %142 = arith.subi %138, %141 : vector<8x1xi32>
    %c0_i32_54 = arith.constant 0 : i32
    %143 = vector.broadcast %c0_i32_54 : i32 to vector<8x1xi32>
    %144 = arith.addi %142, %143 : vector<8x1xi32>
    %c-1_i32_55 = arith.constant -1 : i32
    %145 = vector.broadcast %c-1_i32_55 : i32 to vector<8x1xi32>
    %146 = arith.select %140, %144, %145 : vector<8x1xi1>, vector<8x1xi32>
    %147 = vector.broadcast %146 : vector<8x1xi32> to vector<8x128xi32>
    %148 = arith.cmpi eq, %1, %147 : vector<8x128xi32>
    %cst_56 = arith.constant 1.000000e+00 : f32
    %cst_57 = arith.constant 0.000000e+00 : f32
    %149 = vector.broadcast %cst_56 : f32 to vector<8x128xf32>
    %150 = vector.broadcast %cst_57 : f32 to vector<8x128xf32>
    %151 = arith.select %148, %149, %150 : vector<8x128xi1>, vector<8x128xf32>
    %152 = arith.addf %128, %151 : vector<8x128xf32>
    %c0_i32_58 = arith.constant 0 : i32
    %153 = vector.broadcast %c0_i32_58 : i32 to vector<8x1xi32>
    %154 = arith.cmpi sgt, %138, %153 : vector<8x1xi32>
    %cst_59 = arith.constant 0.000000e+00 : f32
    %cst_60 = arith.constant 1.000000e+00 : f32
    %155 = vector.broadcast %cst_59 : f32 to vector<8x1xf32>
    %156 = vector.broadcast %cst_60 : f32 to vector<8x1xf32>
    %157 = arith.select %154, %155, %156 : vector<8x1xi1>, vector<8x1xf32>
    %158 = arith.addf %134, %157 : vector<8x1xf32>
    %159 = vector.extract_strided_slice %0 {offsets = [0, 228], sizes = [8, 1], strides = [1, 1]} : vector<8x512xf32> to vector<8x1xf32>
    %cst_61 = arith.constant 1.000000e+00 : f32
    %160 = vector.broadcast %cst_61 : f32 to vector<8x1xf32>
    %161 = arith.addf %159, %160 : vector<8x1xf32>
    %162 = arith.fptosi %161 : vector<8x1xf32> to vector<8x1xi32>
    %c0_i32_62 = arith.constant 0 : i32
    %163 = vector.broadcast %c0_i32_62 : i32 to vector<8x1xi32>
    %164 = arith.cmpi sgt, %162, %163 : vector<8x1xi32>
    %c1_i32_63 = arith.constant 1 : i32
    %165 = vector.broadcast %c1_i32_63 : i32 to vector<8x1xi32>
    %166 = arith.subi %162, %165 : vector<8x1xi32>
    %c0_i32_64 = arith.constant 0 : i32
    %167 = vector.broadcast %c0_i32_64 : i32 to vector<8x1xi32>
    %168 = arith.addi %166, %167 : vector<8x1xi32>
    %c-1_i32_65 = arith.constant -1 : i32
    %169 = vector.broadcast %c-1_i32_65 : i32 to vector<8x1xi32>
    %170 = arith.select %164, %168, %169 : vector<8x1xi1>, vector<8x1xi32>
    %171 = vector.broadcast %170 : vector<8x1xi32> to vector<8x128xi32>
    %172 = arith.cmpi eq, %1, %171 : vector<8x128xi32>
    %cst_66 = arith.constant 1.000000e+00 : f32
    %cst_67 = arith.constant 0.000000e+00 : f32
    %173 = vector.broadcast %cst_66 : f32 to vector<8x128xf32>
    %174 = vector.broadcast %cst_67 : f32 to vector<8x128xf32>
    %175 = arith.select %172, %173, %174 : vector<8x128xi1>, vector<8x128xf32>
    %176 = arith.addf %152, %175 : vector<8x128xf32>
    %177 = vector.extract_strided_slice %0 {offsets = [0, 266], sizes = [8, 1], strides = [1, 1]} : vector<8x512xf32> to vector<8x1xf32>
    %cst_68 = arith.constant 1.000000e+00 : f32
    %178 = vector.broadcast %cst_68 : f32 to vector<8x1xf32>
    %179 = arith.addf %177, %178 : vector<8x1xf32>
    %180 = arith.fptosi %179 : vector<8x1xf32> to vector<8x1xi32>
    %c0_i32_69 = arith.constant 0 : i32
    %181 = vector.broadcast %c0_i32_69 : i32 to vector<8x1xi32>
    %182 = arith.cmpi sgt, %180, %181 : vector<8x1xi32>
    %c1_i32_70 = arith.constant 1 : i32
    %183 = vector.broadcast %c1_i32_70 : i32 to vector<8x1xi32>
    %184 = arith.subi %180, %183 : vector<8x1xi32>
    %c0_i32_71 = arith.constant 0 : i32
    %185 = vector.broadcast %c0_i32_71 : i32 to vector<8x1xi32>
    %186 = arith.addi %184, %185 : vector<8x1xi32>
    %c-1_i32_72 = arith.constant -1 : i32
    %187 = vector.broadcast %c-1_i32_72 : i32 to vector<8x1xi32>
    %188 = arith.select %182, %186, %187 : vector<8x1xi1>, vector<8x1xi32>
    %189 = vector.broadcast %188 : vector<8x1xi32> to vector<8x128xi32>
    %190 = arith.cmpi eq, %1, %189 : vector<8x128xi32>
    %cst_73 = arith.constant 1.000000e+00 : f32
    %cst_74 = arith.constant 0.000000e+00 : f32
    %191 = vector.broadcast %cst_73 : f32 to vector<8x128xf32>
    %192 = vector.broadcast %cst_74 : f32 to vector<8x128xf32>
    %193 = arith.select %190, %191, %192 : vector<8x128xi1>, vector<8x128xf32>
    %194 = arith.addf %176, %193 : vector<8x128xf32>
    %195 = vector.extract_strided_slice %0 {offsets = [0, 304], sizes = [8, 1], strides = [1, 1]} : vector<8x512xf32> to vector<8x1xf32>
    %cst_75 = arith.constant 1.000000e+00 : f32
    %196 = vector.broadcast %cst_75 : f32 to vector<8x1xf32>
    %197 = arith.addf %195, %196 : vector<8x1xf32>
    %198 = arith.fptosi %197 : vector<8x1xf32> to vector<8x1xi32>
    %c0_i32_76 = arith.constant 0 : i32
    %199 = vector.broadcast %c0_i32_76 : i32 to vector<8x1xi32>
    %200 = arith.cmpi sgt, %198, %199 : vector<8x1xi32>
    %c1_i32_77 = arith.constant 1 : i32
    %201 = vector.broadcast %c1_i32_77 : i32 to vector<8x1xi32>
    %202 = arith.subi %198, %201 : vector<8x1xi32>
    %c0_i32_78 = arith.constant 0 : i32
    %203 = vector.broadcast %c0_i32_78 : i32 to vector<8x1xi32>
    %204 = arith.addi %202, %203 : vector<8x1xi32>
    %c-1_i32_79 = arith.constant -1 : i32
    %205 = vector.broadcast %c-1_i32_79 : i32 to vector<8x1xi32>
    %206 = arith.select %200, %204, %205 : vector<8x1xi1>, vector<8x1xi32>
    %207 = vector.broadcast %206 : vector<8x1xi32> to vector<8x128xi32>
    %208 = arith.cmpi eq, %1, %207 : vector<8x128xi32>
    %cst_80 = arith.constant 1.000000e+00 : f32
    %cst_81 = arith.constant 0.000000e+00 : f32
    %209 = vector.broadcast %cst_80 : f32 to vector<8x128xf32>
    %210 = vector.broadcast %cst_81 : f32 to vector<8x128xf32>
    %211 = arith.select %208, %209, %210 : vector<8x128xi1>, vector<8x128xf32>
    %212 = arith.addf %194, %211 : vector<8x128xf32>
    %213 = vector.extract_strided_slice %0 {offsets = [0, 342], sizes = [8, 1], strides = [1, 1]} : vector<8x512xf32> to vector<8x1xf32>
    %cst_82 = arith.constant 1.000000e+00 : f32
    %214 = vector.broadcast %cst_82 : f32 to vector<8x1xf32>
    %215 = arith.addf %213, %214 : vector<8x1xf32>
    %216 = arith.fptosi %215 : vector<8x1xf32> to vector<8x1xi32>
    %c0_i32_83 = arith.constant 0 : i32
    %217 = vector.broadcast %c0_i32_83 : i32 to vector<8x1xi32>
    %218 = arith.cmpi sgt, %216, %217 : vector<8x1xi32>
    %c1_i32_84 = arith.constant 1 : i32
    %219 = vector.broadcast %c1_i32_84 : i32 to vector<8x1xi32>
    %220 = arith.subi %216, %219 : vector<8x1xi32>
    %c0_i32_85 = arith.constant 0 : i32
    %221 = vector.broadcast %c0_i32_85 : i32 to vector<8x1xi32>
    %222 = arith.addi %220, %221 : vector<8x1xi32>
    %c-1_i32_86 = arith.constant -1 : i32
    %223 = vector.broadcast %c-1_i32_86 : i32 to vector<8x1xi32>
    %224 = arith.select %218, %222, %223 : vector<8x1xi1>, vector<8x1xi32>
    %225 = vector.broadcast %224 : vector<8x1xi32> to vector<8x128xi32>
    %226 = arith.cmpi eq, %1, %225 : vector<8x128xi32>
    %cst_87 = arith.constant 1.000000e+00 : f32
    %cst_88 = arith.constant 0.000000e+00 : f32
    %227 = vector.broadcast %cst_87 : f32 to vector<8x128xf32>
    %228 = vector.broadcast %cst_88 : f32 to vector<8x128xf32>
    %229 = arith.select %226, %227, %228 : vector<8x128xi1>, vector<8x128xf32>
    %230 = arith.addf %212, %229 : vector<8x128xf32>
    %231 = vector.extract_strided_slice %0 {offsets = [0, 380], sizes = [8, 1], strides = [1, 1]} : vector<8x512xf32> to vector<8x1xf32>
    %cst_89 = arith.constant 1.000000e+00 : f32
    %232 = vector.broadcast %cst_89 : f32 to vector<8x1xf32>
    %233 = arith.addf %231, %232 : vector<8x1xf32>
    %234 = arith.fptosi %233 : vector<8x1xf32> to vector<8x1xi32>
    %c0_i32_90 = arith.constant 0 : i32
    %235 = vector.broadcast %c0_i32_90 : i32 to vector<8x1xi32>
    %236 = arith.cmpi sgt, %234, %235 : vector<8x1xi32>
    %c1_i32_91 = arith.constant 1 : i32
    %237 = vector.broadcast %c1_i32_91 : i32 to vector<8x1xi32>
    %238 = arith.subi %234, %237 : vector<8x1xi32>
    %c0_i32_92 = arith.constant 0 : i32
    %239 = vector.broadcast %c0_i32_92 : i32 to vector<8x1xi32>
    %240 = arith.addi %238, %239 : vector<8x1xi32>
    %c-1_i32_93 = arith.constant -1 : i32
    %241 = vector.broadcast %c-1_i32_93 : i32 to vector<8x1xi32>
    %242 = arith.select %236, %240, %241 : vector<8x1xi1>, vector<8x1xi32>
    %243 = vector.broadcast %242 : vector<8x1xi32> to vector<8x128xi32>
    %244 = arith.cmpi eq, %1, %243 : vector<8x128xi32>
    %cst_94 = arith.constant 1.000000e+00 : f32
    %cst_95 = arith.constant 0.000000e+00 : f32
    %245 = vector.broadcast %cst_94 : f32 to vector<8x128xf32>
    %246 = vector.broadcast %cst_95 : f32 to vector<8x128xf32>
    %247 = arith.select %244, %245, %246 : vector<8x128xi1>, vector<8x128xf32>
    %248 = arith.addf %230, %247 : vector<8x128xf32>
    %249 = vector.extract_strided_slice %0 {offsets = [0, 418], sizes = [8, 1], strides = [1, 1]} : vector<8x512xf32> to vector<8x1xf32>
    %cst_96 = arith.constant 1.000000e+00 : f32
    %250 = vector.broadcast %cst_96 : f32 to vector<8x1xf32>
    %251 = arith.addf %249, %250 : vector<8x1xf32>
    %252 = arith.fptosi %251 : vector<8x1xf32> to vector<8x1xi32>
    %c0_i32_97 = arith.constant 0 : i32
    %253 = vector.broadcast %c0_i32_97 : i32 to vector<8x1xi32>
    %254 = arith.cmpi sgt, %252, %253 : vector<8x1xi32>
    %c1_i32_98 = arith.constant 1 : i32
    %255 = vector.broadcast %c1_i32_98 : i32 to vector<8x1xi32>
    %256 = arith.subi %252, %255 : vector<8x1xi32>
    %c0_i32_99 = arith.constant 0 : i32
    %257 = vector.broadcast %c0_i32_99 : i32 to vector<8x1xi32>
    %258 = arith.addi %256, %257 : vector<8x1xi32>
    %c-1_i32_100 = arith.constant -1 : i32
    %259 = vector.broadcast %c-1_i32_100 : i32 to vector<8x1xi32>
    %260 = arith.select %254, %258, %259 : vector<8x1xi1>, vector<8x1xi32>
    %261 = vector.broadcast %260 : vector<8x1xi32> to vector<8x128xi32>
    %262 = arith.cmpi eq, %1, %261 : vector<8x128xi32>
    %cst_101 = arith.constant 1.000000e+00 : f32
    %cst_102 = arith.constant 0.000000e+00 : f32
    %263 = vector.broadcast %cst_101 : f32 to vector<8x128xf32>
    %264 = vector.broadcast %cst_102 : f32 to vector<8x128xf32>
    %265 = arith.select %262, %263, %264 : vector<8x128xi1>, vector<8x128xf32>
    %266 = arith.addf %248, %265 : vector<8x128xf32>
    %c31_i32 = arith.constant 31 : i32
    %267 = vector.broadcast %c31_i32 : i32 to vector<8x128xi32>
    %268 = arith.cmpi slt, %1, %267 : vector<8x128xi32>
    %cst_103 = arith.constant 1.000000e+00 : f32
    %269 = vector.broadcast %cst_103 : f32 to vector<8x128xf32>
    %270 = arith.subf %269, %266 : vector<8x128xf32>
    %cst_104 = arith.constant 1.000000e+00 : f32
    %271 = vector.broadcast %cst_104 : f32 to vector<8x1xf32>
    %272 = arith.maximumf %158, %271 : vector<8x1xf32>
    %273 = vector.broadcast %272 : vector<8x1xf32> to vector<8x128xf32>
    %274 = arith.divf %270, %273 : vector<8x128xf32>
    %cst_105 = arith.constant 0.000000e+00 : f32
    %275 = vector.broadcast %cst_105 : f32 to vector<8x128xf32>
    %276 = arith.select %268, %274, %275 : vector<8x128xi1>, vector<8x128xf32>
    %c0_106 = arith.constant 0 : index
    %c0_107 = arith.constant 0 : index
    %277 = vector.load %arg2[%c0_106, %c0_107] : memref<256x96xbf16, #tpu.memory_space<vmem>>, vector<256x96xbf16>
    %c0_108 = arith.constant 0 : index
    %c0_109 = arith.constant 0 : index
    %278 = vector.load %arg3[%c0_108, %c0_109] : memref<1x96xf32, #tpu.memory_space<vmem>>, vector<1x96xf32>
    %c0_110 = arith.constant 0 : index
    %c0_111 = arith.constant 0 : index
    %279 = vector.load %arg4[%c0_110, %c0_111] : memref<64x96xf32, #tpu.memory_space<vmem>>, vector<64x96xf32>
    %c0_112 = arith.constant 0 : index
    %c0_113 = arith.constant 0 : index
    %280 = vector.load %arg5[%c0_112, %c0_113] : memref<1x96xf32, #tpu.memory_space<vmem>>, vector<1x96xf32>
    %281 = vector.broadcast %26 : vector<8x1xi32> to vector<8x128xi32>
    %282 = arith.cmpi eq, %1, %281 : vector<8x128xi32>
    %cst_114 = arith.constant 1.000000e+00 : f32
    %cst_115 = arith.constant 0.000000e+00 : f32
    %283 = vector.broadcast %cst_114 : f32 to vector<8x128xf32>
    %284 = vector.broadcast %cst_115 : f32 to vector<8x128xf32>
    %285 = arith.select %282, %283, %284 : vector<8x128xi1>, vector<8x128xf32>
    %286 = vector.broadcast %37 : vector<8x1xf32> to vector<8x128xf32>
    %287 = arith.mulf %286, %276 : vector<8x128xf32>
    %288 = arith.addf %285, %287 : vector<8x128xf32>
    %cst_116 = arith.constant 0.000000e+00 : f32
    %289 = vector.broadcast %cst_116 : f32 to vector<8x1xf32>
    %290 = vector.extract_strided_slice %0 {offsets = [0, 26], sizes = [8, 1], strides = [1, 1]} : vector<8x512xf32> to vector<8x1xf32>
    %cst_117 = arith.constant 1.000000e+00 : f32
    %291 = vector.broadcast %cst_117 : f32 to vector<8x1xf32>
    %292 = arith.addf %290, %291 : vector<8x1xf32>
    %293 = arith.fptosi %292 : vector<8x1xf32> to vector<8x1xi32>
    %c0_i32_118 = arith.constant 0 : i32
    %294 = vector.broadcast %c0_i32_118 : i32 to vector<8x1xi32>
    %295 = arith.cmpi sgt, %293, %294 : vector<8x1xi32>
    %c1_i32_119 = arith.constant 1 : i32
    %296 = vector.broadcast %c1_i32_119 : i32 to vector<8x1xi32>
    %297 = arith.subi %293, %296 : vector<8x1xi32>
    %c31_i32_120 = arith.constant 31 : i32
    %298 = vector.broadcast %c31_i32_120 : i32 to vector<8x1xi32>
    %299 = arith.addi %297, %298 : vector<8x1xi32>
    %c-1_i32_121 = arith.constant -1 : i32
    %300 = vector.broadcast %c-1_i32_121 : i32 to vector<8x1xi32>
    %301 = arith.select %295, %299, %300 : vector<8x1xi1>, vector<8x1xi32>
    %302 = vector.broadcast %301 : vector<8x1xi32> to vector<8x128xi32>
    %303 = arith.cmpi eq, %1, %302 : vector<8x128xi32>
    %cst_122 = arith.constant 1.000000e+00 : f32
    %cst_123 = arith.constant 0.000000e+00 : f32
    %304 = vector.broadcast %cst_122 : f32 to vector<8x128xf32>
    %305 = vector.broadcast %cst_123 : f32 to vector<8x128xf32>
    %306 = arith.select %303, %304, %305 : vector<8x128xi1>, vector<8x128xf32>
    %307 = arith.addf %288, %306 : vector<8x128xf32>
    %308 = vector.extract_strided_slice %0 {offsets = [0, 30], sizes = [8, 1], strides = [1, 1]} : vector<8x512xf32> to vector<8x1xf32>
    %cst_124 = arith.constant 1.000000e+00 : f32
    %309 = vector.broadcast %cst_124 : f32 to vector<8x1xf32>
    %310 = arith.addf %308, %309 : vector<8x1xf32>
    %311 = arith.fptosi %310 : vector<8x1xf32> to vector<8x1xi32>
    %c63_i32 = arith.constant 63 : i32
    %312 = vector.broadcast %c63_i32 : i32 to vector<8x1xi32>
    %313 = arith.minsi %311, %312 : vector<8x1xi32>
    %314 = vector.broadcast %313 : vector<8x1xi32> to vector<8x128xi32>
    %315 = arith.shrsi %314, %7 : vector<8x128xi32>
    %c1_i32_125 = arith.constant 1 : i32
    %316 = vector.broadcast %c1_i32_125 : i32 to vector<8x128xi32>
    %317 = arith.andi %315, %316 : vector<8x128xi32>
    %318 = arith.sitofp %317 : vector<8x128xi32> to vector<8x128xf32>
    %319 = vector.broadcast %295 : vector<8x1xi1> to vector<8x128xi1>
    %320 = arith.andi %12, %319 : vector<8x128xi1>
    %cst_126 = arith.constant 0.000000e+00 : f32
    %321 = vector.broadcast %cst_126 : f32 to vector<8x128xf32>
    %322 = arith.select %320, %318, %321 : vector<8x128xi1>, vector<8x128xf32>
    %323 = arith.addf %307, %322 : vector<8x128xf32>
    %cst_127 = arith.constant 1.000000e+00 : f32
    %cst_128 = arith.constant 0.000000e+00 : f32
    %324 = vector.broadcast %cst_127 : f32 to vector<8x1xf32>
    %325 = vector.broadcast %cst_128 : f32 to vector<8x1xf32>
    %326 = arith.select %295, %324, %325 : vector<8x1xi1>, vector<8x1xf32>
    %327 = arith.addf %289, %326 : vector<8x1xf32>
    %328 = vector.extract_strided_slice %0 {offsets = [0, 27], sizes = [8, 1], strides = [1, 1]} : vector<8x512xf32> to vector<8x1xf32>
    %cst_129 = arith.constant 1.000000e+00 : f32
    %329 = vector.broadcast %cst_129 : f32 to vector<8x1xf32>
    %330 = arith.addf %328, %329 : vector<8x1xf32>
    %331 = arith.fptosi %330 : vector<8x1xf32> to vector<8x1xi32>
    %c0_i32_130 = arith.constant 0 : i32
    %332 = vector.broadcast %c0_i32_130 : i32 to vector<8x1xi32>
    %333 = arith.cmpi sgt, %331, %332 : vector<8x1xi32>
    %c1_i32_131 = arith.constant 1 : i32
    %334 = vector.broadcast %c1_i32_131 : i32 to vector<8x1xi32>
    %335 = arith.subi %331, %334 : vector<8x1xi32>
    %c31_i32_132 = arith.constant 31 : i32
    %336 = vector.broadcast %c31_i32_132 : i32 to vector<8x1xi32>
    %337 = arith.addi %335, %336 : vector<8x1xi32>
    %c-1_i32_133 = arith.constant -1 : i32
    %338 = vector.broadcast %c-1_i32_133 : i32 to vector<8x1xi32>
    %339 = arith.select %333, %337, %338 : vector<8x1xi1>, vector<8x1xi32>
    %340 = vector.broadcast %339 : vector<8x1xi32> to vector<8x128xi32>
    %341 = arith.cmpi eq, %1, %340 : vector<8x128xi32>
    %cst_134 = arith.constant 1.000000e+00 : f32
    %cst_135 = arith.constant 0.000000e+00 : f32
    %342 = vector.broadcast %cst_134 : f32 to vector<8x128xf32>
    %343 = vector.broadcast %cst_135 : f32 to vector<8x128xf32>
    %344 = arith.select %341, %342, %343 : vector<8x128xi1>, vector<8x128xf32>
    %345 = arith.addf %323, %344 : vector<8x128xf32>
    %346 = vector.extract_strided_slice %0 {offsets = [0, 31], sizes = [8, 1], strides = [1, 1]} : vector<8x512xf32> to vector<8x1xf32>
    %cst_136 = arith.constant 1.000000e+00 : f32
    %347 = vector.broadcast %cst_136 : f32 to vector<8x1xf32>
    %348 = arith.addf %346, %347 : vector<8x1xf32>
    %349 = arith.fptosi %348 : vector<8x1xf32> to vector<8x1xi32>
    %c63_i32_137 = arith.constant 63 : i32
    %350 = vector.broadcast %c63_i32_137 : i32 to vector<8x1xi32>
    %351 = arith.minsi %349, %350 : vector<8x1xi32>
    %352 = vector.broadcast %351 : vector<8x1xi32> to vector<8x128xi32>
    %353 = arith.shrsi %352, %7 : vector<8x128xi32>
    %c1_i32_138 = arith.constant 1 : i32
    %354 = vector.broadcast %c1_i32_138 : i32 to vector<8x128xi32>
    %355 = arith.andi %353, %354 : vector<8x128xi32>
    %356 = arith.sitofp %355 : vector<8x128xi32> to vector<8x128xf32>
    %357 = vector.broadcast %333 : vector<8x1xi1> to vector<8x128xi1>
    %358 = arith.andi %12, %357 : vector<8x128xi1>
    %cst_139 = arith.constant 0.000000e+00 : f32
    %359 = vector.broadcast %cst_139 : f32 to vector<8x128xf32>
    %360 = arith.select %358, %356, %359 : vector<8x128xi1>, vector<8x128xf32>
    %361 = arith.addf %345, %360 : vector<8x128xf32>
    %cst_140 = arith.constant 1.000000e+00 : f32
    %cst_141 = arith.constant 0.000000e+00 : f32
    %362 = vector.broadcast %cst_140 : f32 to vector<8x1xf32>
    %363 = vector.broadcast %cst_141 : f32 to vector<8x1xf32>
    %364 = arith.select %333, %362, %363 : vector<8x1xi1>, vector<8x1xf32>
    %365 = arith.addf %327, %364 : vector<8x1xf32>
    %366 = vector.extract_strided_slice %0 {offsets = [0, 28], sizes = [8, 1], strides = [1, 1]} : vector<8x512xf32> to vector<8x1xf32>
    %cst_142 = arith.constant 1.000000e+00 : f32
    %367 = vector.broadcast %cst_142 : f32 to vector<8x1xf32>
    %368 = arith.addf %366, %367 : vector<8x1xf32>
    %369 = arith.fptosi %368 : vector<8x1xf32> to vector<8x1xi32>
    %c0_i32_143 = arith.constant 0 : i32
    %370 = vector.broadcast %c0_i32_143 : i32 to vector<8x1xi32>
    %371 = arith.cmpi sgt, %369, %370 : vector<8x1xi32>
    %c1_i32_144 = arith.constant 1 : i32
    %372 = vector.broadcast %c1_i32_144 : i32 to vector<8x1xi32>
    %373 = arith.subi %369, %372 : vector<8x1xi32>
    %c31_i32_145 = arith.constant 31 : i32
    %374 = vector.broadcast %c31_i32_145 : i32 to vector<8x1xi32>
    %375 = arith.addi %373, %374 : vector<8x1xi32>
    %c-1_i32_146 = arith.constant -1 : i32
    %376 = vector.broadcast %c-1_i32_146 : i32 to vector<8x1xi32>
    %377 = arith.select %371, %375, %376 : vector<8x1xi1>, vector<8x1xi32>
    %378 = vector.broadcast %377 : vector<8x1xi32> to vector<8x128xi32>
    %379 = arith.cmpi eq, %1, %378 : vector<8x128xi32>
    %cst_147 = arith.constant 1.000000e+00 : f32
    %cst_148 = arith.constant 0.000000e+00 : f32
    %380 = vector.broadcast %cst_147 : f32 to vector<8x128xf32>
    %381 = vector.broadcast %cst_148 : f32 to vector<8x128xf32>
    %382 = arith.select %379, %380, %381 : vector<8x128xi1>, vector<8x128xf32>
    %383 = arith.addf %361, %382 : vector<8x128xf32>
    %384 = vector.extract_strided_slice %0 {offsets = [0, 32], sizes = [8, 1], strides = [1, 1]} : vector<8x512xf32> to vector<8x1xf32>
    %cst_149 = arith.constant 1.000000e+00 : f32
    %385 = vector.broadcast %cst_149 : f32 to vector<8x1xf32>
    %386 = arith.addf %384, %385 : vector<8x1xf32>
    %387 = arith.fptosi %386 : vector<8x1xf32> to vector<8x1xi32>
    %c63_i32_150 = arith.constant 63 : i32
    %388 = vector.broadcast %c63_i32_150 : i32 to vector<8x1xi32>
    %389 = arith.minsi %387, %388 : vector<8x1xi32>
    %390 = vector.broadcast %389 : vector<8x1xi32> to vector<8x128xi32>
    %391 = arith.shrsi %390, %7 : vector<8x128xi32>
    %c1_i32_151 = arith.constant 1 : i32
    %392 = vector.broadcast %c1_i32_151 : i32 to vector<8x128xi32>
    %393 = arith.andi %391, %392 : vector<8x128xi32>
    %394 = arith.sitofp %393 : vector<8x128xi32> to vector<8x128xf32>
    %395 = vector.broadcast %371 : vector<8x1xi1> to vector<8x128xi1>
    %396 = arith.andi %12, %395 : vector<8x128xi1>
    %cst_152 = arith.constant 0.000000e+00 : f32
    %397 = vector.broadcast %cst_152 : f32 to vector<8x128xf32>
    %398 = arith.select %396, %394, %397 : vector<8x128xi1>, vector<8x128xf32>
    %399 = arith.addf %383, %398 : vector<8x128xf32>
    %cst_153 = arith.constant 1.000000e+00 : f32
    %cst_154 = arith.constant 0.000000e+00 : f32
    %400 = vector.broadcast %cst_153 : f32 to vector<8x1xf32>
    %401 = vector.broadcast %cst_154 : f32 to vector<8x1xf32>
    %402 = arith.select %371, %400, %401 : vector<8x1xi1>, vector<8x1xf32>
    %403 = arith.addf %365, %402 : vector<8x1xf32>
    %404 = vector.extract_strided_slice %0 {offsets = [0, 29], sizes = [8, 1], strides = [1, 1]} : vector<8x512xf32> to vector<8x1xf32>
    %cst_155 = arith.constant 1.000000e+00 : f32
    %405 = vector.broadcast %cst_155 : f32 to vector<8x1xf32>
    %406 = arith.addf %404, %405 : vector<8x1xf32>
    %407 = arith.fptosi %406 : vector<8x1xf32> to vector<8x1xi32>
    %c0_i32_156 = arith.constant 0 : i32
    %408 = vector.broadcast %c0_i32_156 : i32 to vector<8x1xi32>
    %409 = arith.cmpi sgt, %407, %408 : vector<8x1xi32>
    %c1_i32_157 = arith.constant 1 : i32
    %410 = vector.broadcast %c1_i32_157 : i32 to vector<8x1xi32>
    %411 = arith.subi %407, %410 : vector<8x1xi32>
    %c31_i32_158 = arith.constant 31 : i32
    %412 = vector.broadcast %c31_i32_158 : i32 to vector<8x1xi32>
    %413 = arith.addi %411, %412 : vector<8x1xi32>
    %c-1_i32_159 = arith.constant -1 : i32
    %414 = vector.broadcast %c-1_i32_159 : i32 to vector<8x1xi32>
    %415 = arith.select %409, %413, %414 : vector<8x1xi1>, vector<8x1xi32>
    %416 = vector.broadcast %415 : vector<8x1xi32> to vector<8x128xi32>
    %417 = arith.cmpi eq, %1, %416 : vector<8x128xi32>
    %cst_160 = arith.constant 1.000000e+00 : f32
    %cst_161 = arith.constant 0.000000e+00 : f32
    %418 = vector.broadcast %cst_160 : f32 to vector<8x128xf32>
    %419 = vector.broadcast %cst_161 : f32 to vector<8x128xf32>
    %420 = arith.select %417, %418, %419 : vector<8x128xi1>, vector<8x128xf32>
    %421 = arith.addf %399, %420 : vector<8x128xf32>
    %422 = vector.extract_strided_slice %0 {offsets = [0, 33], sizes = [8, 1], strides = [1, 1]} : vector<8x512xf32> to vector<8x1xf32>
    %cst_162 = arith.constant 1.000000e+00 : f32
    %423 = vector.broadcast %cst_162 : f32 to vector<8x1xf32>
    %424 = arith.addf %422, %423 : vector<8x1xf32>
    %425 = arith.fptosi %424 : vector<8x1xf32> to vector<8x1xi32>
    %c63_i32_163 = arith.constant 63 : i32
    %426 = vector.broadcast %c63_i32_163 : i32 to vector<8x1xi32>
    %427 = arith.minsi %425, %426 : vector<8x1xi32>
    %428 = vector.broadcast %427 : vector<8x1xi32> to vector<8x128xi32>
    %429 = arith.shrsi %428, %7 : vector<8x128xi32>
    %c1_i32_164 = arith.constant 1 : i32
    %430 = vector.broadcast %c1_i32_164 : i32 to vector<8x128xi32>
    %431 = arith.andi %429, %430 : vector<8x128xi32>
    %432 = arith.sitofp %431 : vector<8x128xi32> to vector<8x128xf32>
    %433 = vector.broadcast %409 : vector<8x1xi1> to vector<8x128xi1>
    %434 = arith.andi %12, %433 : vector<8x128xi1>
    %cst_165 = arith.constant 0.000000e+00 : f32
    %435 = vector.broadcast %cst_165 : f32 to vector<8x128xf32>
    %436 = arith.select %434, %432, %435 : vector<8x128xi1>, vector<8x128xf32>
    %437 = arith.addf %421, %436 : vector<8x128xf32>
    %cst_166 = arith.constant 1.000000e+00 : f32
    %cst_167 = arith.constant 0.000000e+00 : f32
    %438 = vector.broadcast %cst_166 : f32 to vector<8x1xf32>
    %439 = vector.broadcast %cst_167 : f32 to vector<8x1xf32>
    %440 = arith.select %409, %438, %439 : vector<8x1xi1>, vector<8x1xf32>
    %441 = arith.addf %403, %440 : vector<8x1xf32>
    %442 = vector.extract_strided_slice %0 {offsets = [0, 15], sizes = [8, 1], strides = [1, 1]} : vector<8x512xf32> to vector<8x1xf32>
    %cst_168 = arith.constant 1.000000e+00 : f32
    %443 = vector.broadcast %cst_168 : f32 to vector<8x1xf32>
    %444 = arith.addf %442, %443 : vector<8x1xf32>
    %445 = arith.fptosi %444 : vector<8x1xf32> to vector<8x1xi32>
    %c0_i32_169 = arith.constant 0 : i32
    %446 = vector.broadcast %c0_i32_169 : i32 to vector<8x1xi32>
    %447 = arith.cmpi sgt, %445, %446 : vector<8x1xi32>
    %cst_170 = arith.constant 1.000000e+00 : f32
    %cst_171 = arith.constant 0.000000e+00 : f32
    %448 = vector.broadcast %cst_170 : f32 to vector<8x1xf32>
    %449 = vector.broadcast %cst_171 : f32 to vector<8x1xf32>
    %450 = arith.select %447, %448, %449 : vector<8x1xi1>, vector<8x1xf32>
    %c0_i32_172 = arith.constant 0 : i32
    %451 = vector.broadcast %c0_i32_172 : i32 to vector<8x1xi32>
    %452 = arith.cmpi sgt, %445, %451 : vector<8x1xi32>
    %c1_i32_173 = arith.constant 1 : i32
    %453 = vector.broadcast %c1_i32_173 : i32 to vector<8x1xi32>
    %454 = arith.subi %445, %453 : vector<8x1xi32>
    %c60_i32_174 = arith.constant 60 : i32
    %455 = vector.broadcast %c60_i32_174 : i32 to vector<8x1xi32>
    %456 = arith.addi %454, %455 : vector<8x1xi32>
    %c-1_i32_175 = arith.constant -1 : i32
    %457 = vector.broadcast %c-1_i32_175 : i32 to vector<8x1xi32>
    %458 = arith.select %452, %456, %457 : vector<8x1xi1>, vector<8x1xi32>
    %459 = vector.broadcast %458 : vector<8x1xi32> to vector<8x128xi32>
    %460 = arith.cmpi eq, %1, %459 : vector<8x128xi32>
    %cst_176 = arith.constant 1.000000e+00 : f32
    %cst_177 = arith.constant 0.000000e+00 : f32
    %461 = vector.broadcast %cst_176 : f32 to vector<8x128xf32>
    %462 = vector.broadcast %cst_177 : f32 to vector<8x128xf32>
    %463 = arith.select %460, %461, %462 : vector<8x128xi1>, vector<8x128xf32>
    %464 = arith.addf %437, %463 : vector<8x128xf32>
    %465 = vector.extract_strided_slice %0 {offsets = [0, 17], sizes = [8, 1], strides = [1, 1]} : vector<8x512xf32> to vector<8x1xf32>
    %cst_178 = arith.constant 1.000000e+00 : f32
    %466 = vector.broadcast %cst_178 : f32 to vector<8x1xf32>
    %467 = arith.addf %465, %466 : vector<8x1xf32>
    %468 = arith.fptosi %467 : vector<8x1xf32> to vector<8x1xi32>
    %c0_i32_179 = arith.constant 0 : i32
    %469 = vector.broadcast %c0_i32_179 : i32 to vector<8x1xi32>
    %470 = arith.cmpi sgt, %468, %469 : vector<8x1xi32>
    %cst_180 = arith.constant 1.000000e+00 : f32
    %cst_181 = arith.constant 0.000000e+00 : f32
    %471 = vector.broadcast %cst_180 : f32 to vector<8x1xf32>
    %472 = vector.broadcast %cst_181 : f32 to vector<8x1xf32>
    %473 = arith.select %470, %471, %472 : vector<8x1xi1>, vector<8x1xf32>
    %c0_i32_182 = arith.constant 0 : i32
    %474 = vector.broadcast %c0_i32_182 : i32 to vector<8x1xi32>
    %475 = arith.cmpi sgt, %468, %474 : vector<8x1xi32>
    %c1_i32_183 = arith.constant 1 : i32
    %476 = vector.broadcast %c1_i32_183 : i32 to vector<8x1xi32>
    %477 = arith.subi %468, %476 : vector<8x1xi32>
    %c75_i32 = arith.constant 75 : i32
    %478 = vector.broadcast %c75_i32 : i32 to vector<8x1xi32>
    %479 = arith.addi %477, %478 : vector<8x1xi32>
    %c-1_i32_184 = arith.constant -1 : i32
    %480 = vector.broadcast %c-1_i32_184 : i32 to vector<8x1xi32>
    %481 = arith.select %475, %479, %480 : vector<8x1xi1>, vector<8x1xi32>
    %482 = vector.broadcast %481 : vector<8x1xi32> to vector<8x128xi32>
    %483 = arith.cmpi eq, %1, %482 : vector<8x128xi32>
    %cst_185 = arith.constant 1.000000e+00 : f32
    %cst_186 = arith.constant 0.000000e+00 : f32
    %484 = vector.broadcast %cst_185 : f32 to vector<8x128xf32>
    %485 = vector.broadcast %cst_186 : f32 to vector<8x128xf32>
    %486 = arith.select %483, %484, %485 : vector<8x128xi1>, vector<8x128xf32>
    %487 = arith.addf %464, %486 : vector<8x128xf32>
    %488 = vector.extract_strided_slice %0 {offsets = [0, 19], sizes = [8, 1], strides = [1, 1]} : vector<8x512xf32> to vector<8x1xf32>
    %cst_187 = arith.constant 1.000000e+00 : f32
    %489 = vector.broadcast %cst_187 : f32 to vector<8x1xf32>
    %490 = arith.addf %488, %489 : vector<8x1xf32>
    %491 = arith.fptosi %490 : vector<8x1xf32> to vector<8x1xi32>
    %c0_i32_188 = arith.constant 0 : i32
    %492 = vector.broadcast %c0_i32_188 : i32 to vector<8x1xi32>
    %493 = arith.cmpi sgt, %468, %492 : vector<8x1xi32>
    %c0_i32_189 = arith.constant 0 : i32
    %494 = vector.broadcast %c0_i32_189 : i32 to vector<8x1xi32>
    %495 = arith.cmpi sgt, %491, %494 : vector<8x1xi32>
    %496 = arith.andi %493, %495 : vector<8x1xi1>
    %c1_i32_190 = arith.constant 1 : i32
    %497 = vector.broadcast %c1_i32_190 : i32 to vector<8x1xi32>
    %498 = arith.subi %491, %497 : vector<8x1xi32>
    %c90_i32 = arith.constant 90 : i32
    %499 = vector.broadcast %c90_i32 : i32 to vector<8x1xi32>
    %500 = arith.addi %498, %499 : vector<8x1xi32>
    %c-1_i32_191 = arith.constant -1 : i32
    %501 = vector.broadcast %c-1_i32_191 : i32 to vector<8x1xi32>
    %502 = arith.select %496, %500, %501 : vector<8x1xi1>, vector<8x1xi32>
    %503 = vector.broadcast %502 : vector<8x1xi32> to vector<8x128xi32>
    %504 = arith.cmpi eq, %1, %503 : vector<8x128xi32>
    %cst_192 = arith.constant 1.000000e+00 : f32
    %cst_193 = arith.constant 0.000000e+00 : f32
    %505 = vector.broadcast %cst_192 : f32 to vector<8x128xf32>
    %506 = vector.broadcast %cst_193 : f32 to vector<8x128xf32>
    %507 = arith.select %504, %505, %506 : vector<8x128xi1>, vector<8x128xf32>
    %508 = arith.addf %487, %507 : vector<8x128xf32>
    %509 = vector.extract_strided_slice %0 {offsets = [0, 35], sizes = [8, 1], strides = [1, 1]} : vector<8x512xf32> to vector<8x1xf32>
    %cst_194 = arith.constant 1.000000e+00 : f32
    %510 = vector.broadcast %cst_194 : f32 to vector<8x1xf32>
    %511 = arith.addf %509, %510 : vector<8x1xf32>
    %512 = arith.fptosi %511 : vector<8x1xf32> to vector<8x1xi32>
    %c0_i32_195 = arith.constant 0 : i32
    %513 = vector.broadcast %c0_i32_195 : i32 to vector<8x1xi32>
    %514 = arith.cmpi sgt, %512, %513 : vector<8x1xi32>
    %c1_i32_196 = arith.constant 1 : i32
    %515 = vector.broadcast %c1_i32_196 : i32 to vector<8x1xi32>
    %516 = arith.subi %512, %515 : vector<8x1xi32>
    %c97_i32 = arith.constant 97 : i32
    %517 = vector.broadcast %c97_i32 : i32 to vector<8x1xi32>
    %518 = arith.addi %516, %517 : vector<8x1xi32>
    %c-1_i32_197 = arith.constant -1 : i32
    %519 = vector.broadcast %c-1_i32_197 : i32 to vector<8x1xi32>
    %520 = arith.select %514, %518, %519 : vector<8x1xi1>, vector<8x1xi32>
    %521 = vector.broadcast %520 : vector<8x1xi32> to vector<8x128xi32>
    %522 = arith.cmpi eq, %1, %521 : vector<8x128xi32>
    %cst_198 = arith.constant 1.000000e+00 : f32
    %cst_199 = arith.constant 0.000000e+00 : f32
    %523 = vector.broadcast %cst_198 : f32 to vector<8x128xf32>
    %524 = vector.broadcast %cst_199 : f32 to vector<8x128xf32>
    %525 = arith.select %522, %523, %524 : vector<8x128xi1>, vector<8x128xf32>
    %526 = arith.addf %508, %525 : vector<8x128xf32>
    %527 = vector.extract_strided_slice %0 {offsets = [0, 1], sizes = [8, 1], strides = [1, 1]} : vector<8x512xf32> to vector<8x1xf32>
    %cst_200 = arith.constant 1.000000e+00 : f32
    %528 = vector.broadcast %cst_200 : f32 to vector<8x1xf32>
    %529 = arith.addf %527, %528 : vector<8x1xf32>
    %530 = arith.fptosi %529 : vector<8x1xf32> to vector<8x1xi32>
    %c0_i32_201 = arith.constant 0 : i32
    %531 = vector.broadcast %c0_i32_201 : i32 to vector<8x1xi32>
    %532 = arith.cmpi sgt, %530, %531 : vector<8x1xi32>
    %c1_i32_202 = arith.constant 1 : i32
    %533 = vector.broadcast %c1_i32_202 : i32 to vector<8x1xi32>
    %534 = arith.subi %530, %533 : vector<8x1xi32>
    %c119_i32 = arith.constant 119 : i32
    %535 = vector.broadcast %c119_i32 : i32 to vector<8x1xi32>
    %536 = arith.addi %534, %535 : vector<8x1xi32>
    %c-1_i32_203 = arith.constant -1 : i32
    %537 = vector.broadcast %c-1_i32_203 : i32 to vector<8x1xi32>
    %538 = arith.select %532, %536, %537 : vector<8x1xi1>, vector<8x1xi32>
    %539 = vector.broadcast %538 : vector<8x1xi32> to vector<8x128xi32>
    %540 = arith.cmpi eq, %1, %539 : vector<8x128xi32>
    %cst_204 = arith.constant 1.000000e+00 : f32
    %cst_205 = arith.constant 0.000000e+00 : f32
    %541 = vector.broadcast %cst_204 : f32 to vector<8x128xf32>
    %542 = vector.broadcast %cst_205 : f32 to vector<8x128xf32>
    %543 = arith.select %540, %541, %542 : vector<8x128xi1>, vector<8x128xf32>
    %544 = arith.addf %526, %543 : vector<8x128xf32>
    %545 = vector.extract_strided_slice %0 {offsets = [0, 12], sizes = [8, 1], strides = [1, 1]} : vector<8x512xf32> to vector<8x1xf32>
    %cst_206 = arith.constant 1.000000e+00 : f32
    %546 = vector.broadcast %cst_206 : f32 to vector<8x1xf32>
    %547 = arith.addf %545, %546 : vector<8x1xf32>
    %548 = arith.fptosi %547 : vector<8x1xf32> to vector<8x1xi32>
    %c0_i32_207 = arith.constant 0 : i32
    %549 = vector.broadcast %c0_i32_207 : i32 to vector<8x1xi32>
    %550 = arith.cmpi sgt, %548, %549 : vector<8x1xi32>
    %c1_i32_208 = arith.constant 1 : i32
    %551 = vector.broadcast %c1_i32_208 : i32 to vector<8x1xi32>
    %552 = arith.subi %548, %551 : vector<8x1xi32>
    %c126_i32 = arith.constant 126 : i32
    %553 = vector.broadcast %c126_i32 : i32 to vector<8x1xi32>
    %554 = arith.addi %552, %553 : vector<8x1xi32>
    %c-1_i32_209 = arith.constant -1 : i32
    %555 = vector.broadcast %c-1_i32_209 : i32 to vector<8x1xi32>
    %556 = arith.select %550, %554, %555 : vector<8x1xi1>, vector<8x1xi32>
    %557 = vector.broadcast %556 : vector<8x1xi32> to vector<8x128xi32>
    %558 = arith.cmpi eq, %1, %557 : vector<8x128xi32>
    %cst_210 = arith.constant 1.000000e+00 : f32
    %cst_211 = arith.constant 0.000000e+00 : f32
    %559 = vector.broadcast %cst_210 : f32 to vector<8x128xf32>
    %560 = vector.broadcast %cst_211 : f32 to vector<8x128xf32>
    %561 = arith.select %558, %559, %560 : vector<8x128xi1>, vector<8x128xf32>
    %562 = arith.addf %544, %561 : vector<8x128xf32>
    %563 = vector.extract_strided_slice %0 {offsets = [0, 37], sizes = [8, 1], strides = [1, 1]} : vector<8x512xf32> to vector<8x1xf32>
    %cst_212 = arith.constant 1.000000e+00 : f32
    %564 = vector.broadcast %cst_212 : f32 to vector<8x1xf32>
    %565 = arith.addf %563, %564 : vector<8x1xf32>
    %566 = arith.fptosi %565 : vector<8x1xf32> to vector<8x1xi32>
    %c1_i32_213 = arith.constant 1 : i32
    %567 = vector.broadcast %c1_i32_213 : i32 to vector<8x1xi32>
    %568 = arith.subi %566, %567 : vector<8x1xi32>
    %c0_i32_214 = arith.constant 0 : i32
    %c1_i32_215 = arith.constant 1 : i32
    %569 = vector.broadcast %c0_i32_214 : i32 to vector<8x1xi32>
    %570 = arith.maxsi %569, %568 : vector<8x1xi32>
    %571 = vector.broadcast %c1_i32_215 : i32 to vector<8x1xi32>
    %572 = arith.minsi %571, %570 : vector<8x1xi32>
    %573 = arith.sitofp %572 : vector<8x1xi32> to vector<8x1xf32>
    %c116_i32 = arith.constant 116 : i32
    %574 = vector.broadcast %c116_i32 : i32 to vector<8x128xi32>
    %575 = arith.cmpi eq, %1, %574 : vector<8x128xi32>
    %cst_216 = arith.constant 0.000000e+00 : f32
    %576 = vector.shape_cast %573 : vector<8x1xf32> to vector<8x1xf32>
    %577 = vector.broadcast %576 : vector<8x1xf32> to vector<8x128xf32>
    %578 = vector.broadcast %cst_216 : f32 to vector<8x128xf32>
    %579 = arith.select %575, %577, %578 : vector<8x128xi1>, vector<8x128xf32>
    %580 = arith.addf %562, %579 : vector<8x128xf32>
    %581 = vector.extract_strided_slice %0 {offsets = [0, 34], sizes = [8, 1], strides = [1, 1]} : vector<8x512xf32> to vector<8x1xf32>
    %cst_217 = arith.constant 1.000000e+00 : f32
    %582 = vector.broadcast %cst_217 : f32 to vector<8x1xf32>
    %583 = arith.addf %581, %582 : vector<8x1xf32>
    %584 = arith.fptosi %583 : vector<8x1xf32> to vector<8x1xi32>
    %c0_i32_218 = arith.constant 0 : i32
    %585 = vector.broadcast %c0_i32_218 : i32 to vector<8x1xi32>
    %586 = arith.cmpi sgt, %584, %585 : vector<8x1xi32>
    %cst_219 = arith.constant 1.000000e+00 : f32
    %cst_220 = arith.constant 0.000000e+00 : f32
    %587 = vector.broadcast %cst_219 : f32 to vector<8x1xf32>
    %588 = vector.broadcast %cst_220 : f32 to vector<8x1xf32>
    %589 = arith.select %586, %587, %588 : vector<8x1xi1>, vector<8x1xf32>
    %c117_i32 = arith.constant 117 : i32
    %590 = vector.broadcast %c117_i32 : i32 to vector<8x128xi32>
    %591 = arith.cmpi eq, %1, %590 : vector<8x128xi32>
    %cst_221 = arith.constant 0.000000e+00 : f32
    %592 = vector.shape_cast %589 : vector<8x1xf32> to vector<8x1xf32>
    %593 = vector.broadcast %592 : vector<8x1xf32> to vector<8x128xf32>
    %594 = vector.broadcast %cst_221 : f32 to vector<8x128xf32>
    %595 = arith.select %591, %593, %594 : vector<8x128xi1>, vector<8x128xf32>
    %596 = arith.addf %580, %595 : vector<8x128xf32>
    %c118_i32 = arith.constant 118 : i32
    %597 = vector.broadcast %c118_i32 : i32 to vector<8x128xi32>
    %598 = arith.cmpi eq, %1, %597 : vector<8x128xi32>
    %c0_i32_222 = arith.constant 0 : i32
    %599 = vector.broadcast %c0_i32_222 : i32 to vector<8x1xi32>
    %600 = arith.cmpi sgt, %512, %599 : vector<8x1xi32>
    %cst_223 = arith.constant 0.000000e+00 : f32
    %cst_224 = arith.constant 1.000000e+00 : f32
    %601 = vector.broadcast %cst_223 : f32 to vector<8x1xf32>
    %602 = vector.broadcast %cst_224 : f32 to vector<8x1xf32>
    %603 = arith.select %600, %601, %602 : vector<8x1xi1>, vector<8x1xf32>
    %cst_225 = arith.constant 0.000000e+00 : f32
    %604 = vector.shape_cast %603 : vector<8x1xf32> to vector<8x1xf32>
    %605 = vector.broadcast %604 : vector<8x1xf32> to vector<8x128xf32>
    %606 = vector.broadcast %cst_225 : f32 to vector<8x128xf32>
    %607 = arith.select %598, %605, %606 : vector<8x128xi1>, vector<8x128xf32>
    %608 = arith.addf %596, %607 : vector<8x128xf32>
    %609 = vector.extract_strided_slice %0 {offsets = [0, 5], sizes = [8, 1], strides = [1, 1]} : vector<8x512xf32> to vector<8x1xf32>
    %cst_226 = arith.constant 1.000000e+01 : f32
    %610 = vector.broadcast %cst_226 : f32 to vector<8x1xf32>
    %611 = arith.mulf %609, %610 : vector<8x1xf32>
    %cst_227 = arith.constant 0.000000e+00 : f32
    %cst_228 = arith.constant 1.000000e+01 : f32
    %612 = vector.broadcast %cst_227 : f32 to vector<8x1xf32>
    %613 = arith.maximumf %612, %611 : vector<8x1xf32>
    %614 = vector.broadcast %cst_228 : f32 to vector<8x1xf32>
    %615 = arith.minimumf %614, %613 : vector<8x1xf32>
    %616 = arith.fptosi %615 : vector<8x1xf32> to vector<8x1xi32>
    %c0_i32_229 = arith.constant 0 : i32
    %617 = vector.broadcast %c0_i32_229 : i32 to vector<8x1xi32>
    %618 = arith.cmpi sgt, %616, %617 : vector<8x1xi32>
    %c1_i32_230 = arith.constant 1 : i32
    %619 = vector.broadcast %c1_i32_230 : i32 to vector<8x1xi32>
    %620 = arith.subi %616, %619 : vector<8x1xi32>
    %c0_i32_231 = arith.constant 0 : i32
    %621 = vector.broadcast %c0_i32_231 : i32 to vector<8x1xi32>
    %622 = arith.addi %620, %621 : vector<8x1xi32>
    %c-1_i32_232 = arith.constant -1 : i32
    %623 = vector.broadcast %c-1_i32_232 : i32 to vector<8x1xi32>
    %624 = arith.select %618, %622, %623 : vector<8x1xi1>, vector<8x1xi32>
    %625 = vector.broadcast %624 : vector<8x1xi32> to vector<8x128xi32>
    %626 = arith.cmpi eq, %1, %625 : vector<8x128xi32>
    %cst_233 = arith.constant 1.000000e+00 : f32
    %cst_234 = arith.constant 0.000000e+00 : f32
    %627 = vector.broadcast %cst_233 : f32 to vector<8x128xf32>
    %628 = vector.broadcast %cst_234 : f32 to vector<8x128xf32>
    %629 = arith.select %626, %627, %628 : vector<8x128xi1>, vector<8x128xf32>
    %630 = vector.extract_strided_slice %0 {offsets = [0, 11], sizes = [8, 1], strides = [1, 1]} : vector<8x512xf32> to vector<8x1xf32>
    %cst_235 = arith.constant 1.000000e+00 : f32
    %631 = vector.broadcast %cst_235 : f32 to vector<8x1xf32>
    %632 = arith.addf %630, %631 : vector<8x1xf32>
    %633 = arith.fptosi %632 : vector<8x1xf32> to vector<8x1xi32>
    %c0_i32_236 = arith.constant 0 : i32
    %634 = vector.broadcast %c0_i32_236 : i32 to vector<8x1xi32>
    %635 = arith.cmpi sgt, %633, %634 : vector<8x1xi32>
    %c1_i32_237 = arith.constant 1 : i32
    %636 = vector.broadcast %c1_i32_237 : i32 to vector<8x1xi32>
    %637 = arith.subi %633, %636 : vector<8x1xi32>
    %c10_i32 = arith.constant 10 : i32
    %638 = vector.broadcast %c10_i32 : i32 to vector<8x1xi32>
    %639 = arith.addi %637, %638 : vector<8x1xi32>
    %c-1_i32_238 = arith.constant -1 : i32
    %640 = vector.broadcast %c-1_i32_238 : i32 to vector<8x1xi32>
    %641 = arith.select %635, %639, %640 : vector<8x1xi1>, vector<8x1xi32>
    %642 = vector.broadcast %641 : vector<8x1xi32> to vector<8x128xi32>
    %643 = arith.cmpi eq, %1, %642 : vector<8x128xi32>
    %cst_239 = arith.constant 1.000000e+00 : f32
    %cst_240 = arith.constant 0.000000e+00 : f32
    %644 = vector.broadcast %cst_239 : f32 to vector<8x128xf32>
    %645 = vector.broadcast %cst_240 : f32 to vector<8x128xf32>
    %646 = arith.select %643, %644, %645 : vector<8x128xi1>, vector<8x128xf32>
    %647 = arith.addf %629, %646 : vector<8x128xf32>
    %648 = vector.extract_strided_slice %0 {offsets = [0, 14], sizes = [8, 1], strides = [1, 1]} : vector<8x512xf32> to vector<8x1xf32>
    %cst_241 = arith.constant 1.000000e+00 : f32
    %649 = vector.broadcast %cst_241 : f32 to vector<8x1xf32>
    %650 = arith.addf %648, %649 : vector<8x1xf32>
    %651 = arith.fptosi %650 : vector<8x1xf32> to vector<8x1xi32>
    %c0_i32_242 = arith.constant 0 : i32
    %652 = vector.broadcast %c0_i32_242 : i32 to vector<8x1xi32>
    %653 = arith.cmpi sgt, %651, %652 : vector<8x1xi32>
    %c1_i32_243 = arith.constant 1 : i32
    %654 = vector.broadcast %c1_i32_243 : i32 to vector<8x1xi32>
    %655 = arith.subi %651, %654 : vector<8x1xi32>
    %c12_i32 = arith.constant 12 : i32
    %656 = vector.broadcast %c12_i32 : i32 to vector<8x1xi32>
    %657 = arith.addi %655, %656 : vector<8x1xi32>
    %c-1_i32_244 = arith.constant -1 : i32
    %658 = vector.broadcast %c-1_i32_244 : i32 to vector<8x1xi32>
    %659 = arith.select %653, %657, %658 : vector<8x1xi1>, vector<8x1xi32>
    %660 = vector.broadcast %659 : vector<8x1xi32> to vector<8x128xi32>
    %661 = arith.cmpi eq, %1, %660 : vector<8x128xi32>
    %cst_245 = arith.constant 1.000000e+00 : f32
    %cst_246 = arith.constant 0.000000e+00 : f32
    %662 = vector.broadcast %cst_245 : f32 to vector<8x128xf32>
    %663 = vector.broadcast %cst_246 : f32 to vector<8x128xf32>
    %664 = arith.select %661, %662, %663 : vector<8x128xi1>, vector<8x128xf32>
    %665 = arith.addf %647, %664 : vector<8x128xf32>
    %666 = vector.extract_strided_slice %0 {offsets = [0, 13], sizes = [8, 1], strides = [1, 1]} : vector<8x512xf32> to vector<8x1xf32>
    %667 = arith.fptosi %666 : vector<8x1xf32> to vector<8x1xi32>
    %c1_i32_247 = arith.constant 1 : i32
    %668 = vector.broadcast %c1_i32_247 : i32 to vector<8x1xi32>
    %669 = arith.maxsi %667, %668 : vector<8x1xi32>
    %c1_i32_248 = arith.constant 1 : i32
    %670 = vector.broadcast %c1_i32_248 : i32 to vector<8x1xi32>
    %671 = arith.subi %669, %670 : vector<8x1xi32>
    %c15_i32 = arith.constant 15 : i32
    %672 = vector.broadcast %c15_i32 : i32 to vector<8x1xi32>
    %673 = arith.addi %671, %672 : vector<8x1xi32>
    %674 = vector.broadcast %673 : vector<8x1xi32> to vector<8x128xi32>
    %675 = arith.cmpi eq, %1, %674 : vector<8x128xi32>
    %cst_249 = arith.constant 1.000000e+00 : f32
    %cst_250 = arith.constant 0.000000e+00 : f32
    %676 = vector.broadcast %cst_249 : f32 to vector<8x128xf32>
    %677 = vector.broadcast %cst_250 : f32 to vector<8x128xf32>
    %678 = arith.select %675, %676, %677 : vector<8x128xi1>, vector<8x128xf32>
    %679 = arith.addf %665, %678 : vector<8x128xf32>
    %680 = vector.extract_strided_slice %0 {offsets = [0, 21], sizes = [8, 1], strides = [1, 1]} : vector<8x512xf32> to vector<8x1xf32>
    %cst_251 = arith.constant 1.000000e+00 : f32
    %681 = vector.broadcast %cst_251 : f32 to vector<8x1xf32>
    %682 = arith.addf %680, %681 : vector<8x1xf32>
    %683 = arith.fptosi %682 : vector<8x1xf32> to vector<8x1xi32>
    %c0_i32_252 = arith.constant 0 : i32
    %684 = vector.broadcast %c0_i32_252 : i32 to vector<8x1xi32>
    %685 = arith.cmpi sgt, %683, %684 : vector<8x1xi32>
    %c1_i32_253 = arith.constant 1 : i32
    %686 = vector.broadcast %c1_i32_253 : i32 to vector<8x1xi32>
    %687 = arith.subi %683, %686 : vector<8x1xi32>
    %c115_i32 = arith.constant 115 : i32
    %688 = vector.broadcast %c115_i32 : i32 to vector<8x1xi32>
    %689 = arith.addi %687, %688 : vector<8x1xi32>
    %c-1_i32_254 = arith.constant -1 : i32
    %690 = vector.broadcast %c-1_i32_254 : i32 to vector<8x1xi32>
    %691 = arith.select %685, %689, %690 : vector<8x1xi1>, vector<8x1xi32>
    %692 = vector.broadcast %691 : vector<8x1xi32> to vector<8x128xi32>
    %693 = arith.cmpi eq, %1, %692 : vector<8x128xi32>
    %cst_255 = arith.constant 1.000000e+00 : f32
    %cst_256 = arith.constant 0.000000e+00 : f32
    %694 = vector.broadcast %cst_255 : f32 to vector<8x128xf32>
    %695 = vector.broadcast %cst_256 : f32 to vector<8x128xf32>
    %696 = arith.select %693, %694, %695 : vector<8x128xi1>, vector<8x128xf32>
    %697 = arith.addf %679, %696 : vector<8x128xf32>
    %698 = vector.extract_strided_slice %0 {offsets = [0, 22], sizes = [8, 1], strides = [1, 1]} : vector<8x512xf32> to vector<8x1xf32>
    %cst_257 = arith.constant 1.000000e+00 : f32
    %699 = vector.broadcast %cst_257 : f32 to vector<8x1xf32>
    %700 = arith.addf %698, %699 : vector<8x1xf32>
    %701 = arith.fptosi %700 : vector<8x1xf32> to vector<8x1xi32>
    %c0_i32_258 = arith.constant 0 : i32
    %702 = vector.broadcast %c0_i32_258 : i32 to vector<8x1xi32>
    %703 = arith.cmpi sgt, %701, %702 : vector<8x1xi32>
    %c1_i32_259 = arith.constant 1 : i32
    %704 = vector.broadcast %c1_i32_259 : i32 to vector<8x1xi32>
    %705 = arith.subi %701, %704 : vector<8x1xi32>
    %c122_i32 = arith.constant 122 : i32
    %706 = vector.broadcast %c122_i32 : i32 to vector<8x1xi32>
    %707 = arith.addi %705, %706 : vector<8x1xi32>
    %c-1_i32_260 = arith.constant -1 : i32
    %708 = vector.broadcast %c-1_i32_260 : i32 to vector<8x1xi32>
    %709 = arith.select %703, %707, %708 : vector<8x1xi1>, vector<8x1xi32>
    %710 = vector.broadcast %709 : vector<8x1xi32> to vector<8x128xi32>
    %711 = arith.cmpi eq, %1, %710 : vector<8x128xi32>
    %cst_261 = arith.constant 1.000000e+00 : f32
    %cst_262 = arith.constant 0.000000e+00 : f32
    %712 = vector.broadcast %cst_261 : f32 to vector<8x128xf32>
    %713 = vector.broadcast %cst_262 : f32 to vector<8x128xf32>
    %714 = arith.select %711, %712, %713 : vector<8x128xi1>, vector<8x128xf32>
    %715 = arith.addf %697, %714 : vector<8x128xf32>
    %716 = vector.extract_strided_slice %0 {offsets = [0, 23], sizes = [8, 1], strides = [1, 1]} : vector<8x512xf32> to vector<8x1xf32>
    %cst_263 = arith.constant 1.000000e+00 : f32
    %717 = vector.broadcast %cst_263 : f32 to vector<8x1xf32>
    %718 = arith.addf %716, %717 : vector<8x1xf32>
    %719 = arith.fptosi %718 : vector<8x1xf32> to vector<8x1xi32>
    %720 = arith.sitofp %719 : vector<8x1xi32> to vector<8x1xf32>
    %721 = math.sqrt %720 : vector<8x1xf32>
    %722 = math.floor %721 : vector<8x1xf32>
    %723 = arith.fptosi %722 : vector<8x1xf32> to vector<8x1xi32>
    %c0_i32_264 = arith.constant 0 : i32
    %724 = vector.broadcast %c0_i32_264 : i32 to vector<8x1xi32>
    %725 = arith.cmpi sgt, %723, %724 : vector<8x1xi32>
    %c1_i32_265 = arith.constant 1 : i32
    %726 = vector.broadcast %c1_i32_265 : i32 to vector<8x1xi32>
    %727 = arith.subi %723, %726 : vector<8x1xi32>
    %c125_i32 = arith.constant 125 : i32
    %728 = vector.broadcast %c125_i32 : i32 to vector<8x1xi32>
    %729 = arith.addi %727, %728 : vector<8x1xi32>
    %c-1_i32_266 = arith.constant -1 : i32
    %730 = vector.broadcast %c-1_i32_266 : i32 to vector<8x1xi32>
    %731 = arith.select %725, %729, %730 : vector<8x1xi1>, vector<8x1xi32>
    %732 = vector.broadcast %731 : vector<8x1xi32> to vector<8x128xi32>
    %733 = arith.cmpi eq, %1, %732 : vector<8x128xi32>
    %cst_267 = arith.constant 1.000000e+00 : f32
    %cst_268 = arith.constant 0.000000e+00 : f32
    %734 = vector.broadcast %cst_267 : f32 to vector<8x128xf32>
    %735 = vector.broadcast %cst_268 : f32 to vector<8x128xf32>
    %736 = arith.select %733, %734, %735 : vector<8x128xi1>, vector<8x128xf32>
    %737 = arith.addf %715, %736 : vector<8x128xf32>
    %738 = tpu.concatenate %608, %737 in 1 : vector<8x128xf32>, vector<8x128xf32> -> vector<8x256xf32>
    %739 = arith.truncf %738 : vector<8x256xf32> to vector<8x256xbf16>
    %cst_269 = arith.constant dense<0.000000e+00> : vector<8x96xf32>
    %740 = tpu.matmul %739, %277, %cst_269 {dimension_numbers = #tpu.dot_dimension_numbers<[1], [0], [0], [1], [0, 0, 1, 1], [], []>} : vector<8x256xbf16>, vector<256x96xbf16>, vector<8x96xf32> -> vector<8x96xf32>
    %741 = vector.broadcast %278 : vector<1x96xf32> to vector<8x96xf32>
    %742 = arith.addf %740, %741 : vector<8x96xf32>
    %743 = vector.extract_strided_slice %742 {offsets = [0, 0], sizes = [8, 32], strides = [1, 1]} : vector<8x96xf32> to vector<8x32xf32>
    %744 = vector.extract_strided_slice %742 {offsets = [0, 32], sizes = [8, 32], strides = [1, 1]} : vector<8x96xf32> to vector<8x32xf32>
    %745 = vector.extract_strided_slice %742 {offsets = [0, 64], sizes = [8, 32], strides = [1, 1]} : vector<8x96xf32> to vector<8x32xf32>
    %cst_270 = arith.constant 0.000000e+00 : f32
    %746 = vector.broadcast %cst_270 : f32 to vector<8x32xf32>
    %747 = arith.maximumf %743, %746 : vector<8x32xf32>
    %748 = arith.addf %744, %743 : vector<8x32xf32>
    %cst_271 = arith.constant 0.000000e+00 : f32
    %749 = vector.broadcast %cst_271 : f32 to vector<8x32xf32>
    %750 = arith.maximumf %748, %749 : vector<8x32xf32>
    %751 = tpu.concatenate %747, %750 in 1 : vector<8x32xf32>, vector<8x32xf32> -> vector<8x64xf32>
    %cst_272 = arith.constant dense<0.000000e+00> : vector<8x96xf32>
    %752 = tpu.matmul %751, %279, %cst_272 {dimension_numbers = #tpu.dot_dimension_numbers<[1], [0], [0], [1], [0, 0, 1, 1], [], []>} : vector<8x64xf32>, vector<64x96xf32>, vector<8x96xf32> -> vector<8x96xf32>
    %753 = vector.broadcast %280 : vector<1x96xf32> to vector<8x96xf32>
    %754 = arith.addf %752, %753 : vector<8x96xf32>
    %755 = arith.addf %743, %745 : vector<8x32xf32>
    %cst_273 = arith.constant 1.000000e+00 : f32
    %756 = vector.broadcast %cst_273 : f32 to vector<8x1xf32>
    %757 = arith.subf %756, %450 : vector<8x1xf32>
    %758 = vector.extract_strided_slice %754 {offsets = [0, 0], sizes = [8, 32], strides = [1, 1]} : vector<8x96xf32> to vector<8x32xf32>
    %759 = vector.broadcast %757 : vector<8x1xf32> to vector<8x32xf32>
    %760 = arith.mulf %759, %758 : vector<8x32xf32>
    %761 = arith.addf %755, %760 : vector<8x32xf32>
    %cst_274 = arith.constant 1.000000e+00 : f32
    %762 = vector.broadcast %cst_274 : f32 to vector<8x1xf32>
    %763 = arith.subf %762, %473 : vector<8x1xf32>
    %764 = vector.extract_strided_slice %754 {offsets = [0, 32], sizes = [8, 32], strides = [1, 1]} : vector<8x96xf32> to vector<8x32xf32>
    %765 = vector.broadcast %763 : vector<8x1xf32> to vector<8x32xf32>
    %766 = arith.mulf %765, %764 : vector<8x32xf32>
    %767 = arith.addf %761, %766 : vector<8x32xf32>
    %cst_275 = arith.constant 4.000000e+00 : f32
    %768 = vector.broadcast %cst_275 : f32 to vector<8x1xf32>
    %769 = arith.subf %768, %441 : vector<8x1xf32>
    %770 = vector.extract_strided_slice %754 {offsets = [0, 64], sizes = [8, 32], strides = [1, 1]} : vector<8x96xf32> to vector<8x32xf32>
    %771 = vector.broadcast %769 : vector<8x1xf32> to vector<8x32xf32>
    %772 = arith.mulf %771, %770 : vector<8x32xf32>
    %773 = arith.addf %767, %772 : vector<8x32xf32>
    %c0_276 = arith.constant 0 : index
    %c0_277 = arith.constant 0 : index
    %774 = vector.load %arg6[%c0_276, %c0_277] : memref<8x192xf32, #tpu.memory_space<vmem>>, vector<8x32xf32>
    tpu.vector_store %arg6[%c0_276, %c0_277], %773 {strides = array<i32>} : memref<8x192xf32, #tpu.memory_space<vmem>>, vector<8x32xf32>,
    %775 = vector.broadcast %50 : vector<8x1xi32> to vector<8x128xi32>
    %776 = arith.cmpi eq, %1, %775 : vector<8x128xi32>
    %cst_278 = arith.constant 1.000000e+00 : f32
    %cst_279 = arith.constant 0.000000e+00 : f32
    %777 = vector.broadcast %cst_278 : f32 to vector<8x128xf32>
    %778 = vector.broadcast %cst_279 : f32 to vector<8x128xf32>
    %779 = arith.select %776, %777, %778 : vector<8x128xi1>, vector<8x128xf32>
    %780 = vector.broadcast %61 : vector<8x1xf32> to vector<8x128xf32>
    %781 = arith.mulf %780, %276 : vector<8x128xf32>
    %782 = arith.addf %779, %781 : vector<8x128xf32>
    %cst_280 = arith.constant 0.000000e+00 : f32
    %783 = vector.broadcast %cst_280 : f32 to vector<8x1xf32>
    %784 = vector.extract_strided_slice %0 {offsets = [0, 64], sizes = [8, 1], strides = [1, 1]} : vector<8x512xf32> to vector<8x1xf32>
    %cst_281 = arith.constant 1.000000e+00 : f32
    %785 = vector.broadcast %cst_281 : f32 to vector<8x1xf32>
    %786 = arith.addf %784, %785 : vector<8x1xf32>
    %787 = arith.fptosi %786 : vector<8x1xf32> to vector<8x1xi32>
    %c0_i32_282 = arith.constant 0 : i32
    %788 = vector.broadcast %c0_i32_282 : i32 to vector<8x1xi32>
    %789 = arith.cmpi sgt, %787, %788 : vector<8x1xi32>
    %c1_i32_283 = arith.constant 1 : i32
    %790 = vector.broadcast %c1_i32_283 : i32 to vector<8x1xi32>
    %791 = arith.subi %787, %790 : vector<8x1xi32>
    %c31_i32_284 = arith.constant 31 : i32
    %792 = vector.broadcast %c31_i32_284 : i32 to vector<8x1xi32>
    %793 = arith.addi %791, %792 : vector<8x1xi32>
    %c-1_i32_285 = arith.constant -1 : i32
    %794 = vector.broadcast %c-1_i32_285 : i32 to vector<8x1xi32>
    %795 = arith.select %789, %793, %794 : vector<8x1xi1>, vector<8x1xi32>
    %796 = vector.broadcast %795 : vector<8x1xi32> to vector<8x128xi32>
    %797 = arith.cmpi eq, %1, %796 : vector<8x128xi32>
    %cst_286 = arith.constant 1.000000e+00 : f32
    %cst_287 = arith.constant 0.000000e+00 : f32
    %798 = vector.broadcast %cst_286 : f32 to vector<8x128xf32>
    %799 = vector.broadcast %cst_287 : f32 to vector<8x128xf32>
    %800 = arith.select %797, %798, %799 : vector<8x128xi1>, vector<8x128xf32>
    %801 = arith.addf %782, %800 : vector<8x128xf32>
    %802 = vector.extract_strided_slice %0 {offsets = [0, 68], sizes = [8, 1], strides = [1, 1]} : vector<8x512xf32> to vector<8x1xf32>
    %cst_288 = arith.constant 1.000000e+00 : f32
    %803 = vector.broadcast %cst_288 : f32 to vector<8x1xf32>
    %804 = arith.addf %802, %803 : vector<8x1xf32>
    %805 = arith.fptosi %804 : vector<8x1xf32> to vector<8x1xi32>
    %c63_i32_289 = arith.constant 63 : i32
    %806 = vector.broadcast %c63_i32_289 : i32 to vector<8x1xi32>
    %807 = arith.minsi %805, %806 : vector<8x1xi32>
    %808 = vector.broadcast %807 : vector<8x1xi32> to vector<8x128xi32>
    %809 = arith.shrsi %808, %7 : vector<8x128xi32>
    %c1_i32_290 = arith.constant 1 : i32
    %810 = vector.broadcast %c1_i32_290 : i32 to vector<8x128xi32>
    %811 = arith.andi %809, %810 : vector<8x128xi32>
    %812 = arith.sitofp %811 : vector<8x128xi32> to vector<8x128xf32>
    %813 = vector.broadcast %789 : vector<8x1xi1> to vector<8x128xi1>
    %814 = arith.andi %12, %813 : vector<8x128xi1>
    %cst_291 = arith.constant 0.000000e+00 : f32
    %815 = vector.broadcast %cst_291 : f32 to vector<8x128xf32>
    %816 = arith.select %814, %812, %815 : vector<8x128xi1>, vector<8x128xf32>
    %817 = arith.addf %801, %816 : vector<8x128xf32>
    %cst_292 = arith.constant 1.000000e+00 : f32
    %cst_293 = arith.constant 0.000000e+00 : f32
    %818 = vector.broadcast %cst_292 : f32 to vector<8x1xf32>
    %819 = vector.broadcast %cst_293 : f32 to vector<8x1xf32>
    %820 = arith.select %789, %818, %819 : vector<8x1xi1>, vector<8x1xf32>
    %821 = arith.addf %783, %820 : vector<8x1xf32>
    %822 = vector.extract_strided_slice %0 {offsets = [0, 65], sizes = [8, 1], strides = [1, 1]} : vector<8x512xf32> to vector<8x1xf32>
    %cst_294 = arith.constant 1.000000e+00 : f32
    %823 = vector.broadcast %cst_294 : f32 to vector<8x1xf32>
    %824 = arith.addf %822, %823 : vector<8x1xf32>
    %825 = arith.fptosi %824 : vector<8x1xf32> to vector<8x1xi32>
    %c0_i32_295 = arith.constant 0 : i32
    %826 = vector.broadcast %c0_i32_295 : i32 to vector<8x1xi32>
    %827 = arith.cmpi sgt, %825, %826 : vector<8x1xi32>
    %c1_i32_296 = arith.constant 1 : i32
    %828 = vector.broadcast %c1_i32_296 : i32 to vector<8x1xi32>
    %829 = arith.subi %825, %828 : vector<8x1xi32>
    %c31_i32_297 = arith.constant 31 : i32
    %830 = vector.broadcast %c31_i32_297 : i32 to vector<8x1xi32>
    %831 = arith.addi %829, %830 : vector<8x1xi32>
    %c-1_i32_298 = arith.constant -1 : i32
    %832 = vector.broadcast %c-1_i32_298 : i32 to vector<8x1xi32>
    %833 = arith.select %827, %831, %832 : vector<8x1xi1>, vector<8x1xi32>
    %834 = vector.broadcast %833 : vector<8x1xi32> to vector<8x128xi32>
    %835 = arith.cmpi eq, %1, %834 : vector<8x128xi32>
    %cst_299 = arith.constant 1.000000e+00 : f32
    %cst_300 = arith.constant 0.000000e+00 : f32
    %836 = vector.broadcast %cst_299 : f32 to vector<8x128xf32>
    %837 = vector.broadcast %cst_300 : f32 to vector<8x128xf32>
    %838 = arith.select %835, %836, %837 : vector<8x128xi1>, vector<8x128xf32>
    %839 = arith.addf %817, %838 : vector<8x128xf32>
    %840 = vector.extract_strided_slice %0 {offsets = [0, 69], sizes = [8, 1], strides = [1, 1]} : vector<8x512xf32> to vector<8x1xf32>
    %cst_301 = arith.constant 1.000000e+00 : f32
    %841 = vector.broadcast %cst_301 : f32 to vector<8x1xf32>
    %842 = arith.addf %840, %841 : vector<8x1xf32>
    %843 = arith.fptosi %842 : vector<8x1xf32> to vector<8x1xi32>
    %c63_i32_302 = arith.constant 63 : i32
    %844 = vector.broadcast %c63_i32_302 : i32 to vector<8x1xi32>
    %845 = arith.minsi %843, %844 : vector<8x1xi32>
    %846 = vector.broadcast %845 : vector<8x1xi32> to vector<8x128xi32>
    %847 = arith.shrsi %846, %7 : vector<8x128xi32>
    %c1_i32_303 = arith.constant 1 : i32
    %848 = vector.broadcast %c1_i32_303 : i32 to vector<8x128xi32>
    %849 = arith.andi %847, %848 : vector<8x128xi32>
    %850 = arith.sitofp %849 : vector<8x128xi32> to vector<8x128xf32>
    %851 = vector.broadcast %827 : vector<8x1xi1> to vector<8x128xi1>
    %852 = arith.andi %12, %851 : vector<8x128xi1>
    %cst_304 = arith.constant 0.000000e+00 : f32
    %853 = vector.broadcast %cst_304 : f32 to vector<8x128xf32>
    %854 = arith.select %852, %850, %853 : vector<8x128xi1>, vector<8x128xf32>
    %855 = arith.addf %839, %854 : vector<8x128xf32>
    %cst_305 = arith.constant 1.000000e+00 : f32
    %cst_306 = arith.constant 0.000000e+00 : f32
    %856 = vector.broadcast %cst_305 : f32 to vector<8x1xf32>
    %857 = vector.broadcast %cst_306 : f32 to vector<8x1xf32>
    %858 = arith.select %827, %856, %857 : vector<8x1xi1>, vector<8x1xf32>
    %859 = arith.addf %821, %858 : vector<8x1xf32>
    %860 = vector.extract_strided_slice %0 {offsets = [0, 66], sizes = [8, 1], strides = [1, 1]} : vector<8x512xf32> to vector<8x1xf32>
    %cst_307 = arith.constant 1.000000e+00 : f32
    %861 = vector.broadcast %cst_307 : f32 to vector<8x1xf32>
    %862 = arith.addf %860, %861 : vector<8x1xf32>
    %863 = arith.fptosi %862 : vector<8x1xf32> to vector<8x1xi32>
    %c0_i32_308 = arith.constant 0 : i32
    %864 = vector.broadcast %c0_i32_308 : i32 to vector<8x1xi32>
    %865 = arith.cmpi sgt, %863, %864 : vector<8x1xi32>
    %c1_i32_309 = arith.constant 1 : i32
    %866 = vector.broadcast %c1_i32_309 : i32 to vector<8x1xi32>
    %867 = arith.subi %863, %866 : vector<8x1xi32>
    %c31_i32_310 = arith.constant 31 : i32
    %868 = vector.broadcast %c31_i32_310 : i32 to vector<8x1xi32>
    %869 = arith.addi %867, %868 : vector<8x1xi32>
    %c-1_i32_311 = arith.constant -1 : i32
    %870 = vector.broadcast %c-1_i32_311 : i32 to vector<8x1xi32>
    %871 = arith.select %865, %869, %870 : vector<8x1xi1>, vector<8x1xi32>
    %872 = vector.broadcast %871 : vector<8x1xi32> to vector<8x128xi32>
    %873 = arith.cmpi eq, %1, %872 : vector<8x128xi32>
    %cst_312 = arith.constant 1.000000e+00 : f32
    %cst_313 = arith.constant 0.000000e+00 : f32
    %874 = vector.broadcast %cst_312 : f32 to vector<8x128xf32>
    %875 = vector.broadcast %cst_313 : f32 to vector<8x128xf32>
    %876 = arith.select %873, %874, %875 : vector<8x128xi1>, vector<8x128xf32>
    %877 = arith.addf %855, %876 : vector<8x128xf32>
    %878 = vector.extract_strided_slice %0 {offsets = [0, 70], sizes = [8, 1], strides = [1, 1]} : vector<8x512xf32> to vector<8x1xf32>
    %cst_314 = arith.constant 1.000000e+00 : f32
    %879 = vector.broadcast %cst_314 : f32 to vector<8x1xf32>
    %880 = arith.addf %878, %879 : vector<8x1xf32>
    %881 = arith.fptosi %880 : vector<8x1xf32> to vector<8x1xi32>
    %c63_i32_315 = arith.constant 63 : i32
    %882 = vector.broadcast %c63_i32_315 : i32 to vector<8x1xi32>
    %883 = arith.minsi %881, %882 : vector<8x1xi32>
    %884 = vector.broadcast %883 : vector<8x1xi32> to vector<8x128xi32>
    %885 = arith.shrsi %884, %7 : vector<8x128xi32>
    %c1_i32_316 = arith.constant 1 : i32
    %886 = vector.broadcast %c1_i32_316 : i32 to vector<8x128xi32>
    %887 = arith.andi %885, %886 : vector<8x128xi32>
    %888 = arith.sitofp %887 : vector<8x128xi32> to vector<8x128xf32>
    %889 = vector.broadcast %865 : vector<8x1xi1> to vector<8x128xi1>
    %890 = arith.andi %12, %889 : vector<8x128xi1>
    %cst_317 = arith.constant 0.000000e+00 : f32
    %891 = vector.broadcast %cst_317 : f32 to vector<8x128xf32>
    %892 = arith.select %890, %888, %891 : vector<8x128xi1>, vector<8x128xf32>
    %893 = arith.addf %877, %892 : vector<8x128xf32>
    %cst_318 = arith.constant 1.000000e+00 : f32
    %cst_319 = arith.constant 0.000000e+00 : f32
    %894 = vector.broadcast %cst_318 : f32 to vector<8x1xf32>
    %895 = vector.broadcast %cst_319 : f32 to vector<8x1xf32>
    %896 = arith.select %865, %894, %895 : vector<8x1xi1>, vector<8x1xf32>
    %897 = arith.addf %859, %896 : vector<8x1xf32>
    %898 = vector.extract_strided_slice %0 {offsets = [0, 67], sizes = [8, 1], strides = [1, 1]} : vector<8x512xf32> to vector<8x1xf32>
    %cst_320 = arith.constant 1.000000e+00 : f32
    %899 = vector.broadcast %cst_320 : f32 to vector<8x1xf32>
    %900 = arith.addf %898, %899 : vector<8x1xf32>
    %901 = arith.fptosi %900 : vector<8x1xf32> to vector<8x1xi32>
    %c0_i32_321 = arith.constant 0 : i32
    %902 = vector.broadcast %c0_i32_321 : i32 to vector<8x1xi32>
    %903 = arith.cmpi sgt, %901, %902 : vector<8x1xi32>
    %c1_i32_322 = arith.constant 1 : i32
    %904 = vector.broadcast %c1_i32_322 : i32 to vector<8x1xi32>
    %905 = arith.subi %901, %904 : vector<8x1xi32>
    %c31_i32_323 = arith.constant 31 : i32
    %906 = vector.broadcast %c31_i32_323 : i32 to vector<8x1xi32>
    %907 = arith.addi %905, %906 : vector<8x1xi32>
    %c-1_i32_324 = arith.constant -1 : i32
    %908 = vector.broadcast %c-1_i32_324 : i32 to vector<8x1xi32>
    %909 = arith.select %903, %907, %908 : vector<8x1xi1>, vector<8x1xi32>
    %910 = vector.broadcast %909 : vector<8x1xi32> to vector<8x128xi32>
    %911 = arith.cmpi eq, %1, %910 : vector<8x128xi32>
    %cst_325 = arith.constant 1.000000e+00 : f32
    %cst_326 = arith.constant 0.000000e+00 : f32
    %912 = vector.broadcast %cst_325 : f32 to vector<8x128xf32>
    %913 = vector.broadcast %cst_326 : f32 to vector<8x128xf32>
    %914 = arith.select %911, %912, %913 : vector<8x128xi1>, vector<8x128xf32>
    %915 = arith.addf %893, %914 : vector<8x128xf32>
    %916 = vector.extract_strided_slice %0 {offsets = [0, 71], sizes = [8, 1], strides = [1, 1]} : vector<8x512xf32> to vector<8x1xf32>
    %cst_327 = arith.constant 1.000000e+00 : f32
    %917 = vector.broadcast %cst_327 : f32 to vector<8x1xf32>
    %918 = arith.addf %916, %917 : vector<8x1xf32>
    %919 = arith.fptosi %918 : vector<8x1xf32> to vector<8x1xi32>
    %c63_i32_328 = arith.constant 63 : i32
    %920 = vector.broadcast %c63_i32_328 : i32 to vector<8x1xi32>
    %921 = arith.minsi %919, %920 : vector<8x1xi32>
    %922 = vector.broadcast %921 : vector<8x1xi32> to vector<8x128xi32>
    %923 = arith.shrsi %922, %7 : vector<8x128xi32>
    %c1_i32_329 = arith.constant 1 : i32
    %924 = vector.broadcast %c1_i32_329 : i32 to vector<8x128xi32>
    %925 = arith.andi %923, %924 : vector<8x128xi32>
    %926 = arith.sitofp %925 : vector<8x128xi32> to vector<8x128xf32>
    %927 = vector.broadcast %903 : vector<8x1xi1> to vector<8x128xi1>
    %928 = arith.andi %12, %927 : vector<8x128xi1>
    %cst_330 = arith.constant 0.000000e+00 : f32
    %929 = vector.broadcast %cst_330 : f32 to vector<8x128xf32>
    %930 = arith.select %928, %926, %929 : vector<8x128xi1>, vector<8x128xf32>
    %931 = arith.addf %915, %930 : vector<8x128xf32>
    %cst_331 = arith.constant 1.000000e+00 : f32
    %cst_332 = arith.constant 0.000000e+00 : f32
    %932 = vector.broadcast %cst_331 : f32 to vector<8x1xf32>
    %933 = vector.broadcast %cst_332 : f32 to vector<8x1xf32>
    %934 = arith.select %903, %932, %933 : vector<8x1xi1>, vector<8x1xf32>
    %935 = arith.addf %897, %934 : vector<8x1xf32>
    %936 = vector.extract_strided_slice %0 {offsets = [0, 53], sizes = [8, 1], strides = [1, 1]} : vector<8x512xf32> to vector<8x1xf32>
    %cst_333 = arith.constant 1.000000e+00 : f32
    %937 = vector.broadcast %cst_333 : f32 to vector<8x1xf32>
    %938 = arith.addf %936, %937 : vector<8x1xf32>
    %939 = arith.fptosi %938 : vector<8x1xf32> to vector<8x1xi32>
    %c0_i32_334 = arith.constant 0 : i32
    %940 = vector.broadcast %c0_i32_334 : i32 to vector<8x1xi32>
    %941 = arith.cmpi sgt, %939, %940 : vector<8x1xi32>
    %cst_335 = arith.constant 1.000000e+00 : f32
    %cst_336 = arith.constant 0.000000e+00 : f32
    %942 = vector.broadcast %cst_335 : f32 to vector<8x1xf32>
    %943 = vector.broadcast %cst_336 : f32 to vector<8x1xf32>
    %944 = arith.select %941, %942, %943 : vector<8x1xi1>, vector<8x1xf32>
    %c0_i32_337 = arith.constant 0 : i32
    %945 = vector.broadcast %c0_i32_337 : i32 to vector<8x1xi32>
    %946 = arith.cmpi sgt, %939, %945 : vector<8x1xi32>
    %c1_i32_338 = arith.constant 1 : i32
    %947 = vector.broadcast %c1_i32_338 : i32 to vector<8x1xi32>
    %948 = arith.subi %939, %947 : vector<8x1xi32>
    %c60_i32_339 = arith.constant 60 : i32
    %949 = vector.broadcast %c60_i32_339 : i32 to vector<8x1xi32>
    %950 = arith.addi %948, %949 : vector<8x1xi32>
    %c-1_i32_340 = arith.constant -1 : i32
    %951 = vector.broadcast %c-1_i32_340 : i32 to vector<8x1xi32>
    %952 = arith.select %946, %950, %951 : vector<8x1xi1>, vector<8x1xi32>
    %953 = vector.broadcast %952 : vector<8x1xi32> to vector<8x128xi32>
    %954 = arith.cmpi eq, %1, %953 : vector<8x128xi32>
    %cst_341 = arith.constant 1.000000e+00 : f32
    %cst_342 = arith.constant 0.000000e+00 : f32
    %955 = vector.broadcast %cst_341 : f32 to vector<8x128xf32>
    %956 = vector.broadcast %cst_342 : f32 to vector<8x128xf32>
    %957 = arith.select %954, %955, %956 : vector<8x128xi1>, vector<8x128xf32>
    %958 = arith.addf %931, %957 : vector<8x128xf32>
    %959 = vector.extract_strided_slice %0 {offsets = [0, 55], sizes = [8, 1], strides = [1, 1]} : vector<8x512xf32> to vector<8x1xf32>
    %cst_343 = arith.constant 1.000000e+00 : f32
    %960 = vector.broadcast %cst_343 : f32 to vector<8x1xf32>
    %961 = arith.addf %959, %960 : vector<8x1xf32>
    %962 = arith.fptosi %961 : vector<8x1xf32> to vector<8x1xi32>
    %c0_i32_344 = arith.constant 0 : i32
    %963 = vector.broadcast %c0_i32_344 : i32 to vector<8x1xi32>
    %964 = arith.cmpi sgt, %962, %963 : vector<8x1xi32>
    %cst_345 = arith.constant 1.000000e+00 : f32
    %cst_346 = arith.constant 0.000000e+00 : f32
    %965 = vector.broadcast %cst_345 : f32 to vector<8x1xf32>
    %966 = vector.broadcast %cst_346 : f32 to vector<8x1xf32>
    %967 = arith.select %964, %965, %966 : vector<8x1xi1>, vector<8x1xf32>
    %c0_i32_347 = arith.constant 0 : i32
    %968 = vector.broadcast %c0_i32_347 : i32 to vector<8x1xi32>
    %969 = arith.cmpi sgt, %962, %968 : vector<8x1xi32>
    %c1_i32_348 = arith.constant 1 : i32
    %970 = vector.broadcast %c1_i32_348 : i32 to vector<8x1xi32>
    %971 = arith.subi %962, %970 : vector<8x1xi32>
    %c75_i32_349 = arith.constant 75 : i32
    %972 = vector.broadcast %c75_i32_349 : i32 to vector<8x1xi32>
    %973 = arith.addi %971, %972 : vector<8x1xi32>
    %c-1_i32_350 = arith.constant -1 : i32
    %974 = vector.broadcast %c-1_i32_350 : i32 to vector<8x1xi32>
    %975 = arith.select %969, %973, %974 : vector<8x1xi1>, vector<8x1xi32>
    %976 = vector.broadcast %975 : vector<8x1xi32> to vector<8x128xi32>
    %977 = arith.cmpi eq, %1, %976 : vector<8x128xi32>
    %cst_351 = arith.constant 1.000000e+00 : f32
    %cst_352 = arith.constant 0.000000e+00 : f32
    %978 = vector.broadcast %cst_351 : f32 to vector<8x128xf32>
    %979 = vector.broadcast %cst_352 : f32 to vector<8x128xf32>
    %980 = arith.select %977, %978, %979 : vector<8x128xi1>, vector<8x128xf32>
    %981 = arith.addf %958, %980 : vector<8x128xf32>
    %982 = vector.extract_strided_slice %0 {offsets = [0, 57], sizes = [8, 1], strides = [1, 1]} : vector<8x512xf32> to vector<8x1xf32>
    %cst_353 = arith.constant 1.000000e+00 : f32
    %983 = vector.broadcast %cst_353 : f32 to vector<8x1xf32>
    %984 = arith.addf %982, %983 : vector<8x1xf32>
    %985 = arith.fptosi %984 : vector<8x1xf32> to vector<8x1xi32>
    %c0_i32_354 = arith.constant 0 : i32
    %986 = vector.broadcast %c0_i32_354 : i32 to vector<8x1xi32>
    %987 = arith.cmpi sgt, %962, %986 : vector<8x1xi32>
    %c0_i32_355 = arith.constant 0 : i32
    %988 = vector.broadcast %c0_i32_355 : i32 to vector<8x1xi32>
    %989 = arith.cmpi sgt, %985, %988 : vector<8x1xi32>
    %990 = arith.andi %987, %989 : vector<8x1xi1>
    %c1_i32_356 = arith.constant 1 : i32
    %991 = vector.broadcast %c1_i32_356 : i32 to vector<8x1xi32>
    %992 = arith.subi %985, %991 : vector<8x1xi32>
    %c90_i32_357 = arith.constant 90 : i32
    %993 = vector.broadcast %c90_i32_357 : i32 to vector<8x1xi32>
    %994 = arith.addi %992, %993 : vector<8x1xi32>
    %c-1_i32_358 = arith.constant -1 : i32
    %995 = vector.broadcast %c-1_i32_358 : i32 to vector<8x1xi32>
    %996 = arith.select %990, %994, %995 : vector<8x1xi1>, vector<8x1xi32>
    %997 = vector.broadcast %996 : vector<8x1xi32> to vector<8x128xi32>
    %998 = arith.cmpi eq, %1, %997 : vector<8x128xi32>
    %cst_359 = arith.constant 1.000000e+00 : f32
    %cst_360 = arith.constant 0.000000e+00 : f32
    %999 = vector.broadcast %cst_359 : f32 to vector<8x128xf32>
    %1000 = vector.broadcast %cst_360 : f32 to vector<8x128xf32>
    %1001 = arith.select %998, %999, %1000 : vector<8x128xi1>, vector<8x128xf32>
    %1002 = arith.addf %981, %1001 : vector<8x128xf32>
    %1003 = vector.extract_strided_slice %0 {offsets = [0, 73], sizes = [8, 1], strides = [1, 1]} : vector<8x512xf32> to vector<8x1xf32>
    %cst_361 = arith.constant 1.000000e+00 : f32
    %1004 = vector.broadcast %cst_361 : f32 to vector<8x1xf32>
    %1005 = arith.addf %1003, %1004 : vector<8x1xf32>
    %1006 = arith.fptosi %1005 : vector<8x1xf32> to vector<8x1xi32>
    %c0_i32_362 = arith.constant 0 : i32
    %1007 = vector.broadcast %c0_i32_362 : i32 to vector<8x1xi32>
    %1008 = arith.cmpi sgt, %1006, %1007 : vector<8x1xi32>
    %c1_i32_363 = arith.constant 1 : i32
    %1009 = vector.broadcast %c1_i32_363 : i32 to vector<8x1xi32>
    %1010 = arith.subi %1006, %1009 : vector<8x1xi32>
    %c97_i32_364 = arith.constant 97 : i32
    %1011 = vector.broadcast %c97_i32_364 : i32 to vector<8x1xi32>
    %1012 = arith.addi %1010, %1011 : vector<8x1xi32>
    %c-1_i32_365 = arith.constant -1 : i32
    %1013 = vector.broadcast %c-1_i32_365 : i32 to vector<8x1xi32>
    %1014 = arith.select %1008, %1012, %1013 : vector<8x1xi1>, vector<8x1xi32>
    %1015 = vector.broadcast %1014 : vector<8x1xi32> to vector<8x128xi32>
    %1016 = arith.cmpi eq, %1, %1015 : vector<8x128xi32>
    %cst_366 = arith.constant 1.000000e+00 : f32
    %cst_367 = arith.constant 0.000000e+00 : f32
    %1017 = vector.broadcast %cst_366 : f32 to vector<8x128xf32>
    %1018 = vector.broadcast %cst_367 : f32 to vector<8x128xf32>
    %1019 = arith.select %1016, %1017, %1018 : vector<8x128xi1>, vector<8x128xf32>
    %1020 = arith.addf %1002, %1019 : vector<8x128xf32>
    %1021 = vector.extract_strided_slice %0 {offsets = [0, 39], sizes = [8, 1], strides = [1, 1]} : vector<8x512xf32> to vector<8x1xf32>
    %cst_368 = arith.constant 1.000000e+00 : f32
    %1022 = vector.broadcast %cst_368 : f32 to vector<8x1xf32>
    %1023 = arith.addf %1021, %1022 : vector<8x1xf32>
    %1024 = arith.fptosi %1023 : vector<8x1xf32> to vector<8x1xi32>
    %c0_i32_369 = arith.constant 0 : i32
    %1025 = vector.broadcast %c0_i32_369 : i32 to vector<8x1xi32>
    %1026 = arith.cmpi sgt, %1024, %1025 : vector<8x1xi32>
    %c1_i32_370 = arith.constant 1 : i32
    %1027 = vector.broadcast %c1_i32_370 : i32 to vector<8x1xi32>
    %1028 = arith.subi %1024, %1027 : vector<8x1xi32>
    %c119_i32_371 = arith.constant 119 : i32
    %1029 = vector.broadcast %c119_i32_371 : i32 to vector<8x1xi32>
    %1030 = arith.addi %1028, %1029 : vector<8x1xi32>
    %c-1_i32_372 = arith.constant -1 : i32
    %1031 = vector.broadcast %c-1_i32_372 : i32 to vector<8x1xi32>
    %1032 = arith.select %1026, %1030, %1031 : vector<8x1xi1>, vector<8x1xi32>
    %1033 = vector.broadcast %1032 : vector<8x1xi32> to vector<8x128xi32>
    %1034 = arith.cmpi eq, %1, %1033 : vector<8x128xi32>
    %cst_373 = arith.constant 1.000000e+00 : f32
    %cst_374 = arith.constant 0.000000e+00 : f32
    %1035 = vector.broadcast %cst_373 : f32 to vector<8x128xf32>
    %1036 = vector.broadcast %cst_374 : f32 to vector<8x128xf32>
    %1037 = arith.select %1034, %1035, %1036 : vector<8x128xi1>, vector<8x128xf32>
    %1038 = arith.addf %1020, %1037 : vector<8x128xf32>
    %1039 = vector.extract_strided_slice %0 {offsets = [0, 50], sizes = [8, 1], strides = [1, 1]} : vector<8x512xf32> to vector<8x1xf32>
    %cst_375 = arith.constant 1.000000e+00 : f32
    %1040 = vector.broadcast %cst_375 : f32 to vector<8x1xf32>
    %1041 = arith.addf %1039, %1040 : vector<8x1xf32>
    %1042 = arith.fptosi %1041 : vector<8x1xf32> to vector<8x1xi32>
    %c0_i32_376 = arith.constant 0 : i32
    %1043 = vector.broadcast %c0_i32_376 : i32 to vector<8x1xi32>
    %1044 = arith.cmpi sgt, %1042, %1043 : vector<8x1xi32>
    %c1_i32_377 = arith.constant 1 : i32
    %1045 = vector.broadcast %c1_i32_377 : i32 to vector<8x1xi32>
    %1046 = arith.subi %1042, %1045 : vector<8x1xi32>
    %c126_i32_378 = arith.constant 126 : i32
    %1047 = vector.broadcast %c126_i32_378 : i32 to vector<8x1xi32>
    %1048 = arith.addi %1046, %1047 : vector<8x1xi32>
    %c-1_i32_379 = arith.constant -1 : i32
    %1049 = vector.broadcast %c-1_i32_379 : i32 to vector<8x1xi32>
    %1050 = arith.select %1044, %1048, %1049 : vector<8x1xi1>, vector<8x1xi32>
    %1051 = vector.broadcast %1050 : vector<8x1xi32> to vector<8x128xi32>
    %1052 = arith.cmpi eq, %1, %1051 : vector<8x128xi32>
    %cst_380 = arith.constant 1.000000e+00 : f32
    %cst_381 = arith.constant 0.000000e+00 : f32
    %1053 = vector.broadcast %cst_380 : f32 to vector<8x128xf32>
    %1054 = vector.broadcast %cst_381 : f32 to vector<8x128xf32>
    %1055 = arith.select %1052, %1053, %1054 : vector<8x128xi1>, vector<8x128xf32>
    %1056 = arith.addf %1038, %1055 : vector<8x128xf32>
    %1057 = vector.extract_strided_slice %0 {offsets = [0, 75], sizes = [8, 1], strides = [1, 1]} : vector<8x512xf32> to vector<8x1xf32>
    %cst_382 = arith.constant 1.000000e+00 : f32
    %1058 = vector.broadcast %cst_382 : f32 to vector<8x1xf32>
    %1059 = arith.addf %1057, %1058 : vector<8x1xf32>
    %1060 = arith.fptosi %1059 : vector<8x1xf32> to vector<8x1xi32>
    %c1_i32_383 = arith.constant 1 : i32
    %1061 = vector.broadcast %c1_i32_383 : i32 to vector<8x1xi32>
    %1062 = arith.subi %1060, %1061 : vector<8x1xi32>
    %c0_i32_384 = arith.constant 0 : i32
    %c1_i32_385 = arith.constant 1 : i32
    %1063 = vector.broadcast %c0_i32_384 : i32 to vector<8x1xi32>
    %1064 = arith.maxsi %1063, %1062 : vector<8x1xi32>
    %1065 = vector.broadcast %c1_i32_385 : i32 to vector<8x1xi32>
    %1066 = arith.minsi %1065, %1064 : vector<8x1xi32>
    %1067 = arith.sitofp %1066 : vector<8x1xi32> to vector<8x1xf32>
    %c116_i32_386 = arith.constant 116 : i32
    %1068 = vector.broadcast %c116_i32_386 : i32 to vector<8x128xi32>
    %1069 = arith.cmpi eq, %1, %1068 : vector<8x128xi32>
    %cst_387 = arith.constant 0.000000e+00 : f32
    %1070 = vector.shape_cast %1067 : vector<8x1xf32> to vector<8x1xf32>
    %1071 = vector.broadcast %1070 : vector<8x1xf32> to vector<8x128xf32>
    %1072 = vector.broadcast %cst_387 : f32 to vector<8x128xf32>
    %1073 = arith.select %1069, %1071, %1072 : vector<8x128xi1>, vector<8x128xf32>
    %1074 = arith.addf %1056, %1073 : vector<8x128xf32>
    %1075 = vector.extract_strided_slice %0 {offsets = [0, 72], sizes = [8, 1], strides = [1, 1]} : vector<8x512xf32> to vector<8x1xf32>
    %cst_388 = arith.constant 1.000000e+00 : f32
    %1076 = vector.broadcast %cst_388 : f32 to vector<8x1xf32>
    %1077 = arith.addf %1075, %1076 : vector<8x1xf32>
    %1078 = arith.fptosi %1077 : vector<8x1xf32> to vector<8x1xi32>
    %c0_i32_389 = arith.constant 0 : i32
    %1079 = vector.broadcast %c0_i32_389 : i32 to vector<8x1xi32>
    %1080 = arith.cmpi sgt, %1078, %1079 : vector<8x1xi32>
    %cst_390 = arith.constant 1.000000e+00 : f32
    %cst_391 = arith.constant 0.000000e+00 : f32
    %1081 = vector.broadcast %cst_390 : f32 to vector<8x1xf32>
    %1082 = vector.broadcast %cst_391 : f32 to vector<8x1xf32>
    %1083 = arith.select %1080, %1081, %1082 : vector<8x1xi1>, vector<8x1xf32>
    %c117_i32_392 = arith.constant 117 : i32
    %1084 = vector.broadcast %c117_i32_392 : i32 to vector<8x128xi32>
    %1085 = arith.cmpi eq, %1, %1084 : vector<8x128xi32>
    %cst_393 = arith.constant 0.000000e+00 : f32
    %1086 = vector.shape_cast %1083 : vector<8x1xf32> to vector<8x1xf32>
    %1087 = vector.broadcast %1086 : vector<8x1xf32> to vector<8x128xf32>
    %1088 = vector.broadcast %cst_393 : f32 to vector<8x128xf32>
    %1089 = arith.select %1085, %1087, %1088 : vector<8x128xi1>, vector<8x128xf32>
    %1090 = arith.addf %1074, %1089 : vector<8x128xf32>
    %c118_i32_394 = arith.constant 118 : i32
    %1091 = vector.broadcast %c118_i32_394 : i32 to vector<8x128xi32>
    %1092 = arith.cmpi eq, %1, %1091 : vector<8x128xi32>
    %c0_i32_395 = arith.constant 0 : i32
    %1093 = vector.broadcast %c0_i32_395 : i32 to vector<8x1xi32>
    %1094 = arith.cmpi sgt, %1006, %1093 : vector<8x1xi32>
    %cst_396 = arith.constant 0.000000e+00 : f32
    %cst_397 = arith.constant 1.000000e+00 : f32
    %1095 = vector.broadcast %cst_396 : f32 to vector<8x1xf32>
    %1096 = vector.broadcast %cst_397 : f32 to vector<8x1xf32>
    %1097 = arith.select %1094, %1095, %1096 : vector<8x1xi1>, vector<8x1xf32>
    %cst_398 = arith.constant 0.000000e+00 : f32
    %1098 = vector.shape_cast %1097 : vector<8x1xf32> to vector<8x1xf32>
    %1099 = vector.broadcast %1098 : vector<8x1xf32> to vector<8x128xf32>
    %1100 = vector.broadcast %cst_398 : f32 to vector<8x128xf32>
    %1101 = arith.select %1092, %1099, %1100 : vector<8x128xi1>, vector<8x128xf32>
    %1102 = arith.addf %1090, %1101 : vector<8x128xf32>
    %1103 = vector.extract_strided_slice %0 {offsets = [0, 43], sizes = [8, 1], strides = [1, 1]} : vector<8x512xf32> to vector<8x1xf32>
    %cst_399 = arith.constant 1.000000e+01 : f32
    %1104 = vector.broadcast %cst_399 : f32 to vector<8x1xf32>
    %1105 = arith.mulf %1103, %1104 : vector<8x1xf32>
    %cst_400 = arith.constant 0.000000e+00 : f32
    %cst_401 = arith.constant 1.000000e+01 : f32
    %1106 = vector.broadcast %cst_400 : f32 to vector<8x1xf32>
    %1107 = arith.maximumf %1106, %1105 : vector<8x1xf32>
    %1108 = vector.broadcast %cst_401 : f32 to vector<8x1xf32>
    %1109 = arith.minimumf %1108, %1107 : vector<8x1xf32>
    %1110 = arith.fptosi %1109 : vector<8x1xf32> to vector<8x1xi32>
    %c0_i32_402 = arith.constant 0 : i32
    %1111 = vector.broadcast %c0_i32_402 : i32 to vector<8x1xi32>
    %1112 = arith.cmpi sgt, %1110, %1111 : vector<8x1xi32>
    %c1_i32_403 = arith.constant 1 : i32
    %1113 = vector.broadcast %c1_i32_403 : i32 to vector<8x1xi32>
    %1114 = arith.subi %1110, %1113 : vector<8x1xi32>
    %c0_i32_404 = arith.constant 0 : i32
    %1115 = vector.broadcast %c0_i32_404 : i32 to vector<8x1xi32>
    %1116 = arith.addi %1114, %1115 : vector<8x1xi32>
    %c-1_i32_405 = arith.constant -1 : i32
    %1117 = vector.broadcast %c-1_i32_405 : i32 to vector<8x1xi32>
    %1118 = arith.select %1112, %1116, %1117 : vector<8x1xi1>, vector<8x1xi32>
    %1119 = vector.broadcast %1118 : vector<8x1xi32> to vector<8x128xi32>
    %1120 = arith.cmpi eq, %1, %1119 : vector<8x128xi32>
    %cst_406 = arith.constant 1.000000e+00 : f32
    %cst_407 = arith.constant 0.000000e+00 : f32
    %1121 = vector.broadcast %cst_406 : f32 to vector<8x128xf32>
    %1122 = vector.broadcast %cst_407 : f32 to vector<8x128xf32>
    %1123 = arith.select %1120, %1121, %1122 : vector<8x128xi1>, vector<8x128xf32>
    %1124 = vector.extract_strided_slice %0 {offsets = [0, 49], sizes = [8, 1], strides = [1, 1]} : vector<8x512xf32> to vector<8x1xf32>
    %cst_408 = arith.constant 1.000000e+00 : f32
    %1125 = vector.broadcast %cst_408 : f32 to vector<8x1xf32>
    %1126 = arith.addf %1124, %1125 : vector<8x1xf32>
    %1127 = arith.fptosi %1126 : vector<8x1xf32> to vector<8x1xi32>
    %c0_i32_409 = arith.constant 0 : i32
    %1128 = vector.broadcast %c0_i32_409 : i32 to vector<8x1xi32>
    %1129 = arith.cmpi sgt, %1127, %1128 : vector<8x1xi32>
    %c1_i32_410 = arith.constant 1 : i32
    %1130 = vector.broadcast %c1_i32_410 : i32 to vector<8x1xi32>
    %1131 = arith.subi %1127, %1130 : vector<8x1xi32>
    %c10_i32_411 = arith.constant 10 : i32
    %1132 = vector.broadcast %c10_i32_411 : i32 to vector<8x1xi32>
    %1133 = arith.addi %1131, %1132 : vector<8x1xi32>
    %c-1_i32_412 = arith.constant -1 : i32
    %1134 = vector.broadcast %c-1_i32_412 : i32 to vector<8x1xi32>
    %1135 = arith.select %1129, %1133, %1134 : vector<8x1xi1>, vector<8x1xi32>
    %1136 = vector.broadcast %1135 : vector<8x1xi32> to vector<8x128xi32>
    %1137 = arith.cmpi eq, %1, %1136 : vector<8x128xi32>
    %cst_413 = arith.constant 1.000000e+00 : f32
    %cst_414 = arith.constant 0.000000e+00 : f32
    %1138 = vector.broadcast %cst_413 : f32 to vector<8x128xf32>
    %1139 = vector.broadcast %cst_414 : f32 to vector<8x128xf32>
    %1140 = arith.select %1137, %1138, %1139 : vector<8x128xi1>, vector<8x128xf32>
    %1141 = arith.addf %1123, %1140 : vector<8x128xf32>
    %1142 = vector.extract_strided_slice %0 {offsets = [0, 52], sizes = [8, 1], strides = [1, 1]} : vector<8x512xf32> to vector<8x1xf32>
    %cst_415 = arith.constant 1.000000e+00 : f32
    %1143 = vector.broadcast %cst_415 : f32 to vector<8x1xf32>
    %1144 = arith.addf %1142, %1143 : vector<8x1xf32>
    %1145 = arith.fptosi %1144 : vector<8x1xf32> to vector<8x1xi32>
    %c0_i32_416 = arith.constant 0 : i32
    %1146 = vector.broadcast %c0_i32_416 : i32 to vector<8x1xi32>
    %1147 = arith.cmpi sgt, %1145, %1146 : vector<8x1xi32>
    %c1_i32_417 = arith.constant 1 : i32
    %1148 = vector.broadcast %c1_i32_417 : i32 to vector<8x1xi32>
    %1149 = arith.subi %1145, %1148 : vector<8x1xi32>
    %c12_i32_418 = arith.constant 12 : i32
    %1150 = vector.broadcast %c12_i32_418 : i32 to vector<8x1xi32>
    %1151 = arith.addi %1149, %1150 : vector<8x1xi32>
    %c-1_i32_419 = arith.constant -1 : i32
    %1152 = vector.broadcast %c-1_i32_419 : i32 to vector<8x1xi32>
    %1153 = arith.select %1147, %1151, %1152 : vector<8x1xi1>, vector<8x1xi32>
    %1154 = vector.broadcast %1153 : vector<8x1xi32> to vector<8x128xi32>
    %1155 = arith.cmpi eq, %1, %1154 : vector<8x128xi32>
    %cst_420 = arith.constant 1.000000e+00 : f32
    %cst_421 = arith.constant 0.000000e+00 : f32
    %1156 = vector.broadcast %cst_420 : f32 to vector<8x128xf32>
    %1157 = vector.broadcast %cst_421 : f32 to vector<8x128xf32>
    %1158 = arith.select %1155, %1156, %1157 : vector<8x128xi1>, vector<8x128xf32>
    %1159 = arith.addf %1141, %1158 : vector<8x128xf32>
    %1160 = vector.extract_strided_slice %0 {offsets = [0, 51], sizes = [8, 1], strides = [1, 1]} : vector<8x512xf32> to vector<8x1xf32>
    %1161 = arith.fptosi %1160 : vector<8x1xf32> to vector<8x1xi32>
    %c1_i32_422 = arith.constant 1 : i32
    %1162 = vector.broadcast %c1_i32_422 : i32 to vector<8x1xi32>
    %1163 = arith.maxsi %1161, %1162 : vector<8x1xi32>
    %c1_i32_423 = arith.constant 1 : i32
    %1164 = vector.broadcast %c1_i32_423 : i32 to vector<8x1xi32>
    %1165 = arith.subi %1163, %1164 : vector<8x1xi32>
    %c15_i32_424 = arith.constant 15 : i32
    %1166 = vector.broadcast %c15_i32_424 : i32 to vector<8x1xi32>
    %1167 = arith.addi %1165, %1166 : vector<8x1xi32>
    %1168 = vector.broadcast %1167 : vector<8x1xi32> to vector<8x128xi32>
    %1169 = arith.cmpi eq, %1, %1168 : vector<8x128xi32>
    %cst_425 = arith.constant 1.000000e+00 : f32
    %cst_426 = arith.constant 0.000000e+00 : f32
    %1170 = vector.broadcast %cst_425 : f32 to vector<8x128xf32>
    %1171 = vector.broadcast %cst_426 : f32 to vector<8x128xf32>
    %1172 = arith.select %1169, %1170, %1171 : vector<8x128xi1>, vector<8x128xf32>
    %1173 = arith.addf %1159, %1172 : vector<8x128xf32>
    %1174 = vector.extract_strided_slice %0 {offsets = [0, 59], sizes = [8, 1], strides = [1, 1]} : vector<8x512xf32> to vector<8x1xf32>
    %cst_427 = arith.constant 1.000000e+00 : f32
    %1175 = vector.broadcast %cst_427 : f32 to vector<8x1xf32>
    %1176 = arith.addf %1174, %1175 : vector<8x1xf32>
    %1177 = arith.fptosi %1176 : vector<8x1xf32> to vector<8x1xi32>
    %c0_i32_428 = arith.constant 0 : i32
    %1178 = vector.broadcast %c0_i32_428 : i32 to vector<8x1xi32>
    %1179 = arith.cmpi sgt, %1177, %1178 : vector<8x1xi32>
    %c1_i32_429 = arith.constant 1 : i32
    %1180 = vector.broadcast %c1_i32_429 : i32 to vector<8x1xi32>
    %1181 = arith.subi %1177, %1180 : vector<8x1xi32>
    %c115_i32_430 = arith.constant 115 : i32
    %1182 = vector.broadcast %c115_i32_430 : i32 to vector<8x1xi32>
    %1183 = arith.addi %1181, %1182 : vector<8x1xi32>
    %c-1_i32_431 = arith.constant -1 : i32
    %1184 = vector.broadcast %c-1_i32_431 : i32 to vector<8x1xi32>
    %1185 = arith.select %1179, %1183, %1184 : vector<8x1xi1>, vector<8x1xi32>
    %1186 = vector.broadcast %1185 : vector<8x1xi32> to vector<8x128xi32>
    %1187 = arith.cmpi eq, %1, %1186 : vector<8x128xi32>
    %cst_432 = arith.constant 1.000000e+00 : f32
    %cst_433 = arith.constant 0.000000e+00 : f32
    %1188 = vector.broadcast %cst_432 : f32 to vector<8x128xf32>
    %1189 = vector.broadcast %cst_433 : f32 to vector<8x128xf32>
    %1190 = arith.select %1187, %1188, %1189 : vector<8x128xi1>, vector<8x128xf32>
    %1191 = arith.addf %1173, %1190 : vector<8x128xf32>
    %1192 = vector.extract_strided_slice %0 {offsets = [0, 60], sizes = [8, 1], strides = [1, 1]} : vector<8x512xf32> to vector<8x1xf32>
    %cst_434 = arith.constant 1.000000e+00 : f32
    %1193 = vector.broadcast %cst_434 : f32 to vector<8x1xf32>
    %1194 = arith.addf %1192, %1193 : vector<8x1xf32>
    %1195 = arith.fptosi %1194 : vector<8x1xf32> to vector<8x1xi32>
    %c0_i32_435 = arith.constant 0 : i32
    %1196 = vector.broadcast %c0_i32_435 : i32 to vector<8x1xi32>
    %1197 = arith.cmpi sgt, %1195, %1196 : vector<8x1xi32>
    %c1_i32_436 = arith.constant 1 : i32
    %1198 = vector.broadcast %c1_i32_436 : i32 to vector<8x1xi32>
    %1199 = arith.subi %1195, %1198 : vector<8x1xi32>
    %c122_i32_437 = arith.constant 122 : i32
    %1200 = vector.broadcast %c122_i32_437 : i32 to vector<8x1xi32>
    %1201 = arith.addi %1199, %1200 : vector<8x1xi32>
    %c-1_i32_438 = arith.constant -1 : i32
    %1202 = vector.broadcast %c-1_i32_438 : i32 to vector<8x1xi32>
    %1203 = arith.select %1197, %1201, %1202 : vector<8x1xi1>, vector<8x1xi32>
    %1204 = vector.broadcast %1203 : vector<8x1xi32> to vector<8x128xi32>
    %1205 = arith.cmpi eq, %1, %1204 : vector<8x128xi32>
    %cst_439 = arith.constant 1.000000e+00 : f32
    %cst_440 = arith.constant 0.000000e+00 : f32
    %1206 = vector.broadcast %cst_439 : f32 to vector<8x128xf32>
    %1207 = vector.broadcast %cst_440 : f32 to vector<8x128xf32>
    %1208 = arith.select %1205, %1206, %1207 : vector<8x128xi1>, vector<8x128xf32>
    %1209 = arith.addf %1191, %1208 : vector<8x128xf32>
    %1210 = vector.extract_strided_slice %0 {offsets = [0, 61], sizes = [8, 1], strides = [1, 1]} : vector<8x512xf32> to vector<8x1xf32>
    %cst_441 = arith.constant 1.000000e+00 : f32
    %1211 = vector.broadcast %cst_441 : f32 to vector<8x1xf32>
    %1212 = arith.addf %1210, %1211 : vector<8x1xf32>
    %1213 = arith.fptosi %1212 : vector<8x1xf32> to vector<8x1xi32>
    %1214 = arith.sitofp %1213 : vector<8x1xi32> to vector<8x1xf32>
    %1215 = math.sqrt %1214 : vector<8x1xf32>
    %1216 = math.floor %1215 : vector<8x1xf32>
    %1217 = arith.fptosi %1216 : vector<8x1xf32> to vector<8x1xi32>
    %c0_i32_442 = arith.constant 0 : i32
    %1218 = vector.broadcast %c0_i32_442 : i32 to vector<8x1xi32>
    %1219 = arith.cmpi sgt, %1217, %1218 : vector<8x1xi32>
    %c1_i32_443 = arith.constant 1 : i32
    %1220 = vector.broadcast %c1_i32_443 : i32 to vector<8x1xi32>
    %1221 = arith.subi %1217, %1220 : vector<8x1xi32>
    %c125_i32_444 = arith.constant 125 : i32
    %1222 = vector.broadcast %c125_i32_444 : i32 to vector<8x1xi32>
    %1223 = arith.addi %1221, %1222 : vector<8x1xi32>
    %c-1_i32_445 = arith.constant -1 : i32
    %1224 = vector.broadcast %c-1_i32_445 : i32 to vector<8x1xi32>
    %1225 = arith.select %1219, %1223, %1224 : vector<8x1xi1>, vector<8x1xi32>
    %1226 = vector.broadcast %1225 : vector<8x1xi32> to vector<8x128xi32>
    %1227 = arith.cmpi eq, %1, %1226 : vector<8x128xi32>
    %cst_446 = arith.constant 1.000000e+00 : f32
    %cst_447 = arith.constant 0.000000e+00 : f32
    %1228 = vector.broadcast %cst_446 : f32 to vector<8x128xf32>
    %1229 = vector.broadcast %cst_447 : f32 to vector<8x128xf32>
    %1230 = arith.select %1227, %1228, %1229 : vector<8x128xi1>, vector<8x128xf32>
    %1231 = arith.addf %1209, %1230 : vector<8x128xf32>
    %1232 = tpu.concatenate %1102, %1231 in 1 : vector<8x128xf32>, vector<8x128xf32> -> vector<8x256xf32>
    %1233 = arith.truncf %1232 : vector<8x256xf32> to vector<8x256xbf16>
    %cst_448 = arith.constant dense<0.000000e+00> : vector<8x96xf32>
    %1234 = tpu.matmul %1233, %277, %cst_448 {dimension_numbers = #tpu.dot_dimension_numbers<[1], [0], [0], [1], [0, 0, 1, 1], [], []>} : vector<8x256xbf16>, vector<256x96xbf16>, vector<8x96xf32> -> vector<8x96xf32>
    %1235 = vector.broadcast %278 : vector<1x96xf32> to vector<8x96xf32>
    %1236 = arith.addf %1234, %1235 : vector<8x96xf32>
    %1237 = vector.extract_strided_slice %1236 {offsets = [0, 0], sizes = [8, 32], strides = [1, 1]} : vector<8x96xf32> to vector<8x32xf32>
    %1238 = vector.extract_strided_slice %1236 {offsets = [0, 32], sizes = [8, 32], strides = [1, 1]} : vector<8x96xf32> to vector<8x32xf32>
    %1239 = vector.extract_strided_slice %1236 {offsets = [0, 64], sizes = [8, 32], strides = [1, 1]} : vector<8x96xf32> to vector<8x32xf32>
    %cst_449 = arith.constant 0.000000e+00 : f32
    %1240 = vector.broadcast %cst_449 : f32 to vector<8x32xf32>
    %1241 = arith.maximumf %1237, %1240 : vector<8x32xf32>
    %1242 = arith.addf %1238, %1237 : vector<8x32xf32>
    %cst_450 = arith.constant 0.000000e+00 : f32
    %1243 = vector.broadcast %cst_450 : f32 to vector<8x32xf32>
    %1244 = arith.maximumf %1242, %1243 : vector<8x32xf32>
    %1245 = tpu.concatenate %1241, %1244 in 1 : vector<8x32xf32>, vector<8x32xf32> -> vector<8x64xf32>
    %cst_451 = arith.constant dense<0.000000e+00> : vector<8x96xf32>
    %1246 = tpu.matmul %1245, %279, %cst_451 {dimension_numbers = #tpu.dot_dimension_numbers<[1], [0], [0], [1], [0, 0, 1, 1], [], []>} : vector<8x64xf32>, vector<64x96xf32>, vector<8x96xf32> -> vector<8x96xf32>
    %1247 = vector.broadcast %280 : vector<1x96xf32> to vector<8x96xf32>
    %1248 = arith.addf %1246, %1247 : vector<8x96xf32>
    %1249 = arith.addf %1237, %1239 : vector<8x32xf32>
    %cst_452 = arith.constant 1.000000e+00 : f32
    %1250 = vector.broadcast %cst_452 : f32 to vector<8x1xf32>
    %1251 = arith.subf %1250, %944 : vector<8x1xf32>
    %1252 = vector.extract_strided_slice %1248 {offsets = [0, 0], sizes = [8, 32], strides = [1, 1]} : vector<8x96xf32> to vector<8x32xf32>
    %1253 = vector.broadcast %1251 : vector<8x1xf32> to vector<8x32xf32>
    %1254 = arith.mulf %1253, %1252 : vector<8x32xf32>
    %1255 = arith.addf %1249, %1254 : vector<8x32xf32>
    %cst_453 = arith.constant 1.000000e+00 : f32
    %1256 = vector.broadcast %cst_453 : f32 to vector<8x1xf32>
    %1257 = arith.subf %1256, %967 : vector<8x1xf32>
    %1258 = vector.extract_strided_slice %1248 {offsets = [0, 32], sizes = [8, 32], strides = [1, 1]} : vector<8x96xf32> to vector<8x32xf32>
    %1259 = vector.broadcast %1257 : vector<8x1xf32> to vector<8x32xf32>
    %1260 = arith.mulf %1259, %1258 : vector<8x32xf32>
    %1261 = arith.addf %1255, %1260 : vector<8x32xf32>
    %cst_454 = arith.constant 4.000000e+00 : f32
    %1262 = vector.broadcast %cst_454 : f32 to vector<8x1xf32>
    %1263 = arith.subf %1262, %935 : vector<8x1xf32>
    %1264 = vector.extract_strided_slice %1248 {offsets = [0, 64], sizes = [8, 32], strides = [1, 1]} : vector<8x96xf32> to vector<8x32xf32>
    %1265 = vector.broadcast %1263 : vector<8x1xf32> to vector<8x32xf32>
    %1266 = arith.mulf %1265, %1264 : vector<8x32xf32>
    %1267 = arith.addf %1261, %1266 : vector<8x32xf32>
    %c0_455 = arith.constant 0 : index
    %c32 = arith.constant 32 : index
    %1268 = vector.load %arg6[%c0_455, %c32] : memref<8x192xf32, #tpu.memory_space<vmem>>, vector<8x32xf32>
    tpu.vector_store %arg6[%c0_455, %c32], %1267 {strides = array<i32>} : memref<8x192xf32, #tpu.memory_space<vmem>>, vector<8x32xf32>,
    %1269 = vector.broadcast %74 : vector<8x1xi32> to vector<8x128xi32>
    %1270 = arith.cmpi eq, %1, %1269 : vector<8x128xi32>
    %cst_456 = arith.constant 1.000000e+00 : f32
    %cst_457 = arith.constant 0.000000e+00 : f32
    %1271 = vector.broadcast %cst_456 : f32 to vector<8x128xf32>
    %1272 = vector.broadcast %cst_457 : f32 to vector<8x128xf32>
    %1273 = arith.select %1270, %1271, %1272 : vector<8x128xi1>, vector<8x128xf32>
    %1274 = vector.broadcast %85 : vector<8x1xf32> to vector<8x128xf32>
    %1275 = arith.mulf %1274, %276 : vector<8x128xf32>
    %1276 = arith.addf %1273, %1275 : vector<8x128xf32>
    %cst_458 = arith.constant 0.000000e+00 : f32
    %1277 = vector.broadcast %cst_458 : f32 to vector<8x1xf32>
    %1278 = vector.extract_strided_slice %0 {offsets = [0, 102], sizes = [8, 1], strides = [1, 1]} : vector<8x512xf32> to vector<8x1xf32>
    %cst_459 = arith.constant 1.000000e+00 : f32
    %1279 = vector.broadcast %cst_459 : f32 to vector<8x1xf32>
    %1280 = arith.addf %1278, %1279 : vector<8x1xf32>
    %1281 = arith.fptosi %1280 : vector<8x1xf32> to vector<8x1xi32>
    %c0_i32_460 = arith.constant 0 : i32
    %1282 = vector.broadcast %c0_i32_460 : i32 to vector<8x1xi32>
    %1283 = arith.cmpi sgt, %1281, %1282 : vector<8x1xi32>
    %c1_i32_461 = arith.constant 1 : i32
    %1284 = vector.broadcast %c1_i32_461 : i32 to vector<8x1xi32>
    %1285 = arith.subi %1281, %1284 : vector<8x1xi32>
    %c31_i32_462 = arith.constant 31 : i32
    %1286 = vector.broadcast %c31_i32_462 : i32 to vector<8x1xi32>
    %1287 = arith.addi %1285, %1286 : vector<8x1xi32>
    %c-1_i32_463 = arith.constant -1 : i32
    %1288 = vector.broadcast %c-1_i32_463 : i32 to vector<8x1xi32>
    %1289 = arith.select %1283, %1287, %1288 : vector<8x1xi1>, vector<8x1xi32>
    %1290 = vector.broadcast %1289 : vector<8x1xi32> to vector<8x128xi32>
    %1291 = arith.cmpi eq, %1, %1290 : vector<8x128xi32>
    %cst_464 = arith.constant 1.000000e+00 : f32
    %cst_465 = arith.constant 0.000000e+00 : f32
    %1292 = vector.broadcast %cst_464 : f32 to vector<8x128xf32>
    %1293 = vector.broadcast %cst_465 : f32 to vector<8x128xf32>
    %1294 = arith.select %1291, %1292, %1293 : vector<8x128xi1>, vector<8x128xf32>
    %1295 = arith.addf %1276, %1294 : vector<8x128xf32>
    %1296 = vector.extract_strided_slice %0 {offsets = [0, 106], sizes = [8, 1], strides = [1, 1]} : vector<8x512xf32> to vector<8x1xf32>
    %cst_466 = arith.constant 1.000000e+00 : f32
    %1297 = vector.broadcast %cst_466 : f32 to vector<8x1xf32>
    %1298 = arith.addf %1296, %1297 : vector<8x1xf32>
    %1299 = arith.fptosi %1298 : vector<8x1xf32> to vector<8x1xi32>
    %c63_i32_467 = arith.constant 63 : i32
    %1300 = vector.broadcast %c63_i32_467 : i32 to vector<8x1xi32>
    %1301 = arith.minsi %1299, %1300 : vector<8x1xi32>
    %1302 = vector.broadcast %1301 : vector<8x1xi32> to vector<8x128xi32>
    %1303 = arith.shrsi %1302, %7 : vector<8x128xi32>
    %c1_i32_468 = arith.constant 1 : i32
    %1304 = vector.broadcast %c1_i32_468 : i32 to vector<8x128xi32>
    %1305 = arith.andi %1303, %1304 : vector<8x128xi32>
    %1306 = arith.sitofp %1305 : vector<8x128xi32> to vector<8x128xf32>
    %1307 = vector.broadcast %1283 : vector<8x1xi1> to vector<8x128xi1>
    %1308 = arith.andi %12, %1307 : vector<8x128xi1>
    %cst_469 = arith.constant 0.000000e+00 : f32
    %1309 = vector.broadcast %cst_469 : f32 to vector<8x128xf32>
    %1310 = arith.select %1308, %1306, %1309 : vector<8x128xi1>, vector<8x128xf32>
    %1311 = arith.addf %1295, %1310 : vector<8x128xf32>
    %cst_470 = arith.constant 1.000000e+00 : f32
    %cst_471 = arith.constant 0.000000e+00 : f32
    %1312 = vector.broadcast %cst_470 : f32 to vector<8x1xf32>
    %1313 = vector.broadcast %cst_471 : f32 to vector<8x1xf32>
    %1314 = arith.select %1283, %1312, %1313 : vector<8x1xi1>, vector<8x1xf32>
    %1315 = arith.addf %1277, %1314 : vector<8x1xf32>
    %1316 = vector.extract_strided_slice %0 {offsets = [0, 103], sizes = [8, 1], strides = [1, 1]} : vector<8x512xf32> to vector<8x1xf32>
    %cst_472 = arith.constant 1.000000e+00 : f32
    %1317 = vector.broadcast %cst_472 : f32 to vector<8x1xf32>
    %1318 = arith.addf %1316, %1317 : vector<8x1xf32>
    %1319 = arith.fptosi %1318 : vector<8x1xf32> to vector<8x1xi32>
    %c0_i32_473 = arith.constant 0 : i32
    %1320 = vector.broadcast %c0_i32_473 : i32 to vector<8x1xi32>
    %1321 = arith.cmpi sgt, %1319, %1320 : vector<8x1xi32>
    %c1_i32_474 = arith.constant 1 : i32
    %1322 = vector.broadcast %c1_i32_474 : i32 to vector<8x1xi32>
    %1323 = arith.subi %1319, %1322 : vector<8x1xi32>
    %c31_i32_475 = arith.constant 31 : i32
    %1324 = vector.broadcast %c31_i32_475 : i32 to vector<8x1xi32>
    %1325 = arith.addi %1323, %1324 : vector<8x1xi32>
    %c-1_i32_476 = arith.constant -1 : i32
    %1326 = vector.broadcast %c-1_i32_476 : i32 to vector<8x1xi32>
    %1327 = arith.select %1321, %1325, %1326 : vector<8x1xi1>, vector<8x1xi32>
    %1328 = vector.broadcast %1327 : vector<8x1xi32> to vector<8x128xi32>
    %1329 = arith.cmpi eq, %1, %1328 : vector<8x128xi32>
    %cst_477 = arith.constant 1.000000e+00 : f32
    %cst_478 = arith.constant 0.000000e+00 : f32
    %1330 = vector.broadcast %cst_477 : f32 to vector<8x128xf32>
    %1331 = vector.broadcast %cst_478 : f32 to vector<8x128xf32>
    %1332 = arith.select %1329, %1330, %1331 : vector<8x128xi1>, vector<8x128xf32>
    %1333 = arith.addf %1311, %1332 : vector<8x128xf32>
    %1334 = vector.extract_strided_slice %0 {offsets = [0, 107], sizes = [8, 1], strides = [1, 1]} : vector<8x512xf32> to vector<8x1xf32>
    %cst_479 = arith.constant 1.000000e+00 : f32
    %1335 = vector.broadcast %cst_479 : f32 to vector<8x1xf32>
    %1336 = arith.addf %1334, %1335 : vector<8x1xf32>
    %1337 = arith.fptosi %1336 : vector<8x1xf32> to vector<8x1xi32>
    %c63_i32_480 = arith.constant 63 : i32
    %1338 = vector.broadcast %c63_i32_480 : i32 to vector<8x1xi32>
    %1339 = arith.minsi %1337, %1338 : vector<8x1xi32>
    %1340 = vector.broadcast %1339 : vector<8x1xi32> to vector<8x128xi32>
    %1341 = arith.shrsi %1340, %7 : vector<8x128xi32>
    %c1_i32_481 = arith.constant 1 : i32
    %1342 = vector.broadcast %c1_i32_481 : i32 to vector<8x128xi32>
    %1343 = arith.andi %1341, %1342 : vector<8x128xi32>
    %1344 = arith.sitofp %1343 : vector<8x128xi32> to vector<8x128xf32>
    %1345 = vector.broadcast %1321 : vector<8x1xi1> to vector<8x128xi1>
    %1346 = arith.andi %12, %1345 : vector<8x128xi1>
    %cst_482 = arith.constant 0.000000e+00 : f32
    %1347 = vector.broadcast %cst_482 : f32 to vector<8x128xf32>
    %1348 = arith.select %1346, %1344, %1347 : vector<8x128xi1>, vector<8x128xf32>
    %1349 = arith.addf %1333, %1348 : vector<8x128xf32>
    %cst_483 = arith.constant 1.000000e+00 : f32
    %cst_484 = arith.constant 0.000000e+00 : f32
    %1350 = vector.broadcast %cst_483 : f32 to vector<8x1xf32>
    %1351 = vector.broadcast %cst_484 : f32 to vector<8x1xf32>
    %1352 = arith.select %1321, %1350, %1351 : vector<8x1xi1>, vector<8x1xf32>
    %1353 = arith.addf %1315, %1352 : vector<8x1xf32>
    %1354 = vector.extract_strided_slice %0 {offsets = [0, 104], sizes = [8, 1], strides = [1, 1]} : vector<8x512xf32> to vector<8x1xf32>
    %cst_485 = arith.constant 1.000000e+00 : f32
    %1355 = vector.broadcast %cst_485 : f32 to vector<8x1xf32>
    %1356 = arith.addf %1354, %1355 : vector<8x1xf32>
    %1357 = arith.fptosi %1356 : vector<8x1xf32> to vector<8x1xi32>
    %c0_i32_486 = arith.constant 0 : i32
    %1358 = vector.broadcast %c0_i32_486 : i32 to vector<8x1xi32>
    %1359 = arith.cmpi sgt, %1357, %1358 : vector<8x1xi32>
    %c1_i32_487 = arith.constant 1 : i32
    %1360 = vector.broadcast %c1_i32_487 : i32 to vector<8x1xi32>
    %1361 = arith.subi %1357, %1360 : vector<8x1xi32>
    %c31_i32_488 = arith.constant 31 : i32
    %1362 = vector.broadcast %c31_i32_488 : i32 to vector<8x1xi32>
    %1363 = arith.addi %1361, %1362 : vector<8x1xi32>
    %c-1_i32_489 = arith.constant -1 : i32
    %1364 = vector.broadcast %c-1_i32_489 : i32 to vector<8x1xi32>
    %1365 = arith.select %1359, %1363, %1364 : vector<8x1xi1>, vector<8x1xi32>
    %1366 = vector.broadcast %1365 : vector<8x1xi32> to vector<8x128xi32>
    %1367 = arith.cmpi eq, %1, %1366 : vector<8x128xi32>
    %cst_490 = arith.constant 1.000000e+00 : f32
    %cst_491 = arith.constant 0.000000e+00 : f32
    %1368 = vector.broadcast %cst_490 : f32 to vector<8x128xf32>
    %1369 = vector.broadcast %cst_491 : f32 to vector<8x128xf32>
    %1370 = arith.select %1367, %1368, %1369 : vector<8x128xi1>, vector<8x128xf32>
    %1371 = arith.addf %1349, %1370 : vector<8x128xf32>
    %1372 = vector.extract_strided_slice %0 {offsets = [0, 108], sizes = [8, 1], strides = [1, 1]} : vector<8x512xf32> to vector<8x1xf32>
    %cst_492 = arith.constant 1.000000e+00 : f32
    %1373 = vector.broadcast %cst_492 : f32 to vector<8x1xf32>
    %1374 = arith.addf %1372, %1373 : vector<8x1xf32>
    %1375 = arith.fptosi %1374 : vector<8x1xf32> to vector<8x1xi32>
    %c63_i32_493 = arith.constant 63 : i32
    %1376 = vector.broadcast %c63_i32_493 : i32 to vector<8x1xi32>
    %1377 = arith.minsi %1375, %1376 : vector<8x1xi32>
    %1378 = vector.broadcast %1377 : vector<8x1xi32> to vector<8x128xi32>
    %1379 = arith.shrsi %1378, %7 : vector<8x128xi32>
    %c1_i32_494 = arith.constant 1 : i32
    %1380 = vector.broadcast %c1_i32_494 : i32 to vector<8x128xi32>
    %1381 = arith.andi %1379, %1380 : vector<8x128xi32>
    %1382 = arith.sitofp %1381 : vector<8x128xi32> to vector<8x128xf32>
    %1383 = vector.broadcast %1359 : vector<8x1xi1> to vector<8x128xi1>
    %1384 = arith.andi %12, %1383 : vector<8x128xi1>
    %cst_495 = arith.constant 0.000000e+00 : f32
    %1385 = vector.broadcast %cst_495 : f32 to vector<8x128xf32>
    %1386 = arith.select %1384, %1382, %1385 : vector<8x128xi1>, vector<8x128xf32>
    %1387 = arith.addf %1371, %1386 : vector<8x128xf32>
    %cst_496 = arith.constant 1.000000e+00 : f32
    %cst_497 = arith.constant 0.000000e+00 : f32
    %1388 = vector.broadcast %cst_496 : f32 to vector<8x1xf32>
    %1389 = vector.broadcast %cst_497 : f32 to vector<8x1xf32>
    %1390 = arith.select %1359, %1388, %1389 : vector<8x1xi1>, vector<8x1xf32>
    %1391 = arith.addf %1353, %1390 : vector<8x1xf32>
    %1392 = vector.extract_strided_slice %0 {offsets = [0, 105], sizes = [8, 1], strides = [1, 1]} : vector<8x512xf32> to vector<8x1xf32>
    %cst_498 = arith.constant 1.000000e+00 : f32
    %1393 = vector.broadcast %cst_498 : f32 to vector<8x1xf32>
    %1394 = arith.addf %1392, %1393 : vector<8x1xf32>
    %1395 = arith.fptosi %1394 : vector<8x1xf32> to vector<8x1xi32>
    %c0_i32_499 = arith.constant 0 : i32
    %1396 = vector.broadcast %c0_i32_499 : i32 to vector<8x1xi32>
    %1397 = arith.cmpi sgt, %1395, %1396 : vector<8x1xi32>
    %c1_i32_500 = arith.constant 1 : i32
    %1398 = vector.broadcast %c1_i32_500 : i32 to vector<8x1xi32>
    %1399 = arith.subi %1395, %1398 : vector<8x1xi32>
    %c31_i32_501 = arith.constant 31 : i32
    %1400 = vector.broadcast %c31_i32_501 : i32 to vector<8x1xi32>
    %1401 = arith.addi %1399, %1400 : vector<8x1xi32>
    %c-1_i32_502 = arith.constant -1 : i32
    %1402 = vector.broadcast %c-1_i32_502 : i32 to vector<8x1xi32>
    %1403 = arith.select %1397, %1401, %1402 : vector<8x1xi1>, vector<8x1xi32>
    %1404 = vector.broadcast %1403 : vector<8x1xi32> to vector<8x128xi32>
    %1405 = arith.cmpi eq, %1, %1404 : vector<8x128xi32>
    %cst_503 = arith.constant 1.000000e+00 : f32
    %cst_504 = arith.constant 0.000000e+00 : f32
    %1406 = vector.broadcast %cst_503 : f32 to vector<8x128xf32>
    %1407 = vector.broadcast %cst_504 : f32 to vector<8x128xf32>
    %1408 = arith.select %1405, %1406, %1407 : vector<8x128xi1>, vector<8x128xf32>
    %1409 = arith.addf %1387, %1408 : vector<8x128xf32>
    %1410 = vector.extract_strided_slice %0 {offsets = [0, 109], sizes = [8, 1], strides = [1, 1]} : vector<8x512xf32> to vector<8x1xf32>
    %cst_505 = arith.constant 1.000000e+00 : f32
    %1411 = vector.broadcast %cst_505 : f32 to vector<8x1xf32>
    %1412 = arith.addf %1410, %1411 : vector<8x1xf32>
    %1413 = arith.fptosi %1412 : vector<8x1xf32> to vector<8x1xi32>
    %c63_i32_506 = arith.constant 63 : i32
    %1414 = vector.broadcast %c63_i32_506 : i32 to vector<8x1xi32>
    %1415 = arith.minsi %1413, %1414 : vector<8x1xi32>
    %1416 = vector.broadcast %1415 : vector<8x1xi32> to vector<8x128xi32>
    %1417 = arith.shrsi %1416, %7 : vector<8x128xi32>
    %c1_i32_507 = arith.constant 1 : i32
    %1418 = vector.broadcast %c1_i32_507 : i32 to vector<8x128xi32>
    %1419 = arith.andi %1417, %1418 : vector<8x128xi32>
    %1420 = arith.sitofp %1419 : vector<8x128xi32> to vector<8x128xf32>
    %1421 = vector.broadcast %1397 : vector<8x1xi1> to vector<8x128xi1>
    %1422 = arith.andi %12, %1421 : vector<8x128xi1>
    %cst_508 = arith.constant 0.000000e+00 : f32
    %1423 = vector.broadcast %cst_508 : f32 to vector<8x128xf32>
    %1424 = arith.select %1422, %1420, %1423 : vector<8x128xi1>, vector<8x128xf32>
    %1425 = arith.addf %1409, %1424 : vector<8x128xf32>
    %cst_509 = arith.constant 1.000000e+00 : f32
    %cst_510 = arith.constant 0.000000e+00 : f32
    %1426 = vector.broadcast %cst_509 : f32 to vector<8x1xf32>
    %1427 = vector.broadcast %cst_510 : f32 to vector<8x1xf32>
    %1428 = arith.select %1397, %1426, %1427 : vector<8x1xi1>, vector<8x1xf32>
    %1429 = arith.addf %1391, %1428 : vector<8x1xf32>
    %1430 = vector.extract_strided_slice %0 {offsets = [0, 91], sizes = [8, 1], strides = [1, 1]} : vector<8x512xf32> to vector<8x1xf32>
    %cst_511 = arith.constant 1.000000e+00 : f32
    %1431 = vector.broadcast %cst_511 : f32 to vector<8x1xf32>
    %1432 = arith.addf %1430, %1431 : vector<8x1xf32>
    %1433 = arith.fptosi %1432 : vector<8x1xf32> to vector<8x1xi32>
    %c0_i32_512 = arith.constant 0 : i32
    %1434 = vector.broadcast %c0_i32_512 : i32 to vector<8x1xi32>
    %1435 = arith.cmpi sgt, %1433, %1434 : vector<8x1xi32>
    %cst_513 = arith.constant 1.000000e+00 : f32
    %cst_514 = arith.constant 0.000000e+00 : f32
    %1436 = vector.broadcast %cst_513 : f32 to vector<8x1xf32>
    %1437 = vector.broadcast %cst_514 : f32 to vector<8x1xf32>
    %1438 = arith.select %1435, %1436, %1437 : vector<8x1xi1>, vector<8x1xf32>
    %c0_i32_515 = arith.constant 0 : i32
    %1439 = vector.broadcast %c0_i32_515 : i32 to vector<8x1xi32>
    %1440 = arith.cmpi sgt, %1433, %1439 : vector<8x1xi32>
    %c1_i32_516 = arith.constant 1 : i32
    %1441 = vector.broadcast %c1_i32_516 : i32 to vector<8x1xi32>
    %1442 = arith.subi %1433, %1441 : vector<8x1xi32>
    %c60_i32_517 = arith.constant 60 : i32
    %1443 = vector.broadcast %c60_i32_517 : i32 to vector<8x1xi32>
    %1444 = arith.addi %1442, %1443 : vector<8x1xi32>
    %c-1_i32_518 = arith.constant -1 : i32
    %1445 = vector.broadcast %c-1_i32_518 : i32 to vector<8x1xi32>
    %1446 = arith.select %1440, %1444, %1445 : vector<8x1xi1>, vector<8x1xi32>
    %1447 = vector.broadcast %1446 : vector<8x1xi32> to vector<8x128xi32>
    %1448 = arith.cmpi eq, %1, %1447 : vector<8x128xi32>
    %cst_519 = arith.constant 1.000000e+00 : f32
    %cst_520 = arith.constant 0.000000e+00 : f32
    %1449 = vector.broadcast %cst_519 : f32 to vector<8x128xf32>
    %1450 = vector.broadcast %cst_520 : f32 to vector<8x128xf32>
    %1451 = arith.select %1448, %1449, %1450 : vector<8x128xi1>, vector<8x128xf32>
    %1452 = arith.addf %1425, %1451 : vector<8x128xf32>
    %1453 = vector.extract_strided_slice %0 {offsets = [0, 93], sizes = [8, 1], strides = [1, 1]} : vector<8x512xf32> to vector<8x1xf32>
    %cst_521 = arith.constant 1.000000e+00 : f32
    %1454 = vector.broadcast %cst_521 : f32 to vector<8x1xf32>
    %1455 = arith.addf %1453, %1454 : vector<8x1xf32>
    %1456 = arith.fptosi %1455 : vector<8x1xf32> to vector<8x1xi32>
    %c0_i32_522 = arith.constant 0 : i32
    %1457 = vector.broadcast %c0_i32_522 : i32 to vector<8x1xi32>
    %1458 = arith.cmpi sgt, %1456, %1457 : vector<8x1xi32>
    %cst_523 = arith.constant 1.000000e+00 : f32
    %cst_524 = arith.constant 0.000000e+00 : f32
    %1459 = vector.broadcast %cst_523 : f32 to vector<8x1xf32>
    %1460 = vector.broadcast %cst_524 : f32 to vector<8x1xf32>
    %1461 = arith.select %1458, %1459, %1460 : vector<8x1xi1>, vector<8x1xf32>
    %c0_i32_525 = arith.constant 0 : i32
    %1462 = vector.broadcast %c0_i32_525 : i32 to vector<8x1xi32>
    %1463 = arith.cmpi sgt, %1456, %1462 : vector<8x1xi32>
    %c1_i32_526 = arith.constant 1 : i32
    %1464 = vector.broadcast %c1_i32_526 : i32 to vector<8x1xi32>
    %1465 = arith.subi %1456, %1464 : vector<8x1xi32>
    %c75_i32_527 = arith.constant 75 : i32
    %1466 = vector.broadcast %c75_i32_527 : i32 to vector<8x1xi32>
    %1467 = arith.addi %1465, %1466 : vector<8x1xi32>
    %c-1_i32_528 = arith.constant -1 : i32
    %1468 = vector.broadcast %c-1_i32_528 : i32 to vector<8x1xi32>
    %1469 = arith.select %1463, %1467, %1468 : vector<8x1xi1>, vector<8x1xi32>
    %1470 = vector.broadcast %1469 : vector<8x1xi32> to vector<8x128xi32>
    %1471 = arith.cmpi eq, %1, %1470 : vector<8x128xi32>
    %cst_529 = arith.constant 1.000000e+00 : f32
    %cst_530 = arith.constant 0.000000e+00 : f32
    %1472 = vector.broadcast %cst_529 : f32 to vector<8x128xf32>
    %1473 = vector.broadcast %cst_530 : f32 to vector<8x128xf32>
    %1474 = arith.select %1471, %1472, %1473 : vector<8x128xi1>, vector<8x128xf32>
    %1475 = arith.addf %1452, %1474 : vector<8x128xf32>
    %1476 = vector.extract_strided_slice %0 {offsets = [0, 95], sizes = [8, 1], strides = [1, 1]} : vector<8x512xf32> to vector<8x1xf32>
    %cst_531 = arith.constant 1.000000e+00 : f32
    %1477 = vector.broadcast %cst_531 : f32 to vector<8x1xf32>
    %1478 = arith.addf %1476, %1477 : vector<8x1xf32>
    %1479 = arith.fptosi %1478 : vector<8x1xf32> to vector<8x1xi32>
    %c0_i32_532 = arith.constant 0 : i32
    %1480 = vector.broadcast %c0_i32_532 : i32 to vector<8x1xi32>
    %1481 = arith.cmpi sgt, %1456, %1480 : vector<8x1xi32>
    %c0_i32_533 = arith.constant 0 : i32
    %1482 = vector.broadcast %c0_i32_533 : i32 to vector<8x1xi32>
    %1483 = arith.cmpi sgt, %1479, %1482 : vector<8x1xi32>
    %1484 = arith.andi %1481, %1483 : vector<8x1xi1>
    %c1_i32_534 = arith.constant 1 : i32
    %1485 = vector.broadcast %c1_i32_534 : i32 to vector<8x1xi32>
    %1486 = arith.subi %1479, %1485 : vector<8x1xi32>
    %c90_i32_535 = arith.constant 90 : i32
    %1487 = vector.broadcast %c90_i32_535 : i32 to vector<8x1xi32>
    %1488 = arith.addi %1486, %1487 : vector<8x1xi32>
    %c-1_i32_536 = arith.constant -1 : i32
    %1489 = vector.broadcast %c-1_i32_536 : i32 to vector<8x1xi32>
    %1490 = arith.select %1484, %1488, %1489 : vector<8x1xi1>, vector<8x1xi32>
    %1491 = vector.broadcast %1490 : vector<8x1xi32> to vector<8x128xi32>
    %1492 = arith.cmpi eq, %1, %1491 : vector<8x128xi32>
    %cst_537 = arith.constant 1.000000e+00 : f32
    %cst_538 = arith.constant 0.000000e+00 : f32
    %1493 = vector.broadcast %cst_537 : f32 to vector<8x128xf32>
    %1494 = vector.broadcast %cst_538 : f32 to vector<8x128xf32>
    %1495 = arith.select %1492, %1493, %1494 : vector<8x128xi1>, vector<8x128xf32>
    %1496 = arith.addf %1475, %1495 : vector<8x128xf32>
    %1497 = vector.extract_strided_slice %0 {offsets = [0, 111], sizes = [8, 1], strides = [1, 1]} : vector<8x512xf32> to vector<8x1xf32>
    %cst_539 = arith.constant 1.000000e+00 : f32
    %1498 = vector.broadcast %cst_539 : f32 to vector<8x1xf32>
    %1499 = arith.addf %1497, %1498 : vector<8x1xf32>
    %1500 = arith.fptosi %1499 : vector<8x1xf32> to vector<8x1xi32>
    %c0_i32_540 = arith.constant 0 : i32
    %1501 = vector.broadcast %c0_i32_540 : i32 to vector<8x1xi32>
    %1502 = arith.cmpi sgt, %1500, %1501 : vector<8x1xi32>
    %c1_i32_541 = arith.constant 1 : i32
    %1503 = vector.broadcast %c1_i32_541 : i32 to vector<8x1xi32>
    %1504 = arith.subi %1500, %1503 : vector<8x1xi32>
    %c97_i32_542 = arith.constant 97 : i32
    %1505 = vector.broadcast %c97_i32_542 : i32 to vector<8x1xi32>
    %1506 = arith.addi %1504, %1505 : vector<8x1xi32>
    %c-1_i32_543 = arith.constant -1 : i32
    %1507 = vector.broadcast %c-1_i32_543 : i32 to vector<8x1xi32>
    %1508 = arith.select %1502, %1506, %1507 : vector<8x1xi1>, vector<8x1xi32>
    %1509 = vector.broadcast %1508 : vector<8x1xi32> to vector<8x128xi32>
    %1510 = arith.cmpi eq, %1, %1509 : vector<8x128xi32>
    %cst_544 = arith.constant 1.000000e+00 : f32
    %cst_545 = arith.constant 0.000000e+00 : f32
    %1511 = vector.broadcast %cst_544 : f32 to vector<8x128xf32>
    %1512 = vector.broadcast %cst_545 : f32 to vector<8x128xf32>
    %1513 = arith.select %1510, %1511, %1512 : vector<8x128xi1>, vector<8x128xf32>
    %1514 = arith.addf %1496, %1513 : vector<8x128xf32>
    %1515 = vector.extract_strided_slice %0 {offsets = [0, 77], sizes = [8, 1], strides = [1, 1]} : vector<8x512xf32> to vector<8x1xf32>
    %cst_546 = arith.constant 1.000000e+00 : f32
    %1516 = vector.broadcast %cst_546 : f32 to vector<8x1xf32>
    %1517 = arith.addf %1515, %1516 : vector<8x1xf32>
    %1518 = arith.fptosi %1517 : vector<8x1xf32> to vector<8x1xi32>
    %c0_i32_547 = arith.constant 0 : i32
    %1519 = vector.broadcast %c0_i32_547 : i32 to vector<8x1xi32>
    %1520 = arith.cmpi sgt, %1518, %1519 : vector<8x1xi32>
    %c1_i32_548 = arith.constant 1 : i32
    %1521 = vector.broadcast %c1_i32_548 : i32 to vector<8x1xi32>
    %1522 = arith.subi %1518, %1521 : vector<8x1xi32>
    %c119_i32_549 = arith.constant 119 : i32
    %1523 = vector.broadcast %c119_i32_549 : i32 to vector<8x1xi32>
    %1524 = arith.addi %1522, %1523 : vector<8x1xi32>
    %c-1_i32_550 = arith.constant -1 : i32
    %1525 = vector.broadcast %c-1_i32_550 : i32 to vector<8x1xi32>
    %1526 = arith.select %1520, %1524, %1525 : vector<8x1xi1>, vector<8x1xi32>
    %1527 = vector.broadcast %1526 : vector<8x1xi32> to vector<8x128xi32>
    %1528 = arith.cmpi eq, %1, %1527 : vector<8x128xi32>
    %cst_551 = arith.constant 1.000000e+00 : f32
    %cst_552 = arith.constant 0.000000e+00 : f32
    %1529 = vector.broadcast %cst_551 : f32 to vector<8x128xf32>
    %1530 = vector.broadcast %cst_552 : f32 to vector<8x128xf32>
    %1531 = arith.select %1528, %1529, %1530 : vector<8x128xi1>, vector<8x128xf32>
    %1532 = arith.addf %1514, %1531 : vector<8x128xf32>
    %1533 = vector.extract_strided_slice %0 {offsets = [0, 88], sizes = [8, 1], strides = [1, 1]} : vector<8x512xf32> to vector<8x1xf32>
    %cst_553 = arith.constant 1.000000e+00 : f32
    %1534 = vector.broadcast %cst_553 : f32 to vector<8x1xf32>
    %1535 = arith.addf %1533, %1534 : vector<8x1xf32>
    %1536 = arith.fptosi %1535 : vector<8x1xf32> to vector<8x1xi32>
    %c0_i32_554 = arith.constant 0 : i32
    %1537 = vector.broadcast %c0_i32_554 : i32 to vector<8x1xi32>
    %1538 = arith.cmpi sgt, %1536, %1537 : vector<8x1xi32>
    %c1_i32_555 = arith.constant 1 : i32
    %1539 = vector.broadcast %c1_i32_555 : i32 to vector<8x1xi32>
    %1540 = arith.subi %1536, %1539 : vector<8x1xi32>
    %c126_i32_556 = arith.constant 126 : i32
    %1541 = vector.broadcast %c126_i32_556 : i32 to vector<8x1xi32>
    %1542 = arith.addi %1540, %1541 : vector<8x1xi32>
    %c-1_i32_557 = arith.constant -1 : i32
    %1543 = vector.broadcast %c-1_i32_557 : i32 to vector<8x1xi32>
    %1544 = arith.select %1538, %1542, %1543 : vector<8x1xi1>, vector<8x1xi32>
    %1545 = vector.broadcast %1544 : vector<8x1xi32> to vector<8x128xi32>
    %1546 = arith.cmpi eq, %1, %1545 : vector<8x128xi32>
    %cst_558 = arith.constant 1.000000e+00 : f32
    %cst_559 = arith.constant 0.000000e+00 : f32
    %1547 = vector.broadcast %cst_558 : f32 to vector<8x128xf32>
    %1548 = vector.broadcast %cst_559 : f32 to vector<8x128xf32>
    %1549 = arith.select %1546, %1547, %1548 : vector<8x128xi1>, vector<8x128xf32>
    %1550 = arith.addf %1532, %1549 : vector<8x128xf32>
    %1551 = vector.extract_strided_slice %0 {offsets = [0, 113], sizes = [8, 1], strides = [1, 1]} : vector<8x512xf32> to vector<8x1xf32>
    %cst_560 = arith.constant 1.000000e+00 : f32
    %1552 = vector.broadcast %cst_560 : f32 to vector<8x1xf32>
    %1553 = arith.addf %1551, %1552 : vector<8x1xf32>
    %1554 = arith.fptosi %1553 : vector<8x1xf32> to vector<8x1xi32>
    %c1_i32_561 = arith.constant 1 : i32
    %1555 = vector.broadcast %c1_i32_561 : i32 to vector<8x1xi32>
    %1556 = arith.subi %1554, %1555 : vector<8x1xi32>
    %c0_i32_562 = arith.constant 0 : i32
    %c1_i32_563 = arith.constant 1 : i32
    %1557 = vector.broadcast %c0_i32_562 : i32 to vector<8x1xi32>
    %1558 = arith.maxsi %1557, %1556 : vector<8x1xi32>
    %1559 = vector.broadcast %c1_i32_563 : i32 to vector<8x1xi32>
    %1560 = arith.minsi %1559, %1558 : vector<8x1xi32>
    %1561 = arith.sitofp %1560 : vector<8x1xi32> to vector<8x1xf32>
    %c116_i32_564 = arith.constant 116 : i32
    %1562 = vector.broadcast %c116_i32_564 : i32 to vector<8x128xi32>
    %1563 = arith.cmpi eq, %1, %1562 : vector<8x128xi32>
    %cst_565 = arith.constant 0.000000e+00 : f32
    %1564 = vector.shape_cast %1561 : vector<8x1xf32> to vector<8x1xf32>
    %1565 = vector.broadcast %1564 : vector<8x1xf32> to vector<8x128xf32>
    %1566 = vector.broadcast %cst_565 : f32 to vector<8x128xf32>
    %1567 = arith.select %1563, %1565, %1566 : vector<8x128xi1>, vector<8x128xf32>
    %1568 = arith.addf %1550, %1567 : vector<8x128xf32>
    %1569 = vector.extract_strided_slice %0 {offsets = [0, 110], sizes = [8, 1], strides = [1, 1]} : vector<8x512xf32> to vector<8x1xf32>
    %cst_566 = arith.constant 1.000000e+00 : f32
    %1570 = vector.broadcast %cst_566 : f32 to vector<8x1xf32>
    %1571 = arith.addf %1569, %1570 : vector<8x1xf32>
    %1572 = arith.fptosi %1571 : vector<8x1xf32> to vector<8x1xi32>
    %c0_i32_567 = arith.constant 0 : i32
    %1573 = vector.broadcast %c0_i32_567 : i32 to vector<8x1xi32>
    %1574 = arith.cmpi sgt, %1572, %1573 : vector<8x1xi32>
    %cst_568 = arith.constant 1.000000e+00 : f32
    %cst_569 = arith.constant 0.000000e+00 : f32
    %1575 = vector.broadcast %cst_568 : f32 to vector<8x1xf32>
    %1576 = vector.broadcast %cst_569 : f32 to vector<8x1xf32>
    %1577 = arith.select %1574, %1575, %1576 : vector<8x1xi1>, vector<8x1xf32>
    %c117_i32_570 = arith.constant 117 : i32
    %1578 = vector.broadcast %c117_i32_570 : i32 to vector<8x128xi32>
    %1579 = arith.cmpi eq, %1, %1578 : vector<8x128xi32>
    %cst_571 = arith.constant 0.000000e+00 : f32
    %1580 = vector.shape_cast %1577 : vector<8x1xf32> to vector<8x1xf32>
    %1581 = vector.broadcast %1580 : vector<8x1xf32> to vector<8x128xf32>
    %1582 = vector.broadcast %cst_571 : f32 to vector<8x128xf32>
    %1583 = arith.select %1579, %1581, %1582 : vector<8x128xi1>, vector<8x128xf32>
    %1584 = arith.addf %1568, %1583 : vector<8x128xf32>
    %c118_i32_572 = arith.constant 118 : i32
    %1585 = vector.broadcast %c118_i32_572 : i32 to vector<8x128xi32>
    %1586 = arith.cmpi eq, %1, %1585 : vector<8x128xi32>
    %c0_i32_573 = arith.constant 0 : i32
    %1587 = vector.broadcast %c0_i32_573 : i32 to vector<8x1xi32>
    %1588 = arith.cmpi sgt, %1500, %1587 : vector<8x1xi32>
    %cst_574 = arith.constant 0.000000e+00 : f32
    %cst_575 = arith.constant 1.000000e+00 : f32
    %1589 = vector.broadcast %cst_574 : f32 to vector<8x1xf32>
    %1590 = vector.broadcast %cst_575 : f32 to vector<8x1xf32>
    %1591 = arith.select %1588, %1589, %1590 : vector<8x1xi1>, vector<8x1xf32>
    %cst_576 = arith.constant 0.000000e+00 : f32
    %1592 = vector.shape_cast %1591 : vector<8x1xf32> to vector<8x1xf32>
    %1593 = vector.broadcast %1592 : vector<8x1xf32> to vector<8x128xf32>
    %1594 = vector.broadcast %cst_576 : f32 to vector<8x128xf32>
    %1595 = arith.select %1586, %1593, %1594 : vector<8x128xi1>, vector<8x128xf32>
    %1596 = arith.addf %1584, %1595 : vector<8x128xf32>
    %1597 = vector.extract_strided_slice %0 {offsets = [0, 81], sizes = [8, 1], strides = [1, 1]} : vector<8x512xf32> to vector<8x1xf32>
    %cst_577 = arith.constant 1.000000e+01 : f32
    %1598 = vector.broadcast %cst_577 : f32 to vector<8x1xf32>
    %1599 = arith.mulf %1597, %1598 : vector<8x1xf32>
    %cst_578 = arith.constant 0.000000e+00 : f32
    %cst_579 = arith.constant 1.000000e+01 : f32
    %1600 = vector.broadcast %cst_578 : f32 to vector<8x1xf32>
    %1601 = arith.maximumf %1600, %1599 : vector<8x1xf32>
    %1602 = vector.broadcast %cst_579 : f32 to vector<8x1xf32>
    %1603 = arith.minimumf %1602, %1601 : vector<8x1xf32>
    %1604 = arith.fptosi %1603 : vector<8x1xf32> to vector<8x1xi32>
    %c0_i32_580 = arith.constant 0 : i32
    %1605 = vector.broadcast %c0_i32_580 : i32 to vector<8x1xi32>
    %1606 = arith.cmpi sgt, %1604, %1605 : vector<8x1xi32>
    %c1_i32_581 = arith.constant 1 : i32
    %1607 = vector.broadcast %c1_i32_581 : i32 to vector<8x1xi32>
    %1608 = arith.subi %1604, %1607 : vector<8x1xi32>
    %c0_i32_582 = arith.constant 0 : i32
    %1609 = vector.broadcast %c0_i32_582 : i32 to vector<8x1xi32>
    %1610 = arith.addi %1608, %1609 : vector<8x1xi32>
    %c-1_i32_583 = arith.constant -1 : i32
    %1611 = vector.broadcast %c-1_i32_583 : i32 to vector<8x1xi32>
    %1612 = arith.select %1606, %1610, %1611 : vector<8x1xi1>, vector<8x1xi32>
    %1613 = vector.broadcast %1612 : vector<8x1xi32> to vector<8x128xi32>
    %1614 = arith.cmpi eq, %1, %1613 : vector<8x128xi32>
    %cst_584 = arith.constant 1.000000e+00 : f32
    %cst_585 = arith.constant 0.000000e+00 : f32
    %1615 = vector.broadcast %cst_584 : f32 to vector<8x128xf32>
    %1616 = vector.broadcast %cst_585 : f32 to vector<8x128xf32>
    %1617 = arith.select %1614, %1615, %1616 : vector<8x128xi1>, vector<8x128xf32>
    %1618 = vector.extract_strided_slice %0 {offsets = [0, 87], sizes = [8, 1], strides = [1, 1]} : vector<8x512xf32> to vector<8x1xf32>
    %cst_586 = arith.constant 1.000000e+00 : f32
    %1619 = vector.broadcast %cst_586 : f32 to vector<8x1xf32>
    %1620 = arith.addf %1618, %1619 : vector<8x1xf32>
    %1621 = arith.fptosi %1620 : vector<8x1xf32> to vector<8x1xi32>
    %c0_i32_587 = arith.constant 0 : i32
    %1622 = vector.broadcast %c0_i32_587 : i32 to vector<8x1xi32>
    %1623 = arith.cmpi sgt, %1621, %1622 : vector<8x1xi32>
    %c1_i32_588 = arith.constant 1 : i32
    %1624 = vector.broadcast %c1_i32_588 : i32 to vector<8x1xi32>
    %1625 = arith.subi %1621, %1624 : vector<8x1xi32>
    %c10_i32_589 = arith.constant 10 : i32
    %1626 = vector.broadcast %c10_i32_589 : i32 to vector<8x1xi32>
    %1627 = arith.addi %1625, %1626 : vector<8x1xi32>
    %c-1_i32_590 = arith.constant -1 : i32
    %1628 = vector.broadcast %c-1_i32_590 : i32 to vector<8x1xi32>
    %1629 = arith.select %1623, %1627, %1628 : vector<8x1xi1>, vector<8x1xi32>
    %1630 = vector.broadcast %1629 : vector<8x1xi32> to vector<8x128xi32>
    %1631 = arith.cmpi eq, %1, %1630 : vector<8x128xi32>
    %cst_591 = arith.constant 1.000000e+00 : f32
    %cst_592 = arith.constant 0.000000e+00 : f32
    %1632 = vector.broadcast %cst_591 : f32 to vector<8x128xf32>
    %1633 = vector.broadcast %cst_592 : f32 to vector<8x128xf32>
    %1634 = arith.select %1631, %1632, %1633 : vector<8x128xi1>, vector<8x128xf32>
    %1635 = arith.addf %1617, %1634 : vector<8x128xf32>
    %1636 = vector.extract_strided_slice %0 {offsets = [0, 90], sizes = [8, 1], strides = [1, 1]} : vector<8x512xf32> to vector<8x1xf32>
    %cst_593 = arith.constant 1.000000e+00 : f32
    %1637 = vector.broadcast %cst_593 : f32 to vector<8x1xf32>
    %1638 = arith.addf %1636, %1637 : vector<8x1xf32>
    %1639 = arith.fptosi %1638 : vector<8x1xf32> to vector<8x1xi32>
    %c0_i32_594 = arith.constant 0 : i32
    %1640 = vector.broadcast %c0_i32_594 : i32 to vector<8x1xi32>
    %1641 = arith.cmpi sgt, %1639, %1640 : vector<8x1xi32>
    %c1_i32_595 = arith.constant 1 : i32
    %1642 = vector.broadcast %c1_i32_595 : i32 to vector<8x1xi32>
    %1643 = arith.subi %1639, %1642 : vector<8x1xi32>
    %c12_i32_596 = arith.constant 12 : i32
    %1644 = vector.broadcast %c12_i32_596 : i32 to vector<8x1xi32>
    %1645 = arith.addi %1643, %1644 : vector<8x1xi32>
    %c-1_i32_597 = arith.constant -1 : i32
    %1646 = vector.broadcast %c-1_i32_597 : i32 to vector<8x1xi32>
    %1647 = arith.select %1641, %1645, %1646 : vector<8x1xi1>, vector<8x1xi32>
    %1648 = vector.broadcast %1647 : vector<8x1xi32> to vector<8x128xi32>
    %1649 = arith.cmpi eq, %1, %1648 : vector<8x128xi32>
    %cst_598 = arith.constant 1.000000e+00 : f32
    %cst_599 = arith.constant 0.000000e+00 : f32
    %1650 = vector.broadcast %cst_598 : f32 to vector<8x128xf32>
    %1651 = vector.broadcast %cst_599 : f32 to vector<8x128xf32>
    %1652 = arith.select %1649, %1650, %1651 : vector<8x128xi1>, vector<8x128xf32>
    %1653 = arith.addf %1635, %1652 : vector<8x128xf32>
    %1654 = vector.extract_strided_slice %0 {offsets = [0, 89], sizes = [8, 1], strides = [1, 1]} : vector<8x512xf32> to vector<8x1xf32>
    %1655 = arith.fptosi %1654 : vector<8x1xf32> to vector<8x1xi32>
    %c1_i32_600 = arith.constant 1 : i32
    %1656 = vector.broadcast %c1_i32_600 : i32 to vector<8x1xi32>
    %1657 = arith.maxsi %1655, %1656 : vector<8x1xi32>
    %c1_i32_601 = arith.constant 1 : i32
    %1658 = vector.broadcast %c1_i32_601 : i32 to vector<8x1xi32>
    %1659 = arith.subi %1657, %1658 : vector<8x1xi32>
    %c15_i32_602 = arith.constant 15 : i32
    %1660 = vector.broadcast %c15_i32_602 : i32 to vector<8x1xi32>
    %1661 = arith.addi %1659, %1660 : vector<8x1xi32>
    %1662 = vector.broadcast %1661 : vector<8x1xi32> to vector<8x128xi32>
    %1663 = arith.cmpi eq, %1, %1662 : vector<8x128xi32>
    %cst_603 = arith.constant 1.000000e+00 : f32
    %cst_604 = arith.constant 0.000000e+00 : f32
    %1664 = vector.broadcast %cst_603 : f32 to vector<8x128xf32>
    %1665 = vector.broadcast %cst_604 : f32 to vector<8x128xf32>
    %1666 = arith.select %1663, %1664, %1665 : vector<8x128xi1>, vector<8x128xf32>
    %1667 = arith.addf %1653, %1666 : vector<8x128xf32>
    %1668 = vector.extract_strided_slice %0 {offsets = [0, 97], sizes = [8, 1], strides = [1, 1]} : vector<8x512xf32> to vector<8x1xf32>
    %cst_605 = arith.constant 1.000000e+00 : f32
    %1669 = vector.broadcast %cst_605 : f32 to vector<8x1xf32>
    %1670 = arith.addf %1668, %1669 : vector<8x1xf32>
    %1671 = arith.fptosi %1670 : vector<8x1xf32> to vector<8x1xi32>
    %c0_i32_606 = arith.constant 0 : i32
    %1672 = vector.broadcast %c0_i32_606 : i32 to vector<8x1xi32>
    %1673 = arith.cmpi sgt, %1671, %1672 : vector<8x1xi32>
    %c1_i32_607 = arith.constant 1 : i32
    %1674 = vector.broadcast %c1_i32_607 : i32 to vector<8x1xi32>
    %1675 = arith.subi %1671, %1674 : vector<8x1xi32>
    %c115_i32_608 = arith.constant 115 : i32
    %1676 = vector.broadcast %c115_i32_608 : i32 to vector<8x1xi32>
    %1677 = arith.addi %1675, %1676 : vector<8x1xi32>
    %c-1_i32_609 = arith.constant -1 : i32
    %1678 = vector.broadcast %c-1_i32_609 : i32 to vector<8x1xi32>
    %1679 = arith.select %1673, %1677, %1678 : vector<8x1xi1>, vector<8x1xi32>
    %1680 = vector.broadcast %1679 : vector<8x1xi32> to vector<8x128xi32>
    %1681 = arith.cmpi eq, %1, %1680 : vector<8x128xi32>
    %cst_610 = arith.constant 1.000000e+00 : f32
    %cst_611 = arith.constant 0.000000e+00 : f32
    %1682 = vector.broadcast %cst_610 : f32 to vector<8x128xf32>
    %1683 = vector.broadcast %cst_611 : f32 to vector<8x128xf32>
    %1684 = arith.select %1681, %1682, %1683 : vector<8x128xi1>, vector<8x128xf32>
    %1685 = arith.addf %1667, %1684 : vector<8x128xf32>
    %1686 = vector.extract_strided_slice %0 {offsets = [0, 98], sizes = [8, 1], strides = [1, 1]} : vector<8x512xf32> to vector<8x1xf32>
    %cst_612 = arith.constant 1.000000e+00 : f32
    %1687 = vector.broadcast %cst_612 : f32 to vector<8x1xf32>
    %1688 = arith.addf %1686, %1687 : vector<8x1xf32>
    %1689 = arith.fptosi %1688 : vector<8x1xf32> to vector<8x1xi32>
    %c0_i32_613 = arith.constant 0 : i32
    %1690 = vector.broadcast %c0_i32_613 : i32 to vector<8x1xi32>
    %1691 = arith.cmpi sgt, %1689, %1690 : vector<8x1xi32>
    %c1_i32_614 = arith.constant 1 : i32
    %1692 = vector.broadcast %c1_i32_614 : i32 to vector<8x1xi32>
    %1693 = arith.subi %1689, %1692 : vector<8x1xi32>
    %c122_i32_615 = arith.constant 122 : i32
    %1694 = vector.broadcast %c122_i32_615 : i32 to vector<8x1xi32>
    %1695 = arith.addi %1693, %1694 : vector<8x1xi32>
    %c-1_i32_616 = arith.constant -1 : i32
    %1696 = vector.broadcast %c-1_i32_616 : i32 to vector<8x1xi32>
    %1697 = arith.select %1691, %1695, %1696 : vector<8x1xi1>, vector<8x1xi32>
    %1698 = vector.broadcast %1697 : vector<8x1xi32> to vector<8x128xi32>
    %1699 = arith.cmpi eq, %1, %1698 : vector<8x128xi32>
    %cst_617 = arith.constant 1.000000e+00 : f32
    %cst_618 = arith.constant 0.000000e+00 : f32
    %1700 = vector.broadcast %cst_617 : f32 to vector<8x128xf32>
    %1701 = vector.broadcast %cst_618 : f32 to vector<8x128xf32>
    %1702 = arith.select %1699, %1700, %1701 : vector<8x128xi1>, vector<8x128xf32>
    %1703 = arith.addf %1685, %1702 : vector<8x128xf32>
    %1704 = vector.extract_strided_slice %0 {offsets = [0, 99], sizes = [8, 1], strides = [1, 1]} : vector<8x512xf32> to vector<8x1xf32>
    %cst_619 = arith.constant 1.000000e+00 : f32
    %1705 = vector.broadcast %cst_619 : f32 to vector<8x1xf32>
    %1706 = arith.addf %1704, %1705 : vector<8x1xf32>
    %1707 = arith.fptosi %1706 : vector<8x1xf32> to vector<8x1xi32>
    %1708 = arith.sitofp %1707 : vector<8x1xi32> to vector<8x1xf32>
    %1709 = math.sqrt %1708 : vector<8x1xf32>
    %1710 = math.floor %1709 : vector<8x1xf32>
    %1711 = arith.fptosi %1710 : vector<8x1xf32> to vector<8x1xi32>
    %c0_i32_620 = arith.constant 0 : i32
    %1712 = vector.broadcast %c0_i32_620 : i32 to vector<8x1xi32>
    %1713 = arith.cmpi sgt, %1711, %1712 : vector<8x1xi32>
    %c1_i32_621 = arith.constant 1 : i32
    %1714 = vector.broadcast %c1_i32_621 : i32 to vector<8x1xi32>
    %1715 = arith.subi %1711, %1714 : vector<8x1xi32>
    %c125_i32_622 = arith.constant 125 : i32
    %1716 = vector.broadcast %c125_i32_622 : i32 to vector<8x1xi32>
    %1717 = arith.addi %1715, %1716 : vector<8x1xi32>
    %c-1_i32_623 = arith.constant -1 : i32
    %1718 = vector.broadcast %c-1_i32_623 : i32 to vector<8x1xi32>
    %1719 = arith.select %1713, %1717, %1718 : vector<8x1xi1>, vector<8x1xi32>
    %1720 = vector.broadcast %1719 : vector<8x1xi32> to vector<8x128xi32>
    %1721 = arith.cmpi eq, %1, %1720 : vector<8x128xi32>
    %cst_624 = arith.constant 1.000000e+00 : f32
    %cst_625 = arith.constant 0.000000e+00 : f32
    %1722 = vector.broadcast %cst_624 : f32 to vector<8x128xf32>
    %1723 = vector.broadcast %cst_625 : f32 to vector<8x128xf32>
    %1724 = arith.select %1721, %1722, %1723 : vector<8x128xi1>, vector<8x128xf32>
    %1725 = arith.addf %1703, %1724 : vector<8x128xf32>
    %1726 = tpu.concatenate %1596, %1725 in 1 : vector<8x128xf32>, vector<8x128xf32> -> vector<8x256xf32>
    %1727 = arith.truncf %1726 : vector<8x256xf32> to vector<8x256xbf16>
    %cst_626 = arith.constant dense<0.000000e+00> : vector<8x96xf32>
    %1728 = tpu.matmul %1727, %277, %cst_626 {dimension_numbers = #tpu.dot_dimension_numbers<[1], [0], [0], [1], [0, 0, 1, 1], [], []>} : vector<8x256xbf16>, vector<256x96xbf16>, vector<8x96xf32> -> vector<8x96xf32>
    %1729 = vector.broadcast %278 : vector<1x96xf32> to vector<8x96xf32>
    %1730 = arith.addf %1728, %1729 : vector<8x96xf32>
    %1731 = vector.extract_strided_slice %1730 {offsets = [0, 0], sizes = [8, 32], strides = [1, 1]} : vector<8x96xf32> to vector<8x32xf32>
    %1732 = vector.extract_strided_slice %1730 {offsets = [0, 32], sizes = [8, 32], strides = [1, 1]} : vector<8x96xf32> to vector<8x32xf32>
    %1733 = vector.extract_strided_slice %1730 {offsets = [0, 64], sizes = [8, 32], strides = [1, 1]} : vector<8x96xf32> to vector<8x32xf32>
    %cst_627 = arith.constant 0.000000e+00 : f32
    %1734 = vector.broadcast %cst_627 : f32 to vector<8x32xf32>
    %1735 = arith.maximumf %1731, %1734 : vector<8x32xf32>
    %1736 = arith.addf %1732, %1731 : vector<8x32xf32>
    %cst_628 = arith.constant 0.000000e+00 : f32
    %1737 = vector.broadcast %cst_628 : f32 to vector<8x32xf32>
    %1738 = arith.maximumf %1736, %1737 : vector<8x32xf32>
    %1739 = tpu.concatenate %1735, %1738 in 1 : vector<8x32xf32>, vector<8x32xf32> -> vector<8x64xf32>
    %cst_629 = arith.constant dense<0.000000e+00> : vector<8x96xf32>
    %1740 = tpu.matmul %1739, %279, %cst_629 {dimension_numbers = #tpu.dot_dimension_numbers<[1], [0], [0], [1], [0, 0, 1, 1], [], []>} : vector<8x64xf32>, vector<64x96xf32>, vector<8x96xf32> -> vector<8x96xf32>
    %1741 = vector.broadcast %280 : vector<1x96xf32> to vector<8x96xf32>
    %1742 = arith.addf %1740, %1741 : vector<8x96xf32>
    %1743 = arith.addf %1731, %1733 : vector<8x32xf32>
    %cst_630 = arith.constant 1.000000e+00 : f32
    %1744 = vector.broadcast %cst_630 : f32 to vector<8x1xf32>
    %1745 = arith.subf %1744, %1438 : vector<8x1xf32>
    %1746 = vector.extract_strided_slice %1742 {offsets = [0, 0], sizes = [8, 32], strides = [1, 1]} : vector<8x96xf32> to vector<8x32xf32>
    %1747 = vector.broadcast %1745 : vector<8x1xf32> to vector<8x32xf32>
    %1748 = arith.mulf %1747, %1746 : vector<8x32xf32>
    %1749 = arith.addf %1743, %1748 : vector<8x32xf32>
    %cst_631 = arith.constant 1.000000e+00 : f32
    %1750 = vector.broadcast %cst_631 : f32 to vector<8x1xf32>
    %1751 = arith.subf %1750, %1461 : vector<8x1xf32>
    %1752 = vector.extract_strided_slice %1742 {offsets = [0, 32], sizes = [8, 32], strides = [1, 1]} : vector<8x96xf32> to vector<8x32xf32>
    %1753 = vector.broadcast %1751 : vector<8x1xf32> to vector<8x32xf32>
    %1754 = arith.mulf %1753, %1752 : vector<8x32xf32>
    %1755 = arith.addf %1749, %1754 : vector<8x32xf32>
    %cst_632 = arith.constant 4.000000e+00 : f32
    %1756 = vector.broadcast %cst_632 : f32 to vector<8x1xf32>
    %1757 = arith.subf %1756, %1429 : vector<8x1xf32>
    %1758 = vector.extract_strided_slice %1742 {offsets = [0, 64], sizes = [8, 32], strides = [1, 1]} : vector<8x96xf32> to vector<8x32xf32>
    %1759 = vector.broadcast %1757 : vector<8x1xf32> to vector<8x32xf32>
    %1760 = arith.mulf %1759, %1758 : vector<8x32xf32>
    %1761 = arith.addf %1755, %1760 : vector<8x32xf32>
    %c0_633 = arith.constant 0 : index
    %c64 = arith.constant 64 : index
    %1762 = vector.load %arg6[%c0_633, %c64] : memref<8x192xf32, #tpu.memory_space<vmem>>, vector<8x32xf32>
    tpu.vector_store %arg6[%c0_633, %c64], %1761 {strides = array<i32>} : memref<8x192xf32, #tpu.memory_space<vmem>>, vector<8x32xf32>,
    %1763 = vector.broadcast %98 : vector<8x1xi32> to vector<8x128xi32>
    %1764 = arith.cmpi eq, %1, %1763 : vector<8x128xi32>
    %cst_634 = arith.constant 1.000000e+00 : f32
    %cst_635 = arith.constant 0.000000e+00 : f32
    %1765 = vector.broadcast %cst_634 : f32 to vector<8x128xf32>
    %1766 = vector.broadcast %cst_635 : f32 to vector<8x128xf32>
    %1767 = arith.select %1764, %1765, %1766 : vector<8x128xi1>, vector<8x128xf32>
    %1768 = vector.broadcast %109 : vector<8x1xf32> to vector<8x128xf32>
    %1769 = arith.mulf %1768, %276 : vector<8x128xf32>
    %1770 = arith.addf %1767, %1769 : vector<8x128xf32>
    %cst_636 = arith.constant 0.000000e+00 : f32
    %1771 = vector.broadcast %cst_636 : f32 to vector<8x1xf32>
    %1772 = vector.extract_strided_slice %0 {offsets = [0, 140], sizes = [8, 1], strides = [1, 1]} : vector<8x512xf32> to vector<8x1xf32>
    %cst_637 = arith.constant 1.000000e+00 : f32
    %1773 = vector.broadcast %cst_637 : f32 to vector<8x1xf32>
    %1774 = arith.addf %1772, %1773 : vector<8x1xf32>
    %1775 = arith.fptosi %1774 : vector<8x1xf32> to vector<8x1xi32>
    %c0_i32_638 = arith.constant 0 : i32
    %1776 = vector.broadcast %c0_i32_638 : i32 to vector<8x1xi32>
    %1777 = arith.cmpi sgt, %1775, %1776 : vector<8x1xi32>
    %c1_i32_639 = arith.constant 1 : i32
    %1778 = vector.broadcast %c1_i32_639 : i32 to vector<8x1xi32>
    %1779 = arith.subi %1775, %1778 : vector<8x1xi32>
    %c31_i32_640 = arith.constant 31 : i32
    %1780 = vector.broadcast %c31_i32_640 : i32 to vector<8x1xi32>
    %1781 = arith.addi %1779, %1780 : vector<8x1xi32>
    %c-1_i32_641 = arith.constant -1 : i32
    %1782 = vector.broadcast %c-1_i32_641 : i32 to vector<8x1xi32>
    %1783 = arith.select %1777, %1781, %1782 : vector<8x1xi1>, vector<8x1xi32>
    %1784 = vector.broadcast %1783 : vector<8x1xi32> to vector<8x128xi32>
    %1785 = arith.cmpi eq, %1, %1784 : vector<8x128xi32>
    %cst_642 = arith.constant 1.000000e+00 : f32
    %cst_643 = arith.constant 0.000000e+00 : f32
    %1786 = vector.broadcast %cst_642 : f32 to vector<8x128xf32>
    %1787 = vector.broadcast %cst_643 : f32 to vector<8x128xf32>
    %1788 = arith.select %1785, %1786, %1787 : vector<8x128xi1>, vector<8x128xf32>
    %1789 = arith.addf %1770, %1788 : vector<8x128xf32>
    %1790 = vector.extract_strided_slice %0 {offsets = [0, 144], sizes = [8, 1], strides = [1, 1]} : vector<8x512xf32> to vector<8x1xf32>
    %cst_644 = arith.constant 1.000000e+00 : f32
    %1791 = vector.broadcast %cst_644 : f32 to vector<8x1xf32>
    %1792 = arith.addf %1790, %1791 : vector<8x1xf32>
    %1793 = arith.fptosi %1792 : vector<8x1xf32> to vector<8x1xi32>
    %c63_i32_645 = arith.constant 63 : i32
    %1794 = vector.broadcast %c63_i32_645 : i32 to vector<8x1xi32>
    %1795 = arith.minsi %1793, %1794 : vector<8x1xi32>
    %1796 = vector.broadcast %1795 : vector<8x1xi32> to vector<8x128xi32>
    %1797 = arith.shrsi %1796, %7 : vector<8x128xi32>
    %c1_i32_646 = arith.constant 1 : i32
    %1798 = vector.broadcast %c1_i32_646 : i32 to vector<8x128xi32>
    %1799 = arith.andi %1797, %1798 : vector<8x128xi32>
    %1800 = arith.sitofp %1799 : vector<8x128xi32> to vector<8x128xf32>
    %1801 = vector.broadcast %1777 : vector<8x1xi1> to vector<8x128xi1>
    %1802 = arith.andi %12, %1801 : vector<8x128xi1>
    %cst_647 = arith.constant 0.000000e+00 : f32
    %1803 = vector.broadcast %cst_647 : f32 to vector<8x128xf32>
    %1804 = arith.select %1802, %1800, %1803 : vector<8x128xi1>, vector<8x128xf32>
    %1805 = arith.addf %1789, %1804 : vector<8x128xf32>
    %cst_648 = arith.constant 1.000000e+00 : f32
    %cst_649 = arith.constant 0.000000e+00 : f32
    %1806 = vector.broadcast %cst_648 : f32 to vector<8x1xf32>
    %1807 = vector.broadcast %cst_649 : f32 to vector<8x1xf32>
    %1808 = arith.select %1777, %1806, %1807 : vector<8x1xi1>, vector<8x1xf32>
    %1809 = arith.addf %1771, %1808 : vector<8x1xf32>
    %1810 = vector.extract_strided_slice %0 {offsets = [0, 141], sizes = [8, 1], strides = [1, 1]} : vector<8x512xf32> to vector<8x1xf32>
    %cst_650 = arith.constant 1.000000e+00 : f32
    %1811 = vector.broadcast %cst_650 : f32 to vector<8x1xf32>
    %1812 = arith.addf %1810, %1811 : vector<8x1xf32>
    %1813 = arith.fptosi %1812 : vector<8x1xf32> to vector<8x1xi32>
    %c0_i32_651 = arith.constant 0 : i32
    %1814 = vector.broadcast %c0_i32_651 : i32 to vector<8x1xi32>
    %1815 = arith.cmpi sgt, %1813, %1814 : vector<8x1xi32>
    %c1_i32_652 = arith.constant 1 : i32
    %1816 = vector.broadcast %c1_i32_652 : i32 to vector<8x1xi32>
    %1817 = arith.subi %1813, %1816 : vector<8x1xi32>
    %c31_i32_653 = arith.constant 31 : i32
    %1818 = vector.broadcast %c31_i32_653 : i32 to vector<8x1xi32>
    %1819 = arith.addi %1817, %1818 : vector<8x1xi32>
    %c-1_i32_654 = arith.constant -1 : i32
    %1820 = vector.broadcast %c-1_i32_654 : i32 to vector<8x1xi32>
    %1821 = arith.select %1815, %1819, %1820 : vector<8x1xi1>, vector<8x1xi32>
    %1822 = vector.broadcast %1821 : vector<8x1xi32> to vector<8x128xi32>
    %1823 = arith.cmpi eq, %1, %1822 : vector<8x128xi32>
    %cst_655 = arith.constant 1.000000e+00 : f32
    %cst_656 = arith.constant 0.000000e+00 : f32
    %1824 = vector.broadcast %cst_655 : f32 to vector<8x128xf32>
    %1825 = vector.broadcast %cst_656 : f32 to vector<8x128xf32>
    %1826 = arith.select %1823, %1824, %1825 : vector<8x128xi1>, vector<8x128xf32>
    %1827 = arith.addf %1805, %1826 : vector<8x128xf32>
    %1828 = vector.extract_strided_slice %0 {offsets = [0, 145], sizes = [8, 1], strides = [1, 1]} : vector<8x512xf32> to vector<8x1xf32>
    %cst_657 = arith.constant 1.000000e+00 : f32
    %1829 = vector.broadcast %cst_657 : f32 to vector<8x1xf32>
    %1830 = arith.addf %1828, %1829 : vector<8x1xf32>
    %1831 = arith.fptosi %1830 : vector<8x1xf32> to vector<8x1xi32>
    %c63_i32_658 = arith.constant 63 : i32
    %1832 = vector.broadcast %c63_i32_658 : i32 to vector<8x1xi32>
    %1833 = arith.minsi %1831, %1832 : vector<8x1xi32>
    %1834 = vector.broadcast %1833 : vector<8x1xi32> to vector<8x128xi32>
    %1835 = arith.shrsi %1834, %7 : vector<8x128xi32>
    %c1_i32_659 = arith.constant 1 : i32
    %1836 = vector.broadcast %c1_i32_659 : i32 to vector<8x128xi32>
    %1837 = arith.andi %1835, %1836 : vector<8x128xi32>
    %1838 = arith.sitofp %1837 : vector<8x128xi32> to vector<8x128xf32>
    %1839 = vector.broadcast %1815 : vector<8x1xi1> to vector<8x128xi1>
    %1840 = arith.andi %12, %1839 : vector<8x128xi1>
    %cst_660 = arith.constant 0.000000e+00 : f32
    %1841 = vector.broadcast %cst_660 : f32 to vector<8x128xf32>
    %1842 = arith.select %1840, %1838, %1841 : vector<8x128xi1>, vector<8x128xf32>
    %1843 = arith.addf %1827, %1842 : vector<8x128xf32>
    %cst_661 = arith.constant 1.000000e+00 : f32
    %cst_662 = arith.constant 0.000000e+00 : f32
    %1844 = vector.broadcast %cst_661 : f32 to vector<8x1xf32>
    %1845 = vector.broadcast %cst_662 : f32 to vector<8x1xf32>
    %1846 = arith.select %1815, %1844, %1845 : vector<8x1xi1>, vector<8x1xf32>
    %1847 = arith.addf %1809, %1846 : vector<8x1xf32>
    %1848 = vector.extract_strided_slice %0 {offsets = [0, 142], sizes = [8, 1], strides = [1, 1]} : vector<8x512xf32> to vector<8x1xf32>
    %cst_663 = arith.constant 1.000000e+00 : f32
    %1849 = vector.broadcast %cst_663 : f32 to vector<8x1xf32>
    %1850 = arith.addf %1848, %1849 : vector<8x1xf32>
    %1851 = arith.fptosi %1850 : vector<8x1xf32> to vector<8x1xi32>
    %c0_i32_664 = arith.constant 0 : i32
    %1852 = vector.broadcast %c0_i32_664 : i32 to vector<8x1xi32>
    %1853 = arith.cmpi sgt, %1851, %1852 : vector<8x1xi32>
    %c1_i32_665 = arith.constant 1 : i32
    %1854 = vector.broadcast %c1_i32_665 : i32 to vector<8x1xi32>
    %1855 = arith.subi %1851, %1854 : vector<8x1xi32>
    %c31_i32_666 = arith.constant 31 : i32
    %1856 = vector.broadcast %c31_i32_666 : i32 to vector<8x1xi32>
    %1857 = arith.addi %1855, %1856 : vector<8x1xi32>
    %c-1_i32_667 = arith.constant -1 : i32
    %1858 = vector.broadcast %c-1_i32_667 : i32 to vector<8x1xi32>
    %1859 = arith.select %1853, %1857, %1858 : vector<8x1xi1>, vector<8x1xi32>
    %1860 = vector.broadcast %1859 : vector<8x1xi32> to vector<8x128xi32>
    %1861 = arith.cmpi eq, %1, %1860 : vector<8x128xi32>
    %cst_668 = arith.constant 1.000000e+00 : f32
    %cst_669 = arith.constant 0.000000e+00 : f32
    %1862 = vector.broadcast %cst_668 : f32 to vector<8x128xf32>
    %1863 = vector.broadcast %cst_669 : f32 to vector<8x128xf32>
    %1864 = arith.select %1861, %1862, %1863 : vector<8x128xi1>, vector<8x128xf32>
    %1865 = arith.addf %1843, %1864 : vector<8x128xf32>
    %1866 = vector.extract_strided_slice %0 {offsets = [0, 146], sizes = [8, 1], strides = [1, 1]} : vector<8x512xf32> to vector<8x1xf32>
    %cst_670 = arith.constant 1.000000e+00 : f32
    %1867 = vector.broadcast %cst_670 : f32 to vector<8x1xf32>
    %1868 = arith.addf %1866, %1867 : vector<8x1xf32>
    %1869 = arith.fptosi %1868 : vector<8x1xf32> to vector<8x1xi32>
    %c63_i32_671 = arith.constant 63 : i32
    %1870 = vector.broadcast %c63_i32_671 : i32 to vector<8x1xi32>
    %1871 = arith.minsi %1869, %1870 : vector<8x1xi32>
    %1872 = vector.broadcast %1871 : vector<8x1xi32> to vector<8x128xi32>
    %1873 = arith.shrsi %1872, %7 : vector<8x128xi32>
    %c1_i32_672 = arith.constant 1 : i32
    %1874 = vector.broadcast %c1_i32_672 : i32 to vector<8x128xi32>
    %1875 = arith.andi %1873, %1874 : vector<8x128xi32>
    %1876 = arith.sitofp %1875 : vector<8x128xi32> to vector<8x128xf32>
    %1877 = vector.broadcast %1853 : vector<8x1xi1> to vector<8x128xi1>
    %1878 = arith.andi %12, %1877 : vector<8x128xi1>
    %cst_673 = arith.constant 0.000000e+00 : f32
    %1879 = vector.broadcast %cst_673 : f32 to vector<8x128xf32>
    %1880 = arith.select %1878, %1876, %1879 : vector<8x128xi1>, vector<8x128xf32>
    %1881 = arith.addf %1865, %1880 : vector<8x128xf32>
    %cst_674 = arith.constant 1.000000e+00 : f32
    %cst_675 = arith.constant 0.000000e+00 : f32
    %1882 = vector.broadcast %cst_674 : f32 to vector<8x1xf32>
    %1883 = vector.broadcast %cst_675 : f32 to vector<8x1xf32>
    %1884 = arith.select %1853, %1882, %1883 : vector<8x1xi1>, vector<8x1xf32>
    %1885 = arith.addf %1847, %1884 : vector<8x1xf32>
    %1886 = vector.extract_strided_slice %0 {offsets = [0, 143], sizes = [8, 1], strides = [1, 1]} : vector<8x512xf32> to vector<8x1xf32>
    %cst_676 = arith.constant 1.000000e+00 : f32
    %1887 = vector.broadcast %cst_676 : f32 to vector<8x1xf32>
    %1888 = arith.addf %1886, %1887 : vector<8x1xf32>
    %1889 = arith.fptosi %1888 : vector<8x1xf32> to vector<8x1xi32>
    %c0_i32_677 = arith.constant 0 : i32
    %1890 = vector.broadcast %c0_i32_677 : i32 to vector<8x1xi32>
    %1891 = arith.cmpi sgt, %1889, %1890 : vector<8x1xi32>
    %c1_i32_678 = arith.constant 1 : i32
    %1892 = vector.broadcast %c1_i32_678 : i32 to vector<8x1xi32>
    %1893 = arith.subi %1889, %1892 : vector<8x1xi32>
    %c31_i32_679 = arith.constant 31 : i32
    %1894 = vector.broadcast %c31_i32_679 : i32 to vector<8x1xi32>
    %1895 = arith.addi %1893, %1894 : vector<8x1xi32>
    %c-1_i32_680 = arith.constant -1 : i32
    %1896 = vector.broadcast %c-1_i32_680 : i32 to vector<8x1xi32>
    %1897 = arith.select %1891, %1895, %1896 : vector<8x1xi1>, vector<8x1xi32>
    %1898 = vector.broadcast %1897 : vector<8x1xi32> to vector<8x128xi32>
    %1899 = arith.cmpi eq, %1, %1898 : vector<8x128xi32>
    %cst_681 = arith.constant 1.000000e+00 : f32
    %cst_682 = arith.constant 0.000000e+00 : f32
    %1900 = vector.broadcast %cst_681 : f32 to vector<8x128xf32>
    %1901 = vector.broadcast %cst_682 : f32 to vector<8x128xf32>
    %1902 = arith.select %1899, %1900, %1901 : vector<8x128xi1>, vector<8x128xf32>
    %1903 = arith.addf %1881, %1902 : vector<8x128xf32>
    %1904 = vector.extract_strided_slice %0 {offsets = [0, 147], sizes = [8, 1], strides = [1, 1]} : vector<8x512xf32> to vector<8x1xf32>
    %cst_683 = arith.constant 1.000000e+00 : f32
    %1905 = vector.broadcast %cst_683 : f32 to vector<8x1xf32>
    %1906 = arith.addf %1904, %1905 : vector<8x1xf32>
    %1907 = arith.fptosi %1906 : vector<8x1xf32> to vector<8x1xi32>
    %c63_i32_684 = arith.constant 63 : i32
    %1908 = vector.broadcast %c63_i32_684 : i32 to vector<8x1xi32>
    %1909 = arith.minsi %1907, %1908 : vector<8x1xi32>
    %1910 = vector.broadcast %1909 : vector<8x1xi32> to vector<8x128xi32>
    %1911 = arith.shrsi %1910, %7 : vector<8x128xi32>
    %c1_i32_685 = arith.constant 1 : i32
    %1912 = vector.broadcast %c1_i32_685 : i32 to vector<8x128xi32>
    %1913 = arith.andi %1911, %1912 : vector<8x128xi32>
    %1914 = arith.sitofp %1913 : vector<8x128xi32> to vector<8x128xf32>
    %1915 = vector.broadcast %1891 : vector<8x1xi1> to vector<8x128xi1>
    %1916 = arith.andi %12, %1915 : vector<8x128xi1>
    %cst_686 = arith.constant 0.000000e+00 : f32
    %1917 = vector.broadcast %cst_686 : f32 to vector<8x128xf32>
    %1918 = arith.select %1916, %1914, %1917 : vector<8x128xi1>, vector<8x128xf32>
    %1919 = arith.addf %1903, %1918 : vector<8x128xf32>
    %cst_687 = arith.constant 1.000000e+00 : f32
    %cst_688 = arith.constant 0.000000e+00 : f32
    %1920 = vector.broadcast %cst_687 : f32 to vector<8x1xf32>
    %1921 = vector.broadcast %cst_688 : f32 to vector<8x1xf32>
    %1922 = arith.select %1891, %1920, %1921 : vector<8x1xi1>, vector<8x1xf32>
    %1923 = arith.addf %1885, %1922 : vector<8x1xf32>
    %1924 = vector.extract_strided_slice %0 {offsets = [0, 129], sizes = [8, 1], strides = [1, 1]} : vector<8x512xf32> to vector<8x1xf32>
    %cst_689 = arith.constant 1.000000e+00 : f32
    %1925 = vector.broadcast %cst_689 : f32 to vector<8x1xf32>
    %1926 = arith.addf %1924, %1925 : vector<8x1xf32>
    %1927 = arith.fptosi %1926 : vector<8x1xf32> to vector<8x1xi32>
    %c0_i32_690 = arith.constant 0 : i32
    %1928 = vector.broadcast %c0_i32_690 : i32 to vector<8x1xi32>
    %1929 = arith.cmpi sgt, %1927, %1928 : vector<8x1xi32>
    %cst_691 = arith.constant 1.000000e+00 : f32
    %cst_692 = arith.constant 0.000000e+00 : f32
    %1930 = vector.broadcast %cst_691 : f32 to vector<8x1xf32>
    %1931 = vector.broadcast %cst_692 : f32 to vector<8x1xf32>
    %1932 = arith.select %1929, %1930, %1931 : vector<8x1xi1>, vector<8x1xf32>
    %c0_i32_693 = arith.constant 0 : i32
    %1933 = vector.broadcast %c0_i32_693 : i32 to vector<8x1xi32>
    %1934 = arith.cmpi sgt, %1927, %1933 : vector<8x1xi32>
    %c1_i32_694 = arith.constant 1 : i32
    %1935 = vector.broadcast %c1_i32_694 : i32 to vector<8x1xi32>
    %1936 = arith.subi %1927, %1935 : vector<8x1xi32>
    %c60_i32_695 = arith.constant 60 : i32
    %1937 = vector.broadcast %c60_i32_695 : i32 to vector<8x1xi32>
    %1938 = arith.addi %1936, %1937 : vector<8x1xi32>
    %c-1_i32_696 = arith.constant -1 : i32
    %1939 = vector.broadcast %c-1_i32_696 : i32 to vector<8x1xi32>
    %1940 = arith.select %1934, %1938, %1939 : vector<8x1xi1>, vector<8x1xi32>
    %1941 = vector.broadcast %1940 : vector<8x1xi32> to vector<8x128xi32>
    %1942 = arith.cmpi eq, %1, %1941 : vector<8x128xi32>
    %cst_697 = arith.constant 1.000000e+00 : f32
    %cst_698 = arith.constant 0.000000e+00 : f32
    %1943 = vector.broadcast %cst_697 : f32 to vector<8x128xf32>
    %1944 = vector.broadcast %cst_698 : f32 to vector<8x128xf32>
    %1945 = arith.select %1942, %1943, %1944 : vector<8x128xi1>, vector<8x128xf32>
    %1946 = arith.addf %1919, %1945 : vector<8x128xf32>
    %1947 = vector.extract_strided_slice %0 {offsets = [0, 131], sizes = [8, 1], strides = [1, 1]} : vector<8x512xf32> to vector<8x1xf32>
    %cst_699 = arith.constant 1.000000e+00 : f32
    %1948 = vector.broadcast %cst_699 : f32 to vector<8x1xf32>
    %1949 = arith.addf %1947, %1948 : vector<8x1xf32>
    %1950 = arith.fptosi %1949 : vector<8x1xf32> to vector<8x1xi32>
    %c0_i32_700 = arith.constant 0 : i32
    %1951 = vector.broadcast %c0_i32_700 : i32 to vector<8x1xi32>
    %1952 = arith.cmpi sgt, %1950, %1951 : vector<8x1xi32>
    %cst_701 = arith.constant 1.000000e+00 : f32
    %cst_702 = arith.constant 0.000000e+00 : f32
    %1953 = vector.broadcast %cst_701 : f32 to vector<8x1xf32>
    %1954 = vector.broadcast %cst_702 : f32 to vector<8x1xf32>
    %1955 = arith.select %1952, %1953, %1954 : vector<8x1xi1>, vector<8x1xf32>
    %c0_i32_703 = arith.constant 0 : i32
    %1956 = vector.broadcast %c0_i32_703 : i32 to vector<8x1xi32>
    %1957 = arith.cmpi sgt, %1950, %1956 : vector<8x1xi32>
    %c1_i32_704 = arith.constant 1 : i32
    %1958 = vector.broadcast %c1_i32_704 : i32 to vector<8x1xi32>
    %1959 = arith.subi %1950, %1958 : vector<8x1xi32>
    %c75_i32_705 = arith.constant 75 : i32
    %1960 = vector.broadcast %c75_i32_705 : i32 to vector<8x1xi32>
    %1961 = arith.addi %1959, %1960 : vector<8x1xi32>
    %c-1_i32_706 = arith.constant -1 : i32
    %1962 = vector.broadcast %c-1_i32_706 : i32 to vector<8x1xi32>
    %1963 = arith.select %1957, %1961, %1962 : vector<8x1xi1>, vector<8x1xi32>
    %1964 = vector.broadcast %1963 : vector<8x1xi32> to vector<8x128xi32>
    %1965 = arith.cmpi eq, %1, %1964 : vector<8x128xi32>
    %cst_707 = arith.constant 1.000000e+00 : f32
    %cst_708 = arith.constant 0.000000e+00 : f32
    %1966 = vector.broadcast %cst_707 : f32 to vector<8x128xf32>
    %1967 = vector.broadcast %cst_708 : f32 to vector<8x128xf32>
    %1968 = arith.select %1965, %1966, %1967 : vector<8x128xi1>, vector<8x128xf32>
    %1969 = arith.addf %1946, %1968 : vector<8x128xf32>
    %1970 = vector.extract_strided_slice %0 {offsets = [0, 133], sizes = [8, 1], strides = [1, 1]} : vector<8x512xf32> to vector<8x1xf32>
    %cst_709 = arith.constant 1.000000e+00 : f32
    %1971 = vector.broadcast %cst_709 : f32 to vector<8x1xf32>
    %1972 = arith.addf %1970, %1971 : vector<8x1xf32>
    %1973 = arith.fptosi %1972 : vector<8x1xf32> to vector<8x1xi32>
    %c0_i32_710 = arith.constant 0 : i32
    %1974 = vector.broadcast %c0_i32_710 : i32 to vector<8x1xi32>
    %1975 = arith.cmpi sgt, %1950, %1974 : vector<8x1xi32>
    %c0_i32_711 = arith.constant 0 : i32
    %1976 = vector.broadcast %c0_i32_711 : i32 to vector<8x1xi32>
    %1977 = arith.cmpi sgt, %1973, %1976 : vector<8x1xi32>
    %1978 = arith.andi %1975, %1977 : vector<8x1xi1>
    %c1_i32_712 = arith.constant 1 : i32
    %1979 = vector.broadcast %c1_i32_712 : i32 to vector<8x1xi32>
    %1980 = arith.subi %1973, %1979 : vector<8x1xi32>
    %c90_i32_713 = arith.constant 90 : i32
    %1981 = vector.broadcast %c90_i32_713 : i32 to vector<8x1xi32>
    %1982 = arith.addi %1980, %1981 : vector<8x1xi32>
    %c-1_i32_714 = arith.constant -1 : i32
    %1983 = vector.broadcast %c-1_i32_714 : i32 to vector<8x1xi32>
    %1984 = arith.select %1978, %1982, %1983 : vector<8x1xi1>, vector<8x1xi32>
    %1985 = vector.broadcast %1984 : vector<8x1xi32> to vector<8x128xi32>
    %1986 = arith.cmpi eq, %1, %1985 : vector<8x128xi32>
    %cst_715 = arith.constant 1.000000e+00 : f32
    %cst_716 = arith.constant 0.000000e+00 : f32
    %1987 = vector.broadcast %cst_715 : f32 to vector<8x128xf32>
    %1988 = vector.broadcast %cst_716 : f32 to vector<8x128xf32>
    %1989 = arith.select %1986, %1987, %1988 : vector<8x128xi1>, vector<8x128xf32>
    %1990 = arith.addf %1969, %1989 : vector<8x128xf32>
    %1991 = vector.extract_strided_slice %0 {offsets = [0, 149], sizes = [8, 1], strides = [1, 1]} : vector<8x512xf32> to vector<8x1xf32>
    %cst_717 = arith.constant 1.000000e+00 : f32
    %1992 = vector.broadcast %cst_717 : f32 to vector<8x1xf32>
    %1993 = arith.addf %1991, %1992 : vector<8x1xf32>
    %1994 = arith.fptosi %1993 : vector<8x1xf32> to vector<8x1xi32>
    %c0_i32_718 = arith.constant 0 : i32
    %1995 = vector.broadcast %c0_i32_718 : i32 to vector<8x1xi32>
    %1996 = arith.cmpi sgt, %1994, %1995 : vector<8x1xi32>
    %c1_i32_719 = arith.constant 1 : i32
    %1997 = vector.broadcast %c1_i32_719 : i32 to vector<8x1xi32>
    %1998 = arith.subi %1994, %1997 : vector<8x1xi32>
    %c97_i32_720 = arith.constant 97 : i32
    %1999 = vector.broadcast %c97_i32_720 : i32 to vector<8x1xi32>
    %2000 = arith.addi %1998, %1999 : vector<8x1xi32>
    %c-1_i32_721 = arith.constant -1 : i32
    %2001 = vector.broadcast %c-1_i32_721 : i32 to vector<8x1xi32>
    %2002 = arith.select %1996, %2000, %2001 : vector<8x1xi1>, vector<8x1xi32>
    %2003 = vector.broadcast %2002 : vector<8x1xi32> to vector<8x128xi32>
    %2004 = arith.cmpi eq, %1, %2003 : vector<8x128xi32>
    %cst_722 = arith.constant 1.000000e+00 : f32
    %cst_723 = arith.constant 0.000000e+00 : f32
    %2005 = vector.broadcast %cst_722 : f32 to vector<8x128xf32>
    %2006 = vector.broadcast %cst_723 : f32 to vector<8x128xf32>
    %2007 = arith.select %2004, %2005, %2006 : vector<8x128xi1>, vector<8x128xf32>
    %2008 = arith.addf %1990, %2007 : vector<8x128xf32>
    %2009 = vector.extract_strided_slice %0 {offsets = [0, 115], sizes = [8, 1], strides = [1, 1]} : vector<8x512xf32> to vector<8x1xf32>
    %cst_724 = arith.constant 1.000000e+00 : f32
    %2010 = vector.broadcast %cst_724 : f32 to vector<8x1xf32>
    %2011 = arith.addf %2009, %2010 : vector<8x1xf32>
    %2012 = arith.fptosi %2011 : vector<8x1xf32> to vector<8x1xi32>
    %c0_i32_725 = arith.constant 0 : i32
    %2013 = vector.broadcast %c0_i32_725 : i32 to vector<8x1xi32>
    %2014 = arith.cmpi sgt, %2012, %2013 : vector<8x1xi32>
    %c1_i32_726 = arith.constant 1 : i32
    %2015 = vector.broadcast %c1_i32_726 : i32 to vector<8x1xi32>
    %2016 = arith.subi %2012, %2015 : vector<8x1xi32>
    %c119_i32_727 = arith.constant 119 : i32
    %2017 = vector.broadcast %c119_i32_727 : i32 to vector<8x1xi32>
    %2018 = arith.addi %2016, %2017 : vector<8x1xi32>
    %c-1_i32_728 = arith.constant -1 : i32
    %2019 = vector.broadcast %c-1_i32_728 : i32 to vector<8x1xi32>
    %2020 = arith.select %2014, %2018, %2019 : vector<8x1xi1>, vector<8x1xi32>
    %2021 = vector.broadcast %2020 : vector<8x1xi32> to vector<8x128xi32>
    %2022 = arith.cmpi eq, %1, %2021 : vector<8x128xi32>
    %cst_729 = arith.constant 1.000000e+00 : f32
    %cst_730 = arith.constant 0.000000e+00 : f32
    %2023 = vector.broadcast %cst_729 : f32 to vector<8x128xf32>
    %2024 = vector.broadcast %cst_730 : f32 to vector<8x128xf32>
    %2025 = arith.select %2022, %2023, %2024 : vector<8x128xi1>, vector<8x128xf32>
    %2026 = arith.addf %2008, %2025 : vector<8x128xf32>
    %2027 = vector.extract_strided_slice %0 {offsets = [0, 126], sizes = [8, 1], strides = [1, 1]} : vector<8x512xf32> to vector<8x1xf32>
    %cst_731 = arith.constant 1.000000e+00 : f32
    %2028 = vector.broadcast %cst_731 : f32 to vector<8x1xf32>
    %2029 = arith.addf %2027, %2028 : vector<8x1xf32>
    %2030 = arith.fptosi %2029 : vector<8x1xf32> to vector<8x1xi32>
    %c0_i32_732 = arith.constant 0 : i32
    %2031 = vector.broadcast %c0_i32_732 : i32 to vector<8x1xi32>
    %2032 = arith.cmpi sgt, %2030, %2031 : vector<8x1xi32>
    %c1_i32_733 = arith.constant 1 : i32
    %2033 = vector.broadcast %c1_i32_733 : i32 to vector<8x1xi32>
    %2034 = arith.subi %2030, %2033 : vector<8x1xi32>
    %c126_i32_734 = arith.constant 126 : i32
    %2035 = vector.broadcast %c126_i32_734 : i32 to vector<8x1xi32>
    %2036 = arith.addi %2034, %2035 : vector<8x1xi32>
    %c-1_i32_735 = arith.constant -1 : i32
    %2037 = vector.broadcast %c-1_i32_735 : i32 to vector<8x1xi32>
    %2038 = arith.select %2032, %2036, %2037 : vector<8x1xi1>, vector<8x1xi32>
    %2039 = vector.broadcast %2038 : vector<8x1xi32> to vector<8x128xi32>
    %2040 = arith.cmpi eq, %1, %2039 : vector<8x128xi32>
    %cst_736 = arith.constant 1.000000e+00 : f32
    %cst_737 = arith.constant 0.000000e+00 : f32
    %2041 = vector.broadcast %cst_736 : f32 to vector<8x128xf32>
    %2042 = vector.broadcast %cst_737 : f32 to vector<8x128xf32>
    %2043 = arith.select %2040, %2041, %2042 : vector<8x128xi1>, vector<8x128xf32>
    %2044 = arith.addf %2026, %2043 : vector<8x128xf32>
    %2045 = vector.extract_strided_slice %0 {offsets = [0, 151], sizes = [8, 1], strides = [1, 1]} : vector<8x512xf32> to vector<8x1xf32>
    %cst_738 = arith.constant 1.000000e+00 : f32
    %2046 = vector.broadcast %cst_738 : f32 to vector<8x1xf32>
    %2047 = arith.addf %2045, %2046 : vector<8x1xf32>
    %2048 = arith.fptosi %2047 : vector<8x1xf32> to vector<8x1xi32>
    %c1_i32_739 = arith.constant 1 : i32
    %2049 = vector.broadcast %c1_i32_739 : i32 to vector<8x1xi32>
    %2050 = arith.subi %2048, %2049 : vector<8x1xi32>
    %c0_i32_740 = arith.constant 0 : i32
    %c1_i32_741 = arith.constant 1 : i32
    %2051 = vector.broadcast %c0_i32_740 : i32 to vector<8x1xi32>
    %2052 = arith.maxsi %2051, %2050 : vector<8x1xi32>
    %2053 = vector.broadcast %c1_i32_741 : i32 to vector<8x1xi32>
    %2054 = arith.minsi %2053, %2052 : vector<8x1xi32>
    %2055 = arith.sitofp %2054 : vector<8x1xi32> to vector<8x1xf32>
    %c116_i32_742 = arith.constant 116 : i32
    %2056 = vector.broadcast %c116_i32_742 : i32 to vector<8x128xi32>
    %2057 = arith.cmpi eq, %1, %2056 : vector<8x128xi32>
    %cst_743 = arith.constant 0.000000e+00 : f32
    %2058 = vector.shape_cast %2055 : vector<8x1xf32> to vector<8x1xf32>
    %2059 = vector.broadcast %2058 : vector<8x1xf32> to vector<8x128xf32>
    %2060 = vector.broadcast %cst_743 : f32 to vector<8x128xf32>
    %2061 = arith.select %2057, %2059, %2060 : vector<8x128xi1>, vector<8x128xf32>
    %2062 = arith.addf %2044, %2061 : vector<8x128xf32>
    %2063 = vector.extract_strided_slice %0 {offsets = [0, 148], sizes = [8, 1], strides = [1, 1]} : vector<8x512xf32> to vector<8x1xf32>
    %cst_744 = arith.constant 1.000000e+00 : f32
    %2064 = vector.broadcast %cst_744 : f32 to vector<8x1xf32>
    %2065 = arith.addf %2063, %2064 : vector<8x1xf32>
    %2066 = arith.fptosi %2065 : vector<8x1xf32> to vector<8x1xi32>
    %c0_i32_745 = arith.constant 0 : i32
    %2067 = vector.broadcast %c0_i32_745 : i32 to vector<8x1xi32>
    %2068 = arith.cmpi sgt, %2066, %2067 : vector<8x1xi32>
    %cst_746 = arith.constant 1.000000e+00 : f32
    %cst_747 = arith.constant 0.000000e+00 : f32
    %2069 = vector.broadcast %cst_746 : f32 to vector<8x1xf32>
    %2070 = vector.broadcast %cst_747 : f32 to vector<8x1xf32>
    %2071 = arith.select %2068, %2069, %2070 : vector<8x1xi1>, vector<8x1xf32>
    %c117_i32_748 = arith.constant 117 : i32
    %2072 = vector.broadcast %c117_i32_748 : i32 to vector<8x128xi32>
    %2073 = arith.cmpi eq, %1, %2072 : vector<8x128xi32>
    %cst_749 = arith.constant 0.000000e+00 : f32
    %2074 = vector.shape_cast %2071 : vector<8x1xf32> to vector<8x1xf32>
    %2075 = vector.broadcast %2074 : vector<8x1xf32> to vector<8x128xf32>
    %2076 = vector.broadcast %cst_749 : f32 to vector<8x128xf32>
    %2077 = arith.select %2073, %2075, %2076 : vector<8x128xi1>, vector<8x128xf32>
    %2078 = arith.addf %2062, %2077 : vector<8x128xf32>
    %c118_i32_750 = arith.constant 118 : i32
    %2079 = vector.broadcast %c118_i32_750 : i32 to vector<8x128xi32>
    %2080 = arith.cmpi eq, %1, %2079 : vector<8x128xi32>
    %c0_i32_751 = arith.constant 0 : i32
    %2081 = vector.broadcast %c0_i32_751 : i32 to vector<8x1xi32>
    %2082 = arith.cmpi sgt, %1994, %2081 : vector<8x1xi32>
    %cst_752 = arith.constant 0.000000e+00 : f32
    %cst_753 = arith.constant 1.000000e+00 : f32
    %2083 = vector.broadcast %cst_752 : f32 to vector<8x1xf32>
    %2084 = vector.broadcast %cst_753 : f32 to vector<8x1xf32>
    %2085 = arith.select %2082, %2083, %2084 : vector<8x1xi1>, vector<8x1xf32>
    %cst_754 = arith.constant 0.000000e+00 : f32
    %2086 = vector.shape_cast %2085 : vector<8x1xf32> to vector<8x1xf32>
    %2087 = vector.broadcast %2086 : vector<8x1xf32> to vector<8x128xf32>
    %2088 = vector.broadcast %cst_754 : f32 to vector<8x128xf32>
    %2089 = arith.select %2080, %2087, %2088 : vector<8x128xi1>, vector<8x128xf32>
    %2090 = arith.addf %2078, %2089 : vector<8x128xf32>
    %2091 = vector.extract_strided_slice %0 {offsets = [0, 119], sizes = [8, 1], strides = [1, 1]} : vector<8x512xf32> to vector<8x1xf32>
    %cst_755 = arith.constant 1.000000e+01 : f32
    %2092 = vector.broadcast %cst_755 : f32 to vector<8x1xf32>
    %2093 = arith.mulf %2091, %2092 : vector<8x1xf32>
    %cst_756 = arith.constant 0.000000e+00 : f32
    %cst_757 = arith.constant 1.000000e+01 : f32
    %2094 = vector.broadcast %cst_756 : f32 to vector<8x1xf32>
    %2095 = arith.maximumf %2094, %2093 : vector<8x1xf32>
    %2096 = vector.broadcast %cst_757 : f32 to vector<8x1xf32>
    %2097 = arith.minimumf %2096, %2095 : vector<8x1xf32>
    %2098 = arith.fptosi %2097 : vector<8x1xf32> to vector<8x1xi32>
    %c0_i32_758 = arith.constant 0 : i32
    %2099 = vector.broadcast %c0_i32_758 : i32 to vector<8x1xi32>
    %2100 = arith.cmpi sgt, %2098, %2099 : vector<8x1xi32>
    %c1_i32_759 = arith.constant 1 : i32
    %2101 = vector.broadcast %c1_i32_759 : i32 to vector<8x1xi32>
    %2102 = arith.subi %2098, %2101 : vector<8x1xi32>
    %c0_i32_760 = arith.constant 0 : i32
    %2103 = vector.broadcast %c0_i32_760 : i32 to vector<8x1xi32>
    %2104 = arith.addi %2102, %2103 : vector<8x1xi32>
    %c-1_i32_761 = arith.constant -1 : i32
    %2105 = vector.broadcast %c-1_i32_761 : i32 to vector<8x1xi32>
    %2106 = arith.select %2100, %2104, %2105 : vector<8x1xi1>, vector<8x1xi32>
    %2107 = vector.broadcast %2106 : vector<8x1xi32> to vector<8x128xi32>
    %2108 = arith.cmpi eq, %1, %2107 : vector<8x128xi32>
    %cst_762 = arith.constant 1.000000e+00 : f32
    %cst_763 = arith.constant 0.000000e+00 : f32
    %2109 = vector.broadcast %cst_762 : f32 to vector<8x128xf32>
    %2110 = vector.broadcast %cst_763 : f32 to vector<8x128xf32>
    %2111 = arith.select %2108, %2109, %2110 : vector<8x128xi1>, vector<8x128xf32>
    %2112 = vector.extract_strided_slice %0 {offsets = [0, 125], sizes = [8, 1], strides = [1, 1]} : vector<8x512xf32> to vector<8x1xf32>
    %cst_764 = arith.constant 1.000000e+00 : f32
    %2113 = vector.broadcast %cst_764 : f32 to vector<8x1xf32>
    %2114 = arith.addf %2112, %2113 : vector<8x1xf32>
    %2115 = arith.fptosi %2114 : vector<8x1xf32> to vector<8x1xi32>
    %c0_i32_765 = arith.constant 0 : i32
    %2116 = vector.broadcast %c0_i32_765 : i32 to vector<8x1xi32>
    %2117 = arith.cmpi sgt, %2115, %2116 : vector<8x1xi32>
    %c1_i32_766 = arith.constant 1 : i32
    %2118 = vector.broadcast %c1_i32_766 : i32 to vector<8x1xi32>
    %2119 = arith.subi %2115, %2118 : vector<8x1xi32>
    %c10_i32_767 = arith.constant 10 : i32
    %2120 = vector.broadcast %c10_i32_767 : i32 to vector<8x1xi32>
    %2121 = arith.addi %2119, %2120 : vector<8x1xi32>
    %c-1_i32_768 = arith.constant -1 : i32
    %2122 = vector.broadcast %c-1_i32_768 : i32 to vector<8x1xi32>
    %2123 = arith.select %2117, %2121, %2122 : vector<8x1xi1>, vector<8x1xi32>
    %2124 = vector.broadcast %2123 : vector<8x1xi32> to vector<8x128xi32>
    %2125 = arith.cmpi eq, %1, %2124 : vector<8x128xi32>
    %cst_769 = arith.constant 1.000000e+00 : f32
    %cst_770 = arith.constant 0.000000e+00 : f32
    %2126 = vector.broadcast %cst_769 : f32 to vector<8x128xf32>
    %2127 = vector.broadcast %cst_770 : f32 to vector<8x128xf32>
    %2128 = arith.select %2125, %2126, %2127 : vector<8x128xi1>, vector<8x128xf32>
    %2129 = arith.addf %2111, %2128 : vector<8x128xf32>
    %2130 = vector.extract_strided_slice %0 {offsets = [0, 128], sizes = [8, 1], strides = [1, 1]} : vector<8x512xf32> to vector<8x1xf32>
    %cst_771 = arith.constant 1.000000e+00 : f32
    %2131 = vector.broadcast %cst_771 : f32 to vector<8x1xf32>
    %2132 = arith.addf %2130, %2131 : vector<8x1xf32>
    %2133 = arith.fptosi %2132 : vector<8x1xf32> to vector<8x1xi32>
    %c0_i32_772 = arith.constant 0 : i32
    %2134 = vector.broadcast %c0_i32_772 : i32 to vector<8x1xi32>
    %2135 = arith.cmpi sgt, %2133, %2134 : vector<8x1xi32>
    %c1_i32_773 = arith.constant 1 : i32
    %2136 = vector.broadcast %c1_i32_773 : i32 to vector<8x1xi32>
    %2137 = arith.subi %2133, %2136 : vector<8x1xi32>
    %c12_i32_774 = arith.constant 12 : i32
    %2138 = vector.broadcast %c12_i32_774 : i32 to vector<8x1xi32>
    %2139 = arith.addi %2137, %2138 : vector<8x1xi32>
    %c-1_i32_775 = arith.constant -1 : i32
    %2140 = vector.broadcast %c-1_i32_775 : i32 to vector<8x1xi32>
    %2141 = arith.select %2135, %2139, %2140 : vector<8x1xi1>, vector<8x1xi32>
    %2142 = vector.broadcast %2141 : vector<8x1xi32> to vector<8x128xi32>
    %2143 = arith.cmpi eq, %1, %2142 : vector<8x128xi32>
    %cst_776 = arith.constant 1.000000e+00 : f32
    %cst_777 = arith.constant 0.000000e+00 : f32
    %2144 = vector.broadcast %cst_776 : f32 to vector<8x128xf32>
    %2145 = vector.broadcast %cst_777 : f32 to vector<8x128xf32>
    %2146 = arith.select %2143, %2144, %2145 : vector<8x128xi1>, vector<8x128xf32>
    %2147 = arith.addf %2129, %2146 : vector<8x128xf32>
    %2148 = vector.extract_strided_slice %0 {offsets = [0, 127], sizes = [8, 1], strides = [1, 1]} : vector<8x512xf32> to vector<8x1xf32>
    %2149 = arith.fptosi %2148 : vector<8x1xf32> to vector<8x1xi32>
    %c1_i32_778 = arith.constant 1 : i32
    %2150 = vector.broadcast %c1_i32_778 : i32 to vector<8x1xi32>
    %2151 = arith.maxsi %2149, %2150 : vector<8x1xi32>
    %c1_i32_779 = arith.constant 1 : i32
    %2152 = vector.broadcast %c1_i32_779 : i32 to vector<8x1xi32>
    %2153 = arith.subi %2151, %2152 : vector<8x1xi32>
    %c15_i32_780 = arith.constant 15 : i32
    %2154 = vector.broadcast %c15_i32_780 : i32 to vector<8x1xi32>
    %2155 = arith.addi %2153, %2154 : vector<8x1xi32>
    %2156 = vector.broadcast %2155 : vector<8x1xi32> to vector<8x128xi32>
    %2157 = arith.cmpi eq, %1, %2156 : vector<8x128xi32>
    %cst_781 = arith.constant 1.000000e+00 : f32
    %cst_782 = arith.constant 0.000000e+00 : f32
    %2158 = vector.broadcast %cst_781 : f32 to vector<8x128xf32>
    %2159 = vector.broadcast %cst_782 : f32 to vector<8x128xf32>
    %2160 = arith.select %2157, %2158, %2159 : vector<8x128xi1>, vector<8x128xf32>
    %2161 = arith.addf %2147, %2160 : vector<8x128xf32>
    %2162 = vector.extract_strided_slice %0 {offsets = [0, 135], sizes = [8, 1], strides = [1, 1]} : vector<8x512xf32> to vector<8x1xf32>
    %cst_783 = arith.constant 1.000000e+00 : f32
    %2163 = vector.broadcast %cst_783 : f32 to vector<8x1xf32>
    %2164 = arith.addf %2162, %2163 : vector<8x1xf32>
    %2165 = arith.fptosi %2164 : vector<8x1xf32> to vector<8x1xi32>
    %c0_i32_784 = arith.constant 0 : i32
    %2166 = vector.broadcast %c0_i32_784 : i32 to vector<8x1xi32>
    %2167 = arith.cmpi sgt, %2165, %2166 : vector<8x1xi32>
    %c1_i32_785 = arith.constant 1 : i32
    %2168 = vector.broadcast %c1_i32_785 : i32 to vector<8x1xi32>
    %2169 = arith.subi %2165, %2168 : vector<8x1xi32>
    %c115_i32_786 = arith.constant 115 : i32
    %2170 = vector.broadcast %c115_i32_786 : i32 to vector<8x1xi32>
    %2171 = arith.addi %2169, %2170 : vector<8x1xi32>
    %c-1_i32_787 = arith.constant -1 : i32
    %2172 = vector.broadcast %c-1_i32_787 : i32 to vector<8x1xi32>
    %2173 = arith.select %2167, %2171, %2172 : vector<8x1xi1>, vector<8x1xi32>
    %2174 = vector.broadcast %2173 : vector<8x1xi32> to vector<8x128xi32>
    %2175 = arith.cmpi eq, %1, %2174 : vector<8x128xi32>
    %cst_788 = arith.constant 1.000000e+00 : f32
    %cst_789 = arith.constant 0.000000e+00 : f32
    %2176 = vector.broadcast %cst_788 : f32 to vector<8x128xf32>
    %2177 = vector.broadcast %cst_789 : f32 to vector<8x128xf32>
    %2178 = arith.select %2175, %2176, %2177 : vector<8x128xi1>, vector<8x128xf32>
    %2179 = arith.addf %2161, %2178 : vector<8x128xf32>
    %2180 = vector.extract_strided_slice %0 {offsets = [0, 136], sizes = [8, 1], strides = [1, 1]} : vector<8x512xf32> to vector<8x1xf32>
    %cst_790 = arith.constant 1.000000e+00 : f32
    %2181 = vector.broadcast %cst_790 : f32 to vector<8x1xf32>
    %2182 = arith.addf %2180, %2181 : vector<8x1xf32>
    %2183 = arith.fptosi %2182 : vector<8x1xf32> to vector<8x1xi32>
    %c0_i32_791 = arith.constant 0 : i32
    %2184 = vector.broadcast %c0_i32_791 : i32 to vector<8x1xi32>
    %2185 = arith.cmpi sgt, %2183, %2184 : vector<8x1xi32>
    %c1_i32_792 = arith.constant 1 : i32
    %2186 = vector.broadcast %c1_i32_792 : i32 to vector<8x1xi32>
    %2187 = arith.subi %2183, %2186 : vector<8x1xi32>
    %c122_i32_793 = arith.constant 122 : i32
    %2188 = vector.broadcast %c122_i32_793 : i32 to vector<8x1xi32>
    %2189 = arith.addi %2187, %2188 : vector<8x1xi32>
    %c-1_i32_794 = arith.constant -1 : i32
    %2190 = vector.broadcast %c-1_i32_794 : i32 to vector<8x1xi32>
    %2191 = arith.select %2185, %2189, %2190 : vector<8x1xi1>, vector<8x1xi32>
    %2192 = vector.broadcast %2191 : vector<8x1xi32> to vector<8x128xi32>
    %2193 = arith.cmpi eq, %1, %2192 : vector<8x128xi32>
    %cst_795 = arith.constant 1.000000e+00 : f32
    %cst_796 = arith.constant 0.000000e+00 : f32
    %2194 = vector.broadcast %cst_795 : f32 to vector<8x128xf32>
    %2195 = vector.broadcast %cst_796 : f32 to vector<8x128xf32>
    %2196 = arith.select %2193, %2194, %2195 : vector<8x128xi1>, vector<8x128xf32>
    %2197 = arith.addf %2179, %2196 : vector<8x128xf32>
    %2198 = vector.extract_strided_slice %0 {offsets = [0, 137], sizes = [8, 1], strides = [1, 1]} : vector<8x512xf32> to vector<8x1xf32>
    %cst_797 = arith.constant 1.000000e+00 : f32
    %2199 = vector.broadcast %cst_797 : f32 to vector<8x1xf32>
    %2200 = arith.addf %2198, %2199 : vector<8x1xf32>
    %2201 = arith.fptosi %2200 : vector<8x1xf32> to vector<8x1xi32>
    %2202 = arith.sitofp %2201 : vector<8x1xi32> to vector<8x1xf32>
    %2203 = math.sqrt %2202 : vector<8x1xf32>
    %2204 = math.floor %2203 : vector<8x1xf32>
    %2205 = arith.fptosi %2204 : vector<8x1xf32> to vector<8x1xi32>
    %c0_i32_798 = arith.constant 0 : i32
    %2206 = vector.broadcast %c0_i32_798 : i32 to vector<8x1xi32>
    %2207 = arith.cmpi sgt, %2205, %2206 : vector<8x1xi32>
    %c1_i32_799 = arith.constant 1 : i32
    %2208 = vector.broadcast %c1_i32_799 : i32 to vector<8x1xi32>
    %2209 = arith.subi %2205, %2208 : vector<8x1xi32>
    %c125_i32_800 = arith.constant 125 : i32
    %2210 = vector.broadcast %c125_i32_800 : i32 to vector<8x1xi32>
    %2211 = arith.addi %2209, %2210 : vector<8x1xi32>
    %c-1_i32_801 = arith.constant -1 : i32
    %2212 = vector.broadcast %c-1_i32_801 : i32 to vector<8x1xi32>
    %2213 = arith.select %2207, %2211, %2212 : vector<8x1xi1>, vector<8x1xi32>
    %2214 = vector.broadcast %2213 : vector<8x1xi32> to vector<8x128xi32>
    %2215 = arith.cmpi eq, %1, %2214 : vector<8x128xi32>
    %cst_802 = arith.constant 1.000000e+00 : f32
    %cst_803 = arith.constant 0.000000e+00 : f32
    %2216 = vector.broadcast %cst_802 : f32 to vector<8x128xf32>
    %2217 = vector.broadcast %cst_803 : f32 to vector<8x128xf32>
    %2218 = arith.select %2215, %2216, %2217 : vector<8x128xi1>, vector<8x128xf32>
    %2219 = arith.addf %2197, %2218 : vector<8x128xf32>
    %2220 = tpu.concatenate %2090, %2219 in 1 : vector<8x128xf32>, vector<8x128xf32> -> vector<8x256xf32>
    %2221 = arith.truncf %2220 : vector<8x256xf32> to vector<8x256xbf16>
    %cst_804 = arith.constant dense<0.000000e+00> : vector<8x96xf32>
    %2222 = tpu.matmul %2221, %277, %cst_804 {dimension_numbers = #tpu.dot_dimension_numbers<[1], [0], [0], [1], [0, 0, 1, 1], [], []>} : vector<8x256xbf16>, vector<256x96xbf16>, vector<8x96xf32> -> vector<8x96xf32>
    %2223 = vector.broadcast %278 : vector<1x96xf32> to vector<8x96xf32>
    %2224 = arith.addf %2222, %2223 : vector<8x96xf32>
    %2225 = vector.extract_strided_slice %2224 {offsets = [0, 0], sizes = [8, 32], strides = [1, 1]} : vector<8x96xf32> to vector<8x32xf32>
    %2226 = vector.extract_strided_slice %2224 {offsets = [0, 32], sizes = [8, 32], strides = [1, 1]} : vector<8x96xf32> to vector<8x32xf32>
    %2227 = vector.extract_strided_slice %2224 {offsets = [0, 64], sizes = [8, 32], strides = [1, 1]} : vector<8x96xf32> to vector<8x32xf32>
    %cst_805 = arith.constant 0.000000e+00 : f32
    %2228 = vector.broadcast %cst_805 : f32 to vector<8x32xf32>
    %2229 = arith.maximumf %2225, %2228 : vector<8x32xf32>
    %2230 = arith.addf %2226, %2225 : vector<8x32xf32>
    %cst_806 = arith.constant 0.000000e+00 : f32
    %2231 = vector.broadcast %cst_806 : f32 to vector<8x32xf32>
    %2232 = arith.maximumf %2230, %2231 : vector<8x32xf32>
    %2233 = tpu.concatenate %2229, %2232 in 1 : vector<8x32xf32>, vector<8x32xf32> -> vector<8x64xf32>
    %cst_807 = arith.constant dense<0.000000e+00> : vector<8x96xf32>
    %2234 = tpu.matmul %2233, %279, %cst_807 {dimension_numbers = #tpu.dot_dimension_numbers<[1], [0], [0], [1], [0, 0, 1, 1], [], []>} : vector<8x64xf32>, vector<64x96xf32>, vector<8x96xf32> -> vector<8x96xf32>
    %2235 = vector.broadcast %280 : vector<1x96xf32> to vector<8x96xf32>
    %2236 = arith.addf %2234, %2235 : vector<8x96xf32>
    %2237 = arith.addf %2225, %2227 : vector<8x32xf32>
    %cst_808 = arith.constant 1.000000e+00 : f32
    %2238 = vector.broadcast %cst_808 : f32 to vector<8x1xf32>
    %2239 = arith.subf %2238, %1932 : vector<8x1xf32>
    %2240 = vector.extract_strided_slice %2236 {offsets = [0, 0], sizes = [8, 32], strides = [1, 1]} : vector<8x96xf32> to vector<8x32xf32>
    %2241 = vector.broadcast %2239 : vector<8x1xf32> to vector<8x32xf32>
    %2242 = arith.mulf %2241, %2240 : vector<8x32xf32>
    %2243 = arith.addf %2237, %2242 : vector<8x32xf32>
    %cst_809 = arith.constant 1.000000e+00 : f32
    %2244 = vector.broadcast %cst_809 : f32 to vector<8x1xf32>
    %2245 = arith.subf %2244, %1955 : vector<8x1xf32>
    %2246 = vector.extract_strided_slice %2236 {offsets = [0, 32], sizes = [8, 32], strides = [1, 1]} : vector<8x96xf32> to vector<8x32xf32>
    %2247 = vector.broadcast %2245 : vector<8x1xf32> to vector<8x32xf32>
    %2248 = arith.mulf %2247, %2246 : vector<8x32xf32>
    %2249 = arith.addf %2243, %2248 : vector<8x32xf32>
    %cst_810 = arith.constant 4.000000e+00 : f32
    %2250 = vector.broadcast %cst_810 : f32 to vector<8x1xf32>
    %2251 = arith.subf %2250, %1923 : vector<8x1xf32>
    %2252 = vector.extract_strided_slice %2236 {offsets = [0, 64], sizes = [8, 32], strides = [1, 1]} : vector<8x96xf32> to vector<8x32xf32>
    %2253 = vector.broadcast %2251 : vector<8x1xf32> to vector<8x32xf32>
    %2254 = arith.mulf %2253, %2252 : vector<8x32xf32>
    %2255 = arith.addf %2249, %2254 : vector<8x32xf32>
    %c0_811 = arith.constant 0 : index
    %c96 = arith.constant 96 : index
    %2256 = vector.load %arg6[%c0_811, %c96] : memref<8x192xf32, #tpu.memory_space<vmem>>, vector<8x32xf32>
    tpu.vector_store %arg6[%c0_811, %c96], %2255 {strides = array<i32>} : memref<8x192xf32, #tpu.memory_space<vmem>>, vector<8x32xf32>,
    %2257 = vector.broadcast %122 : vector<8x1xi32> to vector<8x128xi32>
    %2258 = arith.cmpi eq, %1, %2257 : vector<8x128xi32>
    %cst_812 = arith.constant 1.000000e+00 : f32
    %cst_813 = arith.constant 0.000000e+00 : f32
    %2259 = vector.broadcast %cst_812 : f32 to vector<8x128xf32>
    %2260 = vector.broadcast %cst_813 : f32 to vector<8x128xf32>
    %2261 = arith.select %2258, %2259, %2260 : vector<8x128xi1>, vector<8x128xf32>
    %2262 = vector.broadcast %133 : vector<8x1xf32> to vector<8x128xf32>
    %2263 = arith.mulf %2262, %276 : vector<8x128xf32>
    %2264 = arith.addf %2261, %2263 : vector<8x128xf32>
    %cst_814 = arith.constant 0.000000e+00 : f32
    %2265 = vector.broadcast %cst_814 : f32 to vector<8x1xf32>
    %2266 = vector.extract_strided_slice %0 {offsets = [0, 178], sizes = [8, 1], strides = [1, 1]} : vector<8x512xf32> to vector<8x1xf32>
    %cst_815 = arith.constant 1.000000e+00 : f32
    %2267 = vector.broadcast %cst_815 : f32 to vector<8x1xf32>
    %2268 = arith.addf %2266, %2267 : vector<8x1xf32>
    %2269 = arith.fptosi %2268 : vector<8x1xf32> to vector<8x1xi32>
    %c0_i32_816 = arith.constant 0 : i32
    %2270 = vector.broadcast %c0_i32_816 : i32 to vector<8x1xi32>
    %2271 = arith.cmpi sgt, %2269, %2270 : vector<8x1xi32>
    %c1_i32_817 = arith.constant 1 : i32
    %2272 = vector.broadcast %c1_i32_817 : i32 to vector<8x1xi32>
    %2273 = arith.subi %2269, %2272 : vector<8x1xi32>
    %c31_i32_818 = arith.constant 31 : i32
    %2274 = vector.broadcast %c31_i32_818 : i32 to vector<8x1xi32>
    %2275 = arith.addi %2273, %2274 : vector<8x1xi32>
    %c-1_i32_819 = arith.constant -1 : i32
    %2276 = vector.broadcast %c-1_i32_819 : i32 to vector<8x1xi32>
    %2277 = arith.select %2271, %2275, %2276 : vector<8x1xi1>, vector<8x1xi32>
    %2278 = vector.broadcast %2277 : vector<8x1xi32> to vector<8x128xi32>
    %2279 = arith.cmpi eq, %1, %2278 : vector<8x128xi32>
    %cst_820 = arith.constant 1.000000e+00 : f32
    %cst_821 = arith.constant 0.000000e+00 : f32
    %2280 = vector.broadcast %cst_820 : f32 to vector<8x128xf32>
    %2281 = vector.broadcast %cst_821 : f32 to vector<8x128xf32>
    %2282 = arith.select %2279, %2280, %2281 : vector<8x128xi1>, vector<8x128xf32>
    %2283 = arith.addf %2264, %2282 : vector<8x128xf32>
    %2284 = vector.extract_strided_slice %0 {offsets = [0, 182], sizes = [8, 1], strides = [1, 1]} : vector<8x512xf32> to vector<8x1xf32>
    %cst_822 = arith.constant 1.000000e+00 : f32
    %2285 = vector.broadcast %cst_822 : f32 to vector<8x1xf32>
    %2286 = arith.addf %2284, %2285 : vector<8x1xf32>
    %2287 = arith.fptosi %2286 : vector<8x1xf32> to vector<8x1xi32>
    %c63_i32_823 = arith.constant 63 : i32
    %2288 = vector.broadcast %c63_i32_823 : i32 to vector<8x1xi32>
    %2289 = arith.minsi %2287, %2288 : vector<8x1xi32>
    %2290 = vector.broadcast %2289 : vector<8x1xi32> to vector<8x128xi32>
    %2291 = arith.shrsi %2290, %7 : vector<8x128xi32>
    %c1_i32_824 = arith.constant 1 : i32
    %2292 = vector.broadcast %c1_i32_824 : i32 to vector<8x128xi32>
    %2293 = arith.andi %2291, %2292 : vector<8x128xi32>
    %2294 = arith.sitofp %2293 : vector<8x128xi32> to vector<8x128xf32>
    %2295 = vector.broadcast %2271 : vector<8x1xi1> to vector<8x128xi1>
    %2296 = arith.andi %12, %2295 : vector<8x128xi1>
    %cst_825 = arith.constant 0.000000e+00 : f32
    %2297 = vector.broadcast %cst_825 : f32 to vector<8x128xf32>
    %2298 = arith.select %2296, %2294, %2297 : vector<8x128xi1>, vector<8x128xf32>
    %2299 = arith.addf %2283, %2298 : vector<8x128xf32>
    %cst_826 = arith.constant 1.000000e+00 : f32
    %cst_827 = arith.constant 0.000000e+00 : f32
    %2300 = vector.broadcast %cst_826 : f32 to vector<8x1xf32>
    %2301 = vector.broadcast %cst_827 : f32 to vector<8x1xf32>
    %2302 = arith.select %2271, %2300, %2301 : vector<8x1xi1>, vector<8x1xf32>
    %2303 = arith.addf %2265, %2302 : vector<8x1xf32>
    %2304 = vector.extract_strided_slice %0 {offsets = [0, 179], sizes = [8, 1], strides = [1, 1]} : vector<8x512xf32> to vector<8x1xf32>
    %cst_828 = arith.constant 1.000000e+00 : f32
    %2305 = vector.broadcast %cst_828 : f32 to vector<8x1xf32>
    %2306 = arith.addf %2304, %2305 : vector<8x1xf32>
    %2307 = arith.fptosi %2306 : vector<8x1xf32> to vector<8x1xi32>
    %c0_i32_829 = arith.constant 0 : i32
    %2308 = vector.broadcast %c0_i32_829 : i32 to vector<8x1xi32>
    %2309 = arith.cmpi sgt, %2307, %2308 : vector<8x1xi32>
    %c1_i32_830 = arith.constant 1 : i32
    %2310 = vector.broadcast %c1_i32_830 : i32 to vector<8x1xi32>
    %2311 = arith.subi %2307, %2310 : vector<8x1xi32>
    %c31_i32_831 = arith.constant 31 : i32
    %2312 = vector.broadcast %c31_i32_831 : i32 to vector<8x1xi32>
    %2313 = arith.addi %2311, %2312 : vector<8x1xi32>
    %c-1_i32_832 = arith.constant -1 : i32
    %2314 = vector.broadcast %c-1_i32_832 : i32 to vector<8x1xi32>
    %2315 = arith.select %2309, %2313, %2314 : vector<8x1xi1>, vector<8x1xi32>
    %2316 = vector.broadcast %2315 : vector<8x1xi32> to vector<8x128xi32>
    %2317 = arith.cmpi eq, %1, %2316 : vector<8x128xi32>
    %cst_833 = arith.constant 1.000000e+00 : f32
    %cst_834 = arith.constant 0.000000e+00 : f32
    %2318 = vector.broadcast %cst_833 : f32 to vector<8x128xf32>
    %2319 = vector.broadcast %cst_834 : f32 to vector<8x128xf32>
    %2320 = arith.select %2317, %2318, %2319 : vector<8x128xi1>, vector<8x128xf32>
    %2321 = arith.addf %2299, %2320 : vector<8x128xf32>
    %2322 = vector.extract_strided_slice %0 {offsets = [0, 183], sizes = [8, 1], strides = [1, 1]} : vector<8x512xf32> to vector<8x1xf32>
    %cst_835 = arith.constant 1.000000e+00 : f32
    %2323 = vector.broadcast %cst_835 : f32 to vector<8x1xf32>
    %2324 = arith.addf %2322, %2323 : vector<8x1xf32>
    %2325 = arith.fptosi %2324 : vector<8x1xf32> to vector<8x1xi32>
    %c63_i32_836 = arith.constant 63 : i32
    %2326 = vector.broadcast %c63_i32_836 : i32 to vector<8x1xi32>
    %2327 = arith.minsi %2325, %2326 : vector<8x1xi32>
    %2328 = vector.broadcast %2327 : vector<8x1xi32> to vector<8x128xi32>
    %2329 = arith.shrsi %2328, %7 : vector<8x128xi32>
    %c1_i32_837 = arith.constant 1 : i32
    %2330 = vector.broadcast %c1_i32_837 : i32 to vector<8x128xi32>
    %2331 = arith.andi %2329, %2330 : vector<8x128xi32>
    %2332 = arith.sitofp %2331 : vector<8x128xi32> to vector<8x128xf32>
    %2333 = vector.broadcast %2309 : vector<8x1xi1> to vector<8x128xi1>
    %2334 = arith.andi %12, %2333 : vector<8x128xi1>
    %cst_838 = arith.constant 0.000000e+00 : f32
    %2335 = vector.broadcast %cst_838 : f32 to vector<8x128xf32>
    %2336 = arith.select %2334, %2332, %2335 : vector<8x128xi1>, vector<8x128xf32>
    %2337 = arith.addf %2321, %2336 : vector<8x128xf32>
    %cst_839 = arith.constant 1.000000e+00 : f32
    %cst_840 = arith.constant 0.000000e+00 : f32
    %2338 = vector.broadcast %cst_839 : f32 to vector<8x1xf32>
    %2339 = vector.broadcast %cst_840 : f32 to vector<8x1xf32>
    %2340 = arith.select %2309, %2338, %2339 : vector<8x1xi1>, vector<8x1xf32>
    %2341 = arith.addf %2303, %2340 : vector<8x1xf32>
    %2342 = vector.extract_strided_slice %0 {offsets = [0, 180], sizes = [8, 1], strides = [1, 1]} : vector<8x512xf32> to vector<8x1xf32>
    %cst_841 = arith.constant 1.000000e+00 : f32
    %2343 = vector.broadcast %cst_841 : f32 to vector<8x1xf32>
    %2344 = arith.addf %2342, %2343 : vector<8x1xf32>
    %2345 = arith.fptosi %2344 : vector<8x1xf32> to vector<8x1xi32>
    %c0_i32_842 = arith.constant 0 : i32
    %2346 = vector.broadcast %c0_i32_842 : i32 to vector<8x1xi32>
    %2347 = arith.cmpi sgt, %2345, %2346 : vector<8x1xi32>
    %c1_i32_843 = arith.constant 1 : i32
    %2348 = vector.broadcast %c1_i32_843 : i32 to vector<8x1xi32>
    %2349 = arith.subi %2345, %2348 : vector<8x1xi32>
    %c31_i32_844 = arith.constant 31 : i32
    %2350 = vector.broadcast %c31_i32_844 : i32 to vector<8x1xi32>
    %2351 = arith.addi %2349, %2350 : vector<8x1xi32>
    %c-1_i32_845 = arith.constant -1 : i32
    %2352 = vector.broadcast %c-1_i32_845 : i32 to vector<8x1xi32>
    %2353 = arith.select %2347, %2351, %2352 : vector<8x1xi1>, vector<8x1xi32>
    %2354 = vector.broadcast %2353 : vector<8x1xi32> to vector<8x128xi32>
    %2355 = arith.cmpi eq, %1, %2354 : vector<8x128xi32>
    %cst_846 = arith.constant 1.000000e+00 : f32
    %cst_847 = arith.constant 0.000000e+00 : f32
    %2356 = vector.broadcast %cst_846 : f32 to vector<8x128xf32>
    %2357 = vector.broadcast %cst_847 : f32 to vector<8x128xf32>
    %2358 = arith.select %2355, %2356, %2357 : vector<8x128xi1>, vector<8x128xf32>
    %2359 = arith.addf %2337, %2358 : vector<8x128xf32>
    %2360 = vector.extract_strided_slice %0 {offsets = [0, 184], sizes = [8, 1], strides = [1, 1]} : vector<8x512xf32> to vector<8x1xf32>
    %cst_848 = arith.constant 1.000000e+00 : f32
    %2361 = vector.broadcast %cst_848 : f32 to vector<8x1xf32>
    %2362 = arith.addf %2360, %2361 : vector<8x1xf32>
    %2363 = arith.fptosi %2362 : vector<8x1xf32> to vector<8x1xi32>
    %c63_i32_849 = arith.constant 63 : i32
    %2364 = vector.broadcast %c63_i32_849 : i32 to vector<8x1xi32>
    %2365 = arith.minsi %2363, %2364 : vector<8x1xi32>
    %2366 = vector.broadcast %2365 : vector<8x1xi32> to vector<8x128xi32>
    %2367 = arith.shrsi %2366, %7 : vector<8x128xi32>
    %c1_i32_850 = arith.constant 1 : i32
    %2368 = vector.broadcast %c1_i32_850 : i32 to vector<8x128xi32>
    %2369 = arith.andi %2367, %2368 : vector<8x128xi32>
    %2370 = arith.sitofp %2369 : vector<8x128xi32> to vector<8x128xf32>
    %2371 = vector.broadcast %2347 : vector<8x1xi1> to vector<8x128xi1>
    %2372 = arith.andi %12, %2371 : vector<8x128xi1>
    %cst_851 = arith.constant 0.000000e+00 : f32
    %2373 = vector.broadcast %cst_851 : f32 to vector<8x128xf32>
    %2374 = arith.select %2372, %2370, %2373 : vector<8x128xi1>, vector<8x128xf32>
    %2375 = arith.addf %2359, %2374 : vector<8x128xf32>
    %cst_852 = arith.constant 1.000000e+00 : f32
    %cst_853 = arith.constant 0.000000e+00 : f32
    %2376 = vector.broadcast %cst_852 : f32 to vector<8x1xf32>
    %2377 = vector.broadcast %cst_853 : f32 to vector<8x1xf32>
    %2378 = arith.select %2347, %2376, %2377 : vector<8x1xi1>, vector<8x1xf32>
    %2379 = arith.addf %2341, %2378 : vector<8x1xf32>
    %2380 = vector.extract_strided_slice %0 {offsets = [0, 181], sizes = [8, 1], strides = [1, 1]} : vector<8x512xf32> to vector<8x1xf32>
    %cst_854 = arith.constant 1.000000e+00 : f32
    %2381 = vector.broadcast %cst_854 : f32 to vector<8x1xf32>
    %2382 = arith.addf %2380, %2381 : vector<8x1xf32>
    %2383 = arith.fptosi %2382 : vector<8x1xf32> to vector<8x1xi32>
    %c0_i32_855 = arith.constant 0 : i32
    %2384 = vector.broadcast %c0_i32_855 : i32 to vector<8x1xi32>
    %2385 = arith.cmpi sgt, %2383, %2384 : vector<8x1xi32>
    %c1_i32_856 = arith.constant 1 : i32
    %2386 = vector.broadcast %c1_i32_856 : i32 to vector<8x1xi32>
    %2387 = arith.subi %2383, %2386 : vector<8x1xi32>
    %c31_i32_857 = arith.constant 31 : i32
    %2388 = vector.broadcast %c31_i32_857 : i32 to vector<8x1xi32>
    %2389 = arith.addi %2387, %2388 : vector<8x1xi32>
    %c-1_i32_858 = arith.constant -1 : i32
    %2390 = vector.broadcast %c-1_i32_858 : i32 to vector<8x1xi32>
    %2391 = arith.select %2385, %2389, %2390 : vector<8x1xi1>, vector<8x1xi32>
    %2392 = vector.broadcast %2391 : vector<8x1xi32> to vector<8x128xi32>
    %2393 = arith.cmpi eq, %1, %2392 : vector<8x128xi32>
    %cst_859 = arith.constant 1.000000e+00 : f32
    %cst_860 = arith.constant 0.000000e+00 : f32
    %2394 = vector.broadcast %cst_859 : f32 to vector<8x128xf32>
    %2395 = vector.broadcast %cst_860 : f32 to vector<8x128xf32>
    %2396 = arith.select %2393, %2394, %2395 : vector<8x128xi1>, vector<8x128xf32>
    %2397 = arith.addf %2375, %2396 : vector<8x128xf32>
    %2398 = vector.extract_strided_slice %0 {offsets = [0, 185], sizes = [8, 1], strides = [1, 1]} : vector<8x512xf32> to vector<8x1xf32>
    %cst_861 = arith.constant 1.000000e+00 : f32
    %2399 = vector.broadcast %cst_861 : f32 to vector<8x1xf32>
    %2400 = arith.addf %2398, %2399 : vector<8x1xf32>
    %2401 = arith.fptosi %2400 : vector<8x1xf32> to vector<8x1xi32>
    %c63_i32_862 = arith.constant 63 : i32
    %2402 = vector.broadcast %c63_i32_862 : i32 to vector<8x1xi32>
    %2403 = arith.minsi %2401, %2402 : vector<8x1xi32>
    %2404 = vector.broadcast %2403 : vector<8x1xi32> to vector<8x128xi32>
    %2405 = arith.shrsi %2404, %7 : vector<8x128xi32>
    %c1_i32_863 = arith.constant 1 : i32
    %2406 = vector.broadcast %c1_i32_863 : i32 to vector<8x128xi32>
    %2407 = arith.andi %2405, %2406 : vector<8x128xi32>
    %2408 = arith.sitofp %2407 : vector<8x128xi32> to vector<8x128xf32>
    %2409 = vector.broadcast %2385 : vector<8x1xi1> to vector<8x128xi1>
    %2410 = arith.andi %12, %2409 : vector<8x128xi1>
    %cst_864 = arith.constant 0.000000e+00 : f32
    %2411 = vector.broadcast %cst_864 : f32 to vector<8x128xf32>
    %2412 = arith.select %2410, %2408, %2411 : vector<8x128xi1>, vector<8x128xf32>
    %2413 = arith.addf %2397, %2412 : vector<8x128xf32>
    %cst_865 = arith.constant 1.000000e+00 : f32
    %cst_866 = arith.constant 0.000000e+00 : f32
    %2414 = vector.broadcast %cst_865 : f32 to vector<8x1xf32>
    %2415 = vector.broadcast %cst_866 : f32 to vector<8x1xf32>
    %2416 = arith.select %2385, %2414, %2415 : vector<8x1xi1>, vector<8x1xf32>
    %2417 = arith.addf %2379, %2416 : vector<8x1xf32>
    %2418 = vector.extract_strided_slice %0 {offsets = [0, 167], sizes = [8, 1], strides = [1, 1]} : vector<8x512xf32> to vector<8x1xf32>
    %cst_867 = arith.constant 1.000000e+00 : f32
    %2419 = vector.broadcast %cst_867 : f32 to vector<8x1xf32>
    %2420 = arith.addf %2418, %2419 : vector<8x1xf32>
    %2421 = arith.fptosi %2420 : vector<8x1xf32> to vector<8x1xi32>
    %c0_i32_868 = arith.constant 0 : i32
    %2422 = vector.broadcast %c0_i32_868 : i32 to vector<8x1xi32>
    %2423 = arith.cmpi sgt, %2421, %2422 : vector<8x1xi32>
    %cst_869 = arith.constant 1.000000e+00 : f32
    %cst_870 = arith.constant 0.000000e+00 : f32
    %2424 = vector.broadcast %cst_869 : f32 to vector<8x1xf32>
    %2425 = vector.broadcast %cst_870 : f32 to vector<8x1xf32>
    %2426 = arith.select %2423, %2424, %2425 : vector<8x1xi1>, vector<8x1xf32>
    %c0_i32_871 = arith.constant 0 : i32
    %2427 = vector.broadcast %c0_i32_871 : i32 to vector<8x1xi32>
    %2428 = arith.cmpi sgt, %2421, %2427 : vector<8x1xi32>
    %c1_i32_872 = arith.constant 1 : i32
    %2429 = vector.broadcast %c1_i32_872 : i32 to vector<8x1xi32>
    %2430 = arith.subi %2421, %2429 : vector<8x1xi32>
    %c60_i32_873 = arith.constant 60 : i32
    %2431 = vector.broadcast %c60_i32_873 : i32 to vector<8x1xi32>
    %2432 = arith.addi %2430, %2431 : vector<8x1xi32>
    %c-1_i32_874 = arith.constant -1 : i32
    %2433 = vector.broadcast %c-1_i32_874 : i32 to vector<8x1xi32>
    %2434 = arith.select %2428, %2432, %2433 : vector<8x1xi1>, vector<8x1xi32>
    %2435 = vector.broadcast %2434 : vector<8x1xi32> to vector<8x128xi32>
    %2436 = arith.cmpi eq, %1, %2435 : vector<8x128xi32>
    %cst_875 = arith.constant 1.000000e+00 : f32
    %cst_876 = arith.constant 0.000000e+00 : f32
    %2437 = vector.broadcast %cst_875 : f32 to vector<8x128xf32>
    %2438 = vector.broadcast %cst_876 : f32 to vector<8x128xf32>
    %2439 = arith.select %2436, %2437, %2438 : vector<8x128xi1>, vector<8x128xf32>
    %2440 = arith.addf %2413, %2439 : vector<8x128xf32>
    %2441 = vector.extract_strided_slice %0 {offsets = [0, 169], sizes = [8, 1], strides = [1, 1]} : vector<8x512xf32> to vector<8x1xf32>
    %cst_877 = arith.constant 1.000000e+00 : f32
    %2442 = vector.broadcast %cst_877 : f32 to vector<8x1xf32>
    %2443 = arith.addf %2441, %2442 : vector<8x1xf32>
    %2444 = arith.fptosi %2443 : vector<8x1xf32> to vector<8x1xi32>
    %c0_i32_878 = arith.constant 0 : i32
    %2445 = vector.broadcast %c0_i32_878 : i32 to vector<8x1xi32>
    %2446 = arith.cmpi sgt, %2444, %2445 : vector<8x1xi32>
    %cst_879 = arith.constant 1.000000e+00 : f32
    %cst_880 = arith.constant 0.000000e+00 : f32
    %2447 = vector.broadcast %cst_879 : f32 to vector<8x1xf32>
    %2448 = vector.broadcast %cst_880 : f32 to vector<8x1xf32>
    %2449 = arith.select %2446, %2447, %2448 : vector<8x1xi1>, vector<8x1xf32>
    %c0_i32_881 = arith.constant 0 : i32
    %2450 = vector.broadcast %c0_i32_881 : i32 to vector<8x1xi32>
    %2451 = arith.cmpi sgt, %2444, %2450 : vector<8x1xi32>
    %c1_i32_882 = arith.constant 1 : i32
    %2452 = vector.broadcast %c1_i32_882 : i32 to vector<8x1xi32>
    %2453 = arith.subi %2444, %2452 : vector<8x1xi32>
    %c75_i32_883 = arith.constant 75 : i32
    %2454 = vector.broadcast %c75_i32_883 : i32 to vector<8x1xi32>
    %2455 = arith.addi %2453, %2454 : vector<8x1xi32>
    %c-1_i32_884 = arith.constant -1 : i32
    %2456 = vector.broadcast %c-1_i32_884 : i32 to vector<8x1xi32>
    %2457 = arith.select %2451, %2455, %2456 : vector<8x1xi1>, vector<8x1xi32>
    %2458 = vector.broadcast %2457 : vector<8x1xi32> to vector<8x128xi32>
    %2459 = arith.cmpi eq, %1, %2458 : vector<8x128xi32>
    %cst_885 = arith.constant 1.000000e+00 : f32
    %cst_886 = arith.constant 0.000000e+00 : f32
    %2460 = vector.broadcast %cst_885 : f32 to vector<8x128xf32>
    %2461 = vector.broadcast %cst_886 : f32 to vector<8x128xf32>
    %2462 = arith.select %2459, %2460, %2461 : vector<8x128xi1>, vector<8x128xf32>
    %2463 = arith.addf %2440, %2462 : vector<8x128xf32>
    %2464 = vector.extract_strided_slice %0 {offsets = [0, 171], sizes = [8, 1], strides = [1, 1]} : vector<8x512xf32> to vector<8x1xf32>
    %cst_887 = arith.constant 1.000000e+00 : f32
    %2465 = vector.broadcast %cst_887 : f32 to vector<8x1xf32>
    %2466 = arith.addf %2464, %2465 : vector<8x1xf32>
    %2467 = arith.fptosi %2466 : vector<8x1xf32> to vector<8x1xi32>
    %c0_i32_888 = arith.constant 0 : i32
    %2468 = vector.broadcast %c0_i32_888 : i32 to vector<8x1xi32>
    %2469 = arith.cmpi sgt, %2444, %2468 : vector<8x1xi32>
    %c0_i32_889 = arith.constant 0 : i32
    %2470 = vector.broadcast %c0_i32_889 : i32 to vector<8x1xi32>
    %2471 = arith.cmpi sgt, %2467, %2470 : vector<8x1xi32>
    %2472 = arith.andi %2469, %2471 : vector<8x1xi1>
    %c1_i32_890 = arith.constant 1 : i32
    %2473 = vector.broadcast %c1_i32_890 : i32 to vector<8x1xi32>
    %2474 = arith.subi %2467, %2473 : vector<8x1xi32>
    %c90_i32_891 = arith.constant 90 : i32
    %2475 = vector.broadcast %c90_i32_891 : i32 to vector<8x1xi32>
    %2476 = arith.addi %2474, %2475 : vector<8x1xi32>
    %c-1_i32_892 = arith.constant -1 : i32
    %2477 = vector.broadcast %c-1_i32_892 : i32 to vector<8x1xi32>
    %2478 = arith.select %2472, %2476, %2477 : vector<8x1xi1>, vector<8x1xi32>
    %2479 = vector.broadcast %2478 : vector<8x1xi32> to vector<8x128xi32>
    %2480 = arith.cmpi eq, %1, %2479 : vector<8x128xi32>
    %cst_893 = arith.constant 1.000000e+00 : f32
    %cst_894 = arith.constant 0.000000e+00 : f32
    %2481 = vector.broadcast %cst_893 : f32 to vector<8x128xf32>
    %2482 = vector.broadcast %cst_894 : f32 to vector<8x128xf32>
    %2483 = arith.select %2480, %2481, %2482 : vector<8x128xi1>, vector<8x128xf32>
    %2484 = arith.addf %2463, %2483 : vector<8x128xf32>
    %2485 = vector.extract_strided_slice %0 {offsets = [0, 187], sizes = [8, 1], strides = [1, 1]} : vector<8x512xf32> to vector<8x1xf32>
    %cst_895 = arith.constant 1.000000e+00 : f32
    %2486 = vector.broadcast %cst_895 : f32 to vector<8x1xf32>
    %2487 = arith.addf %2485, %2486 : vector<8x1xf32>
    %2488 = arith.fptosi %2487 : vector<8x1xf32> to vector<8x1xi32>
    %c0_i32_896 = arith.constant 0 : i32
    %2489 = vector.broadcast %c0_i32_896 : i32 to vector<8x1xi32>
    %2490 = arith.cmpi sgt, %2488, %2489 : vector<8x1xi32>
    %c1_i32_897 = arith.constant 1 : i32
    %2491 = vector.broadcast %c1_i32_897 : i32 to vector<8x1xi32>
    %2492 = arith.subi %2488, %2491 : vector<8x1xi32>
    %c97_i32_898 = arith.constant 97 : i32
    %2493 = vector.broadcast %c97_i32_898 : i32 to vector<8x1xi32>
    %2494 = arith.addi %2492, %2493 : vector<8x1xi32>
    %c-1_i32_899 = arith.constant -1 : i32
    %2495 = vector.broadcast %c-1_i32_899 : i32 to vector<8x1xi32>
    %2496 = arith.select %2490, %2494, %2495 : vector<8x1xi1>, vector<8x1xi32>
    %2497 = vector.broadcast %2496 : vector<8x1xi32> to vector<8x128xi32>
    %2498 = arith.cmpi eq, %1, %2497 : vector<8x128xi32>
    %cst_900 = arith.constant 1.000000e+00 : f32
    %cst_901 = arith.constant 0.000000e+00 : f32
    %2499 = vector.broadcast %cst_900 : f32 to vector<8x128xf32>
    %2500 = vector.broadcast %cst_901 : f32 to vector<8x128xf32>
    %2501 = arith.select %2498, %2499, %2500 : vector<8x128xi1>, vector<8x128xf32>
    %2502 = arith.addf %2484, %2501 : vector<8x128xf32>
    %2503 = vector.extract_strided_slice %0 {offsets = [0, 153], sizes = [8, 1], strides = [1, 1]} : vector<8x512xf32> to vector<8x1xf32>
    %cst_902 = arith.constant 1.000000e+00 : f32
    %2504 = vector.broadcast %cst_902 : f32 to vector<8x1xf32>
    %2505 = arith.addf %2503, %2504 : vector<8x1xf32>
    %2506 = arith.fptosi %2505 : vector<8x1xf32> to vector<8x1xi32>
    %c0_i32_903 = arith.constant 0 : i32
    %2507 = vector.broadcast %c0_i32_903 : i32 to vector<8x1xi32>
    %2508 = arith.cmpi sgt, %2506, %2507 : vector<8x1xi32>
    %c1_i32_904 = arith.constant 1 : i32
    %2509 = vector.broadcast %c1_i32_904 : i32 to vector<8x1xi32>
    %2510 = arith.subi %2506, %2509 : vector<8x1xi32>
    %c119_i32_905 = arith.constant 119 : i32
    %2511 = vector.broadcast %c119_i32_905 : i32 to vector<8x1xi32>
    %2512 = arith.addi %2510, %2511 : vector<8x1xi32>
    %c-1_i32_906 = arith.constant -1 : i32
    %2513 = vector.broadcast %c-1_i32_906 : i32 to vector<8x1xi32>
    %2514 = arith.select %2508, %2512, %2513 : vector<8x1xi1>, vector<8x1xi32>
    %2515 = vector.broadcast %2514 : vector<8x1xi32> to vector<8x128xi32>
    %2516 = arith.cmpi eq, %1, %2515 : vector<8x128xi32>
    %cst_907 = arith.constant 1.000000e+00 : f32
    %cst_908 = arith.constant 0.000000e+00 : f32
    %2517 = vector.broadcast %cst_907 : f32 to vector<8x128xf32>
    %2518 = vector.broadcast %cst_908 : f32 to vector<8x128xf32>
    %2519 = arith.select %2516, %2517, %2518 : vector<8x128xi1>, vector<8x128xf32>
    %2520 = arith.addf %2502, %2519 : vector<8x128xf32>
    %2521 = vector.extract_strided_slice %0 {offsets = [0, 164], sizes = [8, 1], strides = [1, 1]} : vector<8x512xf32> to vector<8x1xf32>
    %cst_909 = arith.constant 1.000000e+00 : f32
    %2522 = vector.broadcast %cst_909 : f32 to vector<8x1xf32>
    %2523 = arith.addf %2521, %2522 : vector<8x1xf32>
    %2524 = arith.fptosi %2523 : vector<8x1xf32> to vector<8x1xi32>
    %c0_i32_910 = arith.constant 0 : i32
    %2525 = vector.broadcast %c0_i32_910 : i32 to vector<8x1xi32>
    %2526 = arith.cmpi sgt, %2524, %2525 : vector<8x1xi32>
    %c1_i32_911 = arith.constant 1 : i32
    %2527 = vector.broadcast %c1_i32_911 : i32 to vector<8x1xi32>
    %2528 = arith.subi %2524, %2527 : vector<8x1xi32>
    %c126_i32_912 = arith.constant 126 : i32
    %2529 = vector.broadcast %c126_i32_912 : i32 to vector<8x1xi32>
    %2530 = arith.addi %2528, %2529 : vector<8x1xi32>
    %c-1_i32_913 = arith.constant -1 : i32
    %2531 = vector.broadcast %c-1_i32_913 : i32 to vector<8x1xi32>
    %2532 = arith.select %2526, %2530, %2531 : vector<8x1xi1>, vector<8x1xi32>
    %2533 = vector.broadcast %2532 : vector<8x1xi32> to vector<8x128xi32>
    %2534 = arith.cmpi eq, %1, %2533 : vector<8x128xi32>
    %cst_914 = arith.constant 1.000000e+00 : f32
    %cst_915 = arith.constant 0.000000e+00 : f32
    %2535 = vector.broadcast %cst_914 : f32 to vector<8x128xf32>
    %2536 = vector.broadcast %cst_915 : f32 to vector<8x128xf32>
    %2537 = arith.select %2534, %2535, %2536 : vector<8x128xi1>, vector<8x128xf32>
    %2538 = arith.addf %2520, %2537 : vector<8x128xf32>
    %2539 = vector.extract_strided_slice %0 {offsets = [0, 189], sizes = [8, 1], strides = [1, 1]} : vector<8x512xf32> to vector<8x1xf32>
    %cst_916 = arith.constant 1.000000e+00 : f32
    %2540 = vector.broadcast %cst_916 : f32 to vector<8x1xf32>
    %2541 = arith.addf %2539, %2540 : vector<8x1xf32>
    %2542 = arith.fptosi %2541 : vector<8x1xf32> to vector<8x1xi32>
    %c1_i32_917 = arith.constant 1 : i32
    %2543 = vector.broadcast %c1_i32_917 : i32 to vector<8x1xi32>
    %2544 = arith.subi %2542, %2543 : vector<8x1xi32>
    %c0_i32_918 = arith.constant 0 : i32
    %c1_i32_919 = arith.constant 1 : i32
    %2545 = vector.broadcast %c0_i32_918 : i32 to vector<8x1xi32>
    %2546 = arith.maxsi %2545, %2544 : vector<8x1xi32>
    %2547 = vector.broadcast %c1_i32_919 : i32 to vector<8x1xi32>
    %2548 = arith.minsi %2547, %2546 : vector<8x1xi32>
    %2549 = arith.sitofp %2548 : vector<8x1xi32> to vector<8x1xf32>
    %c116_i32_920 = arith.constant 116 : i32
    %2550 = vector.broadcast %c116_i32_920 : i32 to vector<8x128xi32>
    %2551 = arith.cmpi eq, %1, %2550 : vector<8x128xi32>
    %cst_921 = arith.constant 0.000000e+00 : f32
    %2552 = vector.shape_cast %2549 : vector<8x1xf32> to vector<8x1xf32>
    %2553 = vector.broadcast %2552 : vector<8x1xf32> to vector<8x128xf32>
    %2554 = vector.broadcast %cst_921 : f32 to vector<8x128xf32>
    %2555 = arith.select %2551, %2553, %2554 : vector<8x128xi1>, vector<8x128xf32>
    %2556 = arith.addf %2538, %2555 : vector<8x128xf32>
    %2557 = vector.extract_strided_slice %0 {offsets = [0, 186], sizes = [8, 1], strides = [1, 1]} : vector<8x512xf32> to vector<8x1xf32>
    %cst_922 = arith.constant 1.000000e+00 : f32
    %2558 = vector.broadcast %cst_922 : f32 to vector<8x1xf32>
    %2559 = arith.addf %2557, %2558 : vector<8x1xf32>
    %2560 = arith.fptosi %2559 : vector<8x1xf32> to vector<8x1xi32>
    %c0_i32_923 = arith.constant 0 : i32
    %2561 = vector.broadcast %c0_i32_923 : i32 to vector<8x1xi32>
    %2562 = arith.cmpi sgt, %2560, %2561 : vector<8x1xi32>
    %cst_924 = arith.constant 1.000000e+00 : f32
    %cst_925 = arith.constant 0.000000e+00 : f32
    %2563 = vector.broadcast %cst_924 : f32 to vector<8x1xf32>
    %2564 = vector.broadcast %cst_925 : f32 to vector<8x1xf32>
    %2565 = arith.select %2562, %2563, %2564 : vector<8x1xi1>, vector<8x1xf32>
    %c117_i32_926 = arith.constant 117 : i32
    %2566 = vector.broadcast %c117_i32_926 : i32 to vector<8x128xi32>
    %2567 = arith.cmpi eq, %1, %2566 : vector<8x128xi32>
    %cst_927 = arith.constant 0.000000e+00 : f32
    %2568 = vector.shape_cast %2565 : vector<8x1xf32> to vector<8x1xf32>
    %2569 = vector.broadcast %2568 : vector<8x1xf32> to vector<8x128xf32>
    %2570 = vector.broadcast %cst_927 : f32 to vector<8x128xf32>
    %2571 = arith.select %2567, %2569, %2570 : vector<8x128xi1>, vector<8x128xf32>
    %2572 = arith.addf %2556, %2571 : vector<8x128xf32>
    %c118_i32_928 = arith.constant 118 : i32
    %2573 = vector.broadcast %c118_i32_928 : i32 to vector<8x128xi32>
    %2574 = arith.cmpi eq, %1, %2573 : vector<8x128xi32>
    %c0_i32_929 = arith.constant 0 : i32
    %2575 = vector.broadcast %c0_i32_929 : i32 to vector<8x1xi32>
    %2576 = arith.cmpi sgt, %2488, %2575 : vector<8x1xi32>
    %cst_930 = arith.constant 0.000000e+00 : f32
    %cst_931 = arith.constant 1.000000e+00 : f32
    %2577 = vector.broadcast %cst_930 : f32 to vector<8x1xf32>
    %2578 = vector.broadcast %cst_931 : f32 to vector<8x1xf32>
    %2579 = arith.select %2576, %2577, %2578 : vector<8x1xi1>, vector<8x1xf32>
    %cst_932 = arith.constant 0.000000e+00 : f32
    %2580 = vector.shape_cast %2579 : vector<8x1xf32> to vector<8x1xf32>
    %2581 = vector.broadcast %2580 : vector<8x1xf32> to vector<8x128xf32>
    %2582 = vector.broadcast %cst_932 : f32 to vector<8x128xf32>
    %2583 = arith.select %2574, %2581, %2582 : vector<8x128xi1>, vector<8x128xf32>
    %2584 = arith.addf %2572, %2583 : vector<8x128xf32>
    %2585 = vector.extract_strided_slice %0 {offsets = [0, 157], sizes = [8, 1], strides = [1, 1]} : vector<8x512xf32> to vector<8x1xf32>
    %cst_933 = arith.constant 1.000000e+01 : f32
    %2586 = vector.broadcast %cst_933 : f32 to vector<8x1xf32>
    %2587 = arith.mulf %2585, %2586 : vector<8x1xf32>
    %cst_934 = arith.constant 0.000000e+00 : f32
    %cst_935 = arith.constant 1.000000e+01 : f32
    %2588 = vector.broadcast %cst_934 : f32 to vector<8x1xf32>
    %2589 = arith.maximumf %2588, %2587 : vector<8x1xf32>
    %2590 = vector.broadcast %cst_935 : f32 to vector<8x1xf32>
    %2591 = arith.minimumf %2590, %2589 : vector<8x1xf32>
    %2592 = arith.fptosi %2591 : vector<8x1xf32> to vector<8x1xi32>
    %c0_i32_936 = arith.constant 0 : i32
    %2593 = vector.broadcast %c0_i32_936 : i32 to vector<8x1xi32>
    %2594 = arith.cmpi sgt, %2592, %2593 : vector<8x1xi32>
    %c1_i32_937 = arith.constant 1 : i32
    %2595 = vector.broadcast %c1_i32_937 : i32 to vector<8x1xi32>
    %2596 = arith.subi %2592, %2595 : vector<8x1xi32>
    %c0_i32_938 = arith.constant 0 : i32
    %2597 = vector.broadcast %c0_i32_938 : i32 to vector<8x1xi32>
    %2598 = arith.addi %2596, %2597 : vector<8x1xi32>
    %c-1_i32_939 = arith.constant -1 : i32
    %2599 = vector.broadcast %c-1_i32_939 : i32 to vector<8x1xi32>
    %2600 = arith.select %2594, %2598, %2599 : vector<8x1xi1>, vector<8x1xi32>
    %2601 = vector.broadcast %2600 : vector<8x1xi32> to vector<8x128xi32>
    %2602 = arith.cmpi eq, %1, %2601 : vector<8x128xi32>
    %cst_940 = arith.constant 1.000000e+00 : f32
    %cst_941 = arith.constant 0.000000e+00 : f32
    %2603 = vector.broadcast %cst_940 : f32 to vector<8x128xf32>
    %2604 = vector.broadcast %cst_941 : f32 to vector<8x128xf32>
    %2605 = arith.select %2602, %2603, %2604 : vector<8x128xi1>, vector<8x128xf32>
    %2606 = vector.extract_strided_slice %0 {offsets = [0, 163], sizes = [8, 1], strides = [1, 1]} : vector<8x512xf32> to vector<8x1xf32>
    %cst_942 = arith.constant 1.000000e+00 : f32
    %2607 = vector.broadcast %cst_942 : f32 to vector<8x1xf32>
    %2608 = arith.addf %2606, %2607 : vector<8x1xf32>
    %2609 = arith.fptosi %2608 : vector<8x1xf32> to vector<8x1xi32>
    %c0_i32_943 = arith.constant 0 : i32
    %2610 = vector.broadcast %c0_i32_943 : i32 to vector<8x1xi32>
    %2611 = arith.cmpi sgt, %2609, %2610 : vector<8x1xi32>
    %c1_i32_944 = arith.constant 1 : i32
    %2612 = vector.broadcast %c1_i32_944 : i32 to vector<8x1xi32>
    %2613 = arith.subi %2609, %2612 : vector<8x1xi32>
    %c10_i32_945 = arith.constant 10 : i32
    %2614 = vector.broadcast %c10_i32_945 : i32 to vector<8x1xi32>
    %2615 = arith.addi %2613, %2614 : vector<8x1xi32>
    %c-1_i32_946 = arith.constant -1 : i32
    %2616 = vector.broadcast %c-1_i32_946 : i32 to vector<8x1xi32>
    %2617 = arith.select %2611, %2615, %2616 : vector<8x1xi1>, vector<8x1xi32>
    %2618 = vector.broadcast %2617 : vector<8x1xi32> to vector<8x128xi32>
    %2619 = arith.cmpi eq, %1, %2618 : vector<8x128xi32>
    %cst_947 = arith.constant 1.000000e+00 : f32
    %cst_948 = arith.constant 0.000000e+00 : f32
    %2620 = vector.broadcast %cst_947 : f32 to vector<8x128xf32>
    %2621 = vector.broadcast %cst_948 : f32 to vector<8x128xf32>
    %2622 = arith.select %2619, %2620, %2621 : vector<8x128xi1>, vector<8x128xf32>
    %2623 = arith.addf %2605, %2622 : vector<8x128xf32>
    %2624 = vector.extract_strided_slice %0 {offsets = [0, 166], sizes = [8, 1], strides = [1, 1]} : vector<8x512xf32> to vector<8x1xf32>
    %cst_949 = arith.constant 1.000000e+00 : f32
    %2625 = vector.broadcast %cst_949 : f32 to vector<8x1xf32>
    %2626 = arith.addf %2624, %2625 : vector<8x1xf32>
    %2627 = arith.fptosi %2626 : vector<8x1xf32> to vector<8x1xi32>
    %c0_i32_950 = arith.constant 0 : i32
    %2628 = vector.broadcast %c0_i32_950 : i32 to vector<8x1xi32>
    %2629 = arith.cmpi sgt, %2627, %2628 : vector<8x1xi32>
    %c1_i32_951 = arith.constant 1 : i32
    %2630 = vector.broadcast %c1_i32_951 : i32 to vector<8x1xi32>
    %2631 = arith.subi %2627, %2630 : vector<8x1xi32>
    %c12_i32_952 = arith.constant 12 : i32
    %2632 = vector.broadcast %c12_i32_952 : i32 to vector<8x1xi32>
    %2633 = arith.addi %2631, %2632 : vector<8x1xi32>
    %c-1_i32_953 = arith.constant -1 : i32
    %2634 = vector.broadcast %c-1_i32_953 : i32 to vector<8x1xi32>
    %2635 = arith.select %2629, %2633, %2634 : vector<8x1xi1>, vector<8x1xi32>
    %2636 = vector.broadcast %2635 : vector<8x1xi32> to vector<8x128xi32>
    %2637 = arith.cmpi eq, %1, %2636 : vector<8x128xi32>
    %cst_954 = arith.constant 1.000000e+00 : f32
    %cst_955 = arith.constant 0.000000e+00 : f32
    %2638 = vector.broadcast %cst_954 : f32 to vector<8x128xf32>
    %2639 = vector.broadcast %cst_955 : f32 to vector<8x128xf32>
    %2640 = arith.select %2637, %2638, %2639 : vector<8x128xi1>, vector<8x128xf32>
    %2641 = arith.addf %2623, %2640 : vector<8x128xf32>
    %2642 = vector.extract_strided_slice %0 {offsets = [0, 165], sizes = [8, 1], strides = [1, 1]} : vector<8x512xf32> to vector<8x1xf32>
    %2643 = arith.fptosi %2642 : vector<8x1xf32> to vector<8x1xi32>
    %c1_i32_956 = arith.constant 1 : i32
    %2644 = vector.broadcast %c1_i32_956 : i32 to vector<8x1xi32>
    %2645 = arith.maxsi %2643, %2644 : vector<8x1xi32>
    %c1_i32_957 = arith.constant 1 : i32
    %2646 = vector.broadcast %c1_i32_957 : i32 to vector<8x1xi32>
    %2647 = arith.subi %2645, %2646 : vector<8x1xi32>
    %c15_i32_958 = arith.constant 15 : i32
    %2648 = vector.broadcast %c15_i32_958 : i32 to vector<8x1xi32>
    %2649 = arith.addi %2647, %2648 : vector<8x1xi32>
    %2650 = vector.broadcast %2649 : vector<8x1xi32> to vector<8x128xi32>
    %2651 = arith.cmpi eq, %1, %2650 : vector<8x128xi32>
    %cst_959 = arith.constant 1.000000e+00 : f32
    %cst_960 = arith.constant 0.000000e+00 : f32
    %2652 = vector.broadcast %cst_959 : f32 to vector<8x128xf32>
    %2653 = vector.broadcast %cst_960 : f32 to vector<8x128xf32>
    %2654 = arith.select %2651, %2652, %2653 : vector<8x128xi1>, vector<8x128xf32>
    %2655 = arith.addf %2641, %2654 : vector<8x128xf32>
    %2656 = vector.extract_strided_slice %0 {offsets = [0, 173], sizes = [8, 1], strides = [1, 1]} : vector<8x512xf32> to vector<8x1xf32>
    %cst_961 = arith.constant 1.000000e+00 : f32
    %2657 = vector.broadcast %cst_961 : f32 to vector<8x1xf32>
    %2658 = arith.addf %2656, %2657 : vector<8x1xf32>
    %2659 = arith.fptosi %2658 : vector<8x1xf32> to vector<8x1xi32>
    %c0_i32_962 = arith.constant 0 : i32
    %2660 = vector.broadcast %c0_i32_962 : i32 to vector<8x1xi32>
    %2661 = arith.cmpi sgt, %2659, %2660 : vector<8x1xi32>
    %c1_i32_963 = arith.constant 1 : i32
    %2662 = vector.broadcast %c1_i32_963 : i32 to vector<8x1xi32>
    %2663 = arith.subi %2659, %2662 : vector<8x1xi32>
    %c115_i32_964 = arith.constant 115 : i32
    %2664 = vector.broadcast %c115_i32_964 : i32 to vector<8x1xi32>
    %2665 = arith.addi %2663, %2664 : vector<8x1xi32>
    %c-1_i32_965 = arith.constant -1 : i32
    %2666 = vector.broadcast %c-1_i32_965 : i32 to vector<8x1xi32>
    %2667 = arith.select %2661, %2665, %2666 : vector<8x1xi1>, vector<8x1xi32>
    %2668 = vector.broadcast %2667 : vector<8x1xi32> to vector<8x128xi32>
    %2669 = arith.cmpi eq, %1, %2668 : vector<8x128xi32>
    %cst_966 = arith.constant 1.000000e+00 : f32
    %cst_967 = arith.constant 0.000000e+00 : f32
    %2670 = vector.broadcast %cst_966 : f32 to vector<8x128xf32>
    %2671 = vector.broadcast %cst_967 : f32 to vector<8x128xf32>
    %2672 = arith.select %2669, %2670, %2671 : vector<8x128xi1>, vector<8x128xf32>
    %2673 = arith.addf %2655, %2672 : vector<8x128xf32>
    %2674 = vector.extract_strided_slice %0 {offsets = [0, 174], sizes = [8, 1], strides = [1, 1]} : vector<8x512xf32> to vector<8x1xf32>
    %cst_968 = arith.constant 1.000000e+00 : f32
    %2675 = vector.broadcast %cst_968 : f32 to vector<8x1xf32>
    %2676 = arith.addf %2674, %2675 : vector<8x1xf32>
    %2677 = arith.fptosi %2676 : vector<8x1xf32> to vector<8x1xi32>
    %c0_i32_969 = arith.constant 0 : i32
    %2678 = vector.broadcast %c0_i32_969 : i32 to vector<8x1xi32>
    %2679 = arith.cmpi sgt, %2677, %2678 : vector<8x1xi32>
    %c1_i32_970 = arith.constant 1 : i32
    %2680 = vector.broadcast %c1_i32_970 : i32 to vector<8x1xi32>
    %2681 = arith.subi %2677, %2680 : vector<8x1xi32>
    %c122_i32_971 = arith.constant 122 : i32
    %2682 = vector.broadcast %c122_i32_971 : i32 to vector<8x1xi32>
    %2683 = arith.addi %2681, %2682 : vector<8x1xi32>
    %c-1_i32_972 = arith.constant -1 : i32
    %2684 = vector.broadcast %c-1_i32_972 : i32 to vector<8x1xi32>
    %2685 = arith.select %2679, %2683, %2684 : vector<8x1xi1>, vector<8x1xi32>
    %2686 = vector.broadcast %2685 : vector<8x1xi32> to vector<8x128xi32>
    %2687 = arith.cmpi eq, %1, %2686 : vector<8x128xi32>
    %cst_973 = arith.constant 1.000000e+00 : f32
    %cst_974 = arith.constant 0.000000e+00 : f32
    %2688 = vector.broadcast %cst_973 : f32 to vector<8x128xf32>
    %2689 = vector.broadcast %cst_974 : f32 to vector<8x128xf32>
    %2690 = arith.select %2687, %2688, %2689 : vector<8x128xi1>, vector<8x128xf32>
    %2691 = arith.addf %2673, %2690 : vector<8x128xf32>
    %2692 = vector.extract_strided_slice %0 {offsets = [0, 175], sizes = [8, 1], strides = [1, 1]} : vector<8x512xf32> to vector<8x1xf32>
    %cst_975 = arith.constant 1.000000e+00 : f32
    %2693 = vector.broadcast %cst_975 : f32 to vector<8x1xf32>
    %2694 = arith.addf %2692, %2693 : vector<8x1xf32>
    %2695 = arith.fptosi %2694 : vector<8x1xf32> to vector<8x1xi32>
    %2696 = arith.sitofp %2695 : vector<8x1xi32> to vector<8x1xf32>
    %2697 = math.sqrt %2696 : vector<8x1xf32>
    %2698 = math.floor %2697 : vector<8x1xf32>
    %2699 = arith.fptosi %2698 : vector<8x1xf32> to vector<8x1xi32>
    %c0_i32_976 = arith.constant 0 : i32
    %2700 = vector.broadcast %c0_i32_976 : i32 to vector<8x1xi32>
    %2701 = arith.cmpi sgt, %2699, %2700 : vector<8x1xi32>
    %c1_i32_977 = arith.constant 1 : i32
    %2702 = vector.broadcast %c1_i32_977 : i32 to vector<8x1xi32>
    %2703 = arith.subi %2699, %2702 : vector<8x1xi32>
    %c125_i32_978 = arith.constant 125 : i32
    %2704 = vector.broadcast %c125_i32_978 : i32 to vector<8x1xi32>
    %2705 = arith.addi %2703, %2704 : vector<8x1xi32>
    %c-1_i32_979 = arith.constant -1 : i32
    %2706 = vector.broadcast %c-1_i32_979 : i32 to vector<8x1xi32>
    %2707 = arith.select %2701, %2705, %2706 : vector<8x1xi1>, vector<8x1xi32>
    %2708 = vector.broadcast %2707 : vector<8x1xi32> to vector<8x128xi32>
    %2709 = arith.cmpi eq, %1, %2708 : vector<8x128xi32>
    %cst_980 = arith.constant 1.000000e+00 : f32
    %cst_981 = arith.constant 0.000000e+00 : f32
    %2710 = vector.broadcast %cst_980 : f32 to vector<8x128xf32>
    %2711 = vector.broadcast %cst_981 : f32 to vector<8x128xf32>
    %2712 = arith.select %2709, %2710, %2711 : vector<8x128xi1>, vector<8x128xf32>
    %2713 = arith.addf %2691, %2712 : vector<8x128xf32>
    %2714 = tpu.concatenate %2584, %2713 in 1 : vector<8x128xf32>, vector<8x128xf32> -> vector<8x256xf32>
    %2715 = arith.truncf %2714 : vector<8x256xf32> to vector<8x256xbf16>
    %cst_982 = arith.constant dense<0.000000e+00> : vector<8x96xf32>
    %2716 = tpu.matmul %2715, %277, %cst_982 {dimension_numbers = #tpu.dot_dimension_numbers<[1], [0], [0], [1], [0, 0, 1, 1], [], []>} : vector<8x256xbf16>, vector<256x96xbf16>, vector<8x96xf32> -> vector<8x96xf32>
    %2717 = vector.broadcast %278 : vector<1x96xf32> to vector<8x96xf32>
    %2718 = arith.addf %2716, %2717 : vector<8x96xf32>
    %2719 = vector.extract_strided_slice %2718 {offsets = [0, 0], sizes = [8, 32], strides = [1, 1]} : vector<8x96xf32> to vector<8x32xf32>
    %2720 = vector.extract_strided_slice %2718 {offsets = [0, 32], sizes = [8, 32], strides = [1, 1]} : vector<8x96xf32> to vector<8x32xf32>
    %2721 = vector.extract_strided_slice %2718 {offsets = [0, 64], sizes = [8, 32], strides = [1, 1]} : vector<8x96xf32> to vector<8x32xf32>
    %cst_983 = arith.constant 0.000000e+00 : f32
    %2722 = vector.broadcast %cst_983 : f32 to vector<8x32xf32>
    %2723 = arith.maximumf %2719, %2722 : vector<8x32xf32>
    %2724 = arith.addf %2720, %2719 : vector<8x32xf32>
    %cst_984 = arith.constant 0.000000e+00 : f32
    %2725 = vector.broadcast %cst_984 : f32 to vector<8x32xf32>
    %2726 = arith.maximumf %2724, %2725 : vector<8x32xf32>
    %2727 = tpu.concatenate %2723, %2726 in 1 : vector<8x32xf32>, vector<8x32xf32> -> vector<8x64xf32>
    %cst_985 = arith.constant dense<0.000000e+00> : vector<8x96xf32>
    %2728 = tpu.matmul %2727, %279, %cst_985 {dimension_numbers = #tpu.dot_dimension_numbers<[1], [0], [0], [1], [0, 0, 1, 1], [], []>} : vector<8x64xf32>, vector<64x96xf32>, vector<8x96xf32> -> vector<8x96xf32>
    %2729 = vector.broadcast %280 : vector<1x96xf32> to vector<8x96xf32>
    %2730 = arith.addf %2728, %2729 : vector<8x96xf32>
    %2731 = arith.addf %2719, %2721 : vector<8x32xf32>
    %cst_986 = arith.constant 1.000000e+00 : f32
    %2732 = vector.broadcast %cst_986 : f32 to vector<8x1xf32>
    %2733 = arith.subf %2732, %2426 : vector<8x1xf32>
    %2734 = vector.extract_strided_slice %2730 {offsets = [0, 0], sizes = [8, 32], strides = [1, 1]} : vector<8x96xf32> to vector<8x32xf32>
    %2735 = vector.broadcast %2733 : vector<8x1xf32> to vector<8x32xf32>
    %2736 = arith.mulf %2735, %2734 : vector<8x32xf32>
    %2737 = arith.addf %2731, %2736 : vector<8x32xf32>
    %cst_987 = arith.constant 1.000000e+00 : f32
    %2738 = vector.broadcast %cst_987 : f32 to vector<8x1xf32>
    %2739 = arith.subf %2738, %2449 : vector<8x1xf32>
    %2740 = vector.extract_strided_slice %2730 {offsets = [0, 32], sizes = [8, 32], strides = [1, 1]} : vector<8x96xf32> to vector<8x32xf32>
    %2741 = vector.broadcast %2739 : vector<8x1xf32> to vector<8x32xf32>
    %2742 = arith.mulf %2741, %2740 : vector<8x32xf32>
    %2743 = arith.addf %2737, %2742 : vector<8x32xf32>
    %cst_988 = arith.constant 4.000000e+00 : f32
    %2744 = vector.broadcast %cst_988 : f32 to vector<8x1xf32>
    %2745 = arith.subf %2744, %2417 : vector<8x1xf32>
    %2746 = vector.extract_strided_slice %2730 {offsets = [0, 64], sizes = [8, 32], strides = [1, 1]} : vector<8x96xf32> to vector<8x32xf32>
    %2747 = vector.broadcast %2745 : vector<8x1xf32> to vector<8x32xf32>
    %2748 = arith.mulf %2747, %2746 : vector<8x32xf32>
    %2749 = arith.addf %2743, %2748 : vector<8x32xf32>
    %c0_989 = arith.constant 0 : index
    %c128 = arith.constant 128 : index
    %2750 = vector.load %arg6[%c0_989, %c128] : memref<8x192xf32, #tpu.memory_space<vmem>>, vector<8x32xf32>
    tpu.vector_store %arg6[%c0_989, %c128], %2749 {strides = array<i32>} : memref<8x192xf32, #tpu.memory_space<vmem>>, vector<8x32xf32>,
    %2751 = vector.broadcast %146 : vector<8x1xi32> to vector<8x128xi32>
    %2752 = arith.cmpi eq, %1, %2751 : vector<8x128xi32>
    %cst_990 = arith.constant 1.000000e+00 : f32
    %cst_991 = arith.constant 0.000000e+00 : f32
    %2753 = vector.broadcast %cst_990 : f32 to vector<8x128xf32>
    %2754 = vector.broadcast %cst_991 : f32 to vector<8x128xf32>
    %2755 = arith.select %2752, %2753, %2754 : vector<8x128xi1>, vector<8x128xf32>
    %2756 = vector.broadcast %157 : vector<8x1xf32> to vector<8x128xf32>
    %2757 = arith.mulf %2756, %276 : vector<8x128xf32>
    %2758 = arith.addf %2755, %2757 : vector<8x128xf32>
    %cst_992 = arith.constant 0.000000e+00 : f32
    %2759 = vector.broadcast %cst_992 : f32 to vector<8x1xf32>
    %2760 = vector.extract_strided_slice %0 {offsets = [0, 216], sizes = [8, 1], strides = [1, 1]} : vector<8x512xf32> to vector<8x1xf32>
    %cst_993 = arith.constant 1.000000e+00 : f32
    %2761 = vector.broadcast %cst_993 : f32 to vector<8x1xf32>
    %2762 = arith.addf %2760, %2761 : vector<8x1xf32>
    %2763 = arith.fptosi %2762 : vector<8x1xf32> to vector<8x1xi32>
    %c0_i32_994 = arith.constant 0 : i32
    %2764 = vector.broadcast %c0_i32_994 : i32 to vector<8x1xi32>
    %2765 = arith.cmpi sgt, %2763, %2764 : vector<8x1xi32>
    %c1_i32_995 = arith.constant 1 : i32
    %2766 = vector.broadcast %c1_i32_995 : i32 to vector<8x1xi32>
    %2767 = arith.subi %2763, %2766 : vector<8x1xi32>
    %c31_i32_996 = arith.constant 31 : i32
    %2768 = vector.broadcast %c31_i32_996 : i32 to vector<8x1xi32>
    %2769 = arith.addi %2767, %2768 : vector<8x1xi32>
    %c-1_i32_997 = arith.constant -1 : i32
    %2770 = vector.broadcast %c-1_i32_997 : i32 to vector<8x1xi32>
    %2771 = arith.select %2765, %2769, %2770 : vector<8x1xi1>, vector<8x1xi32>
    %2772 = vector.broadcast %2771 : vector<8x1xi32> to vector<8x128xi32>
    %2773 = arith.cmpi eq, %1, %2772 : vector<8x128xi32>
    %cst_998 = arith.constant 1.000000e+00 : f32
    %cst_999 = arith.constant 0.000000e+00 : f32
    %2774 = vector.broadcast %cst_998 : f32 to vector<8x128xf32>
    %2775 = vector.broadcast %cst_999 : f32 to vector<8x128xf32>
    %2776 = arith.select %2773, %2774, %2775 : vector<8x128xi1>, vector<8x128xf32>
    %2777 = arith.addf %2758, %2776 : vector<8x128xf32>
    %2778 = vector.extract_strided_slice %0 {offsets = [0, 220], sizes = [8, 1], strides = [1, 1]} : vector<8x512xf32> to vector<8x1xf32>
    %cst_1000 = arith.constant 1.000000e+00 : f32
    %2779 = vector.broadcast %cst_1000 : f32 to vector<8x1xf32>
    %2780 = arith.addf %2778, %2779 : vector<8x1xf32>
    %2781 = arith.fptosi %2780 : vector<8x1xf32> to vector<8x1xi32>
    %c63_i32_1001 = arith.constant 63 : i32
    %2782 = vector.broadcast %c63_i32_1001 : i32 to vector<8x1xi32>
    %2783 = arith.minsi %2781, %2782 : vector<8x1xi32>
    %2784 = vector.broadcast %2783 : vector<8x1xi32> to vector<8x128xi32>
    %2785 = arith.shrsi %2784, %7 : vector<8x128xi32>
    %c1_i32_1002 = arith.constant 1 : i32
    %2786 = vector.broadcast %c1_i32_1002 : i32 to vector<8x128xi32>
    %2787 = arith.andi %2785, %2786 : vector<8x128xi32>
    %2788 = arith.sitofp %2787 : vector<8x128xi32> to vector<8x128xf32>
    %2789 = vector.broadcast %2765 : vector<8x1xi1> to vector<8x128xi1>
    %2790 = arith.andi %12, %2789 : vector<8x128xi1>
    %cst_1003 = arith.constant 0.000000e+00 : f32
    %2791 = vector.broadcast %cst_1003 : f32 to vector<8x128xf32>
    %2792 = arith.select %2790, %2788, %2791 : vector<8x128xi1>, vector<8x128xf32>
    %2793 = arith.addf %2777, %2792 : vector<8x128xf32>
    %cst_1004 = arith.constant 1.000000e+00 : f32
    %cst_1005 = arith.constant 0.000000e+00 : f32
    %2794 = vector.broadcast %cst_1004 : f32 to vector<8x1xf32>
    %2795 = vector.broadcast %cst_1005 : f32 to vector<8x1xf32>
    %2796 = arith.select %2765, %2794, %2795 : vector<8x1xi1>, vector<8x1xf32>
    %2797 = arith.addf %2759, %2796 : vector<8x1xf32>
    %2798 = vector.extract_strided_slice %0 {offsets = [0, 217], sizes = [8, 1], strides = [1, 1]} : vector<8x512xf32> to vector<8x1xf32>
    %cst_1006 = arith.constant 1.000000e+00 : f32
    %2799 = vector.broadcast %cst_1006 : f32 to vector<8x1xf32>
    %2800 = arith.addf %2798, %2799 : vector<8x1xf32>
    %2801 = arith.fptosi %2800 : vector<8x1xf32> to vector<8x1xi32>
    %c0_i32_1007 = arith.constant 0 : i32
    %2802 = vector.broadcast %c0_i32_1007 : i32 to vector<8x1xi32>
    %2803 = arith.cmpi sgt, %2801, %2802 : vector<8x1xi32>
    %c1_i32_1008 = arith.constant 1 : i32
    %2804 = vector.broadcast %c1_i32_1008 : i32 to vector<8x1xi32>
    %2805 = arith.subi %2801, %2804 : vector<8x1xi32>
    %c31_i32_1009 = arith.constant 31 : i32
    %2806 = vector.broadcast %c31_i32_1009 : i32 to vector<8x1xi32>
    %2807 = arith.addi %2805, %2806 : vector<8x1xi32>
    %c-1_i32_1010 = arith.constant -1 : i32
    %2808 = vector.broadcast %c-1_i32_1010 : i32 to vector<8x1xi32>
    %2809 = arith.select %2803, %2807, %2808 : vector<8x1xi1>, vector<8x1xi32>
    %2810 = vector.broadcast %2809 : vector<8x1xi32> to vector<8x128xi32>
    %2811 = arith.cmpi eq, %1, %2810 : vector<8x128xi32>
    %cst_1011 = arith.constant 1.000000e+00 : f32
    %cst_1012 = arith.constant 0.000000e+00 : f32
    %2812 = vector.broadcast %cst_1011 : f32 to vector<8x128xf32>
    %2813 = vector.broadcast %cst_1012 : f32 to vector<8x128xf32>
    %2814 = arith.select %2811, %2812, %2813 : vector<8x128xi1>, vector<8x128xf32>
    %2815 = arith.addf %2793, %2814 : vector<8x128xf32>
    %2816 = vector.extract_strided_slice %0 {offsets = [0, 221], sizes = [8, 1], strides = [1, 1]} : vector<8x512xf32> to vector<8x1xf32>
    %cst_1013 = arith.constant 1.000000e+00 : f32
    %2817 = vector.broadcast %cst_1013 : f32 to vector<8x1xf32>
    %2818 = arith.addf %2816, %2817 : vector<8x1xf32>
    %2819 = arith.fptosi %2818 : vector<8x1xf32> to vector<8x1xi32>
    %c63_i32_1014 = arith.constant 63 : i32
    %2820 = vector.broadcast %c63_i32_1014 : i32 to vector<8x1xi32>
    %2821 = arith.minsi %2819, %2820 : vector<8x1xi32>
    %2822 = vector.broadcast %2821 : vector<8x1xi32> to vector<8x128xi32>
    %2823 = arith.shrsi %2822, %7 : vector<8x128xi32>
    %c1_i32_1015 = arith.constant 1 : i32
    %2824 = vector.broadcast %c1_i32_1015 : i32 to vector<8x128xi32>
    %2825 = arith.andi %2823, %2824 : vector<8x128xi32>
    %2826 = arith.sitofp %2825 : vector<8x128xi32> to vector<8x128xf32>
    %2827 = vector.broadcast %2803 : vector<8x1xi1> to vector<8x128xi1>
    %2828 = arith.andi %12, %2827 : vector<8x128xi1>
    %cst_1016 = arith.constant 0.000000e+00 : f32
    %2829 = vector.broadcast %cst_1016 : f32 to vector<8x128xf32>
    %2830 = arith.select %2828, %2826, %2829 : vector<8x128xi1>, vector<8x128xf32>
    %2831 = arith.addf %2815, %2830 : vector<8x128xf32>
    %cst_1017 = arith.constant 1.000000e+00 : f32
    %cst_1018 = arith.constant 0.000000e+00 : f32
    %2832 = vector.broadcast %cst_1017 : f32 to vector<8x1xf32>
    %2833 = vector.broadcast %cst_1018 : f32 to vector<8x1xf32>
    %2834 = arith.select %2803, %2832, %2833 : vector<8x1xi1>, vector<8x1xf32>
    %2835 = arith.addf %2797, %2834 : vector<8x1xf32>
    %2836 = vector.extract_strided_slice %0 {offsets = [0, 218], sizes = [8, 1], strides = [1, 1]} : vector<8x512xf32> to vector<8x1xf32>
    %cst_1019 = arith.constant 1.000000e+00 : f32
    %2837 = vector.broadcast %cst_1019 : f32 to vector<8x1xf32>
    %2838 = arith.addf %2836, %2837 : vector<8x1xf32>
    %2839 = arith.fptosi %2838 : vector<8x1xf32> to vector<8x1xi32>
    %c0_i32_1020 = arith.constant 0 : i32
    %2840 = vector.broadcast %c0_i32_1020 : i32 to vector<8x1xi32>
    %2841 = arith.cmpi sgt, %2839, %2840 : vector<8x1xi32>
    %c1_i32_1021 = arith.constant 1 : i32
    %2842 = vector.broadcast %c1_i32_1021 : i32 to vector<8x1xi32>
    %2843 = arith.subi %2839, %2842 : vector<8x1xi32>
    %c31_i32_1022 = arith.constant 31 : i32
    %2844 = vector.broadcast %c31_i32_1022 : i32 to vector<8x1xi32>
    %2845 = arith.addi %2843, %2844 : vector<8x1xi32>
    %c-1_i32_1023 = arith.constant -1 : i32
    %2846 = vector.broadcast %c-1_i32_1023 : i32 to vector<8x1xi32>
    %2847 = arith.select %2841, %2845, %2846 : vector<8x1xi1>, vector<8x1xi32>
    %2848 = vector.broadcast %2847 : vector<8x1xi32> to vector<8x128xi32>
    %2849 = arith.cmpi eq, %1, %2848 : vector<8x128xi32>
    %cst_1024 = arith.constant 1.000000e+00 : f32
    %cst_1025 = arith.constant 0.000000e+00 : f32
    %2850 = vector.broadcast %cst_1024 : f32 to vector<8x128xf32>
    %2851 = vector.broadcast %cst_1025 : f32 to vector<8x128xf32>
    %2852 = arith.select %2849, %2850, %2851 : vector<8x128xi1>, vector<8x128xf32>
    %2853 = arith.addf %2831, %2852 : vector<8x128xf32>
    %2854 = vector.extract_strided_slice %0 {offsets = [0, 222], sizes = [8, 1], strides = [1, 1]} : vector<8x512xf32> to vector<8x1xf32>
    %cst_1026 = arith.constant 1.000000e+00 : f32
    %2855 = vector.broadcast %cst_1026 : f32 to vector<8x1xf32>
    %2856 = arith.addf %2854, %2855 : vector<8x1xf32>
    %2857 = arith.fptosi %2856 : vector<8x1xf32> to vector<8x1xi32>
    %c63_i32_1027 = arith.constant 63 : i32
    %2858 = vector.broadcast %c63_i32_1027 : i32 to vector<8x1xi32>
    %2859 = arith.minsi %2857, %2858 : vector<8x1xi32>
    %2860 = vector.broadcast %2859 : vector<8x1xi32> to vector<8x128xi32>
    %2861 = arith.shrsi %2860, %7 : vector<8x128xi32>
    %c1_i32_1028 = arith.constant 1 : i32
    %2862 = vector.broadcast %c1_i32_1028 : i32 to vector<8x128xi32>
    %2863 = arith.andi %2861, %2862 : vector<8x128xi32>
    %2864 = arith.sitofp %2863 : vector<8x128xi32> to vector<8x128xf32>
    %2865 = vector.broadcast %2841 : vector<8x1xi1> to vector<8x128xi1>
    %2866 = arith.andi %12, %2865 : vector<8x128xi1>
    %cst_1029 = arith.constant 0.000000e+00 : f32
    %2867 = vector.broadcast %cst_1029 : f32 to vector<8x128xf32>
    %2868 = arith.select %2866, %2864, %2867 : vector<8x128xi1>, vector<8x128xf32>
    %2869 = arith.addf %2853, %2868 : vector<8x128xf32>
    %cst_1030 = arith.constant 1.000000e+00 : f32
    %cst_1031 = arith.constant 0.000000e+00 : f32
    %2870 = vector.broadcast %cst_1030 : f32 to vector<8x1xf32>
    %2871 = vector.broadcast %cst_1031 : f32 to vector<8x1xf32>
    %2872 = arith.select %2841, %2870, %2871 : vector<8x1xi1>, vector<8x1xf32>
    %2873 = arith.addf %2835, %2872 : vector<8x1xf32>
    %2874 = vector.extract_strided_slice %0 {offsets = [0, 219], sizes = [8, 1], strides = [1, 1]} : vector<8x512xf32> to vector<8x1xf32>
    %cst_1032 = arith.constant 1.000000e+00 : f32
    %2875 = vector.broadcast %cst_1032 : f32 to vector<8x1xf32>
    %2876 = arith.addf %2874, %2875 : vector<8x1xf32>
    %2877 = arith.fptosi %2876 : vector<8x1xf32> to vector<8x1xi32>
    %c0_i32_1033 = arith.constant 0 : i32
    %2878 = vector.broadcast %c0_i32_1033 : i32 to vector<8x1xi32>
    %2879 = arith.cmpi sgt, %2877, %2878 : vector<8x1xi32>
    %c1_i32_1034 = arith.constant 1 : i32
    %2880 = vector.broadcast %c1_i32_1034 : i32 to vector<8x1xi32>
    %2881 = arith.subi %2877, %2880 : vector<8x1xi32>
    %c31_i32_1035 = arith.constant 31 : i32
    %2882 = vector.broadcast %c31_i32_1035 : i32 to vector<8x1xi32>
    %2883 = arith.addi %2881, %2882 : vector<8x1xi32>
    %c-1_i32_1036 = arith.constant -1 : i32
    %2884 = vector.broadcast %c-1_i32_1036 : i32 to vector<8x1xi32>
    %2885 = arith.select %2879, %2883, %2884 : vector<8x1xi1>, vector<8x1xi32>
    %2886 = vector.broadcast %2885 : vector<8x1xi32> to vector<8x128xi32>
    %2887 = arith.cmpi eq, %1, %2886 : vector<8x128xi32>
    %cst_1037 = arith.constant 1.000000e+00 : f32
    %cst_1038 = arith.constant 0.000000e+00 : f32
    %2888 = vector.broadcast %cst_1037 : f32 to vector<8x128xf32>
    %2889 = vector.broadcast %cst_1038 : f32 to vector<8x128xf32>
    %2890 = arith.select %2887, %2888, %2889 : vector<8x128xi1>, vector<8x128xf32>
    %2891 = arith.addf %2869, %2890 : vector<8x128xf32>
    %2892 = vector.extract_strided_slice %0 {offsets = [0, 223], sizes = [8, 1], strides = [1, 1]} : vector<8x512xf32> to vector<8x1xf32>
    %cst_1039 = arith.constant 1.000000e+00 : f32
    %2893 = vector.broadcast %cst_1039 : f32 to vector<8x1xf32>
    %2894 = arith.addf %2892, %2893 : vector<8x1xf32>
    %2895 = arith.fptosi %2894 : vector<8x1xf32> to vector<8x1xi32>
    %c63_i32_1040 = arith.constant 63 : i32
    %2896 = vector.broadcast %c63_i32_1040 : i32 to vector<8x1xi32>
    %2897 = arith.minsi %2895, %2896 : vector<8x1xi32>
    %2898 = vector.broadcast %2897 : vector<8x1xi32> to vector<8x128xi32>
    %2899 = arith.shrsi %2898, %7 : vector<8x128xi32>
    %c1_i32_1041 = arith.constant 1 : i32
    %2900 = vector.broadcast %c1_i32_1041 : i32 to vector<8x128xi32>
    %2901 = arith.andi %2899, %2900 : vector<8x128xi32>
    %2902 = arith.sitofp %2901 : vector<8x128xi32> to vector<8x128xf32>
    %2903 = vector.broadcast %2879 : vector<8x1xi1> to vector<8x128xi1>
    %2904 = arith.andi %12, %2903 : vector<8x128xi1>
    %cst_1042 = arith.constant 0.000000e+00 : f32
    %2905 = vector.broadcast %cst_1042 : f32 to vector<8x128xf32>
    %2906 = arith.select %2904, %2902, %2905 : vector<8x128xi1>, vector<8x128xf32>
    %2907 = arith.addf %2891, %2906 : vector<8x128xf32>
    %cst_1043 = arith.constant 1.000000e+00 : f32
    %cst_1044 = arith.constant 0.000000e+00 : f32
    %2908 = vector.broadcast %cst_1043 : f32 to vector<8x1xf32>
    %2909 = vector.broadcast %cst_1044 : f32 to vector<8x1xf32>
    %2910 = arith.select %2879, %2908, %2909 : vector<8x1xi1>, vector<8x1xf32>
    %2911 = arith.addf %2873, %2910 : vector<8x1xf32>
    %2912 = vector.extract_strided_slice %0 {offsets = [0, 205], sizes = [8, 1], strides = [1, 1]} : vector<8x512xf32> to vector<8x1xf32>
    %cst_1045 = arith.constant 1.000000e+00 : f32
    %2913 = vector.broadcast %cst_1045 : f32 to vector<8x1xf32>
    %2914 = arith.addf %2912, %2913 : vector<8x1xf32>
    %2915 = arith.fptosi %2914 : vector<8x1xf32> to vector<8x1xi32>
    %c0_i32_1046 = arith.constant 0 : i32
    %2916 = vector.broadcast %c0_i32_1046 : i32 to vector<8x1xi32>
    %2917 = arith.cmpi sgt, %2915, %2916 : vector<8x1xi32>
    %cst_1047 = arith.constant 1.000000e+00 : f32
    %cst_1048 = arith.constant 0.000000e+00 : f32
    %2918 = vector.broadcast %cst_1047 : f32 to vector<8x1xf32>
    %2919 = vector.broadcast %cst_1048 : f32 to vector<8x1xf32>
    %2920 = arith.select %2917, %2918, %2919 : vector<8x1xi1>, vector<8x1xf32>
    %c0_i32_1049 = arith.constant 0 : i32
    %2921 = vector.broadcast %c0_i32_1049 : i32 to vector<8x1xi32>
    %2922 = arith.cmpi sgt, %2915, %2921 : vector<8x1xi32>
    %c1_i32_1050 = arith.constant 1 : i32
    %2923 = vector.broadcast %c1_i32_1050 : i32 to vector<8x1xi32>
    %2924 = arith.subi %2915, %2923 : vector<8x1xi32>
    %c60_i32_1051 = arith.constant 60 : i32
    %2925 = vector.broadcast %c60_i32_1051 : i32 to vector<8x1xi32>
    %2926 = arith.addi %2924, %2925 : vector<8x1xi32>
    %c-1_i32_1052 = arith.constant -1 : i32
    %2927 = vector.broadcast %c-1_i32_1052 : i32 to vector<8x1xi32>
    %2928 = arith.select %2922, %2926, %2927 : vector<8x1xi1>, vector<8x1xi32>
    %2929 = vector.broadcast %2928 : vector<8x1xi32> to vector<8x128xi32>
    %2930 = arith.cmpi eq, %1, %2929 : vector<8x128xi32>
    %cst_1053 = arith.constant 1.000000e+00 : f32
    %cst_1054 = arith.constant 0.000000e+00 : f32
    %2931 = vector.broadcast %cst_1053 : f32 to vector<8x128xf32>
    %2932 = vector.broadcast %cst_1054 : f32 to vector<8x128xf32>
    %2933 = arith.select %2930, %2931, %2932 : vector<8x128xi1>, vector<8x128xf32>
    %2934 = arith.addf %2907, %2933 : vector<8x128xf32>
    %2935 = vector.extract_strided_slice %0 {offsets = [0, 207], sizes = [8, 1], strides = [1, 1]} : vector<8x512xf32> to vector<8x1xf32>
    %cst_1055 = arith.constant 1.000000e+00 : f32
    %2936 = vector.broadcast %cst_1055 : f32 to vector<8x1xf32>
    %2937 = arith.addf %2935, %2936 : vector<8x1xf32>
    %2938 = arith.fptosi %2937 : vector<8x1xf32> to vector<8x1xi32>
    %c0_i32_1056 = arith.constant 0 : i32
    %2939 = vector.broadcast %c0_i32_1056 : i32 to vector<8x1xi32>
    %2940 = arith.cmpi sgt, %2938, %2939 : vector<8x1xi32>
    %cst_1057 = arith.constant 1.000000e+00 : f32
    %cst_1058 = arith.constant 0.000000e+00 : f32
    %2941 = vector.broadcast %cst_1057 : f32 to vector<8x1xf32>
    %2942 = vector.broadcast %cst_1058 : f32 to vector<8x1xf32>
    %2943 = arith.select %2940, %2941, %2942 : vector<8x1xi1>, vector<8x1xf32>
    %c0_i32_1059 = arith.constant 0 : i32
    %2944 = vector.broadcast %c0_i32_1059 : i32 to vector<8x1xi32>
    %2945 = arith.cmpi sgt, %2938, %2944 : vector<8x1xi32>
    %c1_i32_1060 = arith.constant 1 : i32
    %2946 = vector.broadcast %c1_i32_1060 : i32 to vector<8x1xi32>
    %2947 = arith.subi %2938, %2946 : vector<8x1xi32>
    %c75_i32_1061 = arith.constant 75 : i32
    %2948 = vector.broadcast %c75_i32_1061 : i32 to vector<8x1xi32>
    %2949 = arith.addi %2947, %2948 : vector<8x1xi32>
    %c-1_i32_1062 = arith.constant -1 : i32
    %2950 = vector.broadcast %c-1_i32_1062 : i32 to vector<8x1xi32>
    %2951 = arith.select %2945, %2949, %2950 : vector<8x1xi1>, vector<8x1xi32>
    %2952 = vector.broadcast %2951 : vector<8x1xi32> to vector<8x128xi32>
    %2953 = arith.cmpi eq, %1, %2952 : vector<8x128xi32>
    %cst_1063 = arith.constant 1.000000e+00 : f32
    %cst_1064 = arith.constant 0.000000e+00 : f32
    %2954 = vector.broadcast %cst_1063 : f32 to vector<8x128xf32>
    %2955 = vector.broadcast %cst_1064 : f32 to vector<8x128xf32>
    %2956 = arith.select %2953, %2954, %2955 : vector<8x128xi1>, vector<8x128xf32>
    %2957 = arith.addf %2934, %2956 : vector<8x128xf32>
    %2958 = vector.extract_strided_slice %0 {offsets = [0, 209], sizes = [8, 1], strides = [1, 1]} : vector<8x512xf32> to vector<8x1xf32>
    %cst_1065 = arith.constant 1.000000e+00 : f32
    %2959 = vector.broadcast %cst_1065 : f32 to vector<8x1xf32>
    %2960 = arith.addf %2958, %2959 : vector<8x1xf32>
    %2961 = arith.fptosi %2960 : vector<8x1xf32> to vector<8x1xi32>
    %c0_i32_1066 = arith.constant 0 : i32
    %2962 = vector.broadcast %c0_i32_1066 : i32 to vector<8x1xi32>
    %2963 = arith.cmpi sgt, %2938, %2962 : vector<8x1xi32>
    %c0_i32_1067 = arith.constant 0 : i32
    %2964 = vector.broadcast %c0_i32_1067 : i32 to vector<8x1xi32>
    %2965 = arith.cmpi sgt, %2961, %2964 : vector<8x1xi32>
    %2966 = arith.andi %2963, %2965 : vector<8x1xi1>
    %c1_i32_1068 = arith.constant 1 : i32
    %2967 = vector.broadcast %c1_i32_1068 : i32 to vector<8x1xi32>
    %2968 = arith.subi %2961, %2967 : vector<8x1xi32>
    %c90_i32_1069 = arith.constant 90 : i32
    %2969 = vector.broadcast %c90_i32_1069 : i32 to vector<8x1xi32>
    %2970 = arith.addi %2968, %2969 : vector<8x1xi32>
    %c-1_i32_1070 = arith.constant -1 : i32
    %2971 = vector.broadcast %c-1_i32_1070 : i32 to vector<8x1xi32>
    %2972 = arith.select %2966, %2970, %2971 : vector<8x1xi1>, vector<8x1xi32>
    %2973 = vector.broadcast %2972 : vector<8x1xi32> to vector<8x128xi32>
    %2974 = arith.cmpi eq, %1, %2973 : vector<8x128xi32>
    %cst_1071 = arith.constant 1.000000e+00 : f32
    %cst_1072 = arith.constant 0.000000e+00 : f32
    %2975 = vector.broadcast %cst_1071 : f32 to vector<8x128xf32>
    %2976 = vector.broadcast %cst_1072 : f32 to vector<8x128xf32>
    %2977 = arith.select %2974, %2975, %2976 : vector<8x128xi1>, vector<8x128xf32>
    %2978 = arith.addf %2957, %2977 : vector<8x128xf32>
    %2979 = vector.extract_strided_slice %0 {offsets = [0, 225], sizes = [8, 1], strides = [1, 1]} : vector<8x512xf32> to vector<8x1xf32>
    %cst_1073 = arith.constant 1.000000e+00 : f32
    %2980 = vector.broadcast %cst_1073 : f32 to vector<8x1xf32>
    %2981 = arith.addf %2979, %2980 : vector<8x1xf32>
    %2982 = arith.fptosi %2981 : vector<8x1xf32> to vector<8x1xi32>
    %c0_i32_1074 = arith.constant 0 : i32
    %2983 = vector.broadcast %c0_i32_1074 : i32 to vector<8x1xi32>
    %2984 = arith.cmpi sgt, %2982, %2983 : vector<8x1xi32>
    %c1_i32_1075 = arith.constant 1 : i32
    %2985 = vector.broadcast %c1_i32_1075 : i32 to vector<8x1xi32>
    %2986 = arith.subi %2982, %2985 : vector<8x1xi32>
    %c97_i32_1076 = arith.constant 97 : i32
    %2987 = vector.broadcast %c97_i32_1076 : i32 to vector<8x1xi32>
    %2988 = arith.addi %2986, %2987 : vector<8x1xi32>
    %c-1_i32_1077 = arith.constant -1 : i32
    %2989 = vector.broadcast %c-1_i32_1077 : i32 to vector<8x1xi32>
    %2990 = arith.select %2984, %2988, %2989 : vector<8x1xi1>, vector<8x1xi32>
    %2991 = vector.broadcast %2990 : vector<8x1xi32> to vector<8x128xi32>
    %2992 = arith.cmpi eq, %1, %2991 : vector<8x128xi32>
    %cst_1078 = arith.constant 1.000000e+00 : f32
    %cst_1079 = arith.constant 0.000000e+00 : f32
    %2993 = vector.broadcast %cst_1078 : f32 to vector<8x128xf32>
    %2994 = vector.broadcast %cst_1079 : f32 to vector<8x128xf32>
    %2995 = arith.select %2992, %2993, %2994 : vector<8x128xi1>, vector<8x128xf32>
    %2996 = arith.addf %2978, %2995 : vector<8x128xf32>
    %2997 = vector.extract_strided_slice %0 {offsets = [0, 191], sizes = [8, 1], strides = [1, 1]} : vector<8x512xf32> to vector<8x1xf32>
    %cst_1080 = arith.constant 1.000000e+00 : f32
    %2998 = vector.broadcast %cst_1080 : f32 to vector<8x1xf32>
    %2999 = arith.addf %2997, %2998 : vector<8x1xf32>
    %3000 = arith.fptosi %2999 : vector<8x1xf32> to vector<8x1xi32>
    %c0_i32_1081 = arith.constant 0 : i32
    %3001 = vector.broadcast %c0_i32_1081 : i32 to vector<8x1xi32>
    %3002 = arith.cmpi sgt, %3000, %3001 : vector<8x1xi32>
    %c1_i32_1082 = arith.constant 1 : i32
    %3003 = vector.broadcast %c1_i32_1082 : i32 to vector<8x1xi32>
    %3004 = arith.subi %3000, %3003 : vector<8x1xi32>
    %c119_i32_1083 = arith.constant 119 : i32
    %3005 = vector.broadcast %c119_i32_1083 : i32 to vector<8x1xi32>
    %3006 = arith.addi %3004, %3005 : vector<8x1xi32>
    %c-1_i32_1084 = arith.constant -1 : i32
    %3007 = vector.broadcast %c-1_i32_1084 : i32 to vector<8x1xi32>
    %3008 = arith.select %3002, %3006, %3007 : vector<8x1xi1>, vector<8x1xi32>
    %3009 = vector.broadcast %3008 : vector<8x1xi32> to vector<8x128xi32>
    %3010 = arith.cmpi eq, %1, %3009 : vector<8x128xi32>
    %cst_1085 = arith.constant 1.000000e+00 : f32
    %cst_1086 = arith.constant 0.000000e+00 : f32
    %3011 = vector.broadcast %cst_1085 : f32 to vector<8x128xf32>
    %3012 = vector.broadcast %cst_1086 : f32 to vector<8x128xf32>
    %3013 = arith.select %3010, %3011, %3012 : vector<8x128xi1>, vector<8x128xf32>
    %3014 = arith.addf %2996, %3013 : vector<8x128xf32>
    %3015 = vector.extract_strided_slice %0 {offsets = [0, 202], sizes = [8, 1], strides = [1, 1]} : vector<8x512xf32> to vector<8x1xf32>
    %cst_1087 = arith.constant 1.000000e+00 : f32
    %3016 = vector.broadcast %cst_1087 : f32 to vector<8x1xf32>
    %3017 = arith.addf %3015, %3016 : vector<8x1xf32>
    %3018 = arith.fptosi %3017 : vector<8x1xf32> to vector<8x1xi32>
    %c0_i32_1088 = arith.constant 0 : i32
    %3019 = vector.broadcast %c0_i32_1088 : i32 to vector<8x1xi32>
    %3020 = arith.cmpi sgt, %3018, %3019 : vector<8x1xi32>
    %c1_i32_1089 = arith.constant 1 : i32
    %3021 = vector.broadcast %c1_i32_1089 : i32 to vector<8x1xi32>
    %3022 = arith.subi %3018, %3021 : vector<8x1xi32>
    %c126_i32_1090 = arith.constant 126 : i32
    %3023 = vector.broadcast %c126_i32_1090 : i32 to vector<8x1xi32>
    %3024 = arith.addi %3022, %3023 : vector<8x1xi32>
    %c-1_i32_1091 = arith.constant -1 : i32
    %3025 = vector.broadcast %c-1_i32_1091 : i32 to vector<8x1xi32>
    %3026 = arith.select %3020, %3024, %3025 : vector<8x1xi1>, vector<8x1xi32>
    %3027 = vector.broadcast %3026 : vector<8x1xi32> to vector<8x128xi32>
    %3028 = arith.cmpi eq, %1, %3027 : vector<8x128xi32>
    %cst_1092 = arith.constant 1.000000e+00 : f32
    %cst_1093 = arith.constant 0.000000e+00 : f32
    %3029 = vector.broadcast %cst_1092 : f32 to vector<8x128xf32>
    %3030 = vector.broadcast %cst_1093 : f32 to vector<8x128xf32>
    %3031 = arith.select %3028, %3029, %3030 : vector<8x128xi1>, vector<8x128xf32>
    %3032 = arith.addf %3014, %3031 : vector<8x128xf32>
    %3033 = vector.extract_strided_slice %0 {offsets = [0, 227], sizes = [8, 1], strides = [1, 1]} : vector<8x512xf32> to vector<8x1xf32>
    %cst_1094 = arith.constant 1.000000e+00 : f32
    %3034 = vector.broadcast %cst_1094 : f32 to vector<8x1xf32>
    %3035 = arith.addf %3033, %3034 : vector<8x1xf32>
    %3036 = arith.fptosi %3035 : vector<8x1xf32> to vector<8x1xi32>
    %c1_i32_1095 = arith.constant 1 : i32
    %3037 = vector.broadcast %c1_i32_1095 : i32 to vector<8x1xi32>
    %3038 = arith.subi %3036, %3037 : vector<8x1xi32>
    %c0_i32_1096 = arith.constant 0 : i32
    %c1_i32_1097 = arith.constant 1 : i32
    %3039 = vector.broadcast %c0_i32_1096 : i32 to vector<8x1xi32>
    %3040 = arith.maxsi %3039, %3038 : vector<8x1xi32>
    %3041 = vector.broadcast %c1_i32_1097 : i32 to vector<8x1xi32>
    %3042 = arith.minsi %3041, %3040 : vector<8x1xi32>
    %3043 = arith.sitofp %3042 : vector<8x1xi32> to vector<8x1xf32>
    %c116_i32_1098 = arith.constant 116 : i32
    %3044 = vector.broadcast %c116_i32_1098 : i32 to vector<8x128xi32>
    %3045 = arith.cmpi eq, %1, %3044 : vector<8x128xi32>
    %cst_1099 = arith.constant 0.000000e+00 : f32
    %3046 = vector.shape_cast %3043 : vector<8x1xf32> to vector<8x1xf32>
    %3047 = vector.broadcast %3046 : vector<8x1xf32> to vector<8x128xf32>
    %3048 = vector.broadcast %cst_1099 : f32 to vector<8x128xf32>
    %3049 = arith.select %3045, %3047, %3048 : vector<8x128xi1>, vector<8x128xf32>
    %3050 = arith.addf %3032, %3049 : vector<8x128xf32>
    %3051 = vector.extract_strided_slice %0 {offsets = [0, 224], sizes = [8, 1], strides = [1, 1]} : vector<8x512xf32> to vector<8x1xf32>
    %cst_1100 = arith.constant 1.000000e+00 : f32
    %3052 = vector.broadcast %cst_1100 : f32 to vector<8x1xf32>
    %3053 = arith.addf %3051, %3052 : vector<8x1xf32>
    %3054 = arith.fptosi %3053 : vector<8x1xf32> to vector<8x1xi32>
    %c0_i32_1101 = arith.constant 0 : i32
    %3055 = vector.broadcast %c0_i32_1101 : i32 to vector<8x1xi32>
    %3056 = arith.cmpi sgt, %3054, %3055 : vector<8x1xi32>
    %cst_1102 = arith.constant 1.000000e+00 : f32
    %cst_1103 = arith.constant 0.000000e+00 : f32
    %3057 = vector.broadcast %cst_1102 : f32 to vector<8x1xf32>
    %3058 = vector.broadcast %cst_1103 : f32 to vector<8x1xf32>
    %3059 = arith.select %3056, %3057, %3058 : vector<8x1xi1>, vector<8x1xf32>
    %c117_i32_1104 = arith.constant 117 : i32
    %3060 = vector.broadcast %c117_i32_1104 : i32 to vector<8x128xi32>
    %3061 = arith.cmpi eq, %1, %3060 : vector<8x128xi32>
    %cst_1105 = arith.constant 0.000000e+00 : f32
    %3062 = vector.shape_cast %3059 : vector<8x1xf32> to vector<8x1xf32>
    %3063 = vector.broadcast %3062 : vector<8x1xf32> to vector<8x128xf32>
    %3064 = vector.broadcast %cst_1105 : f32 to vector<8x128xf32>
    %3065 = arith.select %3061, %3063, %3064 : vector<8x128xi1>, vector<8x128xf32>
    %3066 = arith.addf %3050, %3065 : vector<8x128xf32>
    %c118_i32_1106 = arith.constant 118 : i32
    %3067 = vector.broadcast %c118_i32_1106 : i32 to vector<8x128xi32>
    %3068 = arith.cmpi eq, %1, %3067 : vector<8x128xi32>
    %c0_i32_1107 = arith.constant 0 : i32
    %3069 = vector.broadcast %c0_i32_1107 : i32 to vector<8x1xi32>
    %3070 = arith.cmpi sgt, %2982, %3069 : vector<8x1xi32>
    %cst_1108 = arith.constant 0.000000e+00 : f32
    %cst_1109 = arith.constant 1.000000e+00 : f32
    %3071 = vector.broadcast %cst_1108 : f32 to vector<8x1xf32>
    %3072 = vector.broadcast %cst_1109 : f32 to vector<8x1xf32>
    %3073 = arith.select %3070, %3071, %3072 : vector<8x1xi1>, vector<8x1xf32>
    %cst_1110 = arith.constant 0.000000e+00 : f32
    %3074 = vector.shape_cast %3073 : vector<8x1xf32> to vector<8x1xf32>
    %3075 = vector.broadcast %3074 : vector<8x1xf32> to vector<8x128xf32>
    %3076 = vector.broadcast %cst_1110 : f32 to vector<8x128xf32>
    %3077 = arith.select %3068, %3075, %3076 : vector<8x128xi1>, vector<8x128xf32>
    %3078 = arith.addf %3066, %3077 : vector<8x128xf32>
    %3079 = vector.extract_strided_slice %0 {offsets = [0, 195], sizes = [8, 1], strides = [1, 1]} : vector<8x512xf32> to vector<8x1xf32>
    %cst_1111 = arith.constant 1.000000e+01 : f32
    %3080 = vector.broadcast %cst_1111 : f32 to vector<8x1xf32>
    %3081 = arith.mulf %3079, %3080 : vector<8x1xf32>
    %cst_1112 = arith.constant 0.000000e+00 : f32
    %cst_1113 = arith.constant 1.000000e+01 : f32
    %3082 = vector.broadcast %cst_1112 : f32 to vector<8x1xf32>
    %3083 = arith.maximumf %3082, %3081 : vector<8x1xf32>
    %3084 = vector.broadcast %cst_1113 : f32 to vector<8x1xf32>
    %3085 = arith.minimumf %3084, %3083 : vector<8x1xf32>
    %3086 = arith.fptosi %3085 : vector<8x1xf32> to vector<8x1xi32>
    %c0_i32_1114 = arith.constant 0 : i32
    %3087 = vector.broadcast %c0_i32_1114 : i32 to vector<8x1xi32>
    %3088 = arith.cmpi sgt, %3086, %3087 : vector<8x1xi32>
    %c1_i32_1115 = arith.constant 1 : i32
    %3089 = vector.broadcast %c1_i32_1115 : i32 to vector<8x1xi32>
    %3090 = arith.subi %3086, %3089 : vector<8x1xi32>
    %c0_i32_1116 = arith.constant 0 : i32
    %3091 = vector.broadcast %c0_i32_1116 : i32 to vector<8x1xi32>
    %3092 = arith.addi %3090, %3091 : vector<8x1xi32>
    %c-1_i32_1117 = arith.constant -1 : i32
    %3093 = vector.broadcast %c-1_i32_1117 : i32 to vector<8x1xi32>
    %3094 = arith.select %3088, %3092, %3093 : vector<8x1xi1>, vector<8x1xi32>
    %3095 = vector.broadcast %3094 : vector<8x1xi32> to vector<8x128xi32>
    %3096 = arith.cmpi eq, %1, %3095 : vector<8x128xi32>
    %cst_1118 = arith.constant 1.000000e+00 : f32
    %cst_1119 = arith.constant 0.000000e+00 : f32
    %3097 = vector.broadcast %cst_1118 : f32 to vector<8x128xf32>
    %3098 = vector.broadcast %cst_1119 : f32 to vector<8x128xf32>
    %3099 = arith.select %3096, %3097, %3098 : vector<8x128xi1>, vector<8x128xf32>
    %3100 = vector.extract_strided_slice %0 {offsets = [0, 201], sizes = [8, 1], strides = [1, 1]} : vector<8x512xf32> to vector<8x1xf32>
    %cst_1120 = arith.constant 1.000000e+00 : f32
    %3101 = vector.broadcast %cst_1120 : f32 to vector<8x1xf32>
    %3102 = arith.addf %3100, %3101 : vector<8x1xf32>
    %3103 = arith.fptosi %3102 : vector<8x1xf32> to vector<8x1xi32>
    %c0_i32_1121 = arith.constant 0 : i32
    %3104 = vector.broadcast %c0_i32_1121 : i32 to vector<8x1xi32>
    %3105 = arith.cmpi sgt, %3103, %3104 : vector<8x1xi32>
    %c1_i32_1122 = arith.constant 1 : i32
    %3106 = vector.broadcast %c1_i32_1122 : i32 to vector<8x1xi32>
    %3107 = arith.subi %3103, %3106 : vector<8x1xi32>
    %c10_i32_1123 = arith.constant 10 : i32
    %3108 = vector.broadcast %c10_i32_1123 : i32 to vector<8x1xi32>
    %3109 = arith.addi %3107, %3108 : vector<8x1xi32>
    %c-1_i32_1124 = arith.constant -1 : i32
    %3110 = vector.broadcast %c-1_i32_1124 : i32 to vector<8x1xi32>
    %3111 = arith.select %3105, %3109, %3110 : vector<8x1xi1>, vector<8x1xi32>
    %3112 = vector.broadcast %3111 : vector<8x1xi32> to vector<8x128xi32>
    %3113 = arith.cmpi eq, %1, %3112 : vector<8x128xi32>
    %cst_1125 = arith.constant 1.000000e+00 : f32
    %cst_1126 = arith.constant 0.000000e+00 : f32
    %3114 = vector.broadcast %cst_1125 : f32 to vector<8x128xf32>
    %3115 = vector.broadcast %cst_1126 : f32 to vector<8x128xf32>
    %3116 = arith.select %3113, %3114, %3115 : vector<8x128xi1>, vector<8x128xf32>
    %3117 = arith.addf %3099, %3116 : vector<8x128xf32>
    %3118 = vector.extract_strided_slice %0 {offsets = [0, 204], sizes = [8, 1], strides = [1, 1]} : vector<8x512xf32> to vector<8x1xf32>
    %cst_1127 = arith.constant 1.000000e+00 : f32
    %3119 = vector.broadcast %cst_1127 : f32 to vector<8x1xf32>
    %3120 = arith.addf %3118, %3119 : vector<8x1xf32>
    %3121 = arith.fptosi %3120 : vector<8x1xf32> to vector<8x1xi32>
    %c0_i32_1128 = arith.constant 0 : i32
    %3122 = vector.broadcast %c0_i32_1128 : i32 to vector<8x1xi32>
    %3123 = arith.cmpi sgt, %3121, %3122 : vector<8x1xi32>
    %c1_i32_1129 = arith.constant 1 : i32
    %3124 = vector.broadcast %c1_i32_1129 : i32 to vector<8x1xi32>
    %3125 = arith.subi %3121, %3124 : vector<8x1xi32>
    %c12_i32_1130 = arith.constant 12 : i32
    %3126 = vector.broadcast %c12_i32_1130 : i32 to vector<8x1xi32>
    %3127 = arith.addi %3125, %3126 : vector<8x1xi32>
    %c-1_i32_1131 = arith.constant -1 : i32
    %3128 = vector.broadcast %c-1_i32_1131 : i32 to vector<8x1xi32>
    %3129 = arith.select %3123, %3127, %3128 : vector<8x1xi1>, vector<8x1xi32>
    %3130 = vector.broadcast %3129 : vector<8x1xi32> to vector<8x128xi32>
    %3131 = arith.cmpi eq, %1, %3130 : vector<8x128xi32>
    %cst_1132 = arith.constant 1.000000e+00 : f32
    %cst_1133 = arith.constant 0.000000e+00 : f32
    %3132 = vector.broadcast %cst_1132 : f32 to vector<8x128xf32>
    %3133 = vector.broadcast %cst_1133 : f32 to vector<8x128xf32>
    %3134 = arith.select %3131, %3132, %3133 : vector<8x128xi1>, vector<8x128xf32>
    %3135 = arith.addf %3117, %3134 : vector<8x128xf32>
    %3136 = vector.extract_strided_slice %0 {offsets = [0, 203], sizes = [8, 1], strides = [1, 1]} : vector<8x512xf32> to vector<8x1xf32>
    %3137 = arith.fptosi %3136 : vector<8x1xf32> to vector<8x1xi32>
    %c1_i32_1134 = arith.constant 1 : i32
    %3138 = vector.broadcast %c1_i32_1134 : i32 to vector<8x1xi32>
    %3139 = arith.maxsi %3137, %3138 : vector<8x1xi32>
    %c1_i32_1135 = arith.constant 1 : i32
    %3140 = vector.broadcast %c1_i32_1135 : i32 to vector<8x1xi32>
    %3141 = arith.subi %3139, %3140 : vector<8x1xi32>
    %c15_i32_1136 = arith.constant 15 : i32
    %3142 = vector.broadcast %c15_i32_1136 : i32 to vector<8x1xi32>
    %3143 = arith.addi %3141, %3142 : vector<8x1xi32>
    %3144 = vector.broadcast %3143 : vector<8x1xi32> to vector<8x128xi32>
    %3145 = arith.cmpi eq, %1, %3144 : vector<8x128xi32>
    %cst_1137 = arith.constant 1.000000e+00 : f32
    %cst_1138 = arith.constant 0.000000e+00 : f32
    %3146 = vector.broadcast %cst_1137 : f32 to vector<8x128xf32>
    %3147 = vector.broadcast %cst_1138 : f32 to vector<8x128xf32>
    %3148 = arith.select %3145, %3146, %3147 : vector<8x128xi1>, vector<8x128xf32>
    %3149 = arith.addf %3135, %3148 : vector<8x128xf32>
    %3150 = vector.extract_strided_slice %0 {offsets = [0, 211], sizes = [8, 1], strides = [1, 1]} : vector<8x512xf32> to vector<8x1xf32>
    %cst_1139 = arith.constant 1.000000e+00 : f32
    %3151 = vector.broadcast %cst_1139 : f32 to vector<8x1xf32>
    %3152 = arith.addf %3150, %3151 : vector<8x1xf32>
    %3153 = arith.fptosi %3152 : vector<8x1xf32> to vector<8x1xi32>
    %c0_i32_1140 = arith.constant 0 : i32
    %3154 = vector.broadcast %c0_i32_1140 : i32 to vector<8x1xi32>
    %3155 = arith.cmpi sgt, %3153, %3154 : vector<8x1xi32>
    %c1_i32_1141 = arith.constant 1 : i32
    %3156 = vector.broadcast %c1_i32_1141 : i32 to vector<8x1xi32>
    %3157 = arith.subi %3153, %3156 : vector<8x1xi32>
    %c115_i32_1142 = arith.constant 115 : i32
    %3158 = vector.broadcast %c115_i32_1142 : i32 to vector<8x1xi32>
    %3159 = arith.addi %3157, %3158 : vector<8x1xi32>
    %c-1_i32_1143 = arith.constant -1 : i32
    %3160 = vector.broadcast %c-1_i32_1143 : i32 to vector<8x1xi32>
    %3161 = arith.select %3155, %3159, %3160 : vector<8x1xi1>, vector<8x1xi32>
    %3162 = vector.broadcast %3161 : vector<8x1xi32> to vector<8x128xi32>
    %3163 = arith.cmpi eq, %1, %3162 : vector<8x128xi32>
    %cst_1144 = arith.constant 1.000000e+00 : f32
    %cst_1145 = arith.constant 0.000000e+00 : f32
    %3164 = vector.broadcast %cst_1144 : f32 to vector<8x128xf32>
    %3165 = vector.broadcast %cst_1145 : f32 to vector<8x128xf32>
    %3166 = arith.select %3163, %3164, %3165 : vector<8x128xi1>, vector<8x128xf32>
    %3167 = arith.addf %3149, %3166 : vector<8x128xf32>
    %3168 = vector.extract_strided_slice %0 {offsets = [0, 212], sizes = [8, 1], strides = [1, 1]} : vector<8x512xf32> to vector<8x1xf32>
    %cst_1146 = arith.constant 1.000000e+00 : f32
    %3169 = vector.broadcast %cst_1146 : f32 to vector<8x1xf32>
    %3170 = arith.addf %3168, %3169 : vector<8x1xf32>
    %3171 = arith.fptosi %3170 : vector<8x1xf32> to vector<8x1xi32>
    %c0_i32_1147 = arith.constant 0 : i32
    %3172 = vector.broadcast %c0_i32_1147 : i32 to vector<8x1xi32>
    %3173 = arith.cmpi sgt, %3171, %3172 : vector<8x1xi32>
    %c1_i32_1148 = arith.constant 1 : i32
    %3174 = vector.broadcast %c1_i32_1148 : i32 to vector<8x1xi32>
    %3175 = arith.subi %3171, %3174 : vector<8x1xi32>
    %c122_i32_1149 = arith.constant 122 : i32
    %3176 = vector.broadcast %c122_i32_1149 : i32 to vector<8x1xi32>
    %3177 = arith.addi %3175, %3176 : vector<8x1xi32>
    %c-1_i32_1150 = arith.constant -1 : i32
    %3178 = vector.broadcast %c-1_i32_1150 : i32 to vector<8x1xi32>
    %3179 = arith.select %3173, %3177, %3178 : vector<8x1xi1>, vector<8x1xi32>
    %3180 = vector.broadcast %3179 : vector<8x1xi32> to vector<8x128xi32>
    %3181 = arith.cmpi eq, %1, %3180 : vector<8x128xi32>
    %cst_1151 = arith.constant 1.000000e+00 : f32
    %cst_1152 = arith.constant 0.000000e+00 : f32
    %3182 = vector.broadcast %cst_1151 : f32 to vector<8x128xf32>
    %3183 = vector.broadcast %cst_1152 : f32 to vector<8x128xf32>
    %3184 = arith.select %3181, %3182, %3183 : vector<8x128xi1>, vector<8x128xf32>
    %3185 = arith.addf %3167, %3184 : vector<8x128xf32>
    %3186 = vector.extract_strided_slice %0 {offsets = [0, 213], sizes = [8, 1], strides = [1, 1]} : vector<8x512xf32> to vector<8x1xf32>
    %cst_1153 = arith.constant 1.000000e+00 : f32
    %3187 = vector.broadcast %cst_1153 : f32 to vector<8x1xf32>
    %3188 = arith.addf %3186, %3187 : vector<8x1xf32>
    %3189 = arith.fptosi %3188 : vector<8x1xf32> to vector<8x1xi32>
    %3190 = arith.sitofp %3189 : vector<8x1xi32> to vector<8x1xf32>
    %3191 = math.sqrt %3190 : vector<8x1xf32>
    %3192 = math.floor %3191 : vector<8x1xf32>
    %3193 = arith.fptosi %3192 : vector<8x1xf32> to vector<8x1xi32>
    %c0_i32_1154 = arith.constant 0 : i32
    %3194 = vector.broadcast %c0_i32_1154 : i32 to vector<8x1xi32>
    %3195 = arith.cmpi sgt, %3193, %3194 : vector<8x1xi32>
    %c1_i32_1155 = arith.constant 1 : i32
    %3196 = vector.broadcast %c1_i32_1155 : i32 to vector<8x1xi32>
    %3197 = arith.subi %3193, %3196 : vector<8x1xi32>
    %c125_i32_1156 = arith.constant 125 : i32
    %3198 = vector.broadcast %c125_i32_1156 : i32 to vector<8x1xi32>
    %3199 = arith.addi %3197, %3198 : vector<8x1xi32>
    %c-1_i32_1157 = arith.constant -1 : i32
    %3200 = vector.broadcast %c-1_i32_1157 : i32 to vector<8x1xi32>
    %3201 = arith.select %3195, %3199, %3200 : vector<8x1xi1>, vector<8x1xi32>
    %3202 = vector.broadcast %3201 : vector<8x1xi32> to vector<8x128xi32>
    %3203 = arith.cmpi eq, %1, %3202 : vector<8x128xi32>
    %cst_1158 = arith.constant 1.000000e+00 : f32
    %cst_1159 = arith.constant 0.000000e+00 : f32
    %3204 = vector.broadcast %cst_1158 : f32 to vector<8x128xf32>
    %3205 = vector.broadcast %cst_1159 : f32 to vector<8x128xf32>
    %3206 = arith.select %3203, %3204, %3205 : vector<8x128xi1>, vector<8x128xf32>
    %3207 = arith.addf %3185, %3206 : vector<8x128xf32>
    %3208 = tpu.concatenate %3078, %3207 in 1 : vector<8x128xf32>, vector<8x128xf32> -> vector<8x256xf32>
    %3209 = arith.truncf %3208 : vector<8x256xf32> to vector<8x256xbf16>
    %cst_1160 = arith.constant dense<0.000000e+00> : vector<8x96xf32>
    %3210 = tpu.matmul %3209, %277, %cst_1160 {dimension_numbers = #tpu.dot_dimension_numbers<[1], [0], [0], [1], [0, 0, 1, 1], [], []>} : vector<8x256xbf16>, vector<256x96xbf16>, vector<8x96xf32> -> vector<8x96xf32>
    %3211 = vector.broadcast %278 : vector<1x96xf32> to vector<8x96xf32>
    %3212 = arith.addf %3210, %3211 : vector<8x96xf32>
    %3213 = vector.extract_strided_slice %3212 {offsets = [0, 0], sizes = [8, 32], strides = [1, 1]} : vector<8x96xf32> to vector<8x32xf32>
    %3214 = vector.extract_strided_slice %3212 {offsets = [0, 32], sizes = [8, 32], strides = [1, 1]} : vector<8x96xf32> to vector<8x32xf32>
    %3215 = vector.extract_strided_slice %3212 {offsets = [0, 64], sizes = [8, 32], strides = [1, 1]} : vector<8x96xf32> to vector<8x32xf32>
    %cst_1161 = arith.constant 0.000000e+00 : f32
    %3216 = vector.broadcast %cst_1161 : f32 to vector<8x32xf32>
    %3217 = arith.maximumf %3213, %3216 : vector<8x32xf32>
    %3218 = arith.addf %3214, %3213 : vector<8x32xf32>
    %cst_1162 = arith.constant 0.000000e+00 : f32
    %3219 = vector.broadcast %cst_1162 : f32 to vector<8x32xf32>
    %3220 = arith.maximumf %3218, %3219 : vector<8x32xf32>
    %3221 = tpu.concatenate %3217, %3220 in 1 : vector<8x32xf32>, vector<8x32xf32> -> vector<8x64xf32>
    %cst_1163 = arith.constant dense<0.000000e+00> : vector<8x96xf32>
    %3222 = tpu.matmul %3221, %279, %cst_1163 {dimension_numbers = #tpu.dot_dimension_numbers<[1], [0], [0], [1], [0, 0, 1, 1], [], []>} : vector<8x64xf32>, vector<64x96xf32>, vector<8x96xf32> -> vector<8x96xf32>
    %3223 = vector.broadcast %280 : vector<1x96xf32> to vector<8x96xf32>
    %3224 = arith.addf %3222, %3223 : vector<8x96xf32>
    %3225 = arith.addf %3213, %3215 : vector<8x32xf32>
    %cst_1164 = arith.constant 1.000000e+00 : f32
    %3226 = vector.broadcast %cst_1164 : f32 to vector<8x1xf32>
    %3227 = arith.subf %3226, %2920 : vector<8x1xf32>
    %3228 = vector.extract_strided_slice %3224 {offsets = [0, 0], sizes = [8, 32], strides = [1, 1]} : vector<8x96xf32> to vector<8x32xf32>
    %3229 = vector.broadcast %3227 : vector<8x1xf32> to vector<8x32xf32>
    %3230 = arith.mulf %3229, %3228 : vector<8x32xf32>
    %3231 = arith.addf %3225, %3230 : vector<8x32xf32>
    %cst_1165 = arith.constant 1.000000e+00 : f32
    %3232 = vector.broadcast %cst_1165 : f32 to vector<8x1xf32>
    %3233 = arith.subf %3232, %2943 : vector<8x1xf32>
    %3234 = vector.extract_strided_slice %3224 {offsets = [0, 32], sizes = [8, 32], strides = [1, 1]} : vector<8x96xf32> to vector<8x32xf32>
    %3235 = vector.broadcast %3233 : vector<8x1xf32> to vector<8x32xf32>
    %3236 = arith.mulf %3235, %3234 : vector<8x32xf32>
    %3237 = arith.addf %3231, %3236 : vector<8x32xf32>
    %cst_1166 = arith.constant 4.000000e+00 : f32
    %3238 = vector.broadcast %cst_1166 : f32 to vector<8x1xf32>
    %3239 = arith.subf %3238, %2911 : vector<8x1xf32>
    %3240 = vector.extract_strided_slice %3224 {offsets = [0, 64], sizes = [8, 32], strides = [1, 1]} : vector<8x96xf32> to vector<8x32xf32>
    %3241 = vector.broadcast %3239 : vector<8x1xf32> to vector<8x32xf32>
    %3242 = arith.mulf %3241, %3240 : vector<8x32xf32>
    %3243 = arith.addf %3237, %3242 : vector<8x32xf32>
    %c0_1167 = arith.constant 0 : index
    %c160 = arith.constant 160 : index
    %3244 = vector.load %arg6[%c0_1167, %c160] : memref<8x192xf32, #tpu.memory_space<vmem>>, vector<8x32xf32>
    tpu.vector_store %arg6[%c0_1167, %c160], %3243 {strides = array<i32>} : memref<8x192xf32, #tpu.memory_space<vmem>>, vector<8x32xf32>,
    return
  }
  func.func @transform_0(%arg0: i32) -> (i32, i32) {
    %c0_i32 = arith.constant 0 : i32
    %c0_i32_0 = arith.constant 0 : i32
    return %arg0, %c0_i32 : i32, i32
  }
  func.func @transform_1(%arg0: i32) -> (i32, i32) {
    %c0_i32 = arith.constant 0 : i32
    %c0_i32_0 = arith.constant 0 : i32
    %c0_i32_1 = arith.constant 0 : i32
    return %c0_i32, %c0_i32_0 : i32, i32
  }
  func.func @transform_2(%arg0: i32) -> (i32, i32) {
    %c0_i32 = arith.constant 0 : i32
    %c0_i32_0 = arith.constant 0 : i32
    %c0_i32_1 = arith.constant 0 : i32
    return %c0_i32, %c0_i32_0 : i32, i32
  }
  func.func @transform_3(%arg0: i32) -> (i32, i32) {
    %c0_i32 = arith.constant 0 : i32
    %c0_i32_0 = arith.constant 0 : i32
    %c0_i32_1 = arith.constant 0 : i32
    return %c0_i32, %c0_i32_0 : i32, i32
  }
  func.func @transform_4(%arg0: i32) -> (i32, i32) {
    %c0_i32 = arith.constant 0 : i32
    %c0_i32_0 = arith.constant 0 : i32
    %c0_i32_1 = arith.constant 0 : i32
    return %c0_i32, %c0_i32_0 : i32, i32
  }
  func.func @transform_5(%arg0: i32) -> (i32, i32) {
    %c0_i32 = arith.constant 0 : i32
    %c0_i32_0 = arith.constant 0 : i32
    return %arg0, %c0_i32 : i32, i32
  }
}

</mosaic_0001>

<llo_original>
// kernel: tpu_custom_call.1
$region0: #{tpu_custom_call.1}
  #allocation0 [shape = 'u32[]', space=smem, size = 0x4, offset = 0x4, fixed_abs, tag = 'smem constant byte address 0x4 - core index']
  #allocation1 [shape = 'u32[144,128]{1,0:T(1,128)}', space=vmem, size = 0x12000, scoped, tag = 'internal scratch']
  %s0 = inlined_call_operand.vmem [shape: f32[16,512], index: 0, kind: input, shape index: {}]
  %s1 = inlined_call_operand.vmem [shape: bf16[256,96], index: 1, kind: input, shape index: {}]
  %s2 = inlined_call_operand.vmem [shape: f32[1,96], index: 2, kind: input, shape index: {}]
  %s3 = inlined_call_operand.vmem [shape: f32[64,96], index: 3, kind: input, shape index: {}]
  %s4 = inlined_call_operand.vmem [shape: f32[1,96], index: 4, kind: input, shape index: {}]
  %s5 = inlined_call_operand.hbm [shape: f32[16,192], index: 5, kind: output, shape index: {}]
  %s6 = sld [smem:[#allocation0]]
  $region53: #{tpu_custom_call.1} parent=0
    _
  %s8 = ssub.s32 1, %s6
  %s9 = scalar_select 0, %s8, %s6
  $region1: #{tpu_custom_call.1} parent=0
    #allocation2 [shape = 'u8[16384]{0}', space=vmem, size = 0x4000, scoped, tag = 'output window, operand 0']
    #allocation3 [shape = 's32[2]{0}', space=sflag, size = 0x8, scoped, tag = 'scoped memory for tpu_custom_call.1']
    %10 = vsyncpa [#allocation3], 0
    %s11 = scalar_lea.sflag [#allocation3], 1
    %12 = vsyncpa %s11, 0
    loop: start=0, step=1, limit=4
    $region2: #{tpu_custom_call.1} parent=1 // loop_pre_header
      _
    $region3: #{tpu_custom_call.1} parent=1 // loop_header
      %s14 = sphi 0, %s18
      %p15 = scmp.ge.s32.totalorder %s14, 4
      %s24 = sphi 0, %s26
      %s27 = sphi 0, %s24
      %s28 = sphi 0, %s27
      %s44 = sphi 0, %s28
      %s48 = sphi 0, %s48
      %s50 = sphi 0, %s48
      %s51 = sphi 0, %s50
      %s65 = sphi 0, %s51
      %s69 = sphi 0, %s69
      %s71 = sphi 0, %s69
      %s72 = sphi 0, %s71
      %s86 = sphi 0, %s72
      %s90 = sphi 0, %s90
      %s92 = sphi 0, %s90
      %s93 = sphi 0, %s92
      %s107 = sphi 0, %s93
      %s111 = sphi 0, %s111
      %s113 = sphi 0, %s111
      %s114 = sphi 0, %s113
      %s128 = sphi 0, %s114
      %s134 = sphi 0, %s136
      %s137 = sphi 0, %s134
      %s138 = sphi 0, %s137
      %s154 = sphi 0, %s138
    $region4: #{tpu_custom_call.1} parent=1 // loop_header_branch
      %17 = sbr.rel (%p15) target = $region8
    $region5: #{tpu_custom_call.1} parent=1 // loop_body
      %s19 = ssub.s32 %s14, 1
      %s20 = ssub.s32 %s14, 2
      %s21 = sadd.s32 %s14, 1
      %s22 = ssub.s32 %s14, %s21
      %p23 = scmp.eq.s32.totalorder %s22, 0
      %s25 = sadd.s32 %s24, 1
      %s26 = scalar_select %p23, %s24, %s25
      %p29 = pneg %p23
      %p30 = scmp.eq.s32.totalorder %s14, 1
      %p31 = por %p29, %p30
      %p32 = scmp.ne.s32.totalorder %s24, %s27
      %p33 = scmp.eq.s32.totalorder %s14, 0
      %p34 = por %p32, %p33
      %p35 = scmp.ne.s32.totalorder %s24, %s27
      %p36 = scmp.eq.s32.totalorder %s19, 1
      %p37 = por %p35, %p36
      %p38 = scmp.ne.s32.totalorder %s27, %s28
      %p39 = scmp.eq.s32.totalorder %s19, 0
      %p40 = por %p38, %p39
      %p41 = scmp.ne.s32.totalorder %s27, %s28
      %p42 = scmp.eq.s32.totalorder %s20, 1
      %p43 = por %p41, %p42
      %p45 = scmp.ne.s32.totalorder %s28, %s44
      %p46 = scmp.eq.s32.totalorder %s20, 0
      %p47 = por %p45, %p46
      %s49 = sadd.s32 %s48, 1
      %p52 = scmp.eq.s32.totalorder %s14, 1
      %p53 = scmp.ne.s32.totalorder %s48, %s50
      %p54 = scmp.eq.s32.totalorder %s14, 0
      %p55 = por %p53, %p54
      %p56 = scmp.ne.s32.totalorder %s48, %s50
      %p57 = scmp.eq.s32.totalorder %s19, 1
      %p58 = por %p56, %p57
      %p59 = scmp.ne.s32.totalorder %s50, %s51
      %p60 = scmp.eq.s32.totalorder %s19, 0
      %p61 = por %p59, %p60
      %p62 = scmp.ne.s32.totalorder %s50, %s51
      %p63 = scmp.eq.s32.totalorder %s20, 1
      %p64 = por %p62, %p63
      %p66 = scmp.ne.s32.totalorder %s51, %s65
      %p67 = scmp.eq.s32.totalorder %s20, 0
      %p68 = por %p66, %p67
      %s70 = sadd.s32 %s69, 1
      %p73 = scmp.eq.s32.totalorder %s14, 1
      %p74 = scmp.ne.s32.totalorder %s69, %s71
      %p75 = scmp.eq.s32.totalorder %s14, 0
      %p76 = por %p74, %p75
      %p77 = scmp.ne.s32.totalorder %s69, %s71
      %p78 = scmp.eq.s32.totalorder %s19, 1
      %p79 = por %p77, %p78
      %p80 = scmp.ne.s32.totalorder %s71, %s72
      %p81 = scmp.eq.s32.totalorder %s19, 0
      %p82 = por %p80, %p81
      %p83 = scmp.ne.s32.totalorder %s71, %s72
      %p84 = scmp.eq.s32.totalorder %s20, 1
      %p85 = por %p83, %p84
      %p87 = scmp.ne.s32.totalorder %s72, %s86
      %p88 = scmp.eq.s32.totalorder %s20, 0
      %p89 = por %p87, %p88
      %s91 = sadd.s32 %s90, 1
      %p94 = scmp.eq.s32.totalorder %s14, 1
      %p95 = scmp.ne.s32.totalorder %s90, %s92
      %p96 = scmp.eq.s32.totalorder %s14, 0
      %p97 = por %p95, %p96
      %p98 = scmp.ne.s32.totalorder %s90, %s92
      %p99 = scmp.eq.s32.totalorder %s19, 1
      %p100 = por %p98, %p99
      %p101 = scmp.ne.s32.totalorder %s92, %s93
      %p102 = scmp.eq.s32.totalorder %s19, 0
      %p103 = por %p101, %p102
      %p104 = scmp.ne.s32.totalorder %s92, %s93
      %p105 = scmp.eq.s32.totalorder %s20, 1
      %p106 = por %p104, %p105
      %p108 = scmp.ne.s32.totalorder %s93, %s107
      %p109 = scmp.eq.s32.totalorder %s20, 0
      %p110 = por %p108, %p109
      %s112 = sadd.s32 %s111, 1
      %p115 = scmp.eq.s32.totalorder %s14, 1
      %p116 = scmp.ne.s32.totalorder %s111, %s113
      %p117 = scmp.eq.s32.totalorder %s14, 0
      %p118 = por %p116, %p117
      %p119 = scmp.ne.s32.totalorder %s111, %s113
      %p120 = scmp.eq.s32.totalorder %s19, 1
      %p121 = por %p119, %p120
      %p122 = scmp.ne.s32.totalorder %s113, %s114
      %p123 = scmp.eq.s32.totalorder %s19, 0
      %p124 = por %p122, %p123
      %p125 = scmp.ne.s32.totalorder %s113, %s114
      %p126 = scmp.eq.s32.totalorder %s20, 1
      %p127 = por %p125, %p126
      %p129 = scmp.ne.s32.totalorder %s114, %s128
      %p130 = scmp.eq.s32.totalorder %s20, 0
      %p131 = por %p129, %p130
      %s132 = ssub.s32 %s14, %s21
      %p133 = scmp.eq.s32.totalorder %s132, 0
      %s135 = sadd.s32 %s134, 1
      %s136 = scalar_select %p133, %s134, %s135
      %p139 = pneg %p133
      %p140 = scmp.eq.s32.totalorder %s14, 1
      %p141 = por %p139, %p140
      %p142 = scmp.ne.s32.totalorder %s134, %s137
      %p143 = scmp.eq.s32.totalorder %s14, 0
      %p144 = por %p142, %p143
      %p145 = scmp.ne.s32.totalorder %s134, %s137
      %p146 = scmp.eq.s32.totalorder %s19, 1
      %p147 = por %p145, %p146
      %p148 = scmp.ne.s32.totalorder %s137, %s138
      %p149 = scmp.eq.s32.totalorder %s19, 0
      %p150 = por %p148, %p149
      %p151 = scmp.ne.s32.totalorder %s137, %s138
      %p152 = scmp.eq.s32.totalorder %s20, 1
      %p153 = por %p151, %p152
      %p155 = scmp.ne.s32.totalorder %s138, %s154
      %p156 = scmp.eq.s32.totalorder %s20, 0
      %p157 = por %p155, %p156
      %p158 = scmp.le.s32.totalorder 1, %s14
      %p159 = scmp.lt.s32.totalorder %s14, 3
      %p160 = pnand %p158, %p159
      %p161 = pneg %p160
      // Predicated region
      $region9: #{tpu_custom_call.1} parent=5 // pred_check
        _
      $region10: #{tpu_custom_call.1} parent=5 // pred_check_branch
        %163 = sbr.rel (%p160) target = $region12
      $region11: #{tpu_custom_call.1} parent=5 // pred_region
        %s164 = ssub.s32 %s14, 1
        // Predicated region
        $region13: #{tpu_custom_call.1} parent=11 // pred_check
          %p165 = pneg %p61
        $region14: #{tpu_custom_call.1} parent=11 // pred_check_branch
          %167 = sbr.rel (%p165) target = $region16
        $region15: #{tpu_custom_call.1} parent=11 // pred_region
          _
        $region16: #{tpu_custom_call.1} parent=11 // pred_fallthru
          _
        // Predicated region
        $region17: #{tpu_custom_call.1} parent=11 // pred_check
          %p168 = pneg %p82
        $region18: #{tpu_custom_call.1} parent=11 // pred_check_branch
          %170 = sbr.rel (%p168) target = $region20
        $region19: #{tpu_custom_call.1} parent=11 // pred_region
          _
        $region20: #{tpu_custom_call.1} parent=11 // pred_fallthru
          _
        // Predicated region
        $region21: #{tpu_custom_call.1} parent=11 // pred_check
          %p171 = pneg %p103
        $region22: #{tpu_custom_call.1} parent=11 // pred_check_branch
          %173 = sbr.rel (%p171) target = $region24
        $region23: #{tpu_custom_call.1} parent=11 // pred_region
          _
        $region24: #{tpu_custom_call.1} parent=11 // pred_fallthru
          _
        // Predicated region
        $region25: #{tpu_custom_call.1} parent=11 // pred_check
          %p174 = pneg %p124
        $region26: #{tpu_custom_call.1} parent=11 // pred_check_branch
          %176 = sbr.rel (%p174) target = $region28
        $region27: #{tpu_custom_call.1} parent=11 // pred_region
          _
        $region28: #{tpu_custom_call.1} parent=11 // pred_fallthru
          _
      $region12: #{tpu_custom_call.1} parent=5 // pred_fallthru
        _
      %p177 = scmp.lt.s32.totalorder %s14, 2
      // Predicated region
      $region29: #{tpu_custom_call.1} parent=5 // pred_check
        %p178 = pneg %p177
      $region30: #{tpu_custom_call.1} parent=5 // pred_check_branch
        %180 = sbr.rel (%p178) target = $region32
      $region31: #{tpu_custom_call.1} parent=5 // pred_region
        // Predicated region
        $region33: #{tpu_custom_call.1} parent=31 // pred_check
          %p181 = pneg %p34
        $region34: #{tpu_custom_call.1} parent=31 // pred_check_branch
          %183 = sbr.rel (%p181) target = $region36
        $region35: #{tpu_custom_call.1} parent=31 // pred_region
          %p184 = scmp.lt.s32.totalorder %s14, 1
          %s185 = scalar_select %p184, %s14, 1
          %s186 = smul.addr %s185, 4
          %s187 = smul.addr %s186, 8
          %s188 = scalar_lea.vmem %s0, %s187
        $region36: #{tpu_custom_call.1} parent=31 // pred_fallthru
          _
      $region32: #{tpu_custom_call.1} parent=5 // pred_fallthru
        _
      %p189 = scmp.le.s32.totalorder 1, %s14
      %p190 = scmp.lt.s32.totalorder %s14, 3
      %p191 = pnand %p189, %p190
      %p192 = pneg %p191
      // Predicated region
      $region37: #{tpu_custom_call.1} parent=5 // pred_check
        _
      $region38: #{tpu_custom_call.1} parent=5 // pred_check_branch
        %194 = sbr.rel (%p191) target = $region40
      $region39: #{tpu_custom_call.1} parent=5 // pred_region
        %s195 = ssub.s32 %s14, 1
        %p196 = scmp.lt.s32.totalorder %s19, 1
        %s197 = scalar_select %p196, %s19, 1
        %s198 = smul.addr %s197, 4
        %s199 = smul.addr %s198, 8
        %s200 = scalar_lea.vmem %s0, %s199
        %p201 = pneg %p40
        %p202 = pneg %p37
        %p203 = pneg %p61
        %p204 = pneg %p58
        %p205 = pneg %p82
        %p206 = pneg %p79
        %p207 = pneg %p103
        %p208 = pneg %p100
        %p209 = pneg %p124
        %p210 = pneg %p121
        %p211 = pneg %p150
        %p212 = pneg %p147
        %s213 = sand.u32 %s137, 1
        %s214 = scalar_lea.sflag [#allocation3], %s213
        %s215 = sand.u32 %s137, 1
        %s216 = smul.addr %s215, 16
        %s217 = scalar_lea.vmem [#allocation2], %s216
        %p218 = scmp.lt.s32.totalorder %s19, 1
        %s219 = scalar_select %p218, %s19, 1
        %s220 = smul.addr %s219, 4
        %s221 = smul.addr %s220, 8
        %s222 = scalar_lea.vmem %s0, %s221
        %v224 = vld [vmem:[%s222] sm:$0xff]
        %v225 = vld [vmem:[%s222 + $0x8] sm:$0xff]
        %v226 = vld [vmem:[%s222 + $0x10] sm:$0xff]
        %v227 = vld [vmem:[%s222 + $0x18] sm:$0xff]
        %v228 = vlaneseq
        %v229 = vand.u32 %v228, 127
        %v230 = vsub.s32 %v229, 54
        %vm231 = vcmp.gt.s32.totalorder %v230, 0
        %v232 = vsel %vm231, %v230, 0
        %vm233 = vcmp.lt.s32.totalorder %v232, 5
        %v234 = vsel %vm233, %v232, 5
        %vm235 = vcmp.ge.s32.totalorder %v229, 54
        %vm236 = vcmp.lt.s32.totalorder %v229, 60
        %vm237 = vmand %vm235, %vm236
        %v238 = vadd.f32 %v224, 1.0
        %v239 = vcvt.f32.s32.to.zero.pseudo %v238
        %vm240 = vcmp.gt.s32.totalorder %v239, 0
        %v241 = vsub.s32 %v239, 1
        %v242 = vsel %vm240, %v241, 4294967295
        %243 = vset.pattern.permute.xlu0 0
        %244 = vperm.xlu0 %243, %v242
        %v245 = vpop.permute.xlu0 %244
        %vm246 = vcmp.eq.s32.totalorder %v229, %v245
        %v247 = vsel %vm246, 1.0, 0.0
        %v248 = vadd.f32 %v247, 0.0
        %v249 = vsel %vm240, 0.0, 1.0
        %v250 = vadd.f32 %v249, 0.0
        %251 = vset.pattern.permute.xlu0 38
        %252 = vperm.xlu0 %251, %v242
        %v253 = vpop.permute.xlu0 %252
        %vm254 = vcmp.eq.s32.totalorder %v229, %v253
        %v255 = vsel %vm254, 1.0, 0.0
        %v256 = vadd.f32 %v248, %v255
        %258 = vrot.lane.b32.xlu0 %v249, 90
        %v259 = vpop.permute.xlu0 %258
        %v261 = vadd.f32 %v250, %v259
        %262 = vset.pattern.permute.xlu0 76
        %263 = vperm.xlu0 %262, %v242
        %v264 = vpop.permute.xlu0 %263
        %vm265 = vcmp.eq.s32.totalorder %v229, %v264
        %v266 = vsel %vm265, 1.0, 0.0
        %v267 = vadd.f32 %v256, %v266
        %268 = vrot.lane.b32.xlu0 %v249, 52
        %v269 = vpop.permute.xlu0 %268
        %v271 = vadd.f32 %v261, %v269
        %272 = vset.pattern.permute.xlu0 114
        %273 = vperm.xlu0 %272, %v242
        %v274 = vpop.permute.xlu0 %273
        %vm275 = vcmp.eq.s32.totalorder %v229, %v274
        %v276 = vsel %vm275, 1.0, 0.0
        %v277 = vadd.f32 %v267, %v276
        %278 = vrot.lane.b32.xlu0 %v249, 14
        %v279 = vpop.permute.xlu0 %278
        %v281 = vadd.f32 %v271, %v279
        %v282 = vadd.f32 %v225, 1.0
        %v283 = vcvt.f32.s32.to.zero.pseudo %v282
        %vm284 = vcmp.gt.s32.totalorder %v283, 0
        %v285 = vsub.s32 %v283, 1
        %v286 = vsel %vm284, %v285, 4294967295
        %287 = vset.pattern.permute.xlu0 24
        %288 = vperm.xlu0 %287, %v286
        %v289 = vpop.permute.xlu0 %288
        %vm290 = vcmp.eq.s32.totalorder %v229, %v289
        %v291 = vsel %vm290, 1.0, 0.0
        %v292 = vadd.f32 %v277, %v291
        %v293 = vsel %vm284, 0.0, 1.0
        %295 = vrot.lane.b32.xlu0 %v293, 104
        %v296 = vpop.permute.xlu0 %295
        %v298 = vadd.f32 %v281, %v296
        %299 = vset.pattern.permute.xlu0 62
        %300 = vperm.xlu0 %299, %v286
        %v301 = vpop.permute.xlu0 %300
        %vm302 = vcmp.eq.s32.totalorder %v229, %v301
        %v303 = vsel %vm302, 1.0, 0.0
        %v304 = vadd.f32 %v292, %v303
        %305 = vrot.lane.b32.xlu0 %v293, 66
        %v306 = vpop.permute.xlu0 %305
        %v308 = vadd.f32 %v298, %v306
        %309 = vset.pattern.permute.xlu0 100
        %310 = vperm.xlu0 %309, %v286
        %v311 = vpop.permute.xlu0 %310
        %vm312 = vcmp.eq.s32.totalorder %v229, %v311
        %v313 = vsel %vm312, 1.0, 0.0
        %v314 = vadd.f32 %v304, %v313
        %v315 = vadd.f32 %v226, 1.0
        %v316 = vcvt.f32.s32.to.zero.pseudo %v315
        %vm317 = vcmp.gt.s32.totalorder %v316, 0
        %v318 = vsub.s32 %v316, 1
        %v319 = vsel %vm317, %v318, 4294967295
        %320 = vset.pattern.permute.xlu0 10
        %321 = vperm.xlu0 %320, %v319
        %v322 = vpop.permute.xlu0 %321
        %vm323 = vcmp.eq.s32.totalorder %v229, %v322
        %v324 = vsel %vm323, 1.0, 0.0
        %v325 = vadd.f32 %v314, %v324
        %326 = vset.pattern.permute.xlu0 48
        %327 = vperm.xlu0 %326, %v319
        %v328 = vpop.permute.xlu0 %327
        %vm329 = vcmp.eq.s32.totalorder %v229, %v328
        %v330 = vsel %vm329, 1.0, 0.0
        %v331 = vadd.f32 %v325, %v330
        %332 = vset.pattern.permute.xlu0 86
        %333 = vperm.xlu0 %332, %v319
        %v334 = vpop.permute.xlu0 %333
        %vm335 = vcmp.eq.s32.totalorder %v229, %v334
        %v336 = vsel %vm335, 1.0, 0.0
        %v337 = vadd.f32 %v331, %v336
        %338 = vset.pattern.permute.xlu0 124
        %339 = vperm.xlu0 %338, %v319
        %v340 = vpop.permute.xlu0 %339
        %vm341 = vcmp.eq.s32.totalorder %v229, %v340
        %v342 = vsel %vm341, 1.0, 0.0
        %v343 = vadd.f32 %v337, %v342
        %v344 = vadd.f32 %v227, 1.0
        %v345 = vcvt.f32.s32.to.zero.pseudo %v344
        %vm346 = vcmp.gt.s32.totalorder %v345, 0
        %v347 = vsub.s32 %v345, 1
        %v348 = vsel %vm346, %v347, 4294967295
        %349 = vset.pattern.permute.xlu0 34
        %350 = vperm.xlu0 %349, %v348
        %v351 = vpop.permute.xlu0 %350
        %vm352 = vcmp.eq.s32.totalorder %v229, %v351
        %v353 = vsel %vm352, 1.0, 0.0
        %v354 = vadd.f32 %v343, %v353
        %vm355 = vcmp.lt.s32.totalorder %v229, 31
        %v356 = vsub.f32 1.0, %v354
        %v357 = vmax.f32 %v308, 1.0
        %359 = vset.pattern.permute.xlu0 0
        %360 = vperm.xlu0 %359, %v357
        %v361 = vpop.permute.xlu0 %360
        %v363 = vrcp.pop %v361
        %v364 = vmul.f32 %v356, %v363
        %v365 = vsel %vm355, %v364, 0.0
        %v366 = vld [vmem:[%s1] sm:$0xf]
        %v367 = vld [vmem:[%s1 + $0x4] sm:$0xf]
        %v368 = vld [vmem:[%s1 + $0x8] sm:$0xf]
        %v369 = vld [vmem:[%s1 + $0xc] sm:$0xf]
        %v370 = vld [vmem:[%s1 + $0x10] sm:$0xf]
        %v371 = vld [vmem:[%s1 + $0x14] sm:$0xf]
        %v372 = vld [vmem:[%s1 + $0x18] sm:$0xf]
        %v373 = vld [vmem:[%s1 + $0x1c] sm:$0xf]
        %v374 = vld [vmem:[%s1 + $0x20] sm:$0xf]
        %v375 = vld [vmem:[%s1 + $0x24] sm:$0xf]
        %v376 = vld [vmem:[%s1 + $0x28] sm:$0xf]
        %v377 = vld [vmem:[%s1 + $0x2c] sm:$0xf]
        %v378 = vld [vmem:[%s1 + $0x30] sm:$0xf]
        %v379 = vld [vmem:[%s1 + $0x34] sm:$0xf]
        %v380 = vld [vmem:[%s1 + $0x38] sm:$0xf]
        %v381 = vld [vmem:[%s1 + $0x3c] sm:$0xf]
        %v382 = vld [vmem:[%s1 + $0x40] sm:$0xf]
        %v383 = vld [vmem:[%s1 + $0x44] sm:$0xf]
        %v384 = vld [vmem:[%s1 + $0x48] sm:$0xf]
        %v385 = vld [vmem:[%s1 + $0x4c] sm:$0xf]
        %v386 = vld [vmem:[%s1 + $0x50] sm:$0xf]
        %v387 = vld [vmem:[%s1 + $0x54] sm:$0xf]
        %v388 = vld [vmem:[%s1 + $0x58] sm:$0xf]
        %v389 = vld [vmem:[%s1 + $0x5c] sm:$0xf]
        %v390 = vld [vmem:[%s1 + $0x60] sm:$0xf]
        %v391 = vld [vmem:[%s1 + $0x64] sm:$0xf]
        %v392 = vld [vmem:[%s1 + $0x68] sm:$0xf]
        %v393 = vld [vmem:[%s1 + $0x6c] sm:$0xf]
        %v394 = vld [vmem:[%s1 + $0x70] sm:$0xf]
        %v395 = vld [vmem:[%s1 + $0x74] sm:$0xf]
        %v396 = vld [vmem:[%s1 + $0x78] sm:$0xf]
        %v397 = vld [vmem:[%s1 + $0x7c] sm:$0xf]
        %v398 = vld [vmem:[%s2] sm:$0x1]
        %v399 = vld [vmem:[%s3] sm:$0xff]
        %v400 = vld [vmem:[%s3 + $0x8] sm:$0xff]
        %v401 = vld [vmem:[%s3 + $0x10] sm:$0xff]
        %v402 = vld [vmem:[%s3 + $0x18] sm:$0xff]
        %v403 = vld [vmem:[%s3 + $0x20] sm:$0xff]
        %v404 = vld [vmem:[%s3 + $0x28] sm:$0xff]
        %v405 = vld [vmem:[%s3 + $0x30] sm:$0xff]
        %v406 = vld [vmem:[%s3 + $0x38] sm:$0xff]
        %v407 = vld [vmem:[%s4] sm:$0x1]
        %408 = vset.pattern.permute.xlu0 0
        %409 = vperm.xlu0 %408, %v249
        %v410 = vpop.permute.xlu0 %409
        %v412 = vmul.f32 %v410, %v365
        %v413 = vadd.f32 %v247, %v412
        %v414 = vadd.s32 %v241, 31
        %v415 = vsel %vm240, %v414, 4294967295
        %416 = vset.pattern.permute.xlu0 26
        %417 = vperm.xlu0 %416, %v415
        %v418 = vpop.permute.xlu0 %417
        %vm419 = vcmp.eq.s32.totalorder %v229, %v418
        %v420 = vsel %vm419, 1.0, 0.0
        %v421 = vadd.f32 %v413, %v420
        %vm422 = vcmp.lt.s32.totalorder %v239, 63
        %v423 = vsel %vm422, %v239, 63
        %424 = vset.pattern.permute.xlu0 30
        %425 = vperm.xlu0 %424, %v423
        %v426 = vpop.permute.xlu0 %425
        %v427 = vshra.s32 %v426, %v234
        %v428 = vand.u32 %v427, 1
        %v429 = vcvt.s32.f32 %v428
        %v430 = vsel %vm240, 1, 0
        %431 = vset.pattern.permute.xlu0 26
        %432 = vperm.xlu0 %431, %v430
        %v433 = vpop.permute.xlu0 %432
        %vm434 = vcmp.eq.s32.totalorder %v433, 1
        %vm435 = vmand %vm237, %vm434
        %v436 = vsel %vm435, %v429, 0.0
        %v437 = vadd.f32 %v421, %v436
        %v438 = vsel %vm240, 1.0, 0.0
        %v439 = vadd.f32 %v438, 0.0
        %440 = vset.pattern.permute.xlu0 27
        %441 = vperm.xlu0 %440, %v415
        %v442 = vpop.permute.xlu0 %441
        %vm443 = vcmp.eq.s32.totalorder %v229, %v442
        %v444 = vsel %vm443, 1.0, 0.0
        %v445 = vadd.f32 %v437, %v444
        %446 = vset.pattern.permute.xlu0 31
        %447 = vperm.xlu0 %446, %v423
        %v448 = vpop.permute.xlu0 %447
        %v449 = vshra.s32 %v448, %v234
        %v450 = vand.u32 %v449, 1
        %v451 = vcvt.s32.f32 %v450
        %452 = vset.pattern.permute.xlu0 27
        %453 = vperm.xlu0 %452, %v430
        %v454 = vpop.permute.xlu0 %453
        %vm455 = vcmp.eq.s32.totalorder %v454, 1
        %vm456 = vmand %vm237, %vm455
        %v457 = vsel %vm456, %v451, 0.0
        %v458 = vadd.f32 %v445, %v457
        %460 = vrot.lane.b32.xlu0 %v438, 127
        %v461 = vpop.permute.xlu0 %460
        %v463 = vadd.f32 %v439, %v461
        %464 = vset.pattern.permute.xlu0 28
        %465 = vperm.xlu0 %464, %v415
        %v466 = vpop.permute.xlu0 %465
        %vm467 = vcmp.eq.s32.totalorder %v229, %v466
        %v468 = vsel %vm467, 1.0, 0.0
        %v469 = vadd.f32 %v458, %v468
        %470 = vset.pattern.permute.xlu0 32
        %471 = vperm.xlu0 %470, %v423
        %v472 = vpop.permute.xlu0 %471
        %v473 = vshra.s32 %v472, %v234
        %v474 = vand.u32 %v473, 1
        %v475 = vcvt.s32.f32 %v474
        %476 = vset.pattern.permute.xlu0 28
        %477 = vperm.xlu0 %476, %v430
        %v478 = vpop.permute.xlu0 %477
        %vm479 = vcmp.eq.s32.totalorder %v478, 1
        %vm480 = vmand %vm237, %vm479
        %v481 = vsel %vm480, %v475, 0.0
        %v482 = vadd.f32 %v469, %v481
        %483 = vrot.lane.b32.xlu0 %v438, 126
        %v484 = vpop.permute.xlu0 %483
        %v486 = vadd.f32 %v463, %v484
        %487 = vset.pattern.permute.xlu0 29
        %488 = vperm.xlu0 %487, %v415
        %v489 = vpop.permute.xlu0 %488
        %vm490 = vcmp.eq.s32.totalorder %v229, %v489
        %v491 = vsel %vm490, 1.0, 0.0
        %v492 = vadd.f32 %v482, %v491
        %493 = vset.pattern.permute.xlu0 33
        %494 = vperm.xlu0 %493, %v423
        %v495 = vpop.permute.xlu0 %494
        %v496 = vshra.s32 %v495, %v234
        %v497 = vand.u32 %v496, 1
        %v498 = vcvt.s32.f32 %v497
        %499 = vset.pattern.permute.xlu0 29
        %500 = vperm.xlu0 %499, %v430
        %v501 = vpop.permute.xlu0 %500
        %vm502 = vcmp.eq.s32.totalorder %v501, 1
        %vm503 = vmand %vm237, %vm502
        %v504 = vsel %vm503, %v498, 0.0
        %v505 = vadd.f32 %v492, %v504
        %506 = vrot.lane.b32.xlu0 %v438, 125
        %v507 = vpop.permute.xlu0 %506
        %v509 = vadd.f32 %v486, %v507
        %v510 = vadd.s32 %v241, 60
        %v511 = vsel %vm240, %v510, 4294967295
        %512 = vset.pattern.permute.xlu0 15
        %513 = vperm.xlu0 %512, %v511
        %v514 = vpop.permute.xlu0 %513
        %vm515 = vcmp.eq.s32.totalorder %v229, %v514
        %v516 = vsel %vm515, 1.0, 0.0
        %v517 = vadd.f32 %v505, %v516
        %v518 = vadd.s32 %v241, 75
        %v519 = vsel %vm240, %v518, 4294967295
        %520 = vset.pattern.permute.xlu0 17
        %521 = vperm.xlu0 %520, %v519
        %v522 = vpop.permute.xlu0 %521
        %vm523 = vcmp.eq.s32.totalorder %v229, %v522
        %v524 = vsel %vm523, 1.0, 0.0
        %v525 = vadd.f32 %v517, %v524
        %526 = vrot.lane.b32.xlu0 %v430, 126
        %v527 = vpop.permute.xlu0 %526
        %vm528 = vcmp.ne.s32.totalorder %v527, 0
        %vm529 = vmand %vm240, %vm528
        %v530 = vadd.s32 %v241, 90
        %531 = vrot.lane.b32.xlu0 %v530, 126
        %v532 = vpop.permute.xlu0 %531
        %v533 = vsel %vm529, %v532, 4294967295
        %534 = vset.pattern.permute.xlu0 17
        %535 = vperm.xlu0 %534, %v533
        %v536 = vpop.permute.xlu0 %535
        %vm537 = vcmp.eq.s32.totalorder %v229, %v536
        %v538 = vsel %vm537, 1.0, 0.0
        %v539 = vadd.f32 %v525, %v538
        %v540 = vadd.s32 %v241, 97
        %v541 = vsel %vm240, %v540, 4294967295
        %542 = vset.pattern.permute.xlu0 35
        %543 = vperm.xlu0 %542, %v541
        %v544 = vpop.permute.xlu0 %543
        %vm545 = vcmp.eq.s32.totalorder %v229, %v544
        %v546 = vsel %vm545, 1.0, 0.0
        %v547 = vadd.f32 %v539, %v546
        %v548 = vadd.s32 %v241, 119
        %v549 = vsel %vm240, %v548, 4294967295
        %550 = vset.pattern.permute.xlu0 1
        %551 = vperm.xlu0 %550, %v549
        %v552 = vpop.permute.xlu0 %551
        %vm553 = vcmp.eq.s32.totalorder %v229, %v552
        %v554 = vsel %vm553, 1.0, 0.0
        %v555 = vadd.f32 %v547, %v554
        %v556 = vadd.s32 %v241, 126
        %v557 = vsel %vm240, %v556, 4294967295
        %558 = vset.pattern.permute.xlu0 12
        %559 = vperm.xlu0 %558, %v557
        %v560 = vpop.permute.xlu0 %559
        %vm561 = vcmp.eq.s32.totalorder %v229, %v560
        %v562 = vsel %vm561, 1.0, 0.0
        %v563 = vadd.f32 %v555, %v562
        %vm564 = vcmp.gt.s32.totalorder %v241, 0
        %v565 = vsel %vm564, %v241, 0
        %vm566 = vcmp.lt.s32.totalorder %v565, 1
        %v567 = vsel %vm566, %v565, 1
        %v568 = vcvt.s32.f32 %v567
        %vm569 = vcmp.eq.s32.totalorder %v229, 116
        %571 = vset.pattern.permute.xlu0 37
        %572 = vperm.xlu0 %571, %v568
        %v573 = vpop.permute.xlu0 %572
        %v575 = vsel %vm569, %v573, 0.0
        %v576 = vadd.f32 %v563, %v575
        %vm577 = vcmp.eq.s32.totalorder %v229, 117
        %578 = vset.pattern.permute.xlu0 34
        %579 = vperm.xlu0 %578, %v438
        %v580 = vpop.permute.xlu0 %579
        %v582 = vsel %vm577, %v580, 0.0
        %v583 = vadd.f32 %v576, %v582
        %vm584 = vcmp.eq.s32.totalorder %v229, 118
        %585 = vset.pattern.permute.xlu0 35
        %586 = vperm.xlu0 %585, %v249
        %v587 = vpop.permute.xlu0 %586
        %v589 = vsel %vm584, %v587, 0.0
        %v590 = vadd.f32 %v583, %v589
        %v591 = vmul.f32 %v224, 10.0
        %v592 = vmax.f32 %v591, 0.0
        %v593 = vmin.f32 %v592, 10.0
        %v594 = vcvt.f32.s32.to.zero.pseudo %v593
        %vm595 = vcmp.gt.s32.totalorder %v594, 0
        %v596 = vsub.s32 %v594, 1
        %v597 = vsel %vm595, %v596, 4294967295
        %598 = vset.pattern.permute.xlu0 5
        %599 = vperm.xlu0 %598, %v597
        %v600 = vpop.permute.xlu0 %599
        %vm601 = vcmp.eq.s32.totalorder %v229, %v600
        %v602 = vsel %vm601, 1.0, 0.0
        %v603 = vadd.s32 %v241, 10
        %v604 = vsel %vm240, %v603, 4294967295
        %605 = vset.pattern.permute.xlu0 11
        %606 = vperm.xlu0 %605, %v604
        %v607 = vpop.permute.xlu0 %606
        %vm608 = vcmp.eq.s32.totalorder %v229, %v607
        %v609 = vsel %vm608, 1.0, 0.0
        %v610 = vadd.f32 %v602, %v609
        %v611 = vadd.s32 %v241, 12
        %v612 = vsel %vm240, %v611, 4294967295
        %613 = vset.pattern.permute.xlu0 14
        %614 = vperm.xlu0 %613, %v612
        %v615 = vpop.permute.xlu0 %614
        %vm616 = vcmp.eq.s32.totalorder %v229, %v615
        %v617 = vsel %vm616, 1.0, 0.0
        %v618 = vadd.f32 %v610, %v617
        %v619 = vcvt.f32.s32.to.zero.pseudo %v224
        %vm620 = vcmp.gt.s32.totalorder %v619, 1
        %v621 = vsel %vm620, %v619, 1
        %v622 = vsub.s32 %v621, 1
        %v623 = vadd.s32 %v622, 15
        %624 = vset.pattern.permute.xlu0 13
        %625 = vperm.xlu0 %624, %v623
        %v626 = vpop.permute.xlu0 %625
        %vm627 = vcmp.eq.s32.totalorder %v229, %v626
        %v628 = vsel %vm627, 1.0, 0.0
        %v629 = vadd.f32 %v618, %v628
        %v630 = vadd.s32 %v241, 115
        %v631 = vsel %vm240, %v630, 4294967295
        %632 = vset.pattern.permute.xlu0 21
        %633 = vperm.xlu0 %632, %v631
        %v634 = vpop.permute.xlu0 %633
        %vm635 = vcmp.eq.s32.totalorder %v229, %v634
        %v636 = vsel %vm635, 1.0, 0.0
        %v637 = vadd.f32 %v629, %v636
        %v638 = vadd.s32 %v241, 122
        %v639 = vsel %vm240, %v638, 4294967295
        %640 = vset.pattern.permute.xlu0 22
        %641 = vperm.xlu0 %640, %v639
        %v642 = vpop.permute.xlu0 %641
        %vm643 = vcmp.eq.s32.totalorder %v229, %v642
        %v644 = vsel %vm643, 1.0, 0.0
        %v645 = vadd.f32 %v637, %v644
        %v646 = vcvt.s32.f32 %v239
        %v647 = vrsqrt.pop %v646
        %v648 = vmul.f32 %v646, %v647
        %vm649 = vcmp.eq.f32.partialorder %v646, inf
        %v650 = vsel %vm649, %v646, %v648
        %vm651 = vcmp.eq.f32.partialorder %v646, 0.0
        %v652 = vand.u32 %v646, 2147483648
        %v653 = vsel %vm651, %v652, %v650
        %v654 = vfloor.f32 %v653
        %v655 = vcvt.f32.s32.to.zero.pseudo %v654
        %vm656 = vcmp.gt.s32.totalorder %v655, 0
        %v657 = vsub.s32 %v655, 1
        %v658 = vadd.s32 %v657, 125
        %v659 = vsel %vm656, %v658, 4294967295
        %660 = vset.pattern.permute.xlu0 23
        %661 = vperm.xlu0 %660, %v659
        %v662 = vpop.permute.xlu0 %661
        %vm663 = vcmp.eq.s32.totalorder %v229, %v662
        %v664 = vsel %vm663, 1.0, 0.0
        %v665 = vadd.f32 %v645, %v664
        %v666 = vpack.c.bf16 %v590, %v590
        %v667 = vpack.c.bf16 %v665, %v665
        %v669 = vlaneseq
        %v670 = vshrl.u32 %v669, 7
        %v671 = vsub.s32 0, %v670
        %v672 = vrot.slane %v398, %v671
        %v706 = vunpack.c.l.b16 %v366
        %v707 = vunpack.c.l.b16 %v367
        %v708 = vunpack.c.l.b16 %v368
        %v709 = vunpack.c.l.b16 %v369
        %v710 = vunpack.c.l.b16 %v370
        %v711 = vunpack.c.l.b16 %v371
        %v712 = vunpack.c.l.b16 %v372
        %v713 = vunpack.c.l.b16 %v373
        %v714 = vunpack.c.l.b16 %v374
        %v715 = vunpack.c.l.b16 %v375
        %v716 = vunpack.c.l.b16 %v376
        %v717 = vunpack.c.l.b16 %v377
        %v718 = vunpack.c.l.b16 %v378
        %v719 = vunpack.c.l.b16 %v379
        %v720 = vunpack.c.l.b16 %v380
        %v721 = vunpack.c.l.b16 %v381
        %v722 = vunpack.c.l.b16 %v382
        %v723 = vunpack.c.l.b16 %v383
        %v724 = vunpack.c.l.b16 %v384
        %v725 = vunpack.c.l.b16 %v385
        %v726 = vunpack.c.l.b16 %v386
        %v727 = vunpack.c.l.b16 %v387
        %v728 = vunpack.c.l.b16 %v388
        %v729 = vunpack.c.l.b16 %v389
        %v730 = vunpack.c.l.b16 %v390
        %v731 = vunpack.c.l.b16 %v391
        %v732 = vunpack.c.l.b16 %v392
        %v733 = vunpack.c.l.b16 %v393
        %v734 = vunpack.c.l.b16 %v394
        %v735 = vunpack.c.l.b16 %v395
        %v736 = vunpack.c.l.b16 %v396
        %v737 = vunpack.c.l.b16 %v397
        %v738 = vpack.c.b16 %v707, %v706
        %v739 = vpack.c.b16 %v709, %v708
        %v740 = vpack.c.b16 %v711, %v710
        %v741 = vpack.c.b16 %v713, %v712
        %v742 = vpack.c.b16 %v715, %v714
        %v743 = vpack.c.b16 %v717, %v716
        %v744 = vpack.c.b16 %v719, %v718
        %v745 = vpack.c.b16 %v721, %v720
        %v746 = vpack.c.b16 %v723, %v722
        %v747 = vpack.c.b16 %v725, %v724
        %v748 = vpack.c.b16 %v727, %v726
        %v749 = vpack.c.b16 %v729, %v728
        %v750 = vpack.c.b16 %v731, %v730
        %v751 = vpack.c.b16 %v733, %v732
        %v752 = vpack.c.b16 %v735, %v734
        %v753 = vpack.c.b16 %v737, %v736
        %770 = vmatprep.subr.bf16.mxu0 0
        %771 = vmatpush1.bf16.msra.mxu0 %v738
        %772 = vmatprep.subr.bf16.mxu0 0
        %773 = vmatpush1.bf16.msra.mxu0 %v739
        %774 = vmatprep.subr.bf16.mxu0 0
        %775 = vmatpush1.bf16.msra.mxu0 %v740
        %776 = vmatprep.subr.bf16.mxu0 0
        %777 = vmatpush1.bf16.msra.mxu0 %v741
        %778 = vmatprep.subr.bf16.mxu0 0
        %779 = vmatpush1.bf16.msra.mxu0 %v742
        %780 = vmatprep.subr.bf16.mxu0 0
        %781 = vmatpush1.bf16.msra.mxu0 %v743
        %782 = vmatprep.subr.bf16.mxu0 0
        %783 = vmatpush1.bf16.msra.mxu0 %v744
        %784 = vmatprep.subr.bf16.mxu0 0
        %785 = vmatpush1.bf16.msra.mxu0 %v745
        %786 = vmatprep.subr.bf16.mxu0 0
        %787 = vmatpush1.bf16.msra.mxu0 %v746
        %788 = vmatprep.subr.bf16.mxu0 0
        %789 = vmatpush1.bf16.msra.mxu0 %v747
        %790 = vmatprep.subr.bf16.mxu0 0
        %791 = vmatpush1.bf16.msra.mxu0 %v748
        %792 = vmatprep.subr.bf16.mxu0 0
        %793 = vmatpush1.bf16.msra.mxu0 %v749
        %794 = vmatprep.subr.bf16.mxu0 0
        %795 = vmatpush1.bf16.msra.mxu0 %v750
        %796 = vmatprep.subr.bf16.mxu0 0
        %797 = vmatpush1.bf16.msra.mxu0 %v751
        %798 = vmatprep.subr.bf16.mxu0 0
        %799 = vmatpush1.bf16.msra.mxu0 %v752
        %800 = vmatprep.subr.bf16.mxu0 0
        %801 = vmatpush1.bf16.msra.mxu0 %v753
        %802 = vmatprep.mubr.bf16.mxu0 %v667
        %803 = vmatmul.mubr.bf16.gmra.mrb[0].mxu0 %v666
        %v804 = vpop.f32.mrb[0].mxu0
        %v805 = vadd.f32 %v672, %v804
        %v806 = vpop.f32.mrb[0].mxu0
        %v807 = vpop.f32.mrb[0].mxu0
        %v808 = vpop.f32.mrb[0].mxu0
        %809 = vdwg.mxu0
        %v810 = vmax.f32 %v805, 0.0
        %812 = vrot.lane.b32.xlu0 %v805, 32
        %v813 = vpop.permute.xlu0 %812
        %v815 = vadd.f32 %v805, %v813
        %v816 = vmax.f32 %v815, 0.0
        %vm817 = vcmask 261120
        %v818 = vsel %vm817, %v810, %v816
        %v820 = vlaneseq
        %v821 = vshrl.u32 %v820, 7
        %v822 = vsub.s32 0, %v821
        %v823 = vrot.slane %v407, %v822
        %vm825 = vcmask 523264
        %v827 = vsel %vm825, %v818, 0
        %829 = vmatprep.subr.mxu0 0.0
        %830 = vmatpush1.msra.mxu0 %v399
        %831 = vmatprep.subr.mxu0 0.0
        %832 = vmatpush1.msra.mxu0 %v400
        %833 = vmatprep.subr.mxu0 0.0
        %834 = vmatpush1.msra.mxu0 %v401
        %835 = vmatprep.subr.mxu0 0.0
        %836 = vmatpush1.msra.mxu0 %v402
        %837 = vmatprep.subr.mxu0 0.0
        %838 = vmatpush1.msra.mxu0 %v403
        %839 = vmatprep.subr.mxu0 0.0
        %840 = vmatpush1.msra.mxu0 %v404
        %841 = vmatprep.subr.mxu0 0.0
        %842 = vmatpush1.msra.mxu0 %v405
        %843 = vmatprep.subr.mxu0 0.0
        %844 = vmatpush1.msra.mxu0 %v406
        %845 = vmatprep.subr.mxu0 0.0
        %846 = vmatpush1.msra.mxu0 0.0
        %847 = vmatprep.subr.mxu0 0.0
        %848 = vmatpush1.msra.mxu0 0.0
        %849 = vmatprep.subr.mxu0 0.0
        %850 = vmatpush1.msra.mxu0 0.0
        %851 = vmatprep.subr.mxu0 0.0
        %852 = vmatpush1.msra.mxu0 0.0
        %853 = vmatprep.subr.mxu0 0.0
        %854 = vmatpush1.msra.mxu0 0.0
        %855 = vmatprep.subr.mxu0 0.0
        %856 = vmatpush1.msra.mxu0 0.0
        %857 = vmatprep.subr.mxu0 0.0
        %858 = vmatpush1.msra.mxu0 0.0
        %859 = vmatprep.subr.mxu0 0.0
        %860 = vmatpush1.msra.mxu0 0.0
        %861 = vmatprep.subr.mxu0 0.0
        %862 = vmatpush1.msra.mxu0 0.0
        %863 = vmatprep.subr.mxu0 0.0
        %864 = vmatpush1.msra.mxu0 0.0
        %865 = vmatprep.subr.mxu0 0.0
        %866 = vmatpush1.msra.mxu0 0.0
        %867 = vmatprep.subr.mxu0 0.0
        %868 = vmatpush1.msra.mxu0 0.0
        %869 = vmatprep.subr.mxu0 0.0
        %870 = vmatpush1.msra.mxu0 0.0
        %871 = vmatprep.subr.mxu0 0.0
        %872 = vmatpush1.msra.mxu0 0.0
        %873 = vmatprep.subr.mxu0 0.0
        %874 = vmatpush1.msra.mxu0 0.0
        %875 = vmatprep.subr.mxu0 0.0
        %876 = vmatpush1.msra.mxu0 0.0
        %877 = vmatprep.subr.mxu0 0.0
        %878 = vmatpush1.msra.mxu0 0.0
        %879 = vmatprep.subr.mxu0 0.0
        %880 = vmatpush1.msra.mxu0 0.0
        %881 = vmatprep.subr.mxu0 0.0
        %882 = vmatpush1.msra.mxu0 0.0
        %883 = vmatprep.subr.mxu0 0.0
        %884 = vmatpush1.msra.mxu0 0.0
        %885 = vmatprep.subr.mxu0 0.0
        %886 = vmatpush1.msra.mxu0 0.0
        %887 = vmatprep.subr.mxu0 0.0
        %888 = vmatpush1.msra.mxu0 0.0
        %889 = vmatprep.subr.mxu0 0.0
        %890 = vmatpush1.msra.mxu0 0.0
        %891 = vmatprep.subr.mxu0 0.0
        %892 = vmatpush1.msra.mxu0 0.0
        %893 = vmatprep.mubr.f32.mxu0 0.0
        %894 = vmatmul.mubr.f32.gmra.mrb[0].mxu0 %v827
        %v895 = vpop.f32.mrb[0].mxu0
        %v896 = vadd.f32 %v823, %v895
        %v897 = vpop.f32.mrb[0].mxu0
        %898 = vdwg.mxu0
        %899 = vrot.lane.b32.xlu0 %v805, 64
        %v900 = vpop.permute.xlu0 %899
        %v902 = vadd.f32 %v805, %v900
        %v903 = vsub.f32 1.0, %v438
        %905 = vset.pattern.permute.xlu0 15
        %906 = vperm.xlu0 %905, %v903
        %v907 = vpop.permute.xlu0 %906
        %v909 = vmul.f32 %v907, %v896
        %v910 = vadd.f32 %v902, %v909
        %911 = vset.pattern.permute.xlu0 17
        %912 = vperm.xlu0 %911, %v903
        %v913 = vpop.permute.xlu0 %912
        %v915 = vmul.f32 %v913, %v896
        %917 = vrot.lane.b32.xlu0 %v915, 96
        %v918 = vpop.permute.xlu0 %917
        %v920 = vadd.f32 %v910, %v918
        %v921 = vsub.f32 4.0, %v509
        %923 = vset.pattern.permute.xlu0 26
        %924 = vperm.xlu0 %923, %v921
        %v925 = vpop.permute.xlu0 %924
        %v927 = vmul.f32 %v925, %v896
        %929 = vrot.lane.b32.xlu0 %v927, 64
        %v930 = vpop.permute.xlu0 %929
        %v932 = vadd.f32 %v920, %v930
        %933 = vst.msk [vmem:[%s217] sm:$0xff] %vm817, %v932
        %934 = vset.pattern.permute.xlu0 38
        %935 = vperm.xlu0 %934, %v249
        %v936 = vpop.permute.xlu0 %935
        %v938 = vmul.f32 %v936, %v365
        %v939 = vadd.f32 %v255, %v938
        %940 = vset.pattern.permute.xlu0 64
        %941 = vperm.xlu0 %940, %v415
        %v942 = vpop.permute.xlu0 %941
        %vm943 = vcmp.eq.s32.totalorder %v229, %v942
        %v944 = vsel %vm943, 1.0, 0.0
        %v945 = vadd.f32 %v939, %v944
        %946 = vset.pattern.permute.xlu0 68
        %947 = vperm.xlu0 %946, %v423
        %v948 = vpop.permute.xlu0 %947
        %v949 = vshra.s32 %v948, %v234
        %v950 = vand.u32 %v949, 1
        %v951 = vcvt.s32.f32 %v950
        %952 = vset.pattern.permute.xlu0 64
        %953 = vperm.xlu0 %952, %v430
        %v954 = vpop.permute.xlu0 %953
        %vm955 = vcmp.eq.s32.totalorder %v954, 1
        %vm956 = vmand %vm237, %vm955
        %v957 = vsel %vm956, %v951, 0.0
        %v958 = vadd.f32 %v945, %v957
        %959 = vset.pattern.permute.xlu0 65
        %960 = vperm.xlu0 %959, %v415
        %v961 = vpop.permute.xlu0 %960
        %vm962 = vcmp.eq.s32.totalorder %v229, %v961
        %v963 = vsel %vm962, 1.0, 0.0
        %v964 = vadd.f32 %v958, %v963
        %965 = vset.pattern.permute.xlu0 69
        %966 = vperm.xlu0 %965, %v423
        %v967 = vpop.permute.xlu0 %966
        %v968 = vshra.s32 %v967, %v234
        %v969 = vand.u32 %v968, 1
        %v970 = vcvt.s32.f32 %v969
        %971 = vset.pattern.permute.xlu0 65
        %972 = vperm.xlu0 %971, %v430
        %v973 = vpop.permute.xlu0 %972
        %vm974 = vcmp.eq.s32.totalorder %v973, 1
        %vm975 = vmand %vm237, %vm974
        %v976 = vsel %vm975, %v970, 0.0
        %v977 = vadd.f32 %v964, %v976
        %978 = vset.pattern.permute.xlu0 66
        %979 = vperm.xlu0 %978, %v415
        %v980 = vpop.permute.xlu0 %979
        %vm981 = vcmp.eq.s32.totalorder %v229, %v980
        %v982 = vsel %vm981, 1.0, 0.0
        %v983 = vadd.f32 %v977, %v982
        %984 = vset.pattern.permute.xlu0 70
        %985 = vperm.xlu0 %984, %v423
        %v986 = vpop.permute.xlu0 %985
        %v987 = vshra.s32 %v986, %v234
        %v988 = vand.u32 %v987, 1
        %v989 = vcvt.s32.f32 %v988
        %990 = vset.pattern.permute.xlu0 66
        %991 = vperm.xlu0 %990, %v430
        %v992 = vpop.permute.xlu0 %991
        %vm993 = vcmp.eq.s32.totalorder %v992, 1
        %vm994 = vmand %vm237, %vm993
        %v995 = vsel %vm994, %v989, 0.0
        %v996 = vadd.f32 %v983, %v995
        %997 = vset.pattern.permute.xlu0 67
        %998 = vperm.xlu0 %997, %v415
        %v999 = vpop.permute.xlu0 %998
        %vm1000 = vcmp.eq.s32.totalorder %v229, %v999
        %v1001 = vsel %vm1000, 1.0, 0.0
        %v1002 = vadd.f32 %v996, %v1001
        %1003 = vset.pattern.permute.xlu0 71
        %1004 = vperm.xlu0 %1003, %v423
        %v1005 = vpop.permute.xlu0 %1004
        %v1006 = vshra.s32 %v1005, %v234
        %v1007 = vand.u32 %v1006, 1
        %v1008 = vcvt.s32.f32 %v1007
        %1009 = vset.pattern.permute.xlu0 67
        %1010 = vperm.xlu0 %1009, %v430
        %v1011 = vpop.permute.xlu0 %1010
        %vm1012 = vcmp.eq.s32.totalorder %v1011, 1
        %vm1013 = vmand %vm237, %vm1012
        %v1014 = vsel %vm1013, %v1008, 0.0
        %v1015 = vadd.f32 %v1002, %v1014
        %1016 = vset.pattern.permute.xlu0 53
        %1017 = vperm.xlu0 %1016, %v511
        %v1018 = vpop.permute.xlu0 %1017
        %vm1019 = vcmp.eq.s32.totalorder %v229, %v1018
        %v1020 = vsel %vm1019, 1.0, 0.0
        %v1021 = vadd.f32 %v1015, %v1020
        %1022 = vset.pattern.permute.xlu0 55
        %1023 = vperm.xlu0 %1022, %v519
        %v1024 = vpop.permute.xlu0 %1023
        %vm1025 = vcmp.eq.s32.totalorder %v229, %v1024
        %v1026 = vsel %vm1025, 1.0, 0.0
        %v1027 = vadd.f32 %v1021, %v1026
        %1028 = vset.pattern.permute.xlu0 55
        %1029 = vperm.xlu0 %1028, %v533
        %v1030 = vpop.permute.xlu0 %1029
        %vm1031 = vcmp.eq.s32.totalorder %v229, %v1030
        %v1032 = vsel %vm1031, 1.0, 0.0
        %v1033 = vadd.f32 %v1027, %v1032
        %1034 = vset.pattern.permute.xlu0 73
        %1035 = vperm.xlu0 %1034, %v541
        %v1036 = vpop.permute.xlu0 %1035
        %vm1037 = vcmp.eq.s32.totalorder %v229, %v1036
        %v1038 = vsel %vm1037, 1.0, 0.0
        %v1039 = vadd.f32 %v1033, %v1038
        %1040 = vset.pattern.permute.xlu0 39
        %1041 = vperm.xlu0 %1040, %v549
        %v1042 = vpop.permute.xlu0 %1041
        %vm1043 = vcmp.eq.s32.totalorder %v229, %v1042
        %v1044 = vsel %vm1043, 1.0, 0.0
        %v1045 = vadd.f32 %v1039, %v1044
        %1046 = vset.pattern.permute.xlu0 50
        %1047 = vperm.xlu0 %1046, %v557
        %v1048 = vpop.permute.xlu0 %1047
        %vm1049 = vcmp.eq.s32.totalorder %v229, %v1048
        %v1050 = vsel %vm1049, 1.0, 0.0
        %v1051 = vadd.f32 %v1045, %v1050
        %1052 = vset.pattern.permute.xlu0 75
        %1053 = vperm.xlu0 %1052, %v568
        %v1054 = vpop.permute.xlu0 %1053
        %v1056 = vsel %vm569, %v1054, 0.0
        %v1057 = vadd.f32 %v1051, %v1056
        %1058 = vset.pattern.permute.xlu0 72
        %1059 = vperm.xlu0 %1058, %v438
        %v1060 = vpop.permute.xlu0 %1059
        %v1062 = vsel %vm577, %v1060, 0.0
        %v1063 = vadd.f32 %v1057, %v1062
        %1064 = vset.pattern.permute.xlu0 73
        %1065 = vperm.xlu0 %1064, %v249
        %v1066 = vpop.permute.xlu0 %1065
        %v1068 = vsel %vm584, %v1066, 0.0
        %v1069 = vadd.f32 %v1063, %v1068
        %1070 = vset.pattern.permute.xlu0 43
        %1071 = vperm.xlu0 %1070, %v597
        %v1072 = vpop.permute.xlu0 %1071
        %vm1073 = vcmp.eq.s32.totalorder %v229, %v1072
        %v1074 = vsel %vm1073, 1.0, 0.0
        %1075 = vset.pattern.permute.xlu0 49
        %1076 = vperm.xlu0 %1075, %v604
        %v1077 = vpop.permute.xlu0 %1076
        %vm1078 = vcmp.eq.s32.totalorder %v229, %v1077
        %v1079 = vsel %vm1078, 1.0, 0.0
        %v1080 = vadd.f32 %v1074, %v1079
        %1081 = vset.pattern.permute.xlu0 52
        %1082 = vperm.xlu0 %1081, %v612
        %v1083 = vpop.permute.xlu0 %1082
        %vm1084 = vcmp.eq.s32.totalorder %v229, %v1083
        %v1085 = vsel %vm1084, 1.0, 0.0
        %v1086 = vadd.f32 %v1080, %v1085
        %1087 = vset.pattern.permute.xlu0 51
        %1088 = vperm.xlu0 %1087, %v623
        %v1089 = vpop.permute.xlu0 %1088
        %vm1090 = vcmp.eq.s32.totalorder %v229, %v1089
        %v1091 = vsel %vm1090, 1.0, 0.0
        %v1092 = vadd.f32 %v1086, %v1091
        %1093 = vset.pattern.permute.xlu0 59
        %1094 = vperm.xlu0 %1093, %v631
        %v1095 = vpop.permute.xlu0 %1094
        %vm1096 = vcmp.eq.s32.totalorder %v229, %v1095
        %v1097 = vsel %vm1096, 1.0, 0.0
        %v1098 = vadd.f32 %v1092, %v1097
        %1099 = vset.pattern.permute.xlu0 60
        %1100 = vperm.xlu0 %1099, %v639
        %v1101 = vpop.permute.xlu0 %1100
        %vm1102 = vcmp.eq.s32.totalorder %v229, %v1101
        %v1103 = vsel %vm1102, 1.0, 0.0
        %v1104 = vadd.f32 %v1098, %v1103
        %1105 = vset.pattern.permute.xlu0 61
        %1106 = vperm.xlu0 %1105, %v659
        %v1107 = vpop.permute.xlu0 %1106
        %vm1108 = vcmp.eq.s32.totalorder %v229, %v1107
        %v1109 = vsel %vm1108, 1.0, 0.0
        %v1110 = vadd.f32 %v1104, %v1109
        %v1111 = vpack.c.bf16 %v1069, %v1069
        %v1112 = vpack.c.bf16 %v1110, %v1110
        %1113 = vmatprep.subr.bf16.mxu0 0
        %1114 = vmatpush1.bf16.msra.mxu0 %v738
        %1115 = vmatprep.subr.bf16.mxu0 0
        %1116 = vmatpush1.bf16.msra.mxu0 %v739
        %1117 = vmatprep.subr.bf16.mxu0 0
        %1118 = vmatpush1.bf16.msra.mxu0 %v740
        %1119 = vmatprep.subr.bf16.mxu0 0
        %1120 = vmatpush1.bf16.msra.mxu0 %v741
        %1121 = vmatprep.subr.bf16.mxu0 0
        %1122 = vmatpush1.bf16.msra.mxu0 %v742
        %1123 = vmatprep.subr.bf16.mxu0 0
        %1124 = vmatpush1.bf16.msra.mxu0 %v743
        %1125 = vmatprep.subr.bf16.mxu0 0
        %1126 = vmatpush1.bf16.msra.mxu0 %v744
        %1127 = vmatprep.subr.bf16.mxu0 0
        %1128 = vmatpush1.bf16.msra.mxu0 %v745
        %1129 = vmatprep.subr.bf16.mxu0 0
        %1130 = vmatpush1.bf16.msra.mxu0 %v746
        %1131 = vmatprep.subr.bf16.mxu0 0
        %1132 = vmatpush1.bf16.msra.mxu0 %v747
        %1133 = vmatprep.subr.bf16.mxu0 0
        %1134 = vmatpush1.bf16.msra.mxu0 %v748
        %1135 = vmatprep.subr.bf16.mxu0 0
        %1136 = vmatpush1.bf16.msra.mxu0 %v749
        %1137 = vmatprep.subr.bf16.mxu0 0
        %1138 = vmatpush1.bf16.msra.mxu0 %v750
        %1139 = vmatprep.subr.bf16.mxu0 0
        %1140 = vmatpush1.bf16.msra.mxu0 %v751
        %1141 = vmatprep.subr.bf16.mxu0 0
        %1142 = vmatpush1.bf16.msra.mxu0 %v752
        %1143 = vmatprep.subr.bf16.mxu0 0
        %1144 = vmatpush1.bf16.msra.mxu0 %v753
        %1145 = vmatprep.mubr.bf16.mxu0 %v1112
        %1146 = vmatmul.mubr.bf16.gmra.mrb[0].mxu0 %v1111
        %v1147 = vpop.f32.mrb[0].mxu0
        %v1148 = vadd.f32 %v672, %v1147
        %v1149 = vpop.f32.mrb[0].mxu0
        %v1150 = vpop.f32.mrb[0].mxu0
        %v1151 = vpop.f32.mrb[0].mxu0
        %1152 = vdwg.mxu0
        %v1153 = vmax.f32 %v1148, 0.0
        %1155 = vrot.lane.b32.xlu0 %v1148, 32
        %v1156 = vpop.permute.xlu0 %1155
        %v1158 = vadd.f32 %v1148, %v1156
        %v1159 = vmax.f32 %v1158, 0.0
        %v1160 = vsel %vm817, %v1153, %v1159
        %v1162 = vsel %vm825, %v1160, 0
        %1164 = vmatprep.subr.mxu0 0.0
        %1165 = vmatpush1.msra.mxu0 %v399
        %1166 = vmatprep.subr.mxu0 0.0
        %1167 = vmatpush1.msra.mxu0 %v400
        %1168 = vmatprep.subr.mxu0 0.0
        %1169 = vmatpush1.msra.mxu0 %v401
        %1170 = vmatprep.subr.mxu0 0.0
        %1171 = vmatpush1.msra.mxu0 %v402
        %1172 = vmatprep.subr.mxu0 0.0
        %1173 = vmatpush1.msra.mxu0 %v403
        %1174 = vmatprep.subr.mxu0 0.0
        %1175 = vmatpush1.msra.mxu0 %v404
        %1176 = vmatprep.subr.mxu0 0.0
        %1177 = vmatpush1.msra.mxu0 %v405
        %1178 = vmatprep.subr.mxu0 0.0
        %1179 = vmatpush1.msra.mxu0 %v406
        %1180 = vmatprep.subr.mxu0 0.0
        %1181 = vmatpush1.msra.mxu0 0.0
        %1182 = vmatprep.subr.mxu0 0.0
        %1183 = vmatpush1.msra.mxu0 0.0
        %1184 = vmatprep.subr.mxu0 0.0
        %1185 = vmatpush1.msra.mxu0 0.0
        %1186 = vmatprep.subr.mxu0 0.0
        %1187 = vmatpush1.msra.mxu0 0.0
        %1188 = vmatprep.subr.mxu0 0.0
        %1189 = vmatpush1.msra.mxu0 0.0
        %1190 = vmatprep.subr.mxu0 0.0
        %1191 = vmatpush1.msra.mxu0 0.0
        %1192 = vmatprep.subr.mxu0 0.0
        %1193 = vmatpush1.msra.mxu0 0.0
        %1194 = vmatprep.subr.mxu0 0.0
        %1195 = vmatpush1.msra.mxu0 0.0
        %1196 = vmatprep.subr.mxu0 0.0
        %1197 = vmatpush1.msra.mxu0 0.0
        %1198 = vmatprep.subr.mxu0 0.0
        %1199 = vmatpush1.msra.mxu0 0.0
        %1200 = vmatprep.subr.mxu0 0.0
        %1201 = vmatpush1.msra.mxu0 0.0
        %1202 = vmatprep.subr.mxu0 0.0
        %1203 = vmatpush1.msra.mxu0 0.0
        %1204 = vmatprep.subr.mxu0 0.0
        %1205 = vmatpush1.msra.mxu0 0.0
        %1206 = vmatprep.subr.mxu0 0.0
        %1207 = vmatpush1.msra.mxu0 0.0
        %1208 = vmatprep.subr.mxu0 0.0
        %1209 = vmatpush1.msra.mxu0 0.0
        %1210 = vmatprep.subr.mxu0 0.0
        %1211 = vmatpush1.msra.mxu0 0.0
        %1212 = vmatprep.subr.mxu0 0.0
        %1213 = vmatpush1.msra.mxu0 0.0
        %1214 = vmatprep.subr.mxu0 0.0
        %1215 = vmatpush1.msra.mxu0 0.0
        %1216 = vmatprep.subr.mxu0 0.0
        %1217 = vmatpush1.msra.mxu0 0.0
        %1218 = vmatprep.subr.mxu0 0.0
        %1219 = vmatpush1.msra.mxu0 0.0
        %1220 = vmatprep.subr.mxu0 0.0
        %1221 = vmatpush1.msra.mxu0 0.0
        %1222 = vmatprep.subr.mxu0 0.0
        %1223 = vmatpush1.msra.mxu0 0.0
        %1224 = vmatprep.subr.mxu0 0.0
        %1225 = vmatpush1.msra.mxu0 0.0
        %1226 = vmatprep.subr.mxu0 0.0
        %1227 = vmatpush1.msra.mxu0 0.0
        %1228 = vmatprep.mubr.f32.mxu0 0.0
        %1229 = vmatmul.mubr.f32.gmra.mrb[0].mxu0 %v1162
        %v1230 = vpop.f32.mrb[0].mxu0
        %v1231 = vadd.f32 %v823, %v1230
        %v1232 = vpop.f32.mrb[0].mxu0
        %1233 = vdwg.mxu0
        %1234 = vrot.lane.b32.xlu0 %v1148, 64
        %v1235 = vpop.permute.xlu0 %1234
        %v1237 = vadd.f32 %v1148, %v1235
        %1238 = vset.pattern.permute.xlu0 53
        %1239 = vperm.xlu0 %1238, %v903
        %v1240 = vpop.permute.xlu0 %1239
        %v1242 = vmul.f32 %v1240, %v1231
        %v1243 = vadd.f32 %v1237, %v1242
        %1244 = vset.pattern.permute.xlu0 55
        %1245 = vperm.xlu0 %1244, %v903
        %v1246 = vpop.permute.xlu0 %1245
        %v1248 = vmul.f32 %v1246, %v1231
        %1250 = vrot.lane.b32.xlu0 %v1248, 96
        %v1251 = vpop.permute.xlu0 %1250
        %v1253 = vadd.f32 %v1243, %v1251
        %1254 = vset.pattern.permute.xlu0 64
        %1255 = vperm.xlu0 %1254, %v921
        %v1256 = vpop.permute.xlu0 %1255
        %v1258 = vmul.f32 %v1256, %v1231
        %1260 = vrot.lane.b32.xlu0 %v1258, 64
        %v1261 = vpop.permute.xlu0 %1260
        %v1263 = vadd.f32 %v1253, %v1261
        %1265 = vrot.lane.b32.xlu0 %v1263, 32
        %v1266 = vpop.permute.xlu0 %1265
        %vm1268 = vcmask 523520
        %1269 = vst.msk [vmem:[%s217] sm:$0xff] %vm1268, %v1266
        %1270 = vset.pattern.permute.xlu0 76
        %1271 = vperm.xlu0 %1270, %v249
        %v1272 = vpop.permute.xlu0 %1271
        %v1274 = vmul.f32 %v1272, %v365
        %v1275 = vadd.f32 %v266, %v1274
        %1276 = vset.pattern.permute.xlu0 102
        %1277 = vperm.xlu0 %1276, %v415
        %v1278 = vpop.permute.xlu0 %1277
        %vm1279 = vcmp.eq.s32.totalorder %v229, %v1278
        %v1280 = vsel %vm1279, 1.0, 0.0
        %v1281 = vadd.f32 %v1275, %v1280
        %1282 = vset.pattern.permute.xlu0 106
        %1283 = vperm.xlu0 %1282, %v423
        %v1284 = vpop.permute.xlu0 %1283
        %v1285 = vshra.s32 %v1284, %v234
        %v1286 = vand.u32 %v1285, 1
        %v1287 = vcvt.s32.f32 %v1286
        %1288 = vset.pattern.permute.xlu0 102
        %1289 = vperm.xlu0 %1288, %v430
        %v1290 = vpop.permute.xlu0 %1289
        %vm1291 = vcmp.eq.s32.totalorder %v1290, 1
        %vm1292 = vmand %vm237, %vm1291
        %v1293 = vsel %vm1292, %v1287, 0.0
        %v1294 = vadd.f32 %v1281, %v1293
        %1295 = vset.pattern.permute.xlu0 103
        %1296 = vperm.xlu0 %1295, %v415
        %v1297 = vpop.permute.xlu0 %1296
        %vm1298 = vcmp.eq.s32.totalorder %v229, %v1297
        %v1299 = vsel %vm1298, 1.0, 0.0
        %v1300 = vadd.f32 %v1294, %v1299
        %1301 = vset.pattern.permute.xlu0 107
        %1302 = vperm.xlu0 %1301, %v423
        %v1303 = vpop.permute.xlu0 %1302
        %v1304 = vshra.s32 %v1303, %v234
        %v1305 = vand.u32 %v1304, 1
        %v1306 = vcvt.s32.f32 %v1305
        %1307 = vset.pattern.permute.xlu0 103
        %1308 = vperm.xlu0 %1307, %v430
        %v1309 = vpop.permute.xlu0 %1308
        %vm1310 = vcmp.eq.s32.totalorder %v1309, 1
        %vm1311 = vmand %vm237, %vm1310
        %v1312 = vsel %vm1311, %v1306, 0.0
        %v1313 = vadd.f32 %v1300, %v1312
        %1314 = vset.pattern.permute.xlu0 104
        %1315 = vperm.xlu0 %1314, %v415
        %v1316 = vpop.permute.xlu0 %1315
        %vm1317 = vcmp.eq.s32.totalorder %v229, %v1316
        %v1318 = vsel %vm1317, 1.0, 0.0
        %v1319 = vadd.f32 %v1313, %v1318
        %1320 = vset.pattern.permute.xlu0 108
        %1321 = vperm.xlu0 %1320, %v423
        %v1322 = vpop.permute.xlu0 %1321
        %v1323 = vshra.s32 %v1322, %v234
        %v1324 = vand.u32 %v1323, 1
        %v1325 = vcvt.s32.f32 %v1324
        %1326 = vset.pattern.permute.xlu0 104
        %1327 = vperm.xlu0 %1326, %v430
        %v1328 = vpop.permute.xlu0 %1327
        %vm1329 = vcmp.eq.s32.totalorder %v1328, 1
        %vm1330 = vmand %vm237, %vm1329
        %v1331 = vsel %vm1330, %v1325, 0.0
        %v1332 = vadd.f32 %v1319, %v1331
        %1333 = vset.pattern.permute.xlu0 105
        %1334 = vperm.xlu0 %1333, %v415
        %v1335 = vpop.permute.xlu0 %1334
        %vm1336 = vcmp.eq.s32.totalorder %v229, %v1335
        %v1337 = vsel %vm1336, 1.0, 0.0
        %v1338 = vadd.f32 %v1332, %v1337
        %1339 = vset.pattern.permute.xlu0 109
        %1340 = vperm.xlu0 %1339, %v423
        %v1341 = vpop.permute.xlu0 %1340
        %v1342 = vshra.s32 %v1341, %v234
        %v1343 = vand.u32 %v1342, 1
        %v1344 = vcvt.s32.f32 %v1343
        %1345 = vset.pattern.permute.xlu0 105
        %1346 = vperm.xlu0 %1345, %v430
        %v1347 = vpop.permute.xlu0 %1346
        %vm1348 = vcmp.eq.s32.totalorder %v1347, 1
        %vm1349 = vmand %vm237, %vm1348
        %v1350 = vsel %vm1349, %v1344, 0.0
        %v1351 = vadd.f32 %v1338, %v1350
        %1352 = vset.pattern.permute.xlu0 91
        %1353 = vperm.xlu0 %1352, %v511
        %v1354 = vpop.permute.xlu0 %1353
        %vm1355 = vcmp.eq.s32.totalorder %v229, %v1354
        %v1356 = vsel %vm1355, 1.0, 0.0
        %v1357 = vadd.f32 %v1351, %v1356
        %1358 = vset.pattern.permute.xlu0 93
        %1359 = vperm.xlu0 %1358, %v519
        %v1360 = vpop.permute.xlu0 %1359
        %vm1361 = vcmp.eq.s32.totalorder %v229, %v1360
        %v1362 = vsel %vm1361, 1.0, 0.0
        %v1363 = vadd.f32 %v1357, %v1362
        %1364 = vset.pattern.permute.xlu0 93
        %1365 = vperm.xlu0 %1364, %v533
        %v1366 = vpop.permute.xlu0 %1365
        %vm1367 = vcmp.eq.s32.totalorder %v229, %v1366
        %v1368 = vsel %vm1367, 1.0, 0.0
        %v1369 = vadd.f32 %v1363, %v1368
        %1370 = vset.pattern.permute.xlu0 111
        %1371 = vperm.xlu0 %1370, %v541
        %v1372 = vpop.permute.xlu0 %1371
        %vm1373 = vcmp.eq.s32.totalorder %v229, %v1372
        %v1374 = vsel %vm1373, 1.0, 0.0
        %v1375 = vadd.f32 %v1369, %v1374
        %1376 = vset.pattern.permute.xlu0 77
        %1377 = vperm.xlu0 %1376, %v549
        %v1378 = vpop.permute.xlu0 %1377
        %vm1379 = vcmp.eq.s32.totalorder %v229, %v1378
        %v1380 = vsel %vm1379, 1.0, 0.0
        %v1381 = vadd.f32 %v1375, %v1380
        %1382 = vset.pattern.permute.xlu0 88
        %1383 = vperm.xlu0 %1382, %v557
        %v1384 = vpop.permute.xlu0 %1383
        %vm1385 = vcmp.eq.s32.totalorder %v229, %v1384
        %v1386 = vsel %vm1385, 1.0, 0.0
        %v1387 = vadd.f32 %v1381, %v1386
        %1388 = vset.pattern.permute.xlu0 113
        %1389 = vperm.xlu0 %1388, %v568
        %v1390 = vpop.permute.xlu0 %1389
        %v1392 = vsel %vm569, %v1390, 0.0
        %v1393 = vadd.f32 %v1387, %v1392
        %1394 = vset.pattern.permute.xlu0 110
        %1395 = vperm.xlu0 %1394, %v438
        %v1396 = vpop.permute.xlu0 %1395
        %v1398 = vsel %vm577, %v1396, 0.0
        %v1399 = vadd.f32 %v1393, %v1398
        %1400 = vset.pattern.permute.xlu0 111
        %1401 = vperm.xlu0 %1400, %v249
        %v1402 = vpop.permute.xlu0 %1401
        %v1404 = vsel %vm584, %v1402, 0.0
        %v1405 = vadd.f32 %v1399, %v1404
        %1406 = vset.pattern.permute.xlu0 81
        %1407 = vperm.xlu0 %1406, %v597
        %v1408 = vpop.permute.xlu0 %1407
        %vm1409 = vcmp.eq.s32.totalorder %v229, %v1408
        %v1410 = vsel %vm1409, 1.0, 0.0
        %1411 = vset.pattern.permute.xlu0 87
        %1412 = vperm.xlu0 %1411, %v604
        %v1413 = vpop.permute.xlu0 %1412
        %vm1414 = vcmp.eq.s32.totalorder %v229, %v1413
        %v1415 = vsel %vm1414, 1.0, 0.0
        %v1416 = vadd.f32 %v1410, %v1415
        %1417 = vset.pattern.permute.xlu0 90
        %1418 = vperm.xlu0 %1417, %v612
        %v1419 = vpop.permute.xlu0 %1418
        %vm1420 = vcmp.eq.s32.totalorder %v229, %v1419
        %v1421 = vsel %vm1420, 1.0, 0.0
        %v1422 = vadd.f32 %v1416, %v1421
        %1423 = vset.pattern.permute.xlu0 89
        %1424 = vperm.xlu0 %1423, %v623
        %v1425 = vpop.permute.xlu0 %1424
        %vm1426 = vcmp.eq.s32.totalorder %v229, %v1425
        %v1427 = vsel %vm1426, 1.0, 0.0
        %v1428 = vadd.f32 %v1422, %v1427
        %1429 = vset.pattern.permute.xlu0 97
        %1430 = vperm.xlu0 %1429, %v631
        %v1431 = vpop.permute.xlu0 %1430
        %vm1432 = vcmp.eq.s32.totalorder %v229, %v1431
        %v1433 = vsel %vm1432, 1.0, 0.0
        %v1434 = vadd.f32 %v1428, %v1433
        %1435 = vset.pattern.permute.xlu0 98
        %1436 = vperm.xlu0 %1435, %v639
        %v1437 = vpop.permute.xlu0 %1436
        %vm1438 = vcmp.eq.s32.totalorder %v229, %v1437
        %v1439 = vsel %vm1438, 1.0, 0.0
        %v1440 = vadd.f32 %v1434, %v1439
        %1441 = vset.pattern.permute.xlu0 99
        %1442 = vperm.xlu0 %1441, %v659
        %v1443 = vpop.permute.xlu0 %1442
        %vm1444 = vcmp.eq.s32.totalorder %v229, %v1443
        %v1445 = vsel %vm1444, 1.0, 0.0
        %v1446 = vadd.f32 %v1440, %v1445
        %v1447 = vpack.c.bf16 %v1405, %v1405
        %v1448 = vpack.c.bf16 %v1446, %v1446
        %1449 = vmatprep.subr.bf16.mxu0 0
        %1450 = vmatpush1.bf16.msra.mxu0 %v738
        %1451 = vmatprep.subr.bf16.mxu0 0
        %1452 = vmatpush1.bf16.msra.mxu0 %v739
        %1453 = vmatprep.subr.bf16.mxu0 0
        %1454 = vmatpush1.bf16.msra.mxu0 %v740
        %1455 = vmatprep.subr.bf16.mxu0 0
        %1456 = vmatpush1.bf16.msra.mxu0 %v741
        %1457 = vmatprep.subr.bf16.mxu0 0
        %1458 = vmatpush1.bf16.msra.mxu0 %v742
        %1459 = vmatprep.subr.bf16.mxu0 0
        %1460 = vmatpush1.bf16.msra.mxu0 %v743
        %1461 = vmatprep.subr.bf16.mxu0 0
        %1462 = vmatpush1.bf16.msra.mxu0 %v744
        %1463 = vmatprep.subr.bf16.mxu0 0
        %1464 = vmatpush1.bf16.msra.mxu0 %v745
        %1465 = vmatprep.subr.bf16.mxu0 0
        %1466 = vmatpush1.bf16.msra.mxu0 %v746
        %1467 = vmatprep.subr.bf16.mxu0 0
        %1468 = vmatpush1.bf16.msra.mxu0 %v747
        %1469 = vmatprep.subr.bf16.mxu0 0
        %1470 = vmatpush1.bf16.msra.mxu0 %v748
        %1471 = vmatprep.subr.bf16.mxu0 0
        %1472 = vmatpush1.bf16.msra.mxu0 %v749
        %1473 = vmatprep.subr.bf16.mxu0 0
        %1474 = vmatpush1.bf16.msra.mxu0 %v750
        %1475 = vmatprep.subr.bf16.mxu0 0
        %1476 = vmatpush1.bf16.msra.mxu0 %v751
        %1477 = vmatprep.subr.bf16.mxu0 0
        %1478 = vmatpush1.bf16.msra.mxu0 %v752
        %1479 = vmatprep.subr.bf16.mxu0 0
        %1480 = vmatpush1.bf16.msra.mxu0 %v753
        %1481 = vmatprep.mubr.bf16.mxu0 %v1448
        %1482 = vmatmul.mubr.bf16.gmra.mrb[0].mxu0 %v1447
        %v1483 = vpop.f32.mrb[0].mxu0
        %v1484 = vadd.f32 %v672, %v1483
        %v1485 = vpop.f32.mrb[0].mxu0
        %v1486 = vpop.f32.mrb[0].mxu0
        %v1487 = vpop.f32.mrb[0].mxu0
        %1488 = vdwg.mxu0
        %v1489 = vmax.f32 %v1484, 0.0
        %1491 = vrot.lane.b32.xlu0 %v1484, 32
        %v1492 = vpop.permute.xlu0 %1491
        %v1494 = vadd.f32 %v1484, %v1492
        %v1495 = vmax.f32 %v1494, 0.0
        %v1496 = vsel %vm817, %v1489, %v1495
        %v1498 = vsel %vm825, %v1496, 0
        %1500 = vmatprep.subr.mxu0 0.0
        %1501 = vmatpush1.msra.mxu0 %v399
        %1502 = vmatprep.subr.mxu0 0.0
        %1503 = vmatpush1.msra.mxu0 %v400
        %1504 = vmatprep.subr.mxu0 0.0
        %1505 = vmatpush1.msra.mxu0 %v401
        %1506 = vmatprep.subr.mxu0 0.0
        %1507 = vmatpush1.msra.mxu0 %v402
        %1508 = vmatprep.subr.mxu0 0.0
        %1509 = vmatpush1.msra.mxu0 %v403
        %1510 = vmatprep.subr.mxu0 0.0
        %1511 = vmatpush1.msra.mxu0 %v404
        %1512 = vmatprep.subr.mxu0 0.0
        %1513 = vmatpush1.msra.mxu0 %v405
        %1514 = vmatprep.subr.mxu0 0.0
        %1515 = vmatpush1.msra.mxu0 %v406
        %1516 = vmatprep.subr.mxu0 0.0
        %1517 = vmatpush1.msra.mxu0 0.0
        %1518 = vmatprep.subr.mxu0 0.0
        %1519 = vmatpush1.msra.mxu0 0.0
        %1520 = vmatprep.subr.mxu0 0.0
        %1521 = vmatpush1.msra.mxu0 0.0
        %1522 = vmatprep.subr.mxu0 0.0
        %1523 = vmatpush1.msra.mxu0 0.0
        %1524 = vmatprep.subr.mxu0 0.0
        %1525 = vmatpush1.msra.mxu0 0.0
        %1526 = vmatprep.subr.mxu0 0.0
        %1527 = vmatpush1.msra.mxu0 0.0
        %1528 = vmatprep.subr.mxu0 0.0
        %1529 = vmatpush1.msra.mxu0 0.0
        %1530 = vmatprep.subr.mxu0 0.0
        %1531 = vmatpush1.msra.mxu0 0.0
        %1532 = vmatprep.subr.mxu0 0.0
        %1533 = vmatpush1.msra.mxu0 0.0
        %1534 = vmatprep.subr.mxu0 0.0
        %1535 = vmatpush1.msra.mxu0 0.0
        %1536 = vmatprep.subr.mxu0 0.0
        %1537 = vmatpush1.msra.mxu0 0.0
        %1538 = vmatprep.subr.mxu0 0.0
        %1539 = vmatpush1.msra.mxu0 0.0
        %1540 = vmatprep.subr.mxu0 0.0
        %1541 = vmatpush1.msra.mxu0 0.0
        %1542 = vmatprep.subr.mxu0 0.0
        %1543 = vmatpush1.msra.mxu0 0.0
        %1544 = vmatprep.subr.mxu0 0.0
        %1545 = vmatpush1.msra.mxu0 0.0
        %1546 = vmatprep.subr.mxu0 0.0
        %1547 = vmatpush1.msra.mxu0 0.0
        %1548 = vmatprep.subr.mxu0 0.0
        %1549 = vmatpush1.msra.mxu0 0.0
        %1550 = vmatprep.subr.mxu0 0.0
        %1551 = vmatpush1.msra.mxu0 0.0
        %1552 = vmatprep.subr.mxu0 0.0
        %1553 = vmatpush1.msra.mxu0 0.0
        %1554 = vmatprep.subr.mxu0 0.0
        %1555 = vmatpush1.msra.mxu0 0.0
        %1556 = vmatprep.subr.mxu0 0.0
        %1557 = vmatpush1.msra.mxu0 0.0
        %1558 = vmatprep.subr.mxu0 0.0
        %1559 = vmatpush1.msra.mxu0 0.0
        %1560 = vmatprep.subr.mxu0 0.0
        %1561 = vmatpush1.msra.mxu0 0.0
        %1562 = vmatprep.subr.mxu0 0.0
        %1563 = vmatpush1.msra.mxu0 0.0
        %1564 = vmatprep.mubr.f32.mxu0 0.0
        %1565 = vmatmul.mubr.f32.gmra.mrb[0].mxu0 %v1498
        %v1566 = vpop.f32.mrb[0].mxu0
        %v1567 = vadd.f32 %v823, %v1566
        %v1568 = vpop.f32.mrb[0].mxu0
        %1569 = vdwg.mxu0
        %1570 = vrot.lane.b32.xlu0 %v1484, 64
        %v1571 = vpop.permute.xlu0 %1570
        %v1573 = vadd.f32 %v1484, %v1571
        %1574 = vset.pattern.permute.xlu0 91
        %1575 = vperm.xlu0 %1574, %v903
        %v1576 = vpop.permute.xlu0 %1575
        %v1578 = vmul.f32 %v1576, %v1567
        %v1579 = vadd.f32 %v1573, %v1578
        %1580 = vset.pattern.permute.xlu0 93
        %1581 = vperm.xlu0 %1580, %v903
        %v1582 = vpop.permute.xlu0 %1581
        %v1584 = vmul.f32 %v1582, %v1567
        %1586 = vrot.lane.b32.xlu0 %v1584, 96
        %v1587 = vpop.permute.xlu0 %1586
        %v1589 = vadd.f32 %v1579, %v1587
        %1590 = vset.pattern.permute.xlu0 102
        %1591 = vperm.xlu0 %1590, %v921
        %v1592 = vpop.permute.xlu0 %1591
        %v1594 = vmul.f32 %v1592, %v1567
        %1596 = vrot.lane.b32.xlu0 %v1594, 64
        %v1597 = vpop.permute.xlu0 %1596
        %v1599 = vadd.f32 %v1589, %v1597
        %1601 = vrot.lane.b32.xlu0 %v1599, 64
        %v1602 = vpop.permute.xlu0 %1601
        %vm1604 = vcmask 785920
        %1605 = vst.msk [vmem:[%s217] sm:$0xff] %vm1604, %v1602
        %1606 = vset.pattern.permute.xlu0 114
        %1607 = vperm.xlu0 %1606, %v249
        %v1608 = vpop.permute.xlu0 %1607
        %v1610 = vmul.f32 %v1608, %v365
        %v1611 = vadd.f32 %v276, %v1610
        %v1612 = vadd.s32 %v285, 31
        %v1613 = vsel %vm284, %v1612, 4294967295
        %1614 = vset.pattern.permute.xlu0 12
        %1615 = vperm.xlu0 %1614, %v1613
        %v1616 = vpop.permute.xlu0 %1615
        %vm1617 = vcmp.eq.s32.totalorder %v229, %v1616
        %v1618 = vsel %vm1617, 1.0, 0.0
        %v1619 = vadd.f32 %v1611, %v1618
        %vm1620 = vcmp.lt.s32.totalorder %v283, 63
        %v1621 = vsel %vm1620, %v283, 63
        %1622 = vset.pattern.permute.xlu0 16
        %1623 = vperm.xlu0 %1622, %v1621
        %v1624 = vpop.permute.xlu0 %1623
        %v1625 = vshra.s32 %v1624, %v234
        %v1626 = vand.u32 %v1625, 1
        %v1627 = vcvt.s32.f32 %v1626
        %v1628 = vsel %vm284, 1, 0
        %1629 = vset.pattern.permute.xlu0 12
        %1630 = vperm.xlu0 %1629, %v1628
        %v1631 = vpop.permute.xlu0 %1630
        %vm1632 = vcmp.eq.s32.totalorder %v1631, 1
        %vm1633 = vmand %vm237, %vm1632
        %v1634 = vsel %vm1633, %v1627, 0.0
        %v1635 = vadd.f32 %v1619, %v1634
        %v1636 = vsel %vm284, 1.0, 0.0
        %v1637 = vadd.f32 %v1636, 0.0
        %1638 = vset.pattern.permute.xlu0 13
        %1639 = vperm.xlu0 %1638, %v1613
        %v1640 = vpop.permute.xlu0 %1639
        %vm1641 = vcmp.eq.s32.totalorder %v229, %v1640
        %v1642 = vsel %vm1641, 1.0, 0.0
        %v1643 = vadd.f32 %v1635, %v1642
        %1644 = vset.pattern.permute.xlu0 17
        %1645 = vperm.xlu0 %1644, %v1621
        %v1646 = vpop.permute.xlu0 %1645
        %v1647 = vshra.s32 %v1646, %v234
        %v1648 = vand.u32 %v1647, 1
        %v1649 = vcvt.s32.f32 %v1648
        %1650 = vset.pattern.permute.xlu0 13
        %1651 = vperm.xlu0 %1650, %v1628
        %v1652 = vpop.permute.xlu0 %1651
        %vm1653 = vcmp.eq.s32.totalorder %v1652, 1
        %vm1654 = vmand %vm237, %vm1653
        %v1655 = vsel %vm1654, %v1649, 0.0
        %v1656 = vadd.f32 %v1643, %v1655
        %1658 = vrot.lane.b32.xlu0 %v1636, 127
        %v1659 = vpop.permute.xlu0 %1658
        %v1661 = vadd.f32 %v1637, %v1659
        %1662 = vset.pattern.permute.xlu0 14
        %1663 = vperm.xlu0 %1662, %v1613
        %v1664 = vpop.permute.xlu0 %1663
        %vm1665 = vcmp.eq.s32.totalorder %v229, %v1664
        %v1666 = vsel %vm1665, 1.0, 0.0
        %v1667 = vadd.f32 %v1656, %v1666
        %1668 = vset.pattern.permute.xlu0 18
        %1669 = vperm.xlu0 %1668, %v1621
        %v1670 = vpop.permute.xlu0 %1669
        %v1671 = vshra.s32 %v1670, %v234
        %v1672 = vand.u32 %v1671, 1
        %v1673 = vcvt.s32.f32 %v1672
        %1674 = vset.pattern.permute.xlu0 14
        %1675 = vperm.xlu0 %1674, %v1628
        %v1676 = vpop.permute.xlu0 %1675
        %vm1677 = vcmp.eq.s32.totalorder %v1676, 1
        %vm1678 = vmand %vm237, %vm1677
        %v1679 = vsel %vm1678, %v1673, 0.0
        %v1680 = vadd.f32 %v1667, %v1679
        %1681 = vrot.lane.b32.xlu0 %v1636, 126
        %v1682 = vpop.permute.xlu0 %1681
        %v1684 = vadd.f32 %v1661, %v1682
        %1685 = vset.pattern.permute.xlu0 15
        %1686 = vperm.xlu0 %1685, %v1613
        %v1687 = vpop.permute.xlu0 %1686
        %vm1688 = vcmp.eq.s32.totalorder %v229, %v1687
        %v1689 = vsel %vm1688, 1.0, 0.0
        %v1690 = vadd.f32 %v1680, %v1689
        %1691 = vset.pattern.permute.xlu0 19
        %1692 = vperm.xlu0 %1691, %v1621
        %v1693 = vpop.permute.xlu0 %1692
        %v1694 = vshra.s32 %v1693, %v234
        %v1695 = vand.u32 %v1694, 1
        %v1696 = vcvt.s32.f32 %v1695
        %1697 = vset.pattern.permute.xlu0 15
        %1698 = vperm.xlu0 %1697, %v1628
        %v1699 = vpop.permute.xlu0 %1698
        %vm1700 = vcmp.eq.s32.totalorder %v1699, 1
        %vm1701 = vmand %vm237, %vm1700
        %v1702 = vsel %vm1701, %v1696, 0.0
        %v1703 = vadd.f32 %v1690, %v1702
        %1704 = vrot.lane.b32.xlu0 %v1636, 125
        %v1705 = vpop.permute.xlu0 %1704
        %v1707 = vadd.f32 %v1684, %v1705
        %v1708 = vadd.s32 %v285, 60
        %v1709 = vsel %vm284, %v1708, 4294967295
        %1710 = vset.pattern.permute.xlu0 1
        %1711 = vperm.xlu0 %1710, %v1709
        %v1712 = vpop.permute.xlu0 %1711
        %vm1713 = vcmp.eq.s32.totalorder %v229, %v1712
        %v1714 = vsel %vm1713, 1.0, 0.0
        %v1715 = vadd.f32 %v1703, %v1714
        %v1716 = vadd.s32 %v285, 75
        %v1717 = vsel %vm284, %v1716, 4294967295
        %1718 = vset.pattern.permute.xlu0 3
        %1719 = vperm.xlu0 %1718, %v1717
        %v1720 = vpop.permute.xlu0 %1719
        %vm1721 = vcmp.eq.s32.totalorder %v229, %v1720
        %v1722 = vsel %vm1721, 1.0, 0.0
        %v1723 = vadd.f32 %v1715, %v1722
        %1724 = vrot.lane.b32.xlu0 %v1628, 126
        %v1725 = vpop.permute.xlu0 %1724
        %vm1726 = vcmp.ne.s32.totalorder %v1725, 0
        %vm1727 = vmand %vm284, %vm1726
        %v1728 = vadd.s32 %v285, 90
        %1729 = vrot.lane.b32.xlu0 %v1728, 126
        %v1730 = vpop.permute.xlu0 %1729
        %v1731 = vsel %vm1727, %v1730, 4294967295
        %1732 = vset.pattern.permute.xlu0 3
        %1733 = vperm.xlu0 %1732, %v1731
        %v1734 = vpop.permute.xlu0 %1733
        %vm1735 = vcmp.eq.s32.totalorder %v229, %v1734
        %v1736 = vsel %vm1735, 1.0, 0.0
        %v1737 = vadd.f32 %v1723, %v1736
        %v1738 = vadd.s32 %v285, 97
        %v1739 = vsel %vm284, %v1738, 4294967295
        %1740 = vset.pattern.permute.xlu0 21
        %1741 = vperm.xlu0 %1740, %v1739
        %v1742 = vpop.permute.xlu0 %1741
        %vm1743 = vcmp.eq.s32.totalorder %v229, %v1742
        %v1744 = vsel %vm1743, 1.0, 0.0
        %v1745 = vadd.f32 %v1737, %v1744
        %1746 = vset.pattern.permute.xlu0 115
        %1747 = vperm.xlu0 %1746, %v549
        %v1748 = vpop.permute.xlu0 %1747
        %vm1749 = vcmp.eq.s32.totalorder %v229, %v1748
        %v1750 = vsel %vm1749, 1.0, 0.0
        %v1751 = vadd.f32 %v1745, %v1750
        %1752 = vset.pattern.permute.xlu0 126
        %1753 = vperm.xlu0 %1752, %v557
        %v1754 = vpop.permute.xlu0 %1753
        %vm1755 = vcmp.eq.s32.totalorder %v229, %v1754
        %v1756 = vsel %vm1755, 1.0, 0.0
        %v1757 = vadd.f32 %v1751, %v1756
        %vm1758 = vcmp.gt.s32.totalorder %v285, 0
        %v1759 = vsel %vm1758, %v285, 0
        %vm1760 = vcmp.lt.s32.totalorder %v1759, 1
        %v1761 = vsel %vm1760, %v1759, 1
        %v1762 = vcvt.s32.f32 %v1761
        %1764 = vset.pattern.permute.xlu0 23
        %1765 = vperm.xlu0 %1764, %v1762
        %v1766 = vpop.permute.xlu0 %1765
        %v1768 = vsel %vm569, %v1766, 0.0
        %v1769 = vadd.f32 %v1757, %v1768
        %1770 = vset.pattern.permute.xlu0 20
        %1771 = vperm.xlu0 %1770, %v1636
        %v1772 = vpop.permute.xlu0 %1771
        %v1774 = vsel %vm577, %v1772, 0.0
        %v1775 = vadd.f32 %v1769, %v1774
        %1776 = vset.pattern.permute.xlu0 21
        %1777 = vperm.xlu0 %1776, %v293
        %v1778 = vpop.permute.xlu0 %1777
        %v1780 = vsel %vm584, %v1778, 0.0
        %v1781 = vadd.f32 %v1775, %v1780
        %1782 = vset.pattern.permute.xlu0 119
        %1783 = vperm.xlu0 %1782, %v597
        %v1784 = vpop.permute.xlu0 %1783
        %vm1785 = vcmp.eq.s32.totalorder %v229, %v1784
        %v1786 = vsel %vm1785, 1.0, 0.0
        %1787 = vset.pattern.permute.xlu0 125
        %1788 = vperm.xlu0 %1787, %v604
        %v1789 = vpop.permute.xlu0 %1788
        %vm1790 = vcmp.eq.s32.totalorder %v229, %v1789
        %v1791 = vsel %vm1790, 1.0, 0.0
        %v1792 = vadd.f32 %v1786, %v1791
        %v1793 = vadd.s32 %v285, 12
        %v1794 = vsel %vm284, %v1793, 4294967295
        %1795 = vset.pattern.permute.xlu0 0
        %1796 = vperm.xlu0 %1795, %v1794
        %v1797 = vpop.permute.xlu0 %1796
        %vm1798 = vcmp.eq.s32.totalorder %v229, %v1797
        %v1799 = vsel %vm1798, 1.0, 0.0
        %v1800 = vadd.f32 %v1792, %v1799
        %1801 = vset.pattern.permute.xlu0 127
        %1802 = vperm.xlu0 %1801, %v623
        %v1803 = vpop.permute.xlu0 %1802
        %vm1804 = vcmp.eq.s32.totalorder %v229, %v1803
        %v1805 = vsel %vm1804, 1.0, 0.0
        %v1806 = vadd.f32 %v1800, %v1805
        %v1807 = vadd.s32 %v285, 115
        %v1808 = vsel %vm284, %v1807, 4294967295
        %1809 = vset.pattern.permute.xlu0 7
        %1810 = vperm.xlu0 %1809, %v1808
        %v1811 = vpop.permute.xlu0 %1810
        %vm1812 = vcmp.eq.s32.totalorder %v229, %v1811
        %v1813 = vsel %vm1812, 1.0, 0.0
        %v1814 = vadd.f32 %v1806, %v1813
        %v1815 = vadd.s32 %v285, 122
        %v1816 = vsel %vm284, %v1815, 4294967295
        %1817 = vset.pattern.permute.xlu0 8
        %1818 = vperm.xlu0 %1817, %v1816
        %v1819 = vpop.permute.xlu0 %1818
        %vm1820 = vcmp.eq.s32.totalorder %v229, %v1819
        %v1821 = vsel %vm1820, 1.0, 0.0
        %v1822 = vadd.f32 %v1814, %v1821
        %v1823 = vcvt.s32.f32 %v283
        %v1824 = vrsqrt.pop %v1823
        %v1825 = vmul.f32 %v1823, %v1824
        %vm1826 = vcmp.eq.f32.partialorder %v1823, inf
        %v1827 = vsel %vm1826, %v1823, %v1825
        %vm1828 = vcmp.eq.f32.partialorder %v1823, 0.0
        %v1829 = vand.u32 %v1823, 2147483648
        %v1830 = vsel %vm1828, %v1829, %v1827
        %v1831 = vfloor.f32 %v1830
        %v1832 = vcvt.f32.s32.to.zero.pseudo %v1831
        %vm1833 = vcmp.gt.s32.totalorder %v1832, 0
        %v1834 = vsub.s32 %v1832, 1
        %v1835 = vadd.s32 %v1834, 125
        %v1836 = vsel %vm1833, %v1835, 4294967295
        %1837 = vset.pattern.permute.xlu0 9
        %1838 = vperm.xlu0 %1837, %v1836
        %v1839 = vpop.permute.xlu0 %1838
        %vm1840 = vcmp.eq.s32.totalorder %v229, %v1839
        %v1841 = vsel %vm1840, 1.0, 0.0
        %v1842 = vadd.f32 %v1822, %v1841
        %v1843 = vpack.c.bf16 %v1781, %v1781
        %v1844 = vpack.c.bf16 %v1842, %v1842
        %1845 = vmatprep.subr.bf16.mxu0 0
        %1846 = vmatpush1.bf16.msra.mxu0 %v738
        %1847 = vmatprep.subr.bf16.mxu0 0
        %1848 = vmatpush1.bf16.msra.mxu0 %v739
        %1849 = vmatprep.subr.bf16.mxu0 0
        %1850 = vmatpush1.bf16.msra.mxu0 %v740
        %1851 = vmatprep.subr.bf16.mxu0 0
        %1852 = vmatpush1.bf16.msra.mxu0 %v741
        %1853 = vmatprep.subr.bf16.mxu0 0
        %1854 = vmatpush1.bf16.msra.mxu0 %v742
        %1855 = vmatprep.subr.bf16.mxu0 0
        %1856 = vmatpush1.bf16.msra.mxu0 %v743
        %1857 = vmatprep.subr.bf16.mxu0 0
        %1858 = vmatpush1.bf16.msra.mxu0 %v744
        %1859 = vmatprep.subr.bf16.mxu0 0
        %1860 = vmatpush1.bf16.msra.mxu0 %v745
        %1861 = vmatprep.subr.bf16.mxu0 0
        %1862 = vmatpush1.bf16.msra.mxu0 %v746
        %1863 = vmatprep.subr.bf16.mxu0 0
        %1864 = vmatpush1.bf16.msra.mxu0 %v747
        %1865 = vmatprep.subr.bf16.mxu0 0
        %1866 = vmatpush1.bf16.msra.mxu0 %v748
        %1867 = vmatprep.subr.bf16.mxu0 0
        %1868 = vmatpush1.bf16.msra.mxu0 %v749
        %1869 = vmatprep.subr.bf16.mxu0 0
        %1870 = vmatpush1.bf16.msra.mxu0 %v750
        %1871 = vmatprep.subr.bf16.mxu0 0
        %1872 = vmatpush1.bf16.msra.mxu0 %v751
        %1873 = vmatprep.subr.bf16.mxu0 0
        %1874 = vmatpush1.bf16.msra.mxu0 %v752
        %1875 = vmatprep.subr.bf16.mxu0 0
        %1876 = vmatpush1.bf16.msra.mxu0 %v753
        %1877 = vmatprep.mubr.bf16.mxu0 %v1844
        %1878 = vmatmul.mubr.bf16.gmra.mrb[0].mxu0 %v1843
        %v1879 = vpop.f32.mrb[0].mxu0
        %v1880 = vadd.f32 %v672, %v1879
        %v1881 = vpop.f32.mrb[0].mxu0
        %v1882 = vpop.f32.mrb[0].mxu0
        %v1883 = vpop.f32.mrb[0].mxu0
        %1884 = vdwg.mxu0
        %v1885 = vmax.f32 %v1880, 0.0
        %1887 = vrot.lane.b32.xlu0 %v1880, 32
        %v1888 = vpop.permute.xlu0 %1887
        %v1890 = vadd.f32 %v1880, %v1888
        %v1891 = vmax.f32 %v1890, 0.0
        %v1892 = vsel %vm817, %v1885, %v1891
        %v1894 = vsel %vm825, %v1892, 0
        %1896 = vmatprep.subr.mxu0 0.0
        %1897 = vmatpush1.msra.mxu0 %v399
        %1898 = vmatprep.subr.mxu0 0.0
        %1899 = vmatpush1.msra.mxu0 %v400
        %1900 = vmatprep.subr.mxu0 0.0
        %1901 = vmatpush1.msra.mxu0 %v401
        %1902 = vmatprep.subr.mxu0 0.0
        %1903 = vmatpush1.msra.mxu0 %v402
        %1904 = vmatprep.subr.mxu0 0.0
        %1905 = vmatpush1.msra.mxu0 %v403
        %1906 = vmatprep.subr.mxu0 0.0
        %1907 = vmatpush1.msra.mxu0 %v404
        %1908 = vmatprep.subr.mxu0 0.0
        %1909 = vmatpush1.msra.mxu0 %v405
        %1910 = vmatprep.subr.mxu0 0.0
        %1911 = vmatpush1.msra.mxu0 %v406
        %1912 = vmatprep.subr.mxu0 0.0
        %1913 = vmatpush1.msra.mxu0 0.0
        %1914 = vmatprep.subr.mxu0 0.0
        %1915 = vmatpush1.msra.mxu0 0.0
        %1916 = vmatprep.subr.mxu0 0.0
        %1917 = vmatpush1.msra.mxu0 0.0
        %1918 = vmatprep.subr.mxu0 0.0
        %1919 = vmatpush1.msra.mxu0 0.0
        %1920 = vmatprep.subr.mxu0 0.0
        %1921 = vmatpush1.msra.mxu0 0.0
        %1922 = vmatprep.subr.mxu0 0.0
        %1923 = vmatpush1.msra.mxu0 0.0
        %1924 = vmatprep.subr.mxu0 0.0
        %1925 = vmatpush1.msra.mxu0 0.0
        %1926 = vmatprep.subr.mxu0 0.0
        %1927 = vmatpush1.msra.mxu0 0.0
        %1928 = vmatprep.subr.mxu0 0.0
        %1929 = vmatpush1.msra.mxu0 0.0
        %1930 = vmatprep.subr.mxu0 0.0
        %1931 = vmatpush1.msra.mxu0 0.0
        %1932 = vmatprep.subr.mxu0 0.0
        %1933 = vmatpush1.msra.mxu0 0.0
        %1934 = vmatprep.subr.mxu0 0.0
        %1935 = vmatpush1.msra.mxu0 0.0
        %1936 = vmatprep.subr.mxu0 0.0
        %1937 = vmatpush1.msra.mxu0 0.0
        %1938 = vmatprep.subr.mxu0 0.0
        %1939 = vmatpush1.msra.mxu0 0.0
        %1940 = vmatprep.subr.mxu0 0.0
        %1941 = vmatpush1.msra.mxu0 0.0
        %1942 = vmatprep.subr.mxu0 0.0
        %1943 = vmatpush1.msra.mxu0 0.0
        %1944 = vmatprep.subr.mxu0 0.0
        %1945 = vmatpush1.msra.mxu0 0.0
        %1946 = vmatprep.subr.mxu0 0.0
        %1947 = vmatpush1.msra.mxu0 0.0
        %1948 = vmatprep.subr.mxu0 0.0
        %1949 = vmatpush1.msra.mxu0 0.0
        %1950 = vmatprep.subr.mxu0 0.0
        %1951 = vmatpush1.msra.mxu0 0.0
        %1952 = vmatprep.subr.mxu0 0.0
        %1953 = vmatpush1.msra.mxu0 0.0
        %1954 = vmatprep.subr.mxu0 0.0
        %1955 = vmatpush1.msra.mxu0 0.0
        %1956 = vmatprep.subr.mxu0 0.0
        %1957 = vmatpush1.msra.mxu0 0.0
        %1958 = vmatprep.subr.mxu0 0.0
        %1959 = vmatpush1.msra.mxu0 0.0
        %1960 = vmatprep.mubr.f32.mxu0 0.0
        %1961 = vmatmul.mubr.f32.gmra.mrb[0].mxu0 %v1894
        %v1962 = vpop.f32.mrb[0].mxu0
        %v1963 = vadd.f32 %v823, %v1962
        %v1964 = vpop.f32.mrb[0].mxu0
        %1965 = vdwg.mxu0
        %1966 = vrot.lane.b32.xlu0 %v1880, 64
        %v1967 = vpop.permute.xlu0 %1966
        %v1969 = vadd.f32 %v1880, %v1967
        %v1970 = vsub.f32 1.0, %v1636
        %1972 = vset.pattern.permute.xlu0 1
        %1973 = vperm.xlu0 %1972, %v1970
        %v1974 = vpop.permute.xlu0 %1973
        %v1976 = vmul.f32 %v1974, %v1963
        %v1977 = vadd.f32 %v1969, %v1976
        %1978 = vset.pattern.permute.xlu0 3
        %1979 = vperm.xlu0 %1978, %v1970
        %v1980 = vpop.permute.xlu0 %1979
        %v1982 = vmul.f32 %v1980, %v1963
        %1984 = vrot.lane.b32.xlu0 %v1982, 96
        %v1985 = vpop.permute.xlu0 %1984
        %v1987 = vadd.f32 %v1977, %v1985
        %v1988 = vsub.f32 4.0, %v1707
        %1990 = vset.pattern.permute.xlu0 12
        %1991 = vperm.xlu0 %1990, %v1988
        %v1992 = vpop.permute.xlu0 %1991
        %v1994 = vmul.f32 %v1992, %v1963
        %1996 = vrot.lane.b32.xlu0 %v1994, 64
        %v1997 = vpop.permute.xlu0 %1996
        %v1999 = vadd.f32 %v1987, %v1997
        %2001 = vrot.lane.b32.xlu0 %v1999, 96
        %v2002 = vpop.permute.xlu0 %2001
        %vm2004 = vcmask 1048320
        %2005 = vst.msk [vmem:[%s217] sm:$0xff] %vm2004, %v2002
        %2006 = vset.pattern.permute.xlu0 24
        %2007 = vperm.xlu0 %2006, %v293
        %v2008 = vpop.permute.xlu0 %2007
        %v2010 = vmul.f32 %v2008, %v365
        %v2011 = vadd.f32 %v291, %v2010
        %2012 = vset.pattern.permute.xlu0 50
        %2013 = vperm.xlu0 %2012, %v1613
        %v2014 = vpop.permute.xlu0 %2013
        %vm2015 = vcmp.eq.s32.totalorder %v229, %v2014
        %v2016 = vsel %vm2015, 1.0, 0.0
        %v2017 = vadd.f32 %v2011, %v2016
        %2018 = vset.pattern.permute.xlu0 54
        %2019 = vperm.xlu0 %2018, %v1621
        %v2020 = vpop.permute.xlu0 %2019
        %v2021 = vshra.s32 %v2020, %v234
        %v2022 = vand.u32 %v2021, 1
        %v2023 = vcvt.s32.f32 %v2022
        %2024 = vset.pattern.permute.xlu0 50
        %2025 = vperm.xlu0 %2024, %v1628
        %v2026 = vpop.permute.xlu0 %2025
        %vm2027 = vcmp.eq.s32.totalorder %v2026, 1
        %vm2028 = vmand %vm237, %vm2027
        %v2029 = vsel %vm2028, %v2023, 0.0
        %v2030 = vadd.f32 %v2017, %v2029
        %2031 = vset.pattern.permute.xlu0 51
        %2032 = vperm.xlu0 %2031, %v1613
        %v2033 = vpop.permute.xlu0 %2032
        %vm2034 = vcmp.eq.s32.totalorder %v229, %v2033
        %v2035 = vsel %vm2034, 1.0, 0.0
        %v2036 = vadd.f32 %v2030, %v2035
        %2037 = vset.pattern.permute.xlu0 55
        %2038 = vperm.xlu0 %2037, %v1621
        %v2039 = vpop.permute.xlu0 %2038
        %v2040 = vshra.s32 %v2039, %v234
        %v2041 = vand.u32 %v2040, 1
        %v2042 = vcvt.s32.f32 %v2041
        %2043 = vset.pattern.permute.xlu0 51
        %2044 = vperm.xlu0 %2043, %v1628
        %v2045 = vpop.permute.xlu0 %2044
        %vm2046 = vcmp.eq.s32.totalorder %v2045, 1
        %vm2047 = vmand %vm237, %vm2046
        %v2048 = vsel %vm2047, %v2042, 0.0
        %v2049 = vadd.f32 %v2036, %v2048
        %2050 = vset.pattern.permute.xlu0 52
        %2051 = vperm.xlu0 %2050, %v1613
        %v2052 = vpop.permute.xlu0 %2051
        %vm2053 = vcmp.eq.s32.totalorder %v229, %v2052
        %v2054 = vsel %vm2053, 1.0, 0.0
        %v2055 = vadd.f32 %v2049, %v2054
        %2056 = vset.pattern.permute.xlu0 56
        %2057 = vperm.xlu0 %2056, %v1621
        %v2058 = vpop.permute.xlu0 %2057
        %v2059 = vshra.s32 %v2058, %v234
        %v2060 = vand.u32 %v2059, 1
        %v2061 = vcvt.s32.f32 %v2060
        %2062 = vset.pattern.permute.xlu0 52
        %2063 = vperm.xlu0 %2062, %v1628
        %v2064 = vpop.permute.xlu0 %2063
        %vm2065 = vcmp.eq.s32.totalorder %v2064, 1
        %vm2066 = vmand %vm237, %vm2065
        %v2067 = vsel %vm2066, %v2061, 0.0
        %v2068 = vadd.f32 %v2055, %v2067
        %2069 = vset.pattern.permute.xlu0 53
        %2070 = vperm.xlu0 %2069, %v1613
        %v2071 = vpop.permute.xlu0 %2070
        %vm2072 = vcmp.eq.s32.totalorder %v229, %v2071
        %v2073 = vsel %vm2072, 1.0, 0.0
        %v2074 = vadd.f32 %v2068, %v2073
        %2075 = vset.pattern.permute.xlu0 57
        %2076 = vperm.xlu0 %2075, %v1621
        %v2077 = vpop.permute.xlu0 %2076
        %v2078 = vshra.s32 %v2077, %v234
        %v2079 = vand.u32 %v2078, 1
        %v2080 = vcvt.s32.f32 %v2079
        %2081 = vset.pattern.permute.xlu0 53
        %2082 = vperm.xlu0 %2081, %v1628
        %v2083 = vpop.permute.xlu0 %2082
        %vm2084 = vcmp.eq.s32.totalorder %v2083, 1
        %vm2085 = vmand %vm237, %vm2084
        %v2086 = vsel %vm2085, %v2080, 0.0
        %v2087 = vadd.f32 %v2074, %v2086
        %2088 = vset.pattern.permute.xlu0 39
        %2089 = vperm.xlu0 %2088, %v1709
        %v2090 = vpop.permute.xlu0 %2089
        %vm2091 = vcmp.eq.s32.totalorder %v229, %v2090
        %v2092 = vsel %vm2091, 1.0, 0.0
        %v2093 = vadd.f32 %v2087, %v2092
        %2094 = vset.pattern.permute.xlu0 41
        %2095 = vperm.xlu0 %2094, %v1717
        %v2096 = vpop.permute.xlu0 %2095
        %vm2097 = vcmp.eq.s32.totalorder %v229, %v2096
        %v2098 = vsel %vm2097, 1.0, 0.0
        %v2099 = vadd.f32 %v2093, %v2098
        %2100 = vset.pattern.permute.xlu0 41
        %2101 = vperm.xlu0 %2100, %v1731
        %v2102 = vpop.permute.xlu0 %2101
        %vm2103 = vcmp.eq.s32.totalorder %v229, %v2102
        %v2104 = vsel %vm2103, 1.0, 0.0
        %v2105 = vadd.f32 %v2099, %v2104
        %2106 = vset.pattern.permute.xlu0 59
        %2107 = vperm.xlu0 %2106, %v1739
        %v2108 = vpop.permute.xlu0 %2107
        %vm2109 = vcmp.eq.s32.totalorder %v229, %v2108
        %v2110 = vsel %vm2109, 1.0, 0.0
        %v2111 = vadd.f32 %v2105, %v2110
        %v2112 = vadd.s32 %v285, 119
        %v2113 = vsel %vm284, %v2112, 4294967295
        %2114 = vset.pattern.permute.xlu0 25
        %2115 = vperm.xlu0 %2114, %v2113
        %v2116 = vpop.permute.xlu0 %2115
        %vm2117 = vcmp.eq.s32.totalorder %v229, %v2116
        %v2118 = vsel %vm2117, 1.0, 0.0
        %v2119 = vadd.f32 %v2111, %v2118
        %v2120 = vadd.s32 %v285, 126
        %v2121 = vsel %vm284, %v2120, 4294967295
        %2122 = vset.pattern.permute.xlu0 36
        %2123 = vperm.xlu0 %2122, %v2121
        %v2124 = vpop.permute.xlu0 %2123
        %vm2125 = vcmp.eq.s32.totalorder %v229, %v2124
        %v2126 = vsel %vm2125, 1.0, 0.0
        %v2127 = vadd.f32 %v2119, %v2126
        %2128 = vset.pattern.permute.xlu0 61
        %2129 = vperm.xlu0 %2128, %v1762
        %v2130 = vpop.permute.xlu0 %2129
        %v2132 = vsel %vm569, %v2130, 0.0
        %v2133 = vadd.f32 %v2127, %v2132
        %2134 = vset.pattern.permute.xlu0 58
        %2135 = vperm.xlu0 %2134, %v1636
        %v2136 = vpop.permute.xlu0 %2135
        %v2138 = vsel %vm577, %v2136, 0.0
        %v2139 = vadd.f32 %v2133, %v2138
        %2140 = vset.pattern.permute.xlu0 59
        %2141 = vperm.xlu0 %2140, %v293
        %v2142 = vpop.permute.xlu0 %2141
        %v2144 = vsel %vm584, %v2142, 0.0
        %v2145 = vadd.f32 %v2139, %v2144
        %v2146 = vmul.f32 %v225, 10.0
        %v2147 = vmax.f32 %v2146, 0.0
        %v2148 = vmin.f32 %v2147, 10.0
        %v2149 = vcvt.f32.s32.to.zero.pseudo %v2148
        %vm2150 = vcmp.gt.s32.totalorder %v2149, 0
        %v2151 = vsub.s32 %v2149, 1
        %v2152 = vsel %vm2150, %v2151, 4294967295
        %2153 = vset.pattern.permute.xlu0 29
        %2154 = vperm.xlu0 %2153, %v2152
        %v2155 = vpop.permute.xlu0 %2154
        %vm2156 = vcmp.eq.s32.totalorder %v229, %v2155
        %v2157 = vsel %vm2156, 1.0, 0.0
        %v2158 = vadd.s32 %v285, 10
        %v2159 = vsel %vm284, %v2158, 4294967295
        %2160 = vset.pattern.permute.xlu0 35
        %2161 = vperm.xlu0 %2160, %v2159
        %v2162 = vpop.permute.xlu0 %2161
        %vm2163 = vcmp.eq.s32.totalorder %v229, %v2162
        %v2164 = vsel %vm2163, 1.0, 0.0
        %v2165 = vadd.f32 %v2157, %v2164
        %2166 = vset.pattern.permute.xlu0 38
        %2167 = vperm.xlu0 %2166, %v1794
        %v2168 = vpop.permute.xlu0 %2167
        %vm2169 = vcmp.eq.s32.totalorder %v229, %v2168
        %v2170 = vsel %vm2169, 1.0, 0.0
        %v2171 = vadd.f32 %v2165, %v2170
        %v2172 = vcvt.f32.s32.to.zero.pseudo %v225
        %vm2173 = vcmp.gt.s32.totalorder %v2172, 1
        %v2174 = vsel %vm2173, %v2172, 1
        %v2175 = vsub.s32 %v2174, 1
        %v2176 = vadd.s32 %v2175, 15
        %2177 = vset.pattern.permute.xlu0 37
        %2178 = vperm.xlu0 %2177, %v2176
        %v2179 = vpop.permute.xlu0 %2178
        %vm2180 = vcmp.eq.s32.totalorder %v229, %v2179
        %v2181 = vsel %vm2180, 1.0, 0.0
        %v2182 = vadd.f32 %v2171, %v2181
        %2183 = vset.pattern.permute.xlu0 45
        %2184 = vperm.xlu0 %2183, %v1808
        %v2185 = vpop.permute.xlu0 %2184
        %vm2186 = vcmp.eq.s32.totalorder %v229, %v2185
        %v2187 = vsel %vm2186, 1.0, 0.0
        %v2188 = vadd.f32 %v2182, %v2187
        %2189 = vset.pattern.permute.xlu0 46
        %2190 = vperm.xlu0 %2189, %v1816
        %v2191 = vpop.permute.xlu0 %2190
        %vm2192 = vcmp.eq.s32.totalorder %v229, %v2191
        %v2193 = vsel %vm2192, 1.0, 0.0
        %v2194 = vadd.f32 %v2188, %v2193
        %2195 = vset.pattern.permute.xlu0 47
        %2196 = vperm.xlu0 %2195, %v1836
        %v2197 = vpop.permute.xlu0 %2196
        %vm2198 = vcmp.eq.s32.totalorder %v229, %v2197
        %v2199 = vsel %vm2198, 1.0, 0.0
        %v2200 = vadd.f32 %v2194, %v2199
        %v2201 = vpack.c.bf16 %v2145, %v2145
        %v2202 = vpack.c.bf16 %v2200, %v2200
        %2203 = vmatprep.subr.bf16.mxu0 0
        %2204 = vmatpush1.bf16.msra.mxu0 %v738
        %2205 = vmatprep.subr.bf16.mxu0 0
        %2206 = vmatpush1.bf16.msra.mxu0 %v739
        %2207 = vmatprep.subr.bf16.mxu0 0
        %2208 = vmatpush1.bf16.msra.mxu0 %v740
        %2209 = vmatprep.subr.bf16.mxu0 0
        %2210 = vmatpush1.bf16.msra.mxu0 %v741
        %2211 = vmatprep.subr.bf16.mxu0 0
        %2212 = vmatpush1.bf16.msra.mxu0 %v742
        %2213 = vmatprep.subr.bf16.mxu0 0
        %2214 = vmatpush1.bf16.msra.mxu0 %v743
        %2215 = vmatprep.subr.bf16.mxu0 0
        %2216 = vmatpush1.bf16.msra.mxu0 %v744
        %2217 = vmatprep.subr.bf16.mxu0 0
        %2218 = vmatpush1.bf16.msra.mxu0 %v745
        %2219 = vmatprep.subr.bf16.mxu0 0
        %2220 = vmatpush1.bf16.msra.mxu0 %v746
        %2221 = vmatprep.subr.bf16.mxu0 0
        %2222 = vmatpush1.bf16.msra.mxu0 %v747
        %2223 = vmatprep.subr.bf16.mxu0 0
        %2224 = vmatpush1.bf16.msra.mxu0 %v748
        %2225 = vmatprep.subr.bf16.mxu0 0
        %2226 = vmatpush1.bf16.msra.mxu0 %v749
        %2227 = vmatprep.subr.bf16.mxu0 0
        %2228 = vmatpush1.bf16.msra.mxu0 %v750
        %2229 = vmatprep.subr.bf16.mxu0 0
        %2230 = vmatpush1.bf16.msra.mxu0 %v751
        %2231 = vmatprep.subr.bf16.mxu0 0
        %2232 = vmatpush1.bf16.msra.mxu0 %v752
        %2233 = vmatprep.subr.bf16.mxu0 0
        %2234 = vmatpush1.bf16.msra.mxu0 %v753
        %2235 = vmatprep.mubr.bf16.mxu0 %v2202
        %2236 = vmatmul.mubr.bf16.gmra.mrb[0].mxu0 %v2201
        %v2237 = vpop.f32.mrb[0].mxu0
        %v2238 = vadd.f32 %v672, %v2237
        %v2239 = vpop.f32.mrb[0].mxu0
        %v2240 = vpop.f32.mrb[0].mxu0
        %v2241 = vpop.f32.mrb[0].mxu0
        %2242 = vdwg.mxu0
        %v2243 = vmax.f32 %v2238, 0.0
        %2245 = vrot.lane.b32.xlu0 %v2238, 32
        %v2246 = vpop.permute.xlu0 %2245
        %v2248 = vadd.f32 %v2238, %v2246
        %v2249 = vmax.f32 %v2248, 0.0
        %v2250 = vsel %vm817, %v2243, %v2249
        %v2252 = vsel %vm825, %v2250, 0
        %2254 = vmatprep.subr.mxu0 0.0
        %2255 = vmatpush1.msra.mxu0 %v399
        %2256 = vmatprep.subr.mxu0 0.0
        %2257 = vmatpush1.msra.mxu0 %v400
        %2258 = vmatprep.subr.mxu0 0.0
        %2259 = vmatpush1.msra.mxu0 %v401
        %2260 = vmatprep.subr.mxu0 0.0
        %2261 = vmatpush1.msra.mxu0 %v402
        %2262 = vmatprep.subr.mxu0 0.0
        %2263 = vmatpush1.msra.mxu0 %v403
        %2264 = vmatprep.subr.mxu0 0.0
        %2265 = vmatpush1.msra.mxu0 %v404
        %2266 = vmatprep.subr.mxu0 0.0
        %2267 = vmatpush1.msra.mxu0 %v405
        %2268 = vmatprep.subr.mxu0 0.0
        %2269 = vmatpush1.msra.mxu0 %v406
        %2270 = vmatprep.subr.mxu0 0.0
        %2271 = vmatpush1.msra.mxu0 0.0
        %2272 = vmatprep.subr.mxu0 0.0
        %2273 = vmatpush1.msra.mxu0 0.0
        %2274 = vmatprep.subr.mxu0 0.0
        %2275 = vmatpush1.msra.mxu0 0.0
        %2276 = vmatprep.subr.mxu0 0.0
        %2277 = vmatpush1.msra.mxu0 0.0
        %2278 = vmatprep.subr.mxu0 0.0
        %2279 = vmatpush1.msra.mxu0 0.0
        %2280 = vmatprep.subr.mxu0 0.0
        %2281 = vmatpush1.msra.mxu0 0.0
        %2282 = vmatprep.subr.mxu0 0.0
        %2283 = vmatpush1.msra.mxu0 0.0
        %2284 = vmatprep.subr.mxu0 0.0
        %2285 = vmatpush1.msra.mxu0 0.0
        %2286 = vmatprep.subr.mxu0 0.0
        %2287 = vmatpush1.msra.mxu0 0.0
        %2288 = vmatprep.subr.mxu0 0.0
        %2289 = vmatpush1.msra.mxu0 0.0
        %2290 = vmatprep.subr.mxu0 0.0
        %2291 = vmatpush1.msra.mxu0 0.0
        %2292 = vmatprep.subr.mxu0 0.0
        %2293 = vmatpush1.msra.mxu0 0.0
        %2294 = vmatprep.subr.mxu0 0.0
        %2295 = vmatpush1.msra.mxu0 0.0
        %2296 = vmatprep.subr.mxu0 0.0
        %2297 = vmatpush1.msra.mxu0 0.0
        %2298 = vmatprep.subr.mxu0 0.0
        %2299 = vmatpush1.msra.mxu0 0.0
        %2300 = vmatprep.subr.mxu0 0.0
        %2301 = vmatpush1.msra.mxu0 0.0
        %2302 = vmatprep.subr.mxu0 0.0
        %2303 = vmatpush1.msra.mxu0 0.0
        %2304 = vmatprep.subr.mxu0 0.0
        %2305 = vmatpush1.msra.mxu0 0.0
        %2306 = vmatprep.subr.mxu0 0.0
        %2307 = vmatpush1.msra.mxu0 0.0
        %2308 = vmatprep.subr.mxu0 0.0
        %2309 = vmatpush1.msra.mxu0 0.0
        %2310 = vmatprep.subr.mxu0 0.0
        %2311 = vmatpush1.msra.mxu0 0.0
        %2312 = vmatprep.subr.mxu0 0.0
        %2313 = vmatpush1.msra.mxu0 0.0
        %2314 = vmatprep.subr.mxu0 0.0
        %2315 = vmatpush1.msra.mxu0 0.0
        %2316 = vmatprep.subr.mxu0 0.0
        %2317 = vmatpush1.msra.mxu0 0.0
        %2318 = vmatprep.mubr.f32.mxu0 0.0
        %2319 = vmatmul.mubr.f32.gmra.mrb[0].mxu0 %v2252
        %v2320 = vpop.f32.mrb[0].mxu0
        %v2321 = vadd.f32 %v823, %v2320
        %v2322 = vpop.f32.mrb[0].mxu0
        %2323 = vdwg.mxu0
        %2324 = vrot.lane.b32.xlu0 %v2238, 64
        %v2325 = vpop.permute.xlu0 %2324
        %v2327 = vadd.f32 %v2238, %v2325
        %2328 = vset.pattern.permute.xlu0 39
        %2329 = vperm.xlu0 %2328, %v1970
        %v2330 = vpop.permute.xlu0 %2329
        %v2332 = vmul.f32 %v2330, %v2321
        %v2333 = vadd.f32 %v2327, %v2332
        %2334 = vset.pattern.permute.xlu0 41
        %2335 = vperm.xlu0 %2334, %v1970
        %v2336 = vpop.permute.xlu0 %2335
        %v2338 = vmul.f32 %v2336, %v2321
        %2340 = vrot.lane.b32.xlu0 %v2338, 96
        %v2341 = vpop.permute.xlu0 %2340
        %v2343 = vadd.f32 %v2333, %v2341
        %2344 = vset.pattern.permute.xlu0 50
        %2345 = vperm.xlu0 %2344, %v1988
        %v2346 = vpop.permute.xlu0 %2345
        %v2348 = vmul.f32 %v2346, %v2321
        %2350 = vrot.lane.b32.xlu0 %v2348, 64
        %v2351 = vpop.permute.xlu0 %2350
        %v2353 = vadd.f32 %v2343, %v2351
        %2354 = vst.msk [vmem:[%s217 + $0x8] sm:$0xff] %vm817, %v2353
        %2355 = vset.pattern.permute.xlu0 62
        %2356 = vperm.xlu0 %2355, %v293
        %v2357 = vpop.permute.xlu0 %2356
        %v2359 = vmul.f32 %v2357, %v365
        %v2360 = vadd.f32 %v303, %v2359
        %2361 = vset.pattern.permute.xlu0 88
        %2362 = vperm.xlu0 %2361, %v1613
        %v2363 = vpop.permute.xlu0 %2362
        %vm2364 = vcmp.eq.s32.totalorder %v229, %v2363
        %v2365 = vsel %vm2364, 1.0, 0.0
        %v2366 = vadd.f32 %v2360, %v2365
        %2367 = vset.pattern.permute.xlu0 92
        %2368 = vperm.xlu0 %2367, %v1621
        %v2369 = vpop.permute.xlu0 %2368
        %v2370 = vshra.s32 %v2369, %v234
        %v2371 = vand.u32 %v2370, 1
        %v2372 = vcvt.s32.f32 %v2371
        %2373 = vset.pattern.permute.xlu0 88
        %2374 = vperm.xlu0 %2373, %v1628
        %v2375 = vpop.permute.xlu0 %2374
        %vm2376 = vcmp.eq.s32.totalorder %v2375, 1
        %vm2377 = vmand %vm237, %vm2376
        %v2378 = vsel %vm2377, %v2372, 0.0
        %v2379 = vadd.f32 %v2366, %v2378
        %2380 = vset.pattern.permute.xlu0 89
        %2381 = vperm.xlu0 %2380, %v1613
        %v2382 = vpop.permute.xlu0 %2381
        %vm2383 = vcmp.eq.s32.totalorder %v229, %v2382
        %v2384 = vsel %vm2383, 1.0, 0.0
        %v2385 = vadd.f32 %v2379, %v2384
        %2386 = vset.pattern.permute.xlu0 93
        %2387 = vperm.xlu0 %2386, %v1621
        %v2388 = vpop.permute.xlu0 %2387
        %v2389 = vshra.s32 %v2388, %v234
        %v2390 = vand.u32 %v2389, 1
        %v2391 = vcvt.s32.f32 %v2390
        %2392 = vset.pattern.permute.xlu0 89
        %2393 = vperm.xlu0 %2392, %v1628
        %v2394 = vpop.permute.xlu0 %2393
        %vm2395 = vcmp.eq.s32.totalorder %v2394, 1
        %vm2396 = vmand %vm237, %vm2395
        %v2397 = vsel %vm2396, %v2391, 0.0
        %v2398 = vadd.f32 %v2385, %v2397
        %2399 = vset.pattern.permute.xlu0 90
        %2400 = vperm.xlu0 %2399, %v1613
        %v2401 = vpop.permute.xlu0 %2400
        %vm2402 = vcmp.eq.s32.totalorder %v229, %v2401
        %v2403 = vsel %vm2402, 1.0, 0.0
        %v2404 = vadd.f32 %v2398, %v2403
        %2405 = vset.pattern.permute.xlu0 94
        %2406 = vperm.xlu0 %2405, %v1621
        %v2407 = vpop.permute.xlu0 %2406
        %v2408 = vshra.s32 %v2407, %v234
        %v2409 = vand.u32 %v2408, 1
        %v2410 = vcvt.s32.f32 %v2409
        %2411 = vset.pattern.permute.xlu0 90
        %2412 = vperm.xlu0 %2411, %v1628
        %v2413 = vpop.permute.xlu0 %2412
        %vm2414 = vcmp.eq.s32.totalorder %v2413, 1
        %vm2415 = vmand %vm237, %vm2414
        %v2416 = vsel %vm2415, %v2410, 0.0
        %v2417 = vadd.f32 %v2404, %v2416
        %2418 = vset.pattern.permute.xlu0 91
        %2419 = vperm.xlu0 %2418, %v1613
        %v2420 = vpop.permute.xlu0 %2419
        %vm2421 = vcmp.eq.s32.totalorder %v229, %v2420
        %v2422 = vsel %vm2421, 1.0, 0.0
        %v2423 = vadd.f32 %v2417, %v2422
        %2424 = vset.pattern.permute.xlu0 95
        %2425 = vperm.xlu0 %2424, %v1621
        %v2426 = vpop.permute.xlu0 %2425
        %v2427 = vshra.s32 %v2426, %v234
        %v2428 = vand.u32 %v2427, 1
        %v2429 = vcvt.s32.f32 %v2428
        %2430 = vset.pattern.permute.xlu0 91
        %2431 = vperm.xlu0 %2430, %v1628
        %v2432 = vpop.permute.xlu0 %2431
        %vm2433 = vcmp.eq.s32.totalorder %v2432, 1
        %vm2434 = vmand %vm237, %vm2433
        %v2435 = vsel %vm2434, %v2429, 0.0
        %v2436 = vadd.f32 %v2423, %v2435
        %2437 = vset.pattern.permute.xlu0 77
        %2438 = vperm.xlu0 %2437, %v1709
        %v2439 = vpop.permute.xlu0 %2438
        %vm2440 = vcmp.eq.s32.totalorder %v229, %v2439
        %v2441 = vsel %vm2440, 1.0, 0.0
        %v2442 = vadd.f32 %v2436, %v2441
        %2443 = vset.pattern.permute.xlu0 79
        %2444 = vperm.xlu0 %2443, %v1717
        %v2445 = vpop.permute.xlu0 %2444
        %vm2446 = vcmp.eq.s32.totalorder %v229, %v2445
        %v2447 = vsel %vm2446, 1.0, 0.0
        %v2448 = vadd.f32 %v2442, %v2447
        %2449 = vset.pattern.permute.xlu0 79
        %2450 = vperm.xlu0 %2449, %v1731
        %v2451 = vpop.permute.xlu0 %2450
        %vm2452 = vcmp.eq.s32.totalorder %v229, %v2451
        %v2453 = vsel %vm2452, 1.0, 0.0
        %v2454 = vadd.f32 %v2448, %v2453
        %2455 = vset.pattern.permute.xlu0 97
        %2456 = vperm.xlu0 %2455, %v1739
        %v2457 = vpop.permute.xlu0 %2456
        %vm2458 = vcmp.eq.s32.totalorder %v229, %v2457
        %v2459 = vsel %vm2458, 1.0, 0.0
        %v2460 = vadd.f32 %v2454, %v2459
        %2461 = vset.pattern.permute.xlu0 63
        %2462 = vperm.xlu0 %2461, %v2113
        %v2463 = vpop.permute.xlu0 %2462
        %vm2464 = vcmp.eq.s32.totalorder %v229, %v2463
        %v2465 = vsel %vm2464, 1.0, 0.0
        %v2466 = vadd.f32 %v2460, %v2465
        %2467 = vset.pattern.permute.xlu0 74
        %2468 = vperm.xlu0 %2467, %v2121
        %v2469 = vpop.permute.xlu0 %2468
        %vm2470 = vcmp.eq.s32.totalorder %v229, %v2469
        %v2471 = vsel %vm2470, 1.0, 0.0
        %v2472 = vadd.f32 %v2466, %v2471
        %2473 = vset.pattern.permute.xlu0 99
        %2474 = vperm.xlu0 %2473, %v1762
        %v2475 = vpop.permute.xlu0 %2474
        %v2477 = vsel %vm569, %v2475, 0.0
        %v2478 = vadd.f32 %v2472, %v2477
        %2479 = vset.pattern.permute.xlu0 96
        %2480 = vperm.xlu0 %2479, %v1636
        %v2481 = vpop.permute.xlu0 %2480
        %v2483 = vsel %vm577, %v2481, 0.0
        %v2484 = vadd.f32 %v2478, %v2483
        %2485 = vset.pattern.permute.xlu0 97
        %2486 = vperm.xlu0 %2485, %v293
        %v2487 = vpop.permute.xlu0 %2486
        %v2489 = vsel %vm584, %v2487, 0.0
        %v2490 = vadd.f32 %v2484, %v2489
        %2491 = vset.pattern.permute.xlu0 67
        %2492 = vperm.xlu0 %2491, %v2152
        %v2493 = vpop.permute.xlu0 %2492
        %vm2494 = vcmp.eq.s32.totalorder %v229, %v2493
        %v2495 = vsel %vm2494, 1.0, 0.0
        %2496 = vset.pattern.permute.xlu0 73
        %2497 = vperm.xlu0 %2496, %v2159
        %v2498 = vpop.permute.xlu0 %2497
        %vm2499 = vcmp.eq.s32.totalorder %v229, %v2498
        %v2500 = vsel %vm2499, 1.0, 0.0
        %v2501 = vadd.f32 %v2495, %v2500
        %2502 = vset.pattern.permute.xlu0 76
        %2503 = vperm.xlu0 %2502, %v1794
        %v2504 = vpop.permute.xlu0 %2503
        %vm2505 = vcmp.eq.s32.totalorder %v229, %v2504
        %v2506 = vsel %vm2505, 1.0, 0.0
        %v2507 = vadd.f32 %v2501, %v2506
        %2508 = vset.pattern.permute.xlu0 75
        %2509 = vperm.xlu0 %2508, %v2176
        %v2510 = vpop.permute.xlu0 %2509
        %vm2511 = vcmp.eq.s32.totalorder %v229, %v2510
        %v2512 = vsel %vm2511, 1.0, 0.0
        %v2513 = vadd.f32 %v2507, %v2512
        %2514 = vset.pattern.permute.xlu0 83
        %2515 = vperm.xlu0 %2514, %v1808
        %v2516 = vpop.permute.xlu0 %2515
        %vm2517 = vcmp.eq.s32.totalorder %v229, %v2516
        %v2518 = vsel %vm2517, 1.0, 0.0
        %v2519 = vadd.f32 %v2513, %v2518
        %2520 = vset.pattern.permute.xlu0 84
        %2521 = vperm.xlu0 %2520, %v1816
        %v2522 = vpop.permute.xlu0 %2521
        %vm2523 = vcmp.eq.s32.totalorder %v229, %v2522
        %v2524 = vsel %vm2523, 1.0, 0.0
        %v2525 = vadd.f32 %v2519, %v2524
        %2526 = vset.pattern.permute.xlu0 85
        %2527 = vperm.xlu0 %2526, %v1836
        %v2528 = vpop.permute.xlu0 %2527
        %vm2529 = vcmp.eq.s32.totalorder %v229, %v2528
        %v2530 = vsel %vm2529, 1.0, 0.0
        %v2531 = vadd.f32 %v2525, %v2530
        %v2532 = vpack.c.bf16 %v2490, %v2490
        %v2533 = vpack.c.bf16 %v2531, %v2531
        %2534 = vmatprep.subr.bf16.mxu0 0
        %2535 = vmatpush1.bf16.msra.mxu0 %v738
        %2536 = vmatprep.subr.bf16.mxu0 0
        %2537 = vmatpush1.bf16.msra.mxu0 %v739
        %2538 = vmatprep.subr.bf16.mxu0 0
        %2539 = vmatpush1.bf16.msra.mxu0 %v740
        %2540 = vmatprep.subr.bf16.mxu0 0
        %2541 = vmatpush1.bf16.msra.mxu0 %v741
        %2542 = vmatprep.subr.bf16.mxu0 0
        %2543 = vmatpush1.bf16.msra.mxu0 %v742
        %2544 = vmatprep.subr.bf16.mxu0 0
        %2545 = vmatpush1.bf16.msra.mxu0 %v743
        %2546 = vmatprep.subr.bf16.mxu0 0
        %2547 = vmatpush1.bf16.msra.mxu0 %v744
        %2548 = vmatprep.subr.bf16.mxu0 0
        %2549 = vmatpush1.bf16.msra.mxu0 %v745
        %2550 = vmatprep.subr.bf16.mxu0 0
        %2551 = vmatpush1.bf16.msra.mxu0 %v746
        %2552 = vmatprep.subr.bf16.mxu0 0
        %2553 = vmatpush1.bf16.msra.mxu0 %v747
        %2554 = vmatprep.subr.bf16.mxu0 0
        %2555 = vmatpush1.bf16.msra.mxu0 %v748
        %2556 = vmatprep.subr.bf16.mxu0 0
        %2557 = vmatpush1.bf16.msra.mxu0 %v749
        %2558 = vmatprep.subr.bf16.mxu0 0
        %2559 = vmatpush1.bf16.msra.mxu0 %v750
        %2560 = vmatprep.subr.bf16.mxu0 0
        %2561 = vmatpush1.bf16.msra.mxu0 %v751
        %2562 = vmatprep.subr.bf16.mxu0 0
        %2563 = vmatpush1.bf16.msra.mxu0 %v752
        %2564 = vmatprep.subr.bf16.mxu0 0
        %2565 = vmatpush1.bf16.msra.mxu0 %v753
        %2566 = vmatprep.mubr.bf16.mxu0 %v2533
        %2567 = vmatmul.mubr.bf16.gmra.mrb[0].mxu0 %v2532
        %v2568 = vpop.f32.mrb[0].mxu0
        %v2569 = vadd.f32 %v672, %v2568
        %v2570 = vpop.f32.mrb[0].mxu0
        %v2571 = vpop.f32.mrb[0].mxu0
        %v2572 = vpop.f32.mrb[0].mxu0
        %2573 = vdwg.mxu0
        %v2574 = vmax.f32 %v2569, 0.0
        %2576 = vrot.lane.b32.xlu0 %v2569, 32
        %v2577 = vpop.permute.xlu0 %2576
        %v2579 = vadd.f32 %v2569, %v2577
        %v2580 = vmax.f32 %v2579, 0.0
        %v2581 = vsel %vm817, %v2574, %v2580
        %v2583 = vsel %vm825, %v2581, 0
        %2585 = vmatprep.subr.mxu0 0.0
        %2586 = vmatpush1.msra.mxu0 %v399
        %2587 = vmatprep.subr.mxu0 0.0
        %2588 = vmatpush1.msra.mxu0 %v400
        %2589 = vmatprep.subr.mxu0 0.0
        %2590 = vmatpush1.msra.mxu0 %v401
        %2591 = vmatprep.subr.mxu0 0.0
        %2592 = vmatpush1.msra.mxu0 %v402
        %2593 = vmatprep.subr.mxu0 0.0
        %2594 = vmatpush1.msra.mxu0 %v403
        %2595 = vmatprep.subr.mxu0 0.0
        %2596 = vmatpush1.msra.mxu0 %v404
        %2597 = vmatprep.subr.mxu0 0.0
        %2598 = vmatpush1.msra.mxu0 %v405
        %2599 = vmatprep.subr.mxu0 0.0
        %2600 = vmatpush1.msra.mxu0 %v406
        %2601 = vmatprep.subr.mxu0 0.0
        %2602 = vmatpush1.msra.mxu0 0.0
        %2603 = vmatprep.subr.mxu0 0.0
        %2604 = vmatpush1.msra.mxu0 0.0
        %2605 = vmatprep.subr.mxu0 0.0
        %2606 = vmatpush1.msra.mxu0 0.0
        %2607 = vmatprep.subr.mxu0 0.0
        %2608 = vmatpush1.msra.mxu0 0.0
        %2609 = vmatprep.subr.mxu0 0.0
        %2610 = vmatpush1.msra.mxu0 0.0
        %2611 = vmatprep.subr.mxu0 0.0
        %2612 = vmatpush1.msra.mxu0 0.0
        %2613 = vmatprep.subr.mxu0 0.0
        %2614 = vmatpush1.msra.mxu0 0.0
        %2615 = vmatprep.subr.mxu0 0.0
        %2616 = vmatpush1.msra.mxu0 0.0
        %2617 = vmatprep.subr.mxu0 0.0
        %2618 = vmatpush1.msra.mxu0 0.0
        %2619 = vmatprep.subr.mxu0 0.0
        %2620 = vmatpush1.msra.mxu0 0.0
        %2621 = vmatprep.subr.mxu0 0.0
        %2622 = vmatpush1.msra.mxu0 0.0
        %2623 = vmatprep.subr.mxu0 0.0
        %2624 = vmatpush1.msra.mxu0 0.0
        %2625 = vmatprep.subr.mxu0 0.0
        %2626 = vmatpush1.msra.mxu0 0.0
        %2627 = vmatprep.subr.mxu0 0.0
        %2628 = vmatpush1.msra.mxu0 0.0
        %2629 = vmatprep.subr.mxu0 0.0
        %2630 = vmatpush1.msra.mxu0 0.0
        %2631 = vmatprep.subr.mxu0 0.0
        %2632 = vmatpush1.msra.mxu0 0.0
        %2633 = vmatprep.subr.mxu0 0.0
        %2634 = vmatpush1.msra.mxu0 0.0
        %2635 = vmatprep.subr.mxu0 0.0
        %2636 = vmatpush1.msra.mxu0 0.0
        %2637 = vmatprep.subr.mxu0 0.0
        %2638 = vmatpush1.msra.mxu0 0.0
        %2639 = vmatprep.subr.mxu0 0.0
        %2640 = vmatpush1.msra.mxu0 0.0
        %2641 = vmatprep.subr.mxu0 0.0
        %2642 = vmatpush1.msra.mxu0 0.0
        %2643 = vmatprep.subr.mxu0 0.0
        %2644 = vmatpush1.msra.mxu0 0.0
        %2645 = vmatprep.subr.mxu0 0.0
        %2646 = vmatpush1.msra.mxu0 0.0
        %2647 = vmatprep.subr.mxu0 0.0
        %2648 = vmatpush1.msra.mxu0 0.0
        %2649 = vmatprep.mubr.f32.mxu0 0.0
        %2650 = vmatmul.mubr.f32.gmra.mrb[0].mxu0 %v2583
        %v2651 = vpop.f32.mrb[0].mxu0
        %v2652 = vadd.f32 %v823, %v2651
        %v2653 = vpop.f32.mrb[0].mxu0
        %2654 = vdwg.mxu0
        %2655 = vrot.lane.b32.xlu0 %v2569, 64
        %v2656 = vpop.permute.xlu0 %2655
        %v2658 = vadd.f32 %v2569, %v2656
        %2659 = vset.pattern.permute.xlu0 77
        %2660 = vperm.xlu0 %2659, %v1970
        %v2661 = vpop.permute.xlu0 %2660
        %v2663 = vmul.f32 %v2661, %v2652
        %v2664 = vadd.f32 %v2658, %v2663
        %2665 = vset.pattern.permute.xlu0 79
        %2666 = vperm.xlu0 %2665, %v1970
        %v2667 = vpop.permute.xlu0 %2666
        %v2669 = vmul.f32 %v2667, %v2652
        %2671 = vrot.lane.b32.xlu0 %v2669, 96
        %v2672 = vpop.permute.xlu0 %2671
        %v2674 = vadd.f32 %v2664, %v2672
        %2675 = vset.pattern.permute.xlu0 88
        %2676 = vperm.xlu0 %2675, %v1988
        %v2677 = vpop.permute.xlu0 %2676
        %v2679 = vmul.f32 %v2677, %v2652
        %2681 = vrot.lane.b32.xlu0 %v2679, 64
        %v2682 = vpop.permute.xlu0 %2681
        %v2684 = vadd.f32 %v2674, %v2682
        %2686 = vrot.lane.b32.xlu0 %v2684, 32
        %v2687 = vpop.permute.xlu0 %2686
        %2689 = vst.msk [vmem:[%s217 + $0x8] sm:$0xff] %vm1268, %v2687
        %s2690 = sand.u32 %s137, 1
        %s2691 = scalar_lea.sflag [#allocation3], %s2690
        %s2692 = sand.u32 %s137, 1
        %s2693 = smul.addr %s2692, 16
        %s2694 = scalar_lea.vmem [#allocation2], %s2693
        // Predicated region
        $region41: #{tpu_custom_call.1} parent=39 // pred_check
          %p2695 = pneg %p147
        $region42: #{tpu_custom_call.1} parent=39 // pred_check_branch
          %2697 = sbr.rel (%p2695) target = $region44
        $region43: #{tpu_custom_call.1} parent=39 // pred_region
          %s2699 = ssub.s32 256, 256
          %2700 = vsyncadd %s2691, %s2699
          %s2701 = smul.addr %s19, 2
          %s2702 = smul.addr %s2701, 128
          %s2703 = scalar_lea.hbm %s5, %s2702
          %s2705 = sshll.u32 %s2694, 4
          %s2706 = int_to_ptr.vmem [resolvable:$true] %s2705
          %2708 = dma.vmem_to_hbm [thread:$0]  %s2706, 256, %s2703, %s2691
        $region44: #{tpu_custom_call.1} parent=39 // pred_fallthru
          _
      $region40: #{tpu_custom_call.1} parent=5 // pred_fallthru
        _
      %p2709 = scmp.le.s32.totalorder 2, %s14
      // Predicated region
      $region45: #{tpu_custom_call.1} parent=5 // pred_check
        %p2710 = pneg %p2709
      $region46: #{tpu_custom_call.1} parent=5 // pred_check_branch
        %2712 = sbr.rel (%p2710) target = $region48
      $region47: #{tpu_custom_call.1} parent=5 // pred_region
        %s2713 = ssub.s32 %s14, 2
        // Predicated region
        $region49: #{tpu_custom_call.1} parent=47 // pred_check
          %p2714 = pneg %p153
        $region50: #{tpu_custom_call.1} parent=47 // pred_check_branch
          %2716 = sbr.rel (%p2714) target = $region52
        $region51: #{tpu_custom_call.1} parent=47 // pred_region
          %s2717 = sand.u32 %s138, 1
          %s2718 = scalar_lea.sflag [#allocation3], %s2717
          %s2719 = sand.u32 %s138, 1
          %s2720 = smul.addr %s2719, 16
          %s2721 = scalar_lea.vmem [#allocation2], %s2720
          %2722 = dma.done %s2718, 256
        $region52: #{tpu_custom_call.1} parent=47 // pred_fallthru
          _
      $region48: #{tpu_custom_call.1} parent=5 // pred_fallthru
        _
    $region6: #{tpu_custom_call.1} parent=1 // loop_footer
      %s18 = sadd.s32 1, %s14
    $region7: #{tpu_custom_call.1} parent=1 // loop_footer_branch
      %13 = sbr.rel target = $region3
    $region8: #{tpu_custom_call.1} parent=1 // loop_exit
      _
    %2723 = vsyncpa [#allocation3], 1
    %s2724 = scalar_lea.sflag [#allocation3], 1
    %2725 = vsyncpa %s2724, 1

</llo_original>
